<compile_context>
chip_gen: v5e
topology: v5e:2x2
jax: 0.10.0
libtpu: 0.0.40
codegen_flags: <defaults>
</compile_context>

<pallas_src>
import functools

import jax
import jax.numpy as jnp
import numpy as np
from jax.experimental import pallas as pl
from jax.experimental.pallas import tpu as pltpu


# ----------------------------------------------------------------------------
# Flat-grid geometry shared by the three layers.
# ----------------------------------------------------------------------------
_GRID_W = 25                                   # row width of the flat grids
_GRID_Q = _GRID_W * _GRID_W                    # 625 lanes per (batch, channel)
_K = 5                                         # kernel size of layers 2 and 3
_SHIFT_MAX = (_K - 1) * _GRID_W + (_K - 1)     # 104 = largest tap shift
_XF2_W = _GRID_Q + _SHIFT_MAX                  # 729  (layer-2 input scratch)
_XF3_OFF = 128                                 # lane-aligned data offset
_XF3_W = _XF3_OFF + _GRID_Q + 15               # 768  (layer-3 input scratch)


def _make_masks():
    q = np.arange(_GRID_Q)
    y, x = q // _GRID_W, q % _GRID_W
    # layer-1 outputs sit at the dilated positions (4+2i, 4+2j), i,j in [0,9)
    m1 = ((y >= 4) & (y <= 20) & ((y - 4) % 2 == 0) &
          (x >= 4) & (x <= 20) & ((x - 4) % 2 == 0))
    # layer-2 valid outputs occupy the top-left 21x21 of its 25-wide grid
    m2 = (y < 21) & (x < 21)
    return (m1.astype(np.float32).reshape(1, _GRID_Q),
            m2.astype(np.float32).reshape(1, _GRID_Q))


_MASK1_NP, _MASK2_NP = _make_masks()


# ----------------------------------------------------------------------------
# In-kernel helpers
# ----------------------------------------------------------------------------
def _bn_stats(parts, mask, n_valid):
    """Per-channel batch mean / biased variance over `parts` (one (C, Q) slab
    per batch element), restricted to lanes where mask == 1 (mask may be None).
    """
    cnt = float(len(parts) * n_valid)
    tot = None
    for p in parts:
        pm = p if mask is None else p * mask
        s = jnp.sum(pm, axis=1, keepdims=True)
        tot = s if tot is None else tot + s
    mean = tot / cnt

    vtot = None
    for p in parts:
        d = p - mean
        if mask is not None:
            d = d * mask
        s = jnp.sum(d * d, axis=1, keepdims=True)
        vtot = s if vtot is None else vtot + s
    var = vtot / cnt
    return mean, var


def _generator_kernel(l1_ref, w1_ref, w2_ref, w3_ref, bn_ref, m1_ref, m2_ref,
                      out_ref, xf2_ref, xf3_ref, *, batch, eps):
    B = batch
    W, Q, K = _GRID_W, _GRID_Q, _K

    # Zero the grid scratch buffers: all padding / dilation zeros live here.
    xf2_ref[...] = jnp.zeros_like(xf2_ref)
    xf3_ref[...] = jnp.zeros_like(xf3_ref)

    m1 = m1_ref[...]                       # (1, 625) valid mask, layer-1 grid
    m2 = m2_ref[...]                       # (1, 625) valid mask, layer-2 grid

    # ---- layer 1: ConvTranspose2d(16,16,9) on a 1x1 input == dense matmul.
    # The weight is pre-scattered into the dilated+padded 25x25 grid layer 2
    # reads, so acc1 is already in that grid layout ((b,c) rows x 625 lanes).
    acc1 = jnp.dot(l1_ref[...], w1_ref[...],
                   preferred_element_type=jnp.float32)          # (B*16, 625)
    g1 = bn_ref[:, 0:1]
    b1 = bn_ref[:, 1:2]
    parts = [acc1[b * 16:(b + 1) * 16, :] for b in range(B)]
    mean, var = _bn_stats(parts, m1, 81)                        # 9*9 real vals
    scale = jax.lax.rsqrt(var + eps) * g1
    for b in range(B):
        z = jnp.maximum((parts[b] - mean) * scale + b1, 0.0) * m1
        xf2_ref[b * 16:(b + 1) * 16, 0:Q] = z                   # aligned store

    # ---- layer 2: ConvTranspose2d(16,8,5,stride=2) as 25 shifted-window
    # MXU matmuls over the dilated+padded grid held in VMEM.
    acc2 = jnp.zeros((B * 8, Q), jnp.float32)
    for t in range(K * K):
        s = (t // K) * W + (t % K)
        win = xf2_ref[:, s:s + Q]                               # (B*16, 625)
        acc2 = acc2 + jnp.dot(w2_ref[t], win,
                              preferred_element_type=jnp.float32)
    g2 = bn_ref[0:8, 2:3]
    b2 = bn_ref[0:8, 3:4]
    parts = [acc2[b * 8:(b + 1) * 8, :] for b in range(B)]
    mean, var = _bn_stats(parts, m2, 441)                       # 21*21 valid
    scale = jax.lax.rsqrt(var + eps) * g2
    for b in range(B):
        z = jnp.maximum((parts[b] - mean) * scale + b2, 0.0) * m2
        # Store the 25-wide layer-2 grid at a lane-aligned offset; the zeroed
        # prefix / tail / masked lanes provide layer 3's spatial padding.
        xf3_ref[b * 8:(b + 1) * 8, _XF3_OFF:_XF3_OFF + Q] = z

    # ---- layer 3: ConvTranspose2d(8,8,5,stride=1), same shifted-window form.
    acc3 = jnp.zeros((B * 8, Q), jnp.float32)
    base = _XF3_OFF - _SHIFT_MAX                                # 24
    for t in range(K * K):
        s = base + (t // K) * W + (t % K)
        win = xf3_ref[:, s:s + Q]                               # (B*8, 625)
        acc3 = acc3 + jnp.dot(w3_ref[t], win,
                              preferred_element_type=jnp.float32)
    g3 = bn_ref[0:8, 4:5]
    b3 = bn_ref[0:8, 5:6]
    parts = [acc3[b * 8:(b + 1) * 8, :] for b in range(B)]
    mean, var = _bn_stats(parts, None, Q)                       # all 625 valid
    scale = jax.lax.rsqrt(var + eps) * g3
    for b in range(B):
        z = jnp.maximum((parts[b] - mean) * scale + b3, 0.0)
        out_ref[b * 8:(b + 1) * 8, :] = z                       # lane-dense


# ----------------------------------------------------------------------------
# Wrapper: parameter re-layout (tiny, weight-only) + single pallas_call
# ----------------------------------------------------------------------------
def generator_forward(x, params, eps=1e-5):
    """x: (B, 16) (anything reshapeable to it).  Returns (B, 8, 25, 25)."""
    B = x.shape[0]
    x = x.reshape(B, 16).astype(jnp.float32)
    w1, w2, w3 = params["w1"], params["w2"], params["w3"]

    # Layer-1 weight scattered into the dilated (stride-2) + padded (K-1)
    # 25x25 grid consumed by layer 2: value w1[ci,c,i,j] lands at (4+2i, 4+2j).
    w1g = jnp.zeros((16, 16, _GRID_W, _GRID_W), jnp.float32)
    w1g = w1g.at[:, :, 4:22:2, 4:22:2].set(w1)
    w1r = w1g.reshape(16 * 16, _GRID_Q)                          # (256, 625)

    # Layer-1 lhs: L[b*16+c, ci*16+c'] = x[b,ci] * (c==c'), so L @ w1r lands
    # directly in the channel-major (B*16, 625) grid layout.
    eye16 = jnp.eye(16, dtype=jnp.float32)
    l1 = (x[:, None, :, None] * eye16[None, :, None, :]).reshape(B * 16, 256)

    # Per-tap, batch-block-diagonal, spatially flipped conv weights.
    eye_b = jnp.eye(B, dtype=jnp.float32)

    def per_tap_blockdiag(w):
        cin, cout, k, _ = w.shape
        wf = jnp.transpose(w[:, :, ::-1, ::-1], (2, 3, 1, 0))    # (k,k,co,ci)
        wf = wf.reshape(k * k, cout, cin)
        blk = eye_b[None, :, None, :, None] * wf[:, None, :, None, :]
        return blk.reshape(k * k, B * cout, B * cin)

    w2blk = per_tap_blockdiag(w2)                                # (25, B*8, B*16)
    w3blk = per_tap_blockdiag(w3)                                # (25, B*8, B*8)

    # Packed BatchNorm affine params -> one tiny VMEM operand.
    bn = jnp.zeros((16, 6), jnp.float32)
    bn = bn.at[:, 0].set(params["g1"]).at[:, 1].set(params["b1"])
    bn = bn.at[:8, 2].set(params["g2"]).at[:8, 3].set(params["b2"])
    bn = bn.at[:8, 4].set(params["g3"]).at[:8, 5].set(params["b3"])

    m1 = jnp.asarray(_MASK1_NP)
    m2 = jnp.asarray(_MASK2_NP)

    out = pl.pallas_call(
        functools.partial(_generator_kernel, batch=B, eps=eps),
        out_shape=jax.ShapeDtypeStruct((B * 8, _GRID_Q), jnp.float32),
        grid=(1,),
        in_specs=[
            pl.BlockSpec((B * 16, 256), lambda i: (0, 0)),
            pl.BlockSpec((256, _GRID_Q), lambda i: (0, 0)),
            pl.BlockSpec((_K * _K, B * 8, B * 16), lambda i: (0, 0, 0)),
            pl.BlockSpec((_K * _K, B * 8, B * 8), lambda i: (0, 0, 0)),
            pl.BlockSpec((16, 6), lambda i: (0, 0)),
            pl.BlockSpec((1, _GRID_Q), lambda i: (0, 0)),
            pl.BlockSpec((1, _GRID_Q), lambda i: (0, 0)),
        ],
        out_specs=pl.BlockSpec((B * 8, _GRID_Q), lambda i: (0, 0)),
        scratch_shapes=[
            pltpu.VMEM((B * 16, _XF2_W), jnp.float32),   # layer-2 input grid
            pltpu.VMEM((B * 8, _XF3_W), jnp.float32),    # layer-3 input grid
        ],
        compiler_params=pltpu.CompilerParams(
            dimension_semantics=("arbitrary",)),
    )(l1, w1r, w2blk, w3blk, bn, m1, m2)

    # Rows are (b, c_out)-major, lanes are y*25+x -> reshape is NCHW for free.
    return out.reshape(B, 8, 25, 25)


# ----------------------------------------------------------------------------
# Pure-JAX reference (correctness check)
# ----------------------------------------------------------------------------
def _conv_transpose_ref(x_nchw, w_t, stride):
    K = w_t.shape[2]
    w = jnp.transpose(w_t[:, :, ::-1, ::-1], (1, 0, 2, 3))       # (Cout,Cin,K,K)
    return jax.lax.conv_general_dilated(
        x_nchw, w, window_strides=(1, 1),
        padding=[(K - 1, K - 1), (K - 1, K - 1)],
        lhs_dilation=(stride, stride),
        dimension_numbers=("NCHW", "OIHW", "NCHW"))


def _bn_relu_ref(y, gamma, beta, eps=1e-5):
    mean = jnp.mean(y, axis=(0, 2, 3), keepdims=True)
    var = jnp.mean(jnp.square(y - mean), axis=(0, 2, 3), keepdims=True)
    yn = (y - mean) * jax.lax.rsqrt(var + eps)
    return jnp.maximum(yn * gamma.reshape(1, -1, 1, 1)
                       + beta.reshape(1, -1, 1, 1), 0.0)


def generator_ref(x, params):
    h = x.reshape(x.shape[0], 16, 1, 1)
    h = _bn_relu_ref(_conv_transpose_ref(h, params["w1"], 1), params["g1"], params["b1"])
    h = _bn_relu_ref(_conv_transpose_ref(h, params["w2"], 2), params["g2"], params["b2"])
    h = _bn_relu_ref(_conv_transpose_ref(h, params["w3"], 1), params["g3"], params["b3"])
    return h


if __name__ == "__main__":
    key = jax.random.PRNGKey(0)
    kx, k1, k2, k3 = jax.random.split(key, 4)

    params = {
        # ConvTranspose2d weights: (in_channels, out_channels, kH, kW)
        "w1": 0.05 * jax.random.normal(k1, (16, 16, 9, 9), jnp.float32),
        "w2": 0.05 * jax.random.normal(k2, (16, 8, 5, 5), jnp.float32),
        "w3": 0.05 * jax.random.normal(k3, (8, 8, 5, 5), jnp.float32),
        # BatchNorm affine params (PyTorch default init: weight=1, bias=0)
        "g1": jnp.ones((16,), jnp.float32), "b1": jnp.zeros((16,), jnp.float32),
        "g2": jnp.ones((8,), jnp.float32), "b2": jnp.zeros((8,), jnp.float32),
        "g3": jnp.ones((8,), jnp.float32), "b3": jnp.zeros((8,), jnp.float32),
    }

    x = jax.random.normal(kx, (2, 16), jnp.float32)   # forward views to (2,16,1,1)

    out = jax.jit(generator_forward)(x, params)
    out = jax.block_until_ready(out)
    assert out.shape == (2, 8, 25, 25), out.shape

    ref = generator_ref(x, params)
    err = float(jnp.max(jnp.abs(out - ref)))
    assert jnp.allclose(out, ref, rtol=5e-3, atol=5e-3), err

    print("KERNEL_OK")
</pallas_src>

<mosaic_0001>
module attributes {stable_mosaic.version = 11 : i64} {
  func.func @_generator_kernel(%arg0: i32, %arg1: memref<32x256xf32, #tpu.memory_space<vmem>>, %arg2: memref<256x625xf32, #tpu.memory_space<vmem>>, %arg3: memref<25x16x32xf32, #tpu.memory_space<vmem>>, %arg4: memref<25x16x16xf32, #tpu.memory_space<vmem>>, %arg5: memref<16x6xf32, #tpu.memory_space<vmem>>, %arg6: memref<1x625xf32, #tpu.memory_space<vmem>>, %arg7: memref<1x625xf32, #tpu.memory_space<vmem>>, %arg8: memref<16x625xf32, #tpu.memory_space<vmem>>, %arg9: memref<32x729xf32, #tpu.memory_space<vmem>>, %arg10: memref<16x768xf32, #tpu.memory_space<vmem>>) attributes {dimension_semantics = [#tpu.dimension_semantics<arbitrary>], iteration_bounds = array<i64: 1>, scalar_prefetch = 0 : i64, scratch_operands = 2 : i64, tpu.core_type = #tpu.core_type<tc>, window_params = [{pipeline_mode = #tpu.pipeline_mode<synchronous>, transform_indices = @transform_0, window_bounds = array<i64: 32, 256>}, {pipeline_mode = #tpu.pipeline_mode<synchronous>, transform_indices = @transform_1, window_bounds = array<i64: 256, 625>}, {pipeline_mode = #tpu.pipeline_mode<synchronous>, transform_indices = @transform_2, window_bounds = array<i64: 25, 16, 32>}, {pipeline_mode = #tpu.pipeline_mode<synchronous>, transform_indices = @transform_3, window_bounds = array<i64: 25, 16, 16>}, {pipeline_mode = #tpu.pipeline_mode<synchronous>, transform_indices = @transform_4, window_bounds = array<i64: 16, 6>}, {pipeline_mode = #tpu.pipeline_mode<synchronous>, transform_indices = @transform_5, window_bounds = array<i64: 1, 625>}, {pipeline_mode = #tpu.pipeline_mode<synchronous>, transform_indices = @transform_6, window_bounds = array<i64: 1, 625>}, {pipeline_mode = #tpu.pipeline_mode<synchronous>, transform_indices = @transform_7, window_bounds = array<i64: 16, 625>}]} {
    %cst = arith.constant 0.000000e+00 : f32
    %0 = vector.broadcast %cst : f32 to vector<32x729xf32>
    %c0 = arith.constant 0 : index
    %c0_0 = arith.constant 0 : index
    %1 = vector.load %arg9[%c0, %c0_0] : memref<32x729xf32, #tpu.memory_space<vmem>>, vector<32x729xf32>
    tpu.vector_store %arg9[%c0, %c0_0], %0 {strides = array<i32>} : memref<32x729xf32, #tpu.memory_space<vmem>>, vector<32x729xf32>,
    %cst_1 = arith.constant 0.000000e+00 : f32
    %2 = vector.broadcast %cst_1 : f32 to vector<16x768xf32>
    %c0_2 = arith.constant 0 : index
    %c0_3 = arith.constant 0 : index
    %3 = vector.load %arg10[%c0_2, %c0_3] : memref<16x768xf32, #tpu.memory_space<vmem>>, vector<16x768xf32>
    tpu.vector_store %arg10[%c0_2, %c0_3], %2 {strides = array<i32>} : memref<16x768xf32, #tpu.memory_space<vmem>>, vector<16x768xf32>,
    %c0_4 = arith.constant 0 : index
    %c0_5 = arith.constant 0 : index
    %4 = vector.load %arg6[%c0_4, %c0_5] : memref<1x625xf32, #tpu.memory_space<vmem>>, vector<1x625xf32>
    %c0_6 = arith.constant 0 : index
    %c0_7 = arith.constant 0 : index
    %5 = vector.load %arg7[%c0_6, %c0_7] : memref<1x625xf32, #tpu.memory_space<vmem>>, vector<1x625xf32>
    %c0_8 = arith.constant 0 : index
    %c0_9 = arith.constant 0 : index
    %6 = vector.load %arg1[%c0_8, %c0_9] : memref<32x256xf32, #tpu.memory_space<vmem>>, vector<32x256xf32>
    %c0_10 = arith.constant 0 : index
    %c0_11 = arith.constant 0 : index
    %7 = vector.load %arg2[%c0_10, %c0_11] : memref<256x625xf32, #tpu.memory_space<vmem>>, vector<256x625xf32>
    %cst_12 = arith.constant dense<0.000000e+00> : vector<32x625xf32>
    %8 = tpu.matmul %6, %7, %cst_12 {dimension_numbers = #tpu.dot_dimension_numbers<[1], [0], [0], [1], [0, 0, 1, 1], [], []>} : vector<32x256xf32>, vector<256x625xf32>, vector<32x625xf32> -> vector<32x625xf32>
    %c0_13 = arith.constant 0 : index
    %c0_14 = arith.constant 0 : index
    %9 = vector.load %arg5[%c0_13, %c0_14] : memref<16x6xf32, #tpu.memory_space<vmem>>, vector<16x1xf32>
    %c0_15 = arith.constant 0 : index
    %c1 = arith.constant 1 : index
    %10 = vector.load %arg5[%c0_15, %c1] : memref<16x6xf32, #tpu.memory_space<vmem>>, vector<16x1xf32>
    %11 = vector.extract_strided_slice %8 {offsets = [0, 0], sizes = [16, 625], strides = [1, 1]} : vector<32x625xf32> to vector<16x625xf32>
    %12 = vector.extract_strided_slice %8 {offsets = [16, 0], sizes = [16, 625], strides = [1, 1]} : vector<32x625xf32> to vector<16x625xf32>
    %13 = vector.broadcast %4 : vector<1x625xf32> to vector<16x625xf32>
    %14 = arith.mulf %11, %13 : vector<16x625xf32>
    %cst_16 = arith.constant dense<0.000000e+00> : vector<16xf32>
    %15 = vector.multi_reduction <add>, %14, %cst_16 [1] : vector<16x625xf32> to vector<16xf32>
    %16 = vector.shape_cast %15 : vector<16xf32> to vector<16x1xf32>
    %17 = vector.broadcast %4 : vector<1x625xf32> to vector<16x625xf32>
    %18 = arith.mulf %12, %17 : vector<16x625xf32>
    %cst_17 = arith.constant dense<0.000000e+00> : vector<16xf32>
    %19 = vector.multi_reduction <add>, %18, %cst_17 [1] : vector<16x625xf32> to vector<16xf32>
    %20 = vector.shape_cast %19 : vector<16xf32> to vector<16x1xf32>
    %21 = arith.addf %16, %20 : vector<16x1xf32>
    %cst_18 = arith.constant 1.620000e+02 : f32
    %22 = vector.broadcast %cst_18 : f32 to vector<16x1xf32>
    %23 = arith.divf %21, %22 : vector<16x1xf32>
    %24 = vector.broadcast %23 : vector<16x1xf32> to vector<16x625xf32>
    %25 = arith.subf %11, %24 : vector<16x625xf32>
    %26 = vector.broadcast %4 : vector<1x625xf32> to vector<16x625xf32>
    %27 = arith.mulf %25, %26 : vector<16x625xf32>
    %28 = arith.mulf %27, %27 : vector<16x625xf32>
    %cst_19 = arith.constant dense<0.000000e+00> : vector<16xf32>
    %29 = vector.multi_reduction <add>, %28, %cst_19 [1] : vector<16x625xf32> to vector<16xf32>
    %30 = vector.shape_cast %29 : vector<16xf32> to vector<16x1xf32>
    %31 = vector.broadcast %23 : vector<16x1xf32> to vector<16x625xf32>
    %32 = arith.subf %12, %31 : vector<16x625xf32>
    %33 = vector.broadcast %4 : vector<1x625xf32> to vector<16x625xf32>
    %34 = arith.mulf %32, %33 : vector<16x625xf32>
    %35 = arith.mulf %34, %34 : vector<16x625xf32>
    %cst_20 = arith.constant dense<0.000000e+00> : vector<16xf32>
    %36 = vector.multi_reduction <add>, %35, %cst_20 [1] : vector<16x625xf32> to vector<16xf32>
    %37 = vector.shape_cast %36 : vector<16xf32> to vector<16x1xf32>
    %38 = arith.addf %30, %37 : vector<16x1xf32>
    %cst_21 = arith.constant 1.620000e+02 : f32
    %39 = vector.broadcast %cst_21 : f32 to vector<16x1xf32>
    %40 = arith.divf %38, %39 : vector<16x1xf32>
    %cst_22 = arith.constant 9.99999974E-6 : f32
    %41 = vector.broadcast %cst_22 : f32 to vector<16x1xf32>
    %42 = arith.addf %40, %41 : vector<16x1xf32>
    %43 = math.rsqrt %42 : vector<16x1xf32>
    %44 = arith.mulf %43, %9 : vector<16x1xf32>
    %45 = vector.broadcast %23 : vector<16x1xf32> to vector<16x625xf32>
    %46 = arith.subf %11, %45 : vector<16x625xf32>
    %47 = vector.broadcast %44 : vector<16x1xf32> to vector<16x625xf32>
    %48 = arith.mulf %46, %47 : vector<16x625xf32>
    %49 = vector.broadcast %10 : vector<16x1xf32> to vector<16x625xf32>
    %50 = arith.addf %48, %49 : vector<16x625xf32>
    %cst_23 = arith.constant 0.000000e+00 : f32
    %51 = vector.broadcast %cst_23 : f32 to vector<16x625xf32>
    %52 = arith.maximumf %50, %51 : vector<16x625xf32>
    %53 = vector.broadcast %4 : vector<1x625xf32> to vector<16x625xf32>
    %54 = arith.mulf %52, %53 : vector<16x625xf32>
    %c0_24 = arith.constant 0 : index
    %c0_25 = arith.constant 0 : index
    %55 = vector.load %arg9[%c0_24, %c0_25] : memref<32x729xf32, #tpu.memory_space<vmem>>, vector<16x625xf32>
    tpu.vector_store %arg9[%c0_24, %c0_25], %54 {strides = array<i32>} : memref<32x729xf32, #tpu.memory_space<vmem>>, vector<16x625xf32>,
    %56 = vector.broadcast %23 : vector<16x1xf32> to vector<16x625xf32>
    %57 = arith.subf %12, %56 : vector<16x625xf32>
    %58 = vector.broadcast %44 : vector<16x1xf32> to vector<16x625xf32>
    %59 = arith.mulf %57, %58 : vector<16x625xf32>
    %60 = vector.broadcast %10 : vector<16x1xf32> to vector<16x625xf32>
    %61 = arith.addf %59, %60 : vector<16x625xf32>
    %cst_26 = arith.constant 0.000000e+00 : f32
    %62 = vector.broadcast %cst_26 : f32 to vector<16x625xf32>
    %63 = arith.maximumf %61, %62 : vector<16x625xf32>
    %64 = vector.broadcast %4 : vector<1x625xf32> to vector<16x625xf32>
    %65 = arith.mulf %63, %64 : vector<16x625xf32>
    %c16 = arith.constant 16 : index
    %c0_27 = arith.constant 0 : index
    %66 = vector.load %arg9[%c16, %c0_27] : memref<32x729xf32, #tpu.memory_space<vmem>>, vector<16x625xf32>
    tpu.vector_store %arg9[%c16, %c0_27], %65 {strides = array<i32>} : memref<32x729xf32, #tpu.memory_space<vmem>>, vector<16x625xf32>,
    %cst_28 = arith.constant 0.000000e+00 : f32
    %67 = vector.broadcast %cst_28 : f32 to vector<16x625xf32>
    %c0_29 = arith.constant 0 : index
    %c0_30 = arith.constant 0 : index
    %68 = vector.load %arg9[%c0_29, %c0_30] : memref<32x729xf32, #tpu.memory_space<vmem>>, vector<32x625xf32>
    %c0_31 = arith.constant 0 : index
    %c0_32 = arith.constant 0 : index
    %c0_33 = arith.constant 0 : index
    %69 = vector.load %arg3[%c0_31, %c0_32, %c0_33] : memref<25x16x32xf32, #tpu.memory_space<vmem>>, vector<1x16x32xf32>
    %70 = vector.shape_cast %69 : vector<1x16x32xf32> to vector<16x32xf32>
    %cst_34 = arith.constant dense<0.000000e+00> : vector<16x625xf32>
    %71 = tpu.matmul %70, %68, %cst_34 {dimension_numbers = #tpu.dot_dimension_numbers<[1], [0], [0], [1], [0, 0, 1, 1], [], []>} : vector<16x32xf32>, vector<32x625xf32>, vector<16x625xf32> -> vector<16x625xf32>
    %72 = arith.addf %67, %71 : vector<16x625xf32>
    %c0_35 = arith.constant 0 : index
    %c1_36 = arith.constant 1 : index
    %73 = vector.load %arg9[%c0_35, %c1_36] : memref<32x729xf32, #tpu.memory_space<vmem>>, vector<32x625xf32>
    %c1_37 = arith.constant 1 : index
    %c0_38 = arith.constant 0 : index
    %c0_39 = arith.constant 0 : index
    %74 = vector.load %arg3[%c1_37, %c0_38, %c0_39] : memref<25x16x32xf32, #tpu.memory_space<vmem>>, vector<1x16x32xf32>
    %75 = vector.shape_cast %74 : vector<1x16x32xf32> to vector<16x32xf32>
    %cst_40 = arith.constant dense<0.000000e+00> : vector<16x625xf32>
    %76 = tpu.matmul %75, %73, %cst_40 {dimension_numbers = #tpu.dot_dimension_numbers<[1], [0], [0], [1], [0, 0, 1, 1], [], []>} : vector<16x32xf32>, vector<32x625xf32>, vector<16x625xf32> -> vector<16x625xf32>
    %77 = arith.addf %72, %76 : vector<16x625xf32>
    %c0_41 = arith.constant 0 : index
    %c2 = arith.constant 2 : index
    %78 = vector.load %arg9[%c0_41, %c2] : memref<32x729xf32, #tpu.memory_space<vmem>>, vector<32x625xf32>
    %c2_42 = arith.constant 2 : index
    %c0_43 = arith.constant 0 : index
    %c0_44 = arith.constant 0 : index
    %79 = vector.load %arg3[%c2_42, %c0_43, %c0_44] : memref<25x16x32xf32, #tpu.memory_space<vmem>>, vector<1x16x32xf32>
    %80 = vector.shape_cast %79 : vector<1x16x32xf32> to vector<16x32xf32>
    %cst_45 = arith.constant dense<0.000000e+00> : vector<16x625xf32>
    %81 = tpu.matmul %80, %78, %cst_45 {dimension_numbers = #tpu.dot_dimension_numbers<[1], [0], [0], [1], [0, 0, 1, 1], [], []>} : vector<16x32xf32>, vector<32x625xf32>, vector<16x625xf32> -> vector<16x625xf32>
    %82 = arith.addf %77, %81 : vector<16x625xf32>
    %c0_46 = arith.constant 0 : index
    %c3 = arith.constant 3 : index
    %83 = vector.load %arg9[%c0_46, %c3] : memref<32x729xf32, #tpu.memory_space<vmem>>, vector<32x625xf32>
    %c3_47 = arith.constant 3 : index
    %c0_48 = arith.constant 0 : index
    %c0_49 = arith.constant 0 : index
    %84 = vector.load %arg3[%c3_47, %c0_48, %c0_49] : memref<25x16x32xf32, #tpu.memory_space<vmem>>, vector<1x16x32xf32>
    %85 = vector.shape_cast %84 : vector<1x16x32xf32> to vector<16x32xf32>
    %cst_50 = arith.constant dense<0.000000e+00> : vector<16x625xf32>
    %86 = tpu.matmul %85, %83, %cst_50 {dimension_numbers = #tpu.dot_dimension_numbers<[1], [0], [0], [1], [0, 0, 1, 1], [], []>} : vector<16x32xf32>, vector<32x625xf32>, vector<16x625xf32> -> vector<16x625xf32>
    %87 = arith.addf %82, %86 : vector<16x625xf32>
    %c0_51 = arith.constant 0 : index
    %c4 = arith.constant 4 : index
    %88 = vector.load %arg9[%c0_51, %c4] : memref<32x729xf32, #tpu.memory_space<vmem>>, vector<32x625xf32>
    %c4_52 = arith.constant 4 : index
    %c0_53 = arith.constant 0 : index
    %c0_54 = arith.constant 0 : index
    %89 = vector.load %arg3[%c4_52, %c0_53, %c0_54] : memref<25x16x32xf32, #tpu.memory_space<vmem>>, vector<1x16x32xf32>
    %90 = vector.shape_cast %89 : vector<1x16x32xf32> to vector<16x32xf32>
    %cst_55 = arith.constant dense<0.000000e+00> : vector<16x625xf32>
    %91 = tpu.matmul %90, %88, %cst_55 {dimension_numbers = #tpu.dot_dimension_numbers<[1], [0], [0], [1], [0, 0, 1, 1], [], []>} : vector<16x32xf32>, vector<32x625xf32>, vector<16x625xf32> -> vector<16x625xf32>
    %92 = arith.addf %87, %91 : vector<16x625xf32>
    %c0_56 = arith.constant 0 : index
    %c25 = arith.constant 25 : index
    %93 = vector.load %arg9[%c0_56, %c25] : memref<32x729xf32, #tpu.memory_space<vmem>>, vector<32x625xf32>
    %c5 = arith.constant 5 : index
    %c0_57 = arith.constant 0 : index
    %c0_58 = arith.constant 0 : index
    %94 = vector.load %arg3[%c5, %c0_57, %c0_58] : memref<25x16x32xf32, #tpu.memory_space<vmem>>, vector<1x16x32xf32>
    %95 = vector.shape_cast %94 : vector<1x16x32xf32> to vector<16x32xf32>
    %cst_59 = arith.constant dense<0.000000e+00> : vector<16x625xf32>
    %96 = tpu.matmul %95, %93, %cst_59 {dimension_numbers = #tpu.dot_dimension_numbers<[1], [0], [0], [1], [0, 0, 1, 1], [], []>} : vector<16x32xf32>, vector<32x625xf32>, vector<16x625xf32> -> vector<16x625xf32>
    %97 = arith.addf %92, %96 : vector<16x625xf32>
    %c0_60 = arith.constant 0 : index
    %c26 = arith.constant 26 : index
    %98 = vector.load %arg9[%c0_60, %c26] : memref<32x729xf32, #tpu.memory_space<vmem>>, vector<32x625xf32>
    %c6 = arith.constant 6 : index
    %c0_61 = arith.constant 0 : index
    %c0_62 = arith.constant 0 : index
    %99 = vector.load %arg3[%c6, %c0_61, %c0_62] : memref<25x16x32xf32, #tpu.memory_space<vmem>>, vector<1x16x32xf32>
    %100 = vector.shape_cast %99 : vector<1x16x32xf32> to vector<16x32xf32>
    %cst_63 = arith.constant dense<0.000000e+00> : vector<16x625xf32>
    %101 = tpu.matmul %100, %98, %cst_63 {dimension_numbers = #tpu.dot_dimension_numbers<[1], [0], [0], [1], [0, 0, 1, 1], [], []>} : vector<16x32xf32>, vector<32x625xf32>, vector<16x625xf32> -> vector<16x625xf32>
    %102 = arith.addf %97, %101 : vector<16x625xf32>
    %c0_64 = arith.constant 0 : index
    %c27 = arith.constant 27 : index
    %103 = vector.load %arg9[%c0_64, %c27] : memref<32x729xf32, #tpu.memory_space<vmem>>, vector<32x625xf32>
    %c7 = arith.constant 7 : index
    %c0_65 = arith.constant 0 : index
    %c0_66 = arith.constant 0 : index
    %104 = vector.load %arg3[%c7, %c0_65, %c0_66] : memref<25x16x32xf32, #tpu.memory_space<vmem>>, vector<1x16x32xf32>
    %105 = vector.shape_cast %104 : vector<1x16x32xf32> to vector<16x32xf32>
    %cst_67 = arith.constant dense<0.000000e+00> : vector<16x625xf32>
    %106 = tpu.matmul %105, %103, %cst_67 {dimension_numbers = #tpu.dot_dimension_numbers<[1], [0], [0], [1], [0, 0, 1, 1], [], []>} : vector<16x32xf32>, vector<32x625xf32>, vector<16x625xf32> -> vector<16x625xf32>
    %107 = arith.addf %102, %106 : vector<16x625xf32>
    %c0_68 = arith.constant 0 : index
    %c28 = arith.constant 28 : index
    %108 = vector.load %arg9[%c0_68, %c28] : memref<32x729xf32, #tpu.memory_space<vmem>>, vector<32x625xf32>
    %c8 = arith.constant 8 : index
    %c0_69 = arith.constant 0 : index
    %c0_70 = arith.constant 0 : index
    %109 = vector.load %arg3[%c8, %c0_69, %c0_70] : memref<25x16x32xf32, #tpu.memory_space<vmem>>, vector<1x16x32xf32>
    %110 = vector.shape_cast %109 : vector<1x16x32xf32> to vector<16x32xf32>
    %cst_71 = arith.constant dense<0.000000e+00> : vector<16x625xf32>
    %111 = tpu.matmul %110, %108, %cst_71 {dimension_numbers = #tpu.dot_dimension_numbers<[1], [0], [0], [1], [0, 0, 1, 1], [], []>} : vector<16x32xf32>, vector<32x625xf32>, vector<16x625xf32> -> vector<16x625xf32>
    %112 = arith.addf %107, %111 : vector<16x625xf32>
    %c0_72 = arith.constant 0 : index
    %c29 = arith.constant 29 : index
    %113 = vector.load %arg9[%c0_72, %c29] : memref<32x729xf32, #tpu.memory_space<vmem>>, vector<32x625xf32>
    %c9 = arith.constant 9 : index
    %c0_73 = arith.constant 0 : index
    %c0_74 = arith.constant 0 : index
    %114 = vector.load %arg3[%c9, %c0_73, %c0_74] : memref<25x16x32xf32, #tpu.memory_space<vmem>>, vector<1x16x32xf32>
    %115 = vector.shape_cast %114 : vector<1x16x32xf32> to vector<16x32xf32>
    %cst_75 = arith.constant dense<0.000000e+00> : vector<16x625xf32>
    %116 = tpu.matmul %115, %113, %cst_75 {dimension_numbers = #tpu.dot_dimension_numbers<[1], [0], [0], [1], [0, 0, 1, 1], [], []>} : vector<16x32xf32>, vector<32x625xf32>, vector<16x625xf32> -> vector<16x625xf32>
    %117 = arith.addf %112, %116 : vector<16x625xf32>
    %c0_76 = arith.constant 0 : index
    %c50 = arith.constant 50 : index
    %118 = vector.load %arg9[%c0_76, %c50] : memref<32x729xf32, #tpu.memory_space<vmem>>, vector<32x625xf32>
    %c10 = arith.constant 10 : index
    %c0_77 = arith.constant 0 : index
    %c0_78 = arith.constant 0 : index
    %119 = vector.load %arg3[%c10, %c0_77, %c0_78] : memref<25x16x32xf32, #tpu.memory_space<vmem>>, vector<1x16x32xf32>
    %120 = vector.shape_cast %119 : vector<1x16x32xf32> to vector<16x32xf32>
    %cst_79 = arith.constant dense<0.000000e+00> : vector<16x625xf32>
    %121 = tpu.matmul %120, %118, %cst_79 {dimension_numbers = #tpu.dot_dimension_numbers<[1], [0], [0], [1], [0, 0, 1, 1], [], []>} : vector<16x32xf32>, vector<32x625xf32>, vector<16x625xf32> -> vector<16x625xf32>
    %122 = arith.addf %117, %121 : vector<16x625xf32>
    %c0_80 = arith.constant 0 : index
    %c51 = arith.constant 51 : index
    %123 = vector.load %arg9[%c0_80, %c51] : memref<32x729xf32, #tpu.memory_space<vmem>>, vector<32x625xf32>
    %c11 = arith.constant 11 : index
    %c0_81 = arith.constant 0 : index
    %c0_82 = arith.constant 0 : index
    %124 = vector.load %arg3[%c11, %c0_81, %c0_82] : memref<25x16x32xf32, #tpu.memory_space<vmem>>, vector<1x16x32xf32>
    %125 = vector.shape_cast %124 : vector<1x16x32xf32> to vector<16x32xf32>
    %cst_83 = arith.constant dense<0.000000e+00> : vector<16x625xf32>
    %126 = tpu.matmul %125, %123, %cst_83 {dimension_numbers = #tpu.dot_dimension_numbers<[1], [0], [0], [1], [0, 0, 1, 1], [], []>} : vector<16x32xf32>, vector<32x625xf32>, vector<16x625xf32> -> vector<16x625xf32>
    %127 = arith.addf %122, %126 : vector<16x625xf32>
    %c0_84 = arith.constant 0 : index
    %c52 = arith.constant 52 : index
    %128 = vector.load %arg9[%c0_84, %c52] : memref<32x729xf32, #tpu.memory_space<vmem>>, vector<32x625xf32>
    %c12 = arith.constant 12 : index
    %c0_85 = arith.constant 0 : index
    %c0_86 = arith.constant 0 : index
    %129 = vector.load %arg3[%c12, %c0_85, %c0_86] : memref<25x16x32xf32, #tpu.memory_space<vmem>>, vector<1x16x32xf32>
    %130 = vector.shape_cast %129 : vector<1x16x32xf32> to vector<16x32xf32>
    %cst_87 = arith.constant dense<0.000000e+00> : vector<16x625xf32>
    %131 = tpu.matmul %130, %128, %cst_87 {dimension_numbers = #tpu.dot_dimension_numbers<[1], [0], [0], [1], [0, 0, 1, 1], [], []>} : vector<16x32xf32>, vector<32x625xf32>, vector<16x625xf32> -> vector<16x625xf32>
    %132 = arith.addf %127, %131 : vector<16x625xf32>
    %c0_88 = arith.constant 0 : index
    %c53 = arith.constant 53 : index
    %133 = vector.load %arg9[%c0_88, %c53] : memref<32x729xf32, #tpu.memory_space<vmem>>, vector<32x625xf32>
    %c13 = arith.constant 13 : index
    %c0_89 = arith.constant 0 : index
    %c0_90 = arith.constant 0 : index
    %134 = vector.load %arg3[%c13, %c0_89, %c0_90] : memref<25x16x32xf32, #tpu.memory_space<vmem>>, vector<1x16x32xf32>
    %135 = vector.shape_cast %134 : vector<1x16x32xf32> to vector<16x32xf32>
    %cst_91 = arith.constant dense<0.000000e+00> : vector<16x625xf32>
    %136 = tpu.matmul %135, %133, %cst_91 {dimension_numbers = #tpu.dot_dimension_numbers<[1], [0], [0], [1], [0, 0, 1, 1], [], []>} : vector<16x32xf32>, vector<32x625xf32>, vector<16x625xf32> -> vector<16x625xf32>
    %137 = arith.addf %132, %136 : vector<16x625xf32>
    %c0_92 = arith.constant 0 : index
    %c54 = arith.constant 54 : index
    %138 = vector.load %arg9[%c0_92, %c54] : memref<32x729xf32, #tpu.memory_space<vmem>>, vector<32x625xf32>
    %c14 = arith.constant 14 : index
    %c0_93 = arith.constant 0 : index
    %c0_94 = arith.constant 0 : index
    %139 = vector.load %arg3[%c14, %c0_93, %c0_94] : memref<25x16x32xf32, #tpu.memory_space<vmem>>, vector<1x16x32xf32>
    %140 = vector.shape_cast %139 : vector<1x16x32xf32> to vector<16x32xf32>
    %cst_95 = arith.constant dense<0.000000e+00> : vector<16x625xf32>
    %141 = tpu.matmul %140, %138, %cst_95 {dimension_numbers = #tpu.dot_dimension_numbers<[1], [0], [0], [1], [0, 0, 1, 1], [], []>} : vector<16x32xf32>, vector<32x625xf32>, vector<16x625xf32> -> vector<16x625xf32>
    %142 = arith.addf %137, %141 : vector<16x625xf32>
    %c0_96 = arith.constant 0 : index
    %c75 = arith.constant 75 : index
    %143 = vector.load %arg9[%c0_96, %c75] : memref<32x729xf32, #tpu.memory_space<vmem>>, vector<32x625xf32>
    %c15 = arith.constant 15 : index
    %c0_97 = arith.constant 0 : index
    %c0_98 = arith.constant 0 : index
    %144 = vector.load %arg3[%c15, %c0_97, %c0_98] : memref<25x16x32xf32, #tpu.memory_space<vmem>>, vector<1x16x32xf32>
    %145 = vector.shape_cast %144 : vector<1x16x32xf32> to vector<16x32xf32>
    %cst_99 = arith.constant dense<0.000000e+00> : vector<16x625xf32>
    %146 = tpu.matmul %145, %143, %cst_99 {dimension_numbers = #tpu.dot_dimension_numbers<[1], [0], [0], [1], [0, 0, 1, 1], [], []>} : vector<16x32xf32>, vector<32x625xf32>, vector<16x625xf32> -> vector<16x625xf32>
    %147 = arith.addf %142, %146 : vector<16x625xf32>
    %c0_100 = arith.constant 0 : index
    %c76 = arith.constant 76 : index
    %148 = vector.load %arg9[%c0_100, %c76] : memref<32x729xf32, #tpu.memory_space<vmem>>, vector<32x625xf32>
    %c16_101 = arith.constant 16 : index
    %c0_102 = arith.constant 0 : index
    %c0_103 = arith.constant 0 : index
    %149 = vector.load %arg3[%c16_101, %c0_102, %c0_103] : memref<25x16x32xf32, #tpu.memory_space<vmem>>, vector<1x16x32xf32>
    %150 = vector.shape_cast %149 : vector<1x16x32xf32> to vector<16x32xf32>
    %cst_104 = arith.constant dense<0.000000e+00> : vector<16x625xf32>
    %151 = tpu.matmul %150, %148, %cst_104 {dimension_numbers = #tpu.dot_dimension_numbers<[1], [0], [0], [1], [0, 0, 1, 1], [], []>} : vector<16x32xf32>, vector<32x625xf32>, vector<16x625xf32> -> vector<16x625xf32>
    %152 = arith.addf %147, %151 : vector<16x625xf32>
    %c0_105 = arith.constant 0 : index
    %c77 = arith.constant 77 : index
    %153 = vector.load %arg9[%c0_105, %c77] : memref<32x729xf32, #tpu.memory_space<vmem>>, vector<32x625xf32>
    %c17 = arith.constant 17 : index
    %c0_106 = arith.constant 0 : index
    %c0_107 = arith.constant 0 : index
    %154 = vector.load %arg3[%c17, %c0_106, %c0_107] : memref<25x16x32xf32, #tpu.memory_space<vmem>>, vector<1x16x32xf32>
    %155 = vector.shape_cast %154 : vector<1x16x32xf32> to vector<16x32xf32>
    %cst_108 = arith.constant dense<0.000000e+00> : vector<16x625xf32>
    %156 = tpu.matmul %155, %153, %cst_108 {dimension_numbers = #tpu.dot_dimension_numbers<[1], [0], [0], [1], [0, 0, 1, 1], [], []>} : vector<16x32xf32>, vector<32x625xf32>, vector<16x625xf32> -> vector<16x625xf32>
    %157 = arith.addf %152, %156 : vector<16x625xf32>
    %c0_109 = arith.constant 0 : index
    %c78 = arith.constant 78 : index
    %158 = vector.load %arg9[%c0_109, %c78] : memref<32x729xf32, #tpu.memory_space<vmem>>, vector<32x625xf32>
    %c18 = arith.constant 18 : index
    %c0_110 = arith.constant 0 : index
    %c0_111 = arith.constant 0 : index
    %159 = vector.load %arg3[%c18, %c0_110, %c0_111] : memref<25x16x32xf32, #tpu.memory_space<vmem>>, vector<1x16x32xf32>
    %160 = vector.shape_cast %159 : vector<1x16x32xf32> to vector<16x32xf32>
    %cst_112 = arith.constant dense<0.000000e+00> : vector<16x625xf32>
    %161 = tpu.matmul %160, %158, %cst_112 {dimension_numbers = #tpu.dot_dimension_numbers<[1], [0], [0], [1], [0, 0, 1, 1], [], []>} : vector<16x32xf32>, vector<32x625xf32>, vector<16x625xf32> -> vector<16x625xf32>
    %162 = arith.addf %157, %161 : vector<16x625xf32>
    %c0_113 = arith.constant 0 : index
    %c79 = arith.constant 79 : index
    %163 = vector.load %arg9[%c0_113, %c79] : memref<32x729xf32, #tpu.memory_space<vmem>>, vector<32x625xf32>
    %c19 = arith.constant 19 : index
    %c0_114 = arith.constant 0 : index
    %c0_115 = arith.constant 0 : index
    %164 = vector.load %arg3[%c19, %c0_114, %c0_115] : memref<25x16x32xf32, #tpu.memory_space<vmem>>, vector<1x16x32xf32>
    %165 = vector.shape_cast %164 : vector<1x16x32xf32> to vector<16x32xf32>
    %cst_116 = arith.constant dense<0.000000e+00> : vector<16x625xf32>
    %166 = tpu.matmul %165, %163, %cst_116 {dimension_numbers = #tpu.dot_dimension_numbers<[1], [0], [0], [1], [0, 0, 1, 1], [], []>} : vector<16x32xf32>, vector<32x625xf32>, vector<16x625xf32> -> vector<16x625xf32>
    %167 = arith.addf %162, %166 : vector<16x625xf32>
    %c0_117 = arith.constant 0 : index
    %c100 = arith.constant 100 : index
    %168 = vector.load %arg9[%c0_117, %c100] : memref<32x729xf32, #tpu.memory_space<vmem>>, vector<32x625xf32>
    %c20 = arith.constant 20 : index
    %c0_118 = arith.constant 0 : index
    %c0_119 = arith.constant 0 : index
    %169 = vector.load %arg3[%c20, %c0_118, %c0_119] : memref<25x16x32xf32, #tpu.memory_space<vmem>>, vector<1x16x32xf32>
    %170 = vector.shape_cast %169 : vector<1x16x32xf32> to vector<16x32xf32>
    %cst_120 = arith.constant dense<0.000000e+00> : vector<16x625xf32>
    %171 = tpu.matmul %170, %168, %cst_120 {dimension_numbers = #tpu.dot_dimension_numbers<[1], [0], [0], [1], [0, 0, 1, 1], [], []>} : vector<16x32xf32>, vector<32x625xf32>, vector<16x625xf32> -> vector<16x625xf32>
    %172 = arith.addf %167, %171 : vector<16x625xf32>
    %c0_121 = arith.constant 0 : index
    %c101 = arith.constant 101 : index
    %173 = vector.load %arg9[%c0_121, %c101] : memref<32x729xf32, #tpu.memory_space<vmem>>, vector<32x625xf32>
    %c21 = arith.constant 21 : index
    %c0_122 = arith.constant 0 : index
    %c0_123 = arith.constant 0 : index
    %174 = vector.load %arg3[%c21, %c0_122, %c0_123] : memref<25x16x32xf32, #tpu.memory_space<vmem>>, vector<1x16x32xf32>
    %175 = vector.shape_cast %174 : vector<1x16x32xf32> to vector<16x32xf32>
    %cst_124 = arith.constant dense<0.000000e+00> : vector<16x625xf32>
    %176 = tpu.matmul %175, %173, %cst_124 {dimension_numbers = #tpu.dot_dimension_numbers<[1], [0], [0], [1], [0, 0, 1, 1], [], []>} : vector<16x32xf32>, vector<32x625xf32>, vector<16x625xf32> -> vector<16x625xf32>
    %177 = arith.addf %172, %176 : vector<16x625xf32>
    %c0_125 = arith.constant 0 : index
    %c102 = arith.constant 102 : index
    %178 = vector.load %arg9[%c0_125, %c102] : memref<32x729xf32, #tpu.memory_space<vmem>>, vector<32x625xf32>
    %c22 = arith.constant 22 : index
    %c0_126 = arith.constant 0 : index
    %c0_127 = arith.constant 0 : index
    %179 = vector.load %arg3[%c22, %c0_126, %c0_127] : memref<25x16x32xf32, #tpu.memory_space<vmem>>, vector<1x16x32xf32>
    %180 = vector.shape_cast %179 : vector<1x16x32xf32> to vector<16x32xf32>
    %cst_128 = arith.constant dense<0.000000e+00> : vector<16x625xf32>
    %181 = tpu.matmul %180, %178, %cst_128 {dimension_numbers = #tpu.dot_dimension_numbers<[1], [0], [0], [1], [0, 0, 1, 1], [], []>} : vector<16x32xf32>, vector<32x625xf32>, vector<16x625xf32> -> vector<16x625xf32>
    %182 = arith.addf %177, %181 : vector<16x625xf32>
    %c0_129 = arith.constant 0 : index
    %c103 = arith.constant 103 : index
    %183 = vector.load %arg9[%c0_129, %c103] : memref<32x729xf32, #tpu.memory_space<vmem>>, vector<32x625xf32>
    %c23 = arith.constant 23 : index
    %c0_130 = arith.constant 0 : index
    %c0_131 = arith.constant 0 : index
    %184 = vector.load %arg3[%c23, %c0_130, %c0_131] : memref<25x16x32xf32, #tpu.memory_space<vmem>>, vector<1x16x32xf32>
    %185 = vector.shape_cast %184 : vector<1x16x32xf32> to vector<16x32xf32>
    %cst_132 = arith.constant dense<0.000000e+00> : vector<16x625xf32>
    %186 = tpu.matmul %185, %183, %cst_132 {dimension_numbers = #tpu.dot_dimension_numbers<[1], [0], [0], [1], [0, 0, 1, 1], [], []>} : vector<16x32xf32>, vector<32x625xf32>, vector<16x625xf32> -> vector<16x625xf32>
    %187 = arith.addf %182, %186 : vector<16x625xf32>
    %c0_133 = arith.constant 0 : index
    %c104 = arith.constant 104 : index
    %188 = vector.load %arg9[%c0_133, %c104] : memref<32x729xf32, #tpu.memory_space<vmem>>, vector<32x625xf32>
    %c24 = arith.constant 24 : index
    %c0_134 = arith.constant 0 : index
    %c0_135 = arith.constant 0 : index
    %189 = vector.load %arg3[%c24, %c0_134, %c0_135] : memref<25x16x32xf32, #tpu.memory_space<vmem>>, vector<1x16x32xf32>
    %190 = vector.shape_cast %189 : vector<1x16x32xf32> to vector<16x32xf32>
    %cst_136 = arith.constant dense<0.000000e+00> : vector<16x625xf32>
    %191 = tpu.matmul %190, %188, %cst_136 {dimension_numbers = #tpu.dot_dimension_numbers<[1], [0], [0], [1], [0, 0, 1, 1], [], []>} : vector<16x32xf32>, vector<32x625xf32>, vector<16x625xf32> -> vector<16x625xf32>
    %192 = arith.addf %187, %191 : vector<16x625xf32>
    %c0_137 = arith.constant 0 : index
    %c2_138 = arith.constant 2 : index
    %193 = vector.load %arg5[%c0_137, %c2_138] : memref<16x6xf32, #tpu.memory_space<vmem>>, vector<8x1xf32>
    %c0_139 = arith.constant 0 : index
    %c3_140 = arith.constant 3 : index
    %194 = vector.load %arg5[%c0_139, %c3_140] : memref<16x6xf32, #tpu.memory_space<vmem>>, vector<8x1xf32>
    %195 = vector.extract_strided_slice %192 {offsets = [0, 0], sizes = [8, 625], strides = [1, 1]} : vector<16x625xf32> to vector<8x625xf32>
    %196 = vector.extract_strided_slice %192 {offsets = [8, 0], sizes = [8, 625], strides = [1, 1]} : vector<16x625xf32> to vector<8x625xf32>
    %197 = vector.broadcast %5 : vector<1x625xf32> to vector<8x625xf32>
    %198 = arith.mulf %195, %197 : vector<8x625xf32>
    %cst_141 = arith.constant dense<0.000000e+00> : vector<8xf32>
    %199 = vector.multi_reduction <add>, %198, %cst_141 [1] : vector<8x625xf32> to vector<8xf32>
    %200 = vector.shape_cast %199 : vector<8xf32> to vector<8x1xf32>
    %201 = vector.broadcast %5 : vector<1x625xf32> to vector<8x625xf32>
    %202 = arith.mulf %196, %201 : vector<8x625xf32>
    %cst_142 = arith.constant dense<0.000000e+00> : vector<8xf32>
    %203 = vector.multi_reduction <add>, %202, %cst_142 [1] : vector<8x625xf32> to vector<8xf32>
    %204 = vector.shape_cast %203 : vector<8xf32> to vector<8x1xf32>
    %205 = arith.addf %200, %204 : vector<8x1xf32>
    %cst_143 = arith.constant 8.820000e+02 : f32
    %206 = vector.broadcast %cst_143 : f32 to vector<8x1xf32>
    %207 = arith.divf %205, %206 : vector<8x1xf32>
    %208 = vector.broadcast %207 : vector<8x1xf32> to vector<8x625xf32>
    %209 = arith.subf %195, %208 : vector<8x625xf32>
    %210 = vector.broadcast %5 : vector<1x625xf32> to vector<8x625xf32>
    %211 = arith.mulf %209, %210 : vector<8x625xf32>
    %212 = arith.mulf %211, %211 : vector<8x625xf32>
    %cst_144 = arith.constant dense<0.000000e+00> : vector<8xf32>
    %213 = vector.multi_reduction <add>, %212, %cst_144 [1] : vector<8x625xf32> to vector<8xf32>
    %214 = vector.shape_cast %213 : vector<8xf32> to vector<8x1xf32>
    %215 = vector.broadcast %207 : vector<8x1xf32> to vector<8x625xf32>
    %216 = arith.subf %196, %215 : vector<8x625xf32>
    %217 = vector.broadcast %5 : vector<1x625xf32> to vector<8x625xf32>
    %218 = arith.mulf %216, %217 : vector<8x625xf32>
    %219 = arith.mulf %218, %218 : vector<8x625xf32>
    %cst_145 = arith.constant dense<0.000000e+00> : vector<8xf32>
    %220 = vector.multi_reduction <add>, %219, %cst_145 [1] : vector<8x625xf32> to vector<8xf32>
    %221 = vector.shape_cast %220 : vector<8xf32> to vector<8x1xf32>
    %222 = arith.addf %214, %221 : vector<8x1xf32>
    %cst_146 = arith.constant 8.820000e+02 : f32
    %223 = vector.broadcast %cst_146 : f32 to vector<8x1xf32>
    %224 = arith.divf %222, %223 : vector<8x1xf32>
    %cst_147 = arith.constant 9.99999974E-6 : f32
    %225 = vector.broadcast %cst_147 : f32 to vector<8x1xf32>
    %226 = arith.addf %224, %225 : vector<8x1xf32>
    %227 = math.rsqrt %226 : vector<8x1xf32>
    %228 = arith.mulf %227, %193 : vector<8x1xf32>
    %229 = vector.broadcast %207 : vector<8x1xf32> to vector<8x625xf32>
    %230 = arith.subf %195, %229 : vector<8x625xf32>
    %231 = vector.broadcast %228 : vector<8x1xf32> to vector<8x625xf32>
    %232 = arith.mulf %230, %231 : vector<8x625xf32>
    %233 = vector.broadcast %194 : vector<8x1xf32> to vector<8x625xf32>
    %234 = arith.addf %232, %233 : vector<8x625xf32>
    %cst_148 = arith.constant 0.000000e+00 : f32
    %235 = vector.broadcast %cst_148 : f32 to vector<8x625xf32>
    %236 = arith.maximumf %234, %235 : vector<8x625xf32>
    %237 = vector.broadcast %5 : vector<1x625xf32> to vector<8x625xf32>
    %238 = arith.mulf %236, %237 : vector<8x625xf32>
    %c0_149 = arith.constant 0 : index
    %c128 = arith.constant 128 : index
    %239 = vector.load %arg10[%c0_149, %c128] : memref<16x768xf32, #tpu.memory_space<vmem>>, vector<8x625xf32>
    tpu.vector_store %arg10[%c0_149, %c128], %238 {strides = array<i32>} : memref<16x768xf32, #tpu.memory_space<vmem>>, vector<8x625xf32>,
    %240 = vector.broadcast %207 : vector<8x1xf32> to vector<8x625xf32>
    %241 = arith.subf %196, %240 : vector<8x625xf32>
    %242 = vector.broadcast %228 : vector<8x1xf32> to vector<8x625xf32>
    %243 = arith.mulf %241, %242 : vector<8x625xf32>
    %244 = vector.broadcast %194 : vector<8x1xf32> to vector<8x625xf32>
    %245 = arith.addf %243, %244 : vector<8x625xf32>
    %cst_150 = arith.constant 0.000000e+00 : f32
    %246 = vector.broadcast %cst_150 : f32 to vector<8x625xf32>
    %247 = arith.maximumf %245, %246 : vector<8x625xf32>
    %248 = vector.broadcast %5 : vector<1x625xf32> to vector<8x625xf32>
    %249 = arith.mulf %247, %248 : vector<8x625xf32>
    %c8_151 = arith.constant 8 : index
    %c128_152 = arith.constant 128 : index
    %250 = vector.load %arg10[%c8_151, %c128_152] : memref<16x768xf32, #tpu.memory_space<vmem>>, vector<8x625xf32>
    tpu.vector_store %arg10[%c8_151, %c128_152], %249 {strides = array<i32>} : memref<16x768xf32, #tpu.memory_space<vmem>>, vector<8x625xf32>,
    %cst_153 = arith.constant 0.000000e+00 : f32
    %251 = vector.broadcast %cst_153 : f32 to vector<16x625xf32>
    %c0_154 = arith.constant 0 : index
    %c24_155 = arith.constant 24 : index
    %252 = vector.load %arg10[%c0_154, %c24_155] : memref<16x768xf32, #tpu.memory_space<vmem>>, vector<16x625xf32>
    %c0_156 = arith.constant 0 : index
    %c0_157 = arith.constant 0 : index
    %c0_158 = arith.constant 0 : index
    %253 = vector.load %arg4[%c0_156, %c0_157, %c0_158] : memref<25x16x16xf32, #tpu.memory_space<vmem>>, vector<1x16x16xf32>
    %254 = vector.shape_cast %253 : vector<1x16x16xf32> to vector<16x16xf32>
    %cst_159 = arith.constant dense<0.000000e+00> : vector<16x625xf32>
    %255 = tpu.matmul %254, %252, %cst_159 {dimension_numbers = #tpu.dot_dimension_numbers<[1], [0], [0], [1], [0, 0, 1, 1], [], []>} : vector<16x16xf32>, vector<16x625xf32>, vector<16x625xf32> -> vector<16x625xf32>
    %256 = arith.addf %251, %255 : vector<16x625xf32>
    %c0_160 = arith.constant 0 : index
    %c25_161 = arith.constant 25 : index
    %257 = vector.load %arg10[%c0_160, %c25_161] : memref<16x768xf32, #tpu.memory_space<vmem>>, vector<16x625xf32>
    %c1_162 = arith.constant 1 : index
    %c0_163 = arith.constant 0 : index
    %c0_164 = arith.constant 0 : index
    %258 = vector.load %arg4[%c1_162, %c0_163, %c0_164] : memref<25x16x16xf32, #tpu.memory_space<vmem>>, vector<1x16x16xf32>
    %259 = vector.shape_cast %258 : vector<1x16x16xf32> to vector<16x16xf32>
    %cst_165 = arith.constant dense<0.000000e+00> : vector<16x625xf32>
    %260 = tpu.matmul %259, %257, %cst_165 {dimension_numbers = #tpu.dot_dimension_numbers<[1], [0], [0], [1], [0, 0, 1, 1], [], []>} : vector<16x16xf32>, vector<16x625xf32>, vector<16x625xf32> -> vector<16x625xf32>
    %261 = arith.addf %256, %260 : vector<16x625xf32>
    %c0_166 = arith.constant 0 : index
    %c26_167 = arith.constant 26 : index
    %262 = vector.load %arg10[%c0_166, %c26_167] : memref<16x768xf32, #tpu.memory_space<vmem>>, vector<16x625xf32>
    %c2_168 = arith.constant 2 : index
    %c0_169 = arith.constant 0 : index
    %c0_170 = arith.constant 0 : index
    %263 = vector.load %arg4[%c2_168, %c0_169, %c0_170] : memref<25x16x16xf32, #tpu.memory_space<vmem>>, vector<1x16x16xf32>
    %264 = vector.shape_cast %263 : vector<1x16x16xf32> to vector<16x16xf32>
    %cst_171 = arith.constant dense<0.000000e+00> : vector<16x625xf32>
    %265 = tpu.matmul %264, %262, %cst_171 {dimension_numbers = #tpu.dot_dimension_numbers<[1], [0], [0], [1], [0, 0, 1, 1], [], []>} : vector<16x16xf32>, vector<16x625xf32>, vector<16x625xf32> -> vector<16x625xf32>
    %266 = arith.addf %261, %265 : vector<16x625xf32>
    %c0_172 = arith.constant 0 : index
    %c27_173 = arith.constant 27 : index
    %267 = vector.load %arg10[%c0_172, %c27_173] : memref<16x768xf32, #tpu.memory_space<vmem>>, vector<16x625xf32>
    %c3_174 = arith.constant 3 : index
    %c0_175 = arith.constant 0 : index
    %c0_176 = arith.constant 0 : index
    %268 = vector.load %arg4[%c3_174, %c0_175, %c0_176] : memref<25x16x16xf32, #tpu.memory_space<vmem>>, vector<1x16x16xf32>
    %269 = vector.shape_cast %268 : vector<1x16x16xf32> to vector<16x16xf32>
    %cst_177 = arith.constant dense<0.000000e+00> : vector<16x625xf32>
    %270 = tpu.matmul %269, %267, %cst_177 {dimension_numbers = #tpu.dot_dimension_numbers<[1], [0], [0], [1], [0, 0, 1, 1], [], []>} : vector<16x16xf32>, vector<16x625xf32>, vector<16x625xf32> -> vector<16x625xf32>
    %271 = arith.addf %266, %270 : vector<16x625xf32>
    %c0_178 = arith.constant 0 : index
    %c28_179 = arith.constant 28 : index
    %272 = vector.load %arg10[%c0_178, %c28_179] : memref<16x768xf32, #tpu.memory_space<vmem>>, vector<16x625xf32>
    %c4_180 = arith.constant 4 : index
    %c0_181 = arith.constant 0 : index
    %c0_182 = arith.constant 0 : index
    %273 = vector.load %arg4[%c4_180, %c0_181, %c0_182] : memref<25x16x16xf32, #tpu.memory_space<vmem>>, vector<1x16x16xf32>
    %274 = vector.shape_cast %273 : vector<1x16x16xf32> to vector<16x16xf32>
    %cst_183 = arith.constant dense<0.000000e+00> : vector<16x625xf32>
    %275 = tpu.matmul %274, %272, %cst_183 {dimension_numbers = #tpu.dot_dimension_numbers<[1], [0], [0], [1], [0, 0, 1, 1], [], []>} : vector<16x16xf32>, vector<16x625xf32>, vector<16x625xf32> -> vector<16x625xf32>
    %276 = arith.addf %271, %275 : vector<16x625xf32>
    %c0_184 = arith.constant 0 : index
    %c49 = arith.constant 49 : index
    %277 = vector.load %arg10[%c0_184, %c49] : memref<16x768xf32, #tpu.memory_space<vmem>>, vector<16x625xf32>
    %c5_185 = arith.constant 5 : index
    %c0_186 = arith.constant 0 : index
    %c0_187 = arith.constant 0 : index
    %278 = vector.load %arg4[%c5_185, %c0_186, %c0_187] : memref<25x16x16xf32, #tpu.memory_space<vmem>>, vector<1x16x16xf32>
    %279 = vector.shape_cast %278 : vector<1x16x16xf32> to vector<16x16xf32>
    %cst_188 = arith.constant dense<0.000000e+00> : vector<16x625xf32>
    %280 = tpu.matmul %279, %277, %cst_188 {dimension_numbers = #tpu.dot_dimension_numbers<[1], [0], [0], [1], [0, 0, 1, 1], [], []>} : vector<16x16xf32>, vector<16x625xf32>, vector<16x625xf32> -> vector<16x625xf32>
    %281 = arith.addf %276, %280 : vector<16x625xf32>
    %c0_189 = arith.constant 0 : index
    %c50_190 = arith.constant 50 : index
    %282 = vector.load %arg10[%c0_189, %c50_190] : memref<16x768xf32, #tpu.memory_space<vmem>>, vector<16x625xf32>
    %c6_191 = arith.constant 6 : index
    %c0_192 = arith.constant 0 : index
    %c0_193 = arith.constant 0 : index
    %283 = vector.load %arg4[%c6_191, %c0_192, %c0_193] : memref<25x16x16xf32, #tpu.memory_space<vmem>>, vector<1x16x16xf32>
    %284 = vector.shape_cast %283 : vector<1x16x16xf32> to vector<16x16xf32>
    %cst_194 = arith.constant dense<0.000000e+00> : vector<16x625xf32>
    %285 = tpu.matmul %284, %282, %cst_194 {dimension_numbers = #tpu.dot_dimension_numbers<[1], [0], [0], [1], [0, 0, 1, 1], [], []>} : vector<16x16xf32>, vector<16x625xf32>, vector<16x625xf32> -> vector<16x625xf32>
    %286 = arith.addf %281, %285 : vector<16x625xf32>
    %c0_195 = arith.constant 0 : index
    %c51_196 = arith.constant 51 : index
    %287 = vector.load %arg10[%c0_195, %c51_196] : memref<16x768xf32, #tpu.memory_space<vmem>>, vector<16x625xf32>
    %c7_197 = arith.constant 7 : index
    %c0_198 = arith.constant 0 : index
    %c0_199 = arith.constant 0 : index
    %288 = vector.load %arg4[%c7_197, %c0_198, %c0_199] : memref<25x16x16xf32, #tpu.memory_space<vmem>>, vector<1x16x16xf32>
    %289 = vector.shape_cast %288 : vector<1x16x16xf32> to vector<16x16xf32>
    %cst_200 = arith.constant dense<0.000000e+00> : vector<16x625xf32>
    %290 = tpu.matmul %289, %287, %cst_200 {dimension_numbers = #tpu.dot_dimension_numbers<[1], [0], [0], [1], [0, 0, 1, 1], [], []>} : vector<16x16xf32>, vector<16x625xf32>, vector<16x625xf32> -> vector<16x625xf32>
    %291 = arith.addf %286, %290 : vector<16x625xf32>
    %c0_201 = arith.constant 0 : index
    %c52_202 = arith.constant 52 : index
    %292 = vector.load %arg10[%c0_201, %c52_202] : memref<16x768xf32, #tpu.memory_space<vmem>>, vector<16x625xf32>
    %c8_203 = arith.constant 8 : index
    %c0_204 = arith.constant 0 : index
    %c0_205 = arith.constant 0 : index
    %293 = vector.load %arg4[%c8_203, %c0_204, %c0_205] : memref<25x16x16xf32, #tpu.memory_space<vmem>>, vector<1x16x16xf32>
    %294 = vector.shape_cast %293 : vector<1x16x16xf32> to vector<16x16xf32>
    %cst_206 = arith.constant dense<0.000000e+00> : vector<16x625xf32>
    %295 = tpu.matmul %294, %292, %cst_206 {dimension_numbers = #tpu.dot_dimension_numbers<[1], [0], [0], [1], [0, 0, 1, 1], [], []>} : vector<16x16xf32>, vector<16x625xf32>, vector<16x625xf32> -> vector<16x625xf32>
    %296 = arith.addf %291, %295 : vector<16x625xf32>
    %c0_207 = arith.constant 0 : index
    %c53_208 = arith.constant 53 : index
    %297 = vector.load %arg10[%c0_207, %c53_208] : memref<16x768xf32, #tpu.memory_space<vmem>>, vector<16x625xf32>
    %c9_209 = arith.constant 9 : index
    %c0_210 = arith.constant 0 : index
    %c0_211 = arith.constant 0 : index
    %298 = vector.load %arg4[%c9_209, %c0_210, %c0_211] : memref<25x16x16xf32, #tpu.memory_space<vmem>>, vector<1x16x16xf32>
    %299 = vector.shape_cast %298 : vector<1x16x16xf32> to vector<16x16xf32>
    %cst_212 = arith.constant dense<0.000000e+00> : vector<16x625xf32>
    %300 = tpu.matmul %299, %297, %cst_212 {dimension_numbers = #tpu.dot_dimension_numbers<[1], [0], [0], [1], [0, 0, 1, 1], [], []>} : vector<16x16xf32>, vector<16x625xf32>, vector<16x625xf32> -> vector<16x625xf32>
    %301 = arith.addf %296, %300 : vector<16x625xf32>
    %c0_213 = arith.constant 0 : index
    %c74 = arith.constant 74 : index
    %302 = vector.load %arg10[%c0_213, %c74] : memref<16x768xf32, #tpu.memory_space<vmem>>, vector<16x625xf32>
    %c10_214 = arith.constant 10 : index
    %c0_215 = arith.constant 0 : index
    %c0_216 = arith.constant 0 : index
    %303 = vector.load %arg4[%c10_214, %c0_215, %c0_216] : memref<25x16x16xf32, #tpu.memory_space<vmem>>, vector<1x16x16xf32>
    %304 = vector.shape_cast %303 : vector<1x16x16xf32> to vector<16x16xf32>
    %cst_217 = arith.constant dense<0.000000e+00> : vector<16x625xf32>
    %305 = tpu.matmul %304, %302, %cst_217 {dimension_numbers = #tpu.dot_dimension_numbers<[1], [0], [0], [1], [0, 0, 1, 1], [], []>} : vector<16x16xf32>, vector<16x625xf32>, vector<16x625xf32> -> vector<16x625xf32>
    %306 = arith.addf %301, %305 : vector<16x625xf32>
    %c0_218 = arith.constant 0 : index
    %c75_219 = arith.constant 75 : index
    %307 = vector.load %arg10[%c0_218, %c75_219] : memref<16x768xf32, #tpu.memory_space<vmem>>, vector<16x625xf32>
    %c11_220 = arith.constant 11 : index
    %c0_221 = arith.constant 0 : index
    %c0_222 = arith.constant 0 : index
    %308 = vector.load %arg4[%c11_220, %c0_221, %c0_222] : memref<25x16x16xf32, #tpu.memory_space<vmem>>, vector<1x16x16xf32>
    %309 = vector.shape_cast %308 : vector<1x16x16xf32> to vector<16x16xf32>
    %cst_223 = arith.constant dense<0.000000e+00> : vector<16x625xf32>
    %310 = tpu.matmul %309, %307, %cst_223 {dimension_numbers = #tpu.dot_dimension_numbers<[1], [0], [0], [1], [0, 0, 1, 1], [], []>} : vector<16x16xf32>, vector<16x625xf32>, vector<16x625xf32> -> vector<16x625xf32>
    %311 = arith.addf %306, %310 : vector<16x625xf32>
    %c0_224 = arith.constant 0 : index
    %c76_225 = arith.constant 76 : index
    %312 = vector.load %arg10[%c0_224, %c76_225] : memref<16x768xf32, #tpu.memory_space<vmem>>, vector<16x625xf32>
    %c12_226 = arith.constant 12 : index
    %c0_227 = arith.constant 0 : index
    %c0_228 = arith.constant 0 : index
    %313 = vector.load %arg4[%c12_226, %c0_227, %c0_228] : memref<25x16x16xf32, #tpu.memory_space<vmem>>, vector<1x16x16xf32>
    %314 = vector.shape_cast %313 : vector<1x16x16xf32> to vector<16x16xf32>
    %cst_229 = arith.constant dense<0.000000e+00> : vector<16x625xf32>
    %315 = tpu.matmul %314, %312, %cst_229 {dimension_numbers = #tpu.dot_dimension_numbers<[1], [0], [0], [1], [0, 0, 1, 1], [], []>} : vector<16x16xf32>, vector<16x625xf32>, vector<16x625xf32> -> vector<16x625xf32>
    %316 = arith.addf %311, %315 : vector<16x625xf32>
    %c0_230 = arith.constant 0 : index
    %c77_231 = arith.constant 77 : index
    %317 = vector.load %arg10[%c0_230, %c77_231] : memref<16x768xf32, #tpu.memory_space<vmem>>, vector<16x625xf32>
    %c13_232 = arith.constant 13 : index
    %c0_233 = arith.constant 0 : index
    %c0_234 = arith.constant 0 : index
    %318 = vector.load %arg4[%c13_232, %c0_233, %c0_234] : memref<25x16x16xf32, #tpu.memory_space<vmem>>, vector<1x16x16xf32>
    %319 = vector.shape_cast %318 : vector<1x16x16xf32> to vector<16x16xf32>
    %cst_235 = arith.constant dense<0.000000e+00> : vector<16x625xf32>
    %320 = tpu.matmul %319, %317, %cst_235 {dimension_numbers = #tpu.dot_dimension_numbers<[1], [0], [0], [1], [0, 0, 1, 1], [], []>} : vector<16x16xf32>, vector<16x625xf32>, vector<16x625xf32> -> vector<16x625xf32>
    %321 = arith.addf %316, %320 : vector<16x625xf32>
    %c0_236 = arith.constant 0 : index
    %c78_237 = arith.constant 78 : index
    %322 = vector.load %arg10[%c0_236, %c78_237] : memref<16x768xf32, #tpu.memory_space<vmem>>, vector<16x625xf32>
    %c14_238 = arith.constant 14 : index
    %c0_239 = arith.constant 0 : index
    %c0_240 = arith.constant 0 : index
    %323 = vector.load %arg4[%c14_238, %c0_239, %c0_240] : memref<25x16x16xf32, #tpu.memory_space<vmem>>, vector<1x16x16xf32>
    %324 = vector.shape_cast %323 : vector<1x16x16xf32> to vector<16x16xf32>
    %cst_241 = arith.constant dense<0.000000e+00> : vector<16x625xf32>
    %325 = tpu.matmul %324, %322, %cst_241 {dimension_numbers = #tpu.dot_dimension_numbers<[1], [0], [0], [1], [0, 0, 1, 1], [], []>} : vector<16x16xf32>, vector<16x625xf32>, vector<16x625xf32> -> vector<16x625xf32>
    %326 = arith.addf %321, %325 : vector<16x625xf32>
    %c0_242 = arith.constant 0 : index
    %c99 = arith.constant 99 : index
    %327 = vector.load %arg10[%c0_242, %c99] : memref<16x768xf32, #tpu.memory_space<vmem>>, vector<16x625xf32>
    %c15_243 = arith.constant 15 : index
    %c0_244 = arith.constant 0 : index
    %c0_245 = arith.constant 0 : index
    %328 = vector.load %arg4[%c15_243, %c0_244, %c0_245] : memref<25x16x16xf32, #tpu.memory_space<vmem>>, vector<1x16x16xf32>
    %329 = vector.shape_cast %328 : vector<1x16x16xf32> to vector<16x16xf32>
    %cst_246 = arith.constant dense<0.000000e+00> : vector<16x625xf32>
    %330 = tpu.matmul %329, %327, %cst_246 {dimension_numbers = #tpu.dot_dimension_numbers<[1], [0], [0], [1], [0, 0, 1, 1], [], []>} : vector<16x16xf32>, vector<16x625xf32>, vector<16x625xf32> -> vector<16x625xf32>
    %331 = arith.addf %326, %330 : vector<16x625xf32>
    %c0_247 = arith.constant 0 : index
    %c100_248 = arith.constant 100 : index
    %332 = vector.load %arg10[%c0_247, %c100_248] : memref<16x768xf32, #tpu.memory_space<vmem>>, vector<16x625xf32>
    %c16_249 = arith.constant 16 : index
    %c0_250 = arith.constant 0 : index
    %c0_251 = arith.constant 0 : index
    %333 = vector.load %arg4[%c16_249, %c0_250, %c0_251] : memref<25x16x16xf32, #tpu.memory_space<vmem>>, vector<1x16x16xf32>
    %334 = vector.shape_cast %333 : vector<1x16x16xf32> to vector<16x16xf32>
    %cst_252 = arith.constant dense<0.000000e+00> : vector<16x625xf32>
    %335 = tpu.matmul %334, %332, %cst_252 {dimension_numbers = #tpu.dot_dimension_numbers<[1], [0], [0], [1], [0, 0, 1, 1], [], []>} : vector<16x16xf32>, vector<16x625xf32>, vector<16x625xf32> -> vector<16x625xf32>
    %336 = arith.addf %331, %335 : vector<16x625xf32>
    %c0_253 = arith.constant 0 : index
    %c101_254 = arith.constant 101 : index
    %337 = vector.load %arg10[%c0_253, %c101_254] : memref<16x768xf32, #tpu.memory_space<vmem>>, vector<16x625xf32>
    %c17_255 = arith.constant 17 : index
    %c0_256 = arith.constant 0 : index
    %c0_257 = arith.constant 0 : index
    %338 = vector.load %arg4[%c17_255, %c0_256, %c0_257] : memref<25x16x16xf32, #tpu.memory_space<vmem>>, vector<1x16x16xf32>
    %339 = vector.shape_cast %338 : vector<1x16x16xf32> to vector<16x16xf32>
    %cst_258 = arith.constant dense<0.000000e+00> : vector<16x625xf32>
    %340 = tpu.matmul %339, %337, %cst_258 {dimension_numbers = #tpu.dot_dimension_numbers<[1], [0], [0], [1], [0, 0, 1, 1], [], []>} : vector<16x16xf32>, vector<16x625xf32>, vector<16x625xf32> -> vector<16x625xf32>
    %341 = arith.addf %336, %340 : vector<16x625xf32>
    %c0_259 = arith.constant 0 : index
    %c102_260 = arith.constant 102 : index
    %342 = vector.load %arg10[%c0_259, %c102_260] : memref<16x768xf32, #tpu.memory_space<vmem>>, vector<16x625xf32>
    %c18_261 = arith.constant 18 : index
    %c0_262 = arith.constant 0 : index
    %c0_263 = arith.constant 0 : index
    %343 = vector.load %arg4[%c18_261, %c0_262, %c0_263] : memref<25x16x16xf32, #tpu.memory_space<vmem>>, vector<1x16x16xf32>
    %344 = vector.shape_cast %343 : vector<1x16x16xf32> to vector<16x16xf32>
    %cst_264 = arith.constant dense<0.000000e+00> : vector<16x625xf32>
    %345 = tpu.matmul %344, %342, %cst_264 {dimension_numbers = #tpu.dot_dimension_numbers<[1], [0], [0], [1], [0, 0, 1, 1], [], []>} : vector<16x16xf32>, vector<16x625xf32>, vector<16x625xf32> -> vector<16x625xf32>
    %346 = arith.addf %341, %345 : vector<16x625xf32>
    %c0_265 = arith.constant 0 : index
    %c103_266 = arith.constant 103 : index
    %347 = vector.load %arg10[%c0_265, %c103_266] : memref<16x768xf32, #tpu.memory_space<vmem>>, vector<16x625xf32>
    %c19_267 = arith.constant 19 : index
    %c0_268 = arith.constant 0 : index
    %c0_269 = arith.constant 0 : index
    %348 = vector.load %arg4[%c19_267, %c0_268, %c0_269] : memref<25x16x16xf32, #tpu.memory_space<vmem>>, vector<1x16x16xf32>
    %349 = vector.shape_cast %348 : vector<1x16x16xf32> to vector<16x16xf32>
    %cst_270 = arith.constant dense<0.000000e+00> : vector<16x625xf32>
    %350 = tpu.matmul %349, %347, %cst_270 {dimension_numbers = #tpu.dot_dimension_numbers<[1], [0], [0], [1], [0, 0, 1, 1], [], []>} : vector<16x16xf32>, vector<16x625xf32>, vector<16x625xf32> -> vector<16x625xf32>
    %351 = arith.addf %346, %350 : vector<16x625xf32>
    %c0_271 = arith.constant 0 : index
    %c124 = arith.constant 124 : index
    %352 = vector.load %arg10[%c0_271, %c124] : memref<16x768xf32, #tpu.memory_space<vmem>>, vector<16x625xf32>
    %c20_272 = arith.constant 20 : index
    %c0_273 = arith.constant 0 : index
    %c0_274 = arith.constant 0 : index
    %353 = vector.load %arg4[%c20_272, %c0_273, %c0_274] : memref<25x16x16xf32, #tpu.memory_space<vmem>>, vector<1x16x16xf32>
    %354 = vector.shape_cast %353 : vector<1x16x16xf32> to vector<16x16xf32>
    %cst_275 = arith.constant dense<0.000000e+00> : vector<16x625xf32>
    %355 = tpu.matmul %354, %352, %cst_275 {dimension_numbers = #tpu.dot_dimension_numbers<[1], [0], [0], [1], [0, 0, 1, 1], [], []>} : vector<16x16xf32>, vector<16x625xf32>, vector<16x625xf32> -> vector<16x625xf32>
    %356 = arith.addf %351, %355 : vector<16x625xf32>
    %c0_276 = arith.constant 0 : index
    %c125 = arith.constant 125 : index
    %357 = vector.load %arg10[%c0_276, %c125] : memref<16x768xf32, #tpu.memory_space<vmem>>, vector<16x625xf32>
    %c21_277 = arith.constant 21 : index
    %c0_278 = arith.constant 0 : index
    %c0_279 = arith.constant 0 : index
    %358 = vector.load %arg4[%c21_277, %c0_278, %c0_279] : memref<25x16x16xf32, #tpu.memory_space<vmem>>, vector<1x16x16xf32>
    %359 = vector.shape_cast %358 : vector<1x16x16xf32> to vector<16x16xf32>
    %cst_280 = arith.constant dense<0.000000e+00> : vector<16x625xf32>
    %360 = tpu.matmul %359, %357, %cst_280 {dimension_numbers = #tpu.dot_dimension_numbers<[1], [0], [0], [1], [0, 0, 1, 1], [], []>} : vector<16x16xf32>, vector<16x625xf32>, vector<16x625xf32> -> vector<16x625xf32>
    %361 = arith.addf %356, %360 : vector<16x625xf32>
    %c0_281 = arith.constant 0 : index
    %c126 = arith.constant 126 : index
    %362 = vector.load %arg10[%c0_281, %c126] : memref<16x768xf32, #tpu.memory_space<vmem>>, vector<16x625xf32>
    %c22_282 = arith.constant 22 : index
    %c0_283 = arith.constant 0 : index
    %c0_284 = arith.constant 0 : index
    %363 = vector.load %arg4[%c22_282, %c0_283, %c0_284] : memref<25x16x16xf32, #tpu.memory_space<vmem>>, vector<1x16x16xf32>
    %364 = vector.shape_cast %363 : vector<1x16x16xf32> to vector<16x16xf32>
    %cst_285 = arith.constant dense<0.000000e+00> : vector<16x625xf32>
    %365 = tpu.matmul %364, %362, %cst_285 {dimension_numbers = #tpu.dot_dimension_numbers<[1], [0], [0], [1], [0, 0, 1, 1], [], []>} : vector<16x16xf32>, vector<16x625xf32>, vector<16x625xf32> -> vector<16x625xf32>
    %366 = arith.addf %361, %365 : vector<16x625xf32>
    %c0_286 = arith.constant 0 : index
    %c127 = arith.constant 127 : index
    %367 = vector.load %arg10[%c0_286, %c127] : memref<16x768xf32, #tpu.memory_space<vmem>>, vector<16x625xf32>
    %c23_287 = arith.constant 23 : index
    %c0_288 = arith.constant 0 : index
    %c0_289 = arith.constant 0 : index
    %368 = vector.load %arg4[%c23_287, %c0_288, %c0_289] : memref<25x16x16xf32, #tpu.memory_space<vmem>>, vector<1x16x16xf32>
    %369 = vector.shape_cast %368 : vector<1x16x16xf32> to vector<16x16xf32>
    %cst_290 = arith.constant dense<0.000000e+00> : vector<16x625xf32>
    %370 = tpu.matmul %369, %367, %cst_290 {dimension_numbers = #tpu.dot_dimension_numbers<[1], [0], [0], [1], [0, 0, 1, 1], [], []>} : vector<16x16xf32>, vector<16x625xf32>, vector<16x625xf32> -> vector<16x625xf32>
    %371 = arith.addf %366, %370 : vector<16x625xf32>
    %c0_291 = arith.constant 0 : index
    %c128_292 = arith.constant 128 : index
    %372 = vector.load %arg10[%c0_291, %c128_292] : memref<16x768xf32, #tpu.memory_space<vmem>>, vector<16x625xf32>
    %c24_293 = arith.constant 24 : index
    %c0_294 = arith.constant 0 : index
    %c0_295 = arith.constant 0 : index
    %373 = vector.load %arg4[%c24_293, %c0_294, %c0_295] : memref<25x16x16xf32, #tpu.memory_space<vmem>>, vector<1x16x16xf32>
    %374 = vector.shape_cast %373 : vector<1x16x16xf32> to vector<16x16xf32>
    %cst_296 = arith.constant dense<0.000000e+00> : vector<16x625xf32>
    %375 = tpu.matmul %374, %372, %cst_296 {dimension_numbers = #tpu.dot_dimension_numbers<[1], [0], [0], [1], [0, 0, 1, 1], [], []>} : vector<16x16xf32>, vector<16x625xf32>, vector<16x625xf32> -> vector<16x625xf32>
    %376 = arith.addf %371, %375 : vector<16x625xf32>
    %c0_297 = arith.constant 0 : index
    %c4_298 = arith.constant 4 : index
    %377 = vector.load %arg5[%c0_297, %c4_298] : memref<16x6xf32, #tpu.memory_space<vmem>>, vector<8x1xf32>
    %c0_299 = arith.constant 0 : index
    %c5_300 = arith.constant 5 : index
    %378 = vector.load %arg5[%c0_299, %c5_300] : memref<16x6xf32, #tpu.memory_space<vmem>>, vector<8x1xf32>
    %379 = vector.extract_strided_slice %376 {offsets = [0, 0], sizes = [8, 625], strides = [1, 1]} : vector<16x625xf32> to vector<8x625xf32>
    %380 = vector.extract_strided_slice %376 {offsets = [8, 0], sizes = [8, 625], strides = [1, 1]} : vector<16x625xf32> to vector<8x625xf32>
    %cst_301 = arith.constant dense<0.000000e+00> : vector<8xf32>
    %381 = vector.multi_reduction <add>, %379, %cst_301 [1] : vector<8x625xf32> to vector<8xf32>
    %382 = vector.shape_cast %381 : vector<8xf32> to vector<8x1xf32>
    %cst_302 = arith.constant dense<0.000000e+00> : vector<8xf32>
    %383 = vector.multi_reduction <add>, %380, %cst_302 [1] : vector<8x625xf32> to vector<8xf32>
    %384 = vector.shape_cast %383 : vector<8xf32> to vector<8x1xf32>
    %385 = arith.addf %382, %384 : vector<8x1xf32>
    %cst_303 = arith.constant 1.250000e+03 : f32
    %386 = vector.broadcast %cst_303 : f32 to vector<8x1xf32>
    %387 = arith.divf %385, %386 : vector<8x1xf32>
    %388 = vector.broadcast %387 : vector<8x1xf32> to vector<8x625xf32>
    %389 = arith.subf %379, %388 : vector<8x625xf32>
    %390 = arith.mulf %389, %389 : vector<8x625xf32>
    %cst_304 = arith.constant dense<0.000000e+00> : vector<8xf32>
    %391 = vector.multi_reduction <add>, %390, %cst_304 [1] : vector<8x625xf32> to vector<8xf32>
    %392 = vector.shape_cast %391 : vector<8xf32> to vector<8x1xf32>
    %393 = vector.broadcast %387 : vector<8x1xf32> to vector<8x625xf32>
    %394 = arith.subf %380, %393 : vector<8x625xf32>
    %395 = arith.mulf %394, %394 : vector<8x625xf32>
    %cst_305 = arith.constant dense<0.000000e+00> : vector<8xf32>
    %396 = vector.multi_reduction <add>, %395, %cst_305 [1] : vector<8x625xf32> to vector<8xf32>
    %397 = vector.shape_cast %396 : vector<8xf32> to vector<8x1xf32>
    %398 = arith.addf %392, %397 : vector<8x1xf32>
    %cst_306 = arith.constant 1.250000e+03 : f32
    %399 = vector.broadcast %cst_306 : f32 to vector<8x1xf32>
    %400 = arith.divf %398, %399 : vector<8x1xf32>
    %cst_307 = arith.constant 9.99999974E-6 : f32
    %401 = vector.broadcast %cst_307 : f32 to vector<8x1xf32>
    %402 = arith.addf %400, %401 : vector<8x1xf32>
    %403 = math.rsqrt %402 : vector<8x1xf32>
    %404 = arith.mulf %403, %377 : vector<8x1xf32>
    %405 = vector.broadcast %387 : vector<8x1xf32> to vector<8x625xf32>
    %406 = arith.subf %379, %405 : vector<8x625xf32>
    %407 = vector.broadcast %404 : vector<8x1xf32> to vector<8x625xf32>
    %408 = arith.mulf %406, %407 : vector<8x625xf32>
    %409 = vector.broadcast %378 : vector<8x1xf32> to vector<8x625xf32>
    %410 = arith.addf %408, %409 : vector<8x625xf32>
    %cst_308 = arith.constant 0.000000e+00 : f32
    %411 = vector.broadcast %cst_308 : f32 to vector<8x625xf32>
    %412 = arith.maximumf %410, %411 : vector<8x625xf32>
    %c0_309 = arith.constant 0 : index
    %c0_310 = arith.constant 0 : index
    %413 = vector.load %arg8[%c0_309, %c0_310] : memref<16x625xf32, #tpu.memory_space<vmem>>, vector<8x625xf32>
    tpu.vector_store %arg8[%c0_309, %c0_310], %412 {strides = array<i32>} : memref<16x625xf32, #tpu.memory_space<vmem>>, vector<8x625xf32>,
    %414 = vector.broadcast %387 : vector<8x1xf32> to vector<8x625xf32>
    %415 = arith.subf %380, %414 : vector<8x625xf32>
    %416 = vector.broadcast %404 : vector<8x1xf32> to vector<8x625xf32>
    %417 = arith.mulf %415, %416 : vector<8x625xf32>
    %418 = vector.broadcast %378 : vector<8x1xf32> to vector<8x625xf32>
    %419 = arith.addf %417, %418 : vector<8x625xf32>
    %cst_311 = arith.constant 0.000000e+00 : f32
    %420 = vector.broadcast %cst_311 : f32 to vector<8x625xf32>
    %421 = arith.maximumf %419, %420 : vector<8x625xf32>
    %c8_312 = arith.constant 8 : index
    %c0_313 = arith.constant 0 : index
    %422 = vector.load %arg8[%c8_312, %c0_313] : memref<16x625xf32, #tpu.memory_space<vmem>>, vector<8x625xf32>
    tpu.vector_store %arg8[%c8_312, %c0_313], %421 {strides = array<i32>} : memref<16x625xf32, #tpu.memory_space<vmem>>, vector<8x625xf32>,
    return
  }
  func.func @transform_0(%arg0: i32) -> (i32, i32) {
    %c0_i32 = arith.constant 0 : i32
    %c0_i32_0 = arith.constant 0 : i32
    %c0_i32_1 = arith.constant 0 : i32
    return %c0_i32, %c0_i32_0 : i32, i32
  }
  func.func @transform_1(%arg0: i32) -> (i32, i32) {
    %c0_i32 = arith.constant 0 : i32
    %c0_i32_0 = arith.constant 0 : i32
    %c0_i32_1 = arith.constant 0 : i32
    return %c0_i32, %c0_i32_0 : i32, i32
  }
  func.func @transform_2(%arg0: i32) -> (i32, i32, i32) {
    %c0_i32 = arith.constant 0 : i32
    %c0_i32_0 = arith.constant 0 : i32
    %c0_i32_1 = arith.constant 0 : i32
    %c0_i32_2 = arith.constant 0 : i32
    return %c0_i32, %c0_i32_0, %c0_i32_1 : i32, i32, i32
  }
  func.func @transform_3(%arg0: i32) -> (i32, i32, i32) {
    %c0_i32 = arith.constant 0 : i32
    %c0_i32_0 = arith.constant 0 : i32
    %c0_i32_1 = arith.constant 0 : i32
    %c0_i32_2 = arith.constant 0 : i32
    return %c0_i32, %c0_i32_0, %c0_i32_1 : i32, i32, i32
  }
  func.func @transform_4(%arg0: i32) -> (i32, i32) {
    %c0_i32 = arith.constant 0 : i32
    %c0_i32_0 = arith.constant 0 : i32
    %c0_i32_1 = arith.constant 0 : i32
    return %c0_i32, %c0_i32_0 : i32, i32
  }
  func.func @transform_5(%arg0: i32) -> (i32, i32) {
    %c0_i32 = arith.constant 0 : i32
    %c0_i32_0 = arith.constant 0 : i32
    %c0_i32_1 = arith.constant 0 : i32
    return %c0_i32, %c0_i32_0 : i32, i32
  }
  func.func @transform_6(%arg0: i32) -> (i32, i32) {
    %c0_i32 = arith.constant 0 : i32
    %c0_i32_0 = arith.constant 0 : i32
    %c0_i32_1 = arith.constant 0 : i32
    return %c0_i32, %c0_i32_0 : i32, i32
  }
  func.func @transform_7(%arg0: i32) -> (i32, i32) {
    %c0_i32 = arith.constant 0 : i32
    %c0_i32_0 = arith.constant 0 : i32
    %c0_i32_1 = arith.constant 0 : i32
    return %c0_i32, %c0_i32_0 : i32, i32
  }
}

</mosaic_0001>

<llo_original>
// kernel: generator_forward.1
$region0: #{generator_forward.1}
  #allocation0 [shape = 'u32[]', space=smem, size = 0x4, offset = 0x4, fixed_abs, tag = 'smem constant byte address 0x4 - core index']
  #allocation1 [shape = 'u32[72,128]{1,0:T(1,128)}', space=vmem, size = 0x9000, scoped, tag = 'internal scratch']
  #allocation2 [shape = 'f32[32,729]{1,0:T(8,128)}', space=vmem, size = 0x18000, scoped, tag = 'scratch operand']
  #allocation3 [shape = 'f32[16,768]{1,0:T(8,128)}', space=vmem, size = 0xc000, scoped, tag = 'scratch operand']
  %s0 = inlined_call_operand.vmem [shape: f32[32,256], index: 0, kind: input, shape index: {}]
  %s1 = inlined_call_operand.vmem [shape: f32[256,625], index: 1, kind: input, shape index: {}]
  %s2 = inlined_call_operand.vmem [shape: f32[25,16,32], index: 2, kind: input, shape index: {}]
  %s3 = inlined_call_operand.vmem [shape: f32[25,16,16], index: 3, kind: input, shape index: {}]
  %s4 = inlined_call_operand.vmem [shape: f32[16,6], index: 4, kind: input, shape index: {}]
  %s5 = inlined_call_operand.vmem [shape: f32[1,625], index: 5, kind: input, shape index: {}]
  %s6 = inlined_call_operand.vmem [shape: f32[1,625], index: 6, kind: input, shape index: {}]
  %s7 = inlined_call_operand.vmem [shape: f32[16,625], index: 7, kind: output, shape index: {}]
  %s8 = sld [smem:[#allocation0]]
  $region38: #{generator_forward.1} parent=0
    _
  %s10 = ssub.s32 1, %s8
  %s11 = scalar_select 0, %s10, %s8
  // Predicated region
  $region2: #{generator_forward.1} parent=0 // pred_check
    _
  $region3: #{generator_forward.1} parent=0 // pred_check_branch
    %13 = sbr.rel (0) target = $region5
  $region4: #{generator_forward.1} parent=0 // pred_region
    _
  $region5: #{generator_forward.1} parent=0 // pred_fallthru
    _
  // Predicated region
  $region6: #{generator_forward.1} parent=0 // pred_check
    _
  $region7: #{generator_forward.1} parent=0 // pred_check_branch
    %15 = sbr.rel (0) target = $region9
  $region8: #{generator_forward.1} parent=0 // pred_region
    _
  $region9: #{generator_forward.1} parent=0 // pred_fallthru
    _
  // Predicated region
  $region10: #{generator_forward.1} parent=0 // pred_check
    _
  $region11: #{generator_forward.1} parent=0 // pred_check_branch
    %17 = sbr.rel (0) target = $region13
  $region12: #{generator_forward.1} parent=0 // pred_region
    _
  $region13: #{generator_forward.1} parent=0 // pred_fallthru
    _
  // Predicated region
  $region14: #{generator_forward.1} parent=0 // pred_check
    _
  $region15: #{generator_forward.1} parent=0 // pred_check_branch
    %19 = sbr.rel (0) target = $region17
  $region16: #{generator_forward.1} parent=0 // pred_region
    _
  $region17: #{generator_forward.1} parent=0 // pred_fallthru
    _
  // Predicated region
  $region18: #{generator_forward.1} parent=0 // pred_check
    _
  $region19: #{generator_forward.1} parent=0 // pred_check_branch
    %21 = sbr.rel (0) target = $region21
  $region20: #{generator_forward.1} parent=0 // pred_region
    _
  $region21: #{generator_forward.1} parent=0 // pred_fallthru
    _
  // Predicated region
  $region22: #{generator_forward.1} parent=0 // pred_check
    _
  $region23: #{generator_forward.1} parent=0 // pred_check_branch
    %23 = sbr.rel (0) target = $region25
  $region24: #{generator_forward.1} parent=0 // pred_region
    _
  $region25: #{generator_forward.1} parent=0 // pred_fallthru
    _
  // Predicated region
  $region26: #{generator_forward.1} parent=0 // pred_check
    _
  $region27: #{generator_forward.1} parent=0 // pred_check_branch
    %25 = sbr.rel (0) target = $region29
  $region28: #{generator_forward.1} parent=0 // pred_region
    _
  $region29: #{generator_forward.1} parent=0 // pred_fallthru
    _
  %26 = vst [vmem:[#allocation2] sm:$0xff] 0.0
  %27 = vst [vmem:[#allocation2 + $0x8] sm:$0xff] 0.0
  %28 = vst [vmem:[#allocation2 + $0x10] sm:$0xff] 0.0
  %29 = vst [vmem:[#allocation2 + $0x18] sm:$0xff] 0.0
  %30 = vst [vmem:[#allocation2 + $0x20] sm:$0xff] 0.0
  %vm31 = vcmask 728064
  %32 = vst.msk [vmem:[#allocation2 + $0x28] sm:$0xff] %vm31, 0.0
  %33 = vst [vmem:[#allocation2 + $0x30] sm:$0xff] 0.0
  %34 = vst [vmem:[#allocation2 + $0x38] sm:$0xff] 0.0
  %35 = vst [vmem:[#allocation2 + $0x40] sm:$0xff] 0.0
  %36 = vst [vmem:[#allocation2 + $0x48] sm:$0xff] 0.0
  %37 = vst [vmem:[#allocation2 + $0x50] sm:$0xff] 0.0
  %38 = vst.msk [vmem:[#allocation2 + $0x58] sm:$0xff] %vm31, 0.0
  %39 = vst [vmem:[#allocation2 + $0x60] sm:$0xff] 0.0
  %40 = vst [vmem:[#allocation2 + $0x68] sm:$0xff] 0.0
  %41 = vst [vmem:[#allocation2 + $0x70] sm:$0xff] 0.0
  %42 = vst [vmem:[#allocation2 + $0x78] sm:$0xff] 0.0
  %43 = vst [vmem:[#allocation2 + $0x80] sm:$0xff] 0.0
  %44 = vst.msk [vmem:[#allocation2 + $0x88] sm:$0xff] %vm31, 0.0
  %45 = vst [vmem:[#allocation2 + $0x90] sm:$0xff] 0.0
  %46 = vst [vmem:[#allocation2 + $0x98] sm:$0xff] 0.0
  %47 = vst [vmem:[#allocation2 + $0xa0] sm:$0xff] 0.0
  %48 = vst [vmem:[#allocation2 + $0xa8] sm:$0xff] 0.0
  %49 = vst [vmem:[#allocation2 + $0xb0] sm:$0xff] 0.0
  %50 = vst.msk [vmem:[#allocation2 + $0xb8] sm:$0xff] %vm31, 0.0
  %51 = vst [vmem:[#allocation3] sm:$0xff] 0.0
  %52 = vst [vmem:[#allocation3 + $0x8] sm:$0xff] 0.0
  %53 = vst [vmem:[#allocation3 + $0x10] sm:$0xff] 0.0
  %54 = vst [vmem:[#allocation3 + $0x18] sm:$0xff] 0.0
  %55 = vst [vmem:[#allocation3 + $0x20] sm:$0xff] 0.0
  %56 = vst [vmem:[#allocation3 + $0x28] sm:$0xff] 0.0
  %57 = vst [vmem:[#allocation3 + $0x30] sm:$0xff] 0.0
  %58 = vst [vmem:[#allocation3 + $0x38] sm:$0xff] 0.0
  %59 = vst [vmem:[#allocation3 + $0x40] sm:$0xff] 0.0
  %60 = vst [vmem:[#allocation3 + $0x48] sm:$0xff] 0.0
  %61 = vst [vmem:[#allocation3 + $0x50] sm:$0xff] 0.0
  %62 = vst [vmem:[#allocation3 + $0x58] sm:$0xff] 0.0
  %v63 = vld [vmem:[%s5] sm:$0x1f]
  %v64 = vld [vmem:[%s6] sm:$0x1f]
  %v65 = vld [vmem:[%s0] sm:$0xff]
  %v66 = vld [vmem:[%s0 + $0x8] sm:$0xff]
  %v67 = vld [vmem:[%s0 + $0x10] sm:$0xff]
  %v68 = vld [vmem:[%s0 + $0x18] sm:$0xff]
  %v69 = vld [vmem:[%s0 + $0x20] sm:$0xff]
  %v70 = vld [vmem:[%s0 + $0x28] sm:$0xff]
  %v71 = vld [vmem:[%s0 + $0x30] sm:$0xff]
  %v72 = vld [vmem:[%s0 + $0x38] sm:$0xff]
  %v73 = vld [vmem:[%s1] sm:$0xff]
  %v74 = vld [vmem:[%s1 + $0x8] sm:$0xff]
  %v75 = vld [vmem:[%s1 + $0x10] sm:$0xff]
  %v76 = vld [vmem:[%s1 + $0x18] sm:$0xff]
  %v77 = vld [vmem:[%s1 + $0x20] sm:$0xff]
  %v78 = vld [vmem:[%s1 + $0x28] sm:$0xff]
  %v79 = vld [vmem:[%s1 + $0x30] sm:$0xff]
  %v80 = vld [vmem:[%s1 + $0x38] sm:$0xff]
  %v81 = vld [vmem:[%s1 + $0x40] sm:$0xff]
  %v82 = vld [vmem:[%s1 + $0x48] sm:$0xff]
  %v83 = vld [vmem:[%s1 + $0x50] sm:$0xff]
  %v84 = vld [vmem:[%s1 + $0x58] sm:$0xff]
  %v85 = vld [vmem:[%s1 + $0x60] sm:$0xff]
  %v86 = vld [vmem:[%s1 + $0x68] sm:$0xff]
  %v87 = vld [vmem:[%s1 + $0x70] sm:$0xff]
  %v88 = vld [vmem:[%s1 + $0x78] sm:$0xff]
  %v89 = vld [vmem:[%s1 + $0x80] sm:$0xff]
  %v90 = vld [vmem:[%s1 + $0x88] sm:$0xff]
  %v91 = vld [vmem:[%s1 + $0x90] sm:$0xff]
  %v92 = vld [vmem:[%s1 + $0x98] sm:$0xff]
  %v93 = vld [vmem:[%s1 + $0xa0] sm:$0xff]
  %v94 = vld [vmem:[%s1 + $0xa8] sm:$0xff]
  %v95 = vld [vmem:[%s1 + $0xb0] sm:$0xff]
  %v96 = vld [vmem:[%s1 + $0xb8] sm:$0xff]
  %v97 = vld [vmem:[%s1 + $0xc0] sm:$0xff]
  %v98 = vld [vmem:[%s1 + $0xc8] sm:$0xff]
  %v99 = vld [vmem:[%s1 + $0xd0] sm:$0xff]
  %v100 = vld [vmem:[%s1 + $0xd8] sm:$0xff]
  %v101 = vld [vmem:[%s1 + $0xe0] sm:$0xff]
  %v102 = vld [vmem:[%s1 + $0xe8] sm:$0xff]
  %v103 = vld [vmem:[%s1 + $0xf0] sm:$0xff]
  %v104 = vld [vmem:[%s1 + $0xf8] sm:$0xff]
  %v105 = vld [vmem:[%s1 + $0x100] sm:$0xff]
  %v106 = vld [vmem:[%s1 + $0x108] sm:$0xff]
  %v107 = vld [vmem:[%s1 + $0x110] sm:$0xff]
  %v108 = vld [vmem:[%s1 + $0x118] sm:$0xff]
  %v109 = vld [vmem:[%s1 + $0x120] sm:$0xff]
  %v110 = vld [vmem:[%s1 + $0x128] sm:$0xff]
  %v111 = vld [vmem:[%s1 + $0x130] sm:$0xff]
  %v112 = vld [vmem:[%s1 + $0x138] sm:$0xff]
  %v113 = vld [vmem:[%s1 + $0x140] sm:$0xff]
  %v114 = vld [vmem:[%s1 + $0x148] sm:$0xff]
  %v115 = vld [vmem:[%s1 + $0x150] sm:$0xff]
  %v116 = vld [vmem:[%s1 + $0x158] sm:$0xff]
  %v117 = vld [vmem:[%s1 + $0x160] sm:$0xff]
  %v118 = vld [vmem:[%s1 + $0x168] sm:$0xff]
  %v119 = vld [vmem:[%s1 + $0x170] sm:$0xff]
  %v120 = vld [vmem:[%s1 + $0x178] sm:$0xff]
  %v121 = vld [vmem:[%s1 + $0x180] sm:$0xff]
  %v122 = vld [vmem:[%s1 + $0x188] sm:$0xff]
  %v123 = vld [vmem:[%s1 + $0x190] sm:$0xff]
  %v124 = vld [vmem:[%s1 + $0x198] sm:$0xff]
  %v125 = vld [vmem:[%s1 + $0x1a0] sm:$0xff]
  %v126 = vld [vmem:[%s1 + $0x1a8] sm:$0xff]
  %v127 = vld [vmem:[%s1 + $0x1b0] sm:$0xff]
  %v128 = vld [vmem:[%s1 + $0x1b8] sm:$0xff]
  %v129 = vld [vmem:[%s1 + $0x1c0] sm:$0xff]
  %v130 = vld [vmem:[%s1 + $0x1c8] sm:$0xff]
  %v131 = vld [vmem:[%s1 + $0x1d0] sm:$0xff]
  %v132 = vld [vmem:[%s1 + $0x1d8] sm:$0xff]
  %v133 = vld [vmem:[%s1 + $0x1e0] sm:$0xff]
  %v134 = vld [vmem:[%s1 + $0x1e8] sm:$0xff]
  %v135 = vld [vmem:[%s1 + $0x1f0] sm:$0xff]
  %v136 = vld [vmem:[%s1 + $0x1f8] sm:$0xff]
  %v137 = vld [vmem:[%s1 + $0x200] sm:$0xff]
  %v138 = vld [vmem:[%s1 + $0x208] sm:$0xff]
  %v139 = vld [vmem:[%s1 + $0x210] sm:$0xff]
  %v140 = vld [vmem:[%s1 + $0x218] sm:$0xff]
  %v141 = vld [vmem:[%s1 + $0x220] sm:$0xff]
  %v142 = vld [vmem:[%s1 + $0x228] sm:$0xff]
  %v143 = vld [vmem:[%s1 + $0x230] sm:$0xff]
  %v144 = vld [vmem:[%s1 + $0x238] sm:$0xff]
  %v145 = vld [vmem:[%s1 + $0x240] sm:$0xff]
  %v146 = vld [vmem:[%s1 + $0x248] sm:$0xff]
  %v147 = vld [vmem:[%s1 + $0x250] sm:$0xff]
  %v148 = vld [vmem:[%s1 + $0x258] sm:$0xff]
  %v149 = vld [vmem:[%s1 + $0x260] sm:$0xff]
  %v150 = vld [vmem:[%s1 + $0x268] sm:$0xff]
  %v151 = vld [vmem:[%s1 + $0x270] sm:$0xff]
  %v152 = vld [vmem:[%s1 + $0x278] sm:$0xff]
  %v153 = vld [vmem:[%s1 + $0x280] sm:$0xff]
  %v154 = vld [vmem:[%s1 + $0x288] sm:$0xff]
  %v155 = vld [vmem:[%s1 + $0x290] sm:$0xff]
  %v156 = vld [vmem:[%s1 + $0x298] sm:$0xff]
  %v157 = vld [vmem:[%s1 + $0x2a0] sm:$0xff]
  %v158 = vld [vmem:[%s1 + $0x2a8] sm:$0xff]
  %v159 = vld [vmem:[%s1 + $0x2b0] sm:$0xff]
  %v160 = vld [vmem:[%s1 + $0x2b8] sm:$0xff]
  %v161 = vld [vmem:[%s1 + $0x2c0] sm:$0xff]
  %v162 = vld [vmem:[%s1 + $0x2c8] sm:$0xff]
  %v163 = vld [vmem:[%s1 + $0x2d0] sm:$0xff]
  %v164 = vld [vmem:[%s1 + $0x2d8] sm:$0xff]
  %v165 = vld [vmem:[%s1 + $0x2e0] sm:$0xff]
  %v166 = vld [vmem:[%s1 + $0x2e8] sm:$0xff]
  %v167 = vld [vmem:[%s1 + $0x2f0] sm:$0xff]
  %v168 = vld [vmem:[%s1 + $0x2f8] sm:$0xff]
  %v169 = vld [vmem:[%s1 + $0x300] sm:$0xff]
  %v170 = vld [vmem:[%s1 + $0x308] sm:$0xff]
  %v171 = vld [vmem:[%s1 + $0x310] sm:$0xff]
  %v172 = vld [vmem:[%s1 + $0x318] sm:$0xff]
  %v173 = vld [vmem:[%s1 + $0x320] sm:$0xff]
  %v174 = vld [vmem:[%s1 + $0x328] sm:$0xff]
  %v175 = vld [vmem:[%s1 + $0x330] sm:$0xff]
  %v176 = vld [vmem:[%s1 + $0x338] sm:$0xff]
  %v177 = vld [vmem:[%s1 + $0x340] sm:$0xff]
  %v178 = vld [vmem:[%s1 + $0x348] sm:$0xff]
  %v179 = vld [vmem:[%s1 + $0x350] sm:$0xff]
  %v180 = vld [vmem:[%s1 + $0x358] sm:$0xff]
  %v181 = vld [vmem:[%s1 + $0x360] sm:$0xff]
  %v182 = vld [vmem:[%s1 + $0x368] sm:$0xff]
  %v183 = vld [vmem:[%s1 + $0x370] sm:$0xff]
  %v184 = vld [vmem:[%s1 + $0x378] sm:$0xff]
  %v185 = vld [vmem:[%s1 + $0x380] sm:$0xff]
  %v186 = vld [vmem:[%s1 + $0x388] sm:$0xff]
  %v187 = vld [vmem:[%s1 + $0x390] sm:$0xff]
  %v188 = vld [vmem:[%s1 + $0x398] sm:$0xff]
  %v189 = vld [vmem:[%s1 + $0x3a0] sm:$0xff]
  %v190 = vld [vmem:[%s1 + $0x3a8] sm:$0xff]
  %v191 = vld [vmem:[%s1 + $0x3b0] sm:$0xff]
  %v192 = vld [vmem:[%s1 + $0x3b8] sm:$0xff]
  %v193 = vld [vmem:[%s1 + $0x3c0] sm:$0xff]
  %v194 = vld [vmem:[%s1 + $0x3c8] sm:$0xff]
  %v195 = vld [vmem:[%s1 + $0x3d0] sm:$0xff]
  %v196 = vld [vmem:[%s1 + $0x3d8] sm:$0xff]
  %v197 = vld [vmem:[%s1 + $0x3e0] sm:$0xff]
  %v198 = vld [vmem:[%s1 + $0x3e8] sm:$0xff]
  %v199 = vld [vmem:[%s1 + $0x3f0] sm:$0xff]
  %v200 = vld [vmem:[%s1 + $0x3f8] sm:$0xff]
  %v201 = vld [vmem:[%s1 + $0x400] sm:$0xff]
  %v202 = vld [vmem:[%s1 + $0x408] sm:$0xff]
  %v203 = vld [vmem:[%s1 + $0x410] sm:$0xff]
  %v204 = vld [vmem:[%s1 + $0x418] sm:$0xff]
  %v205 = vld [vmem:[%s1 + $0x420] sm:$0xff]
  %v206 = vld [vmem:[%s1 + $0x428] sm:$0xff]
  %v207 = vld [vmem:[%s1 + $0x430] sm:$0xff]
  %v208 = vld [vmem:[%s1 + $0x438] sm:$0xff]
  %v209 = vld [vmem:[%s1 + $0x440] sm:$0xff]
  %v210 = vld [vmem:[%s1 + $0x448] sm:$0xff]
  %v211 = vld [vmem:[%s1 + $0x450] sm:$0xff]
  %v212 = vld [vmem:[%s1 + $0x458] sm:$0xff]
  %v213 = vld [vmem:[%s1 + $0x460] sm:$0xff]
  %v214 = vld [vmem:[%s1 + $0x468] sm:$0xff]
  %v215 = vld [vmem:[%s1 + $0x470] sm:$0xff]
  %v216 = vld [vmem:[%s1 + $0x478] sm:$0xff]
  %v217 = vld [vmem:[%s1 + $0x480] sm:$0xff]
  %v218 = vld [vmem:[%s1 + $0x488] sm:$0xff]
  %v219 = vld [vmem:[%s1 + $0x490] sm:$0xff]
  %v220 = vld [vmem:[%s1 + $0x498] sm:$0xff]
  %v221 = vld [vmem:[%s1 + $0x4a0] sm:$0xff]
  %v222 = vld [vmem:[%s1 + $0x4a8] sm:$0xff]
  %v223 = vld [vmem:[%s1 + $0x4b0] sm:$0xff]
  %v224 = vld [vmem:[%s1 + $0x4b8] sm:$0xff]
  %v225 = vld [vmem:[%s1 + $0x4c0] sm:$0xff]
  %v226 = vld [vmem:[%s1 + $0x4c8] sm:$0xff]
  %v227 = vld [vmem:[%s1 + $0x4d0] sm:$0xff]
  %v228 = vld [vmem:[%s1 + $0x4d8] sm:$0xff]
  %v229 = vld [vmem:[%s1 + $0x4e0] sm:$0xff]
  %v230 = vld [vmem:[%s1 + $0x4e8] sm:$0xff]
  %v231 = vld [vmem:[%s1 + $0x4f0] sm:$0xff]
  %v232 = vld [vmem:[%s1 + $0x4f8] sm:$0xff]
  %233 = vmatpush.msra.mxu0 %v148
  %234 = vmatpush.msra.mxu0 %v143
  %235 = vmatpush.msra.mxu0 %v138
  %236 = vmatpush.msra.mxu0 %v133
  %237 = vmatpush.msra.mxu0 %v128
  %238 = vmatpush.msra.mxu0 %v123
  %239 = vmatpush.msra.mxu0 %v118
  %240 = vmatpush.msra.mxu0 %v113
  %241 = vmatpush.msra.mxu0 %v108
  %242 = vmatpush.msra.mxu0 %v103
  %243 = vmatpush.msra.mxu0 %v98
  %244 = vmatpush.msra.mxu0 %v93
  %245 = vmatpush.msra.mxu0 %v88
  %246 = vmatpush.msra.mxu0 %v83
  %247 = vmatpush.msra.mxu0 %v78
  %248 = vmatpush.msra.mxu0 %v73
  %249 = vmatmul.f32.gmra.mxu0 %v65
  %v250 = vpop.f32.mrf.mxu0
  %v251 = vadd.f32 0.0, %v250
  %252 = vmatmul.f32.gmra.mxu0 %v67
  %v253 = vpop.f32.mrf.mxu0
  %v254 = vadd.f32 0.0, %v253
  %255 = vmatmul.f32.gmra.mxu0 %v69
  %v256 = vpop.f32.mrf.mxu0
  %v257 = vadd.f32 0.0, %v256
  %258 = vmatmul.f32.gmra.mxu0 %v71
  %v259 = vpop.f32.mrf.mxu0
  %v260 = vadd.f32 0.0, %v259
  %261 = vdwg.mxu0
  %262 = vmatpush.msra.mxu0 %v228
  %263 = vmatpush.msra.mxu0 %v223
  %264 = vmatpush.msra.mxu0 %v218
  %265 = vmatpush.msra.mxu0 %v213
  %266 = vmatpush.msra.mxu0 %v208
  %267 = vmatpush.msra.mxu0 %v203
  %268 = vmatpush.msra.mxu0 %v198
  %269 = vmatpush.msra.mxu0 %v193
  %270 = vmatpush.msra.mxu0 %v188
  %271 = vmatpush.msra.mxu0 %v183
  %272 = vmatpush.msra.mxu0 %v178
  %273 = vmatpush.msra.mxu0 %v173
  %274 = vmatpush.msra.mxu0 %v168
  %275 = vmatpush.msra.mxu0 %v163
  %276 = vmatpush.msra.mxu0 %v158
  %277 = vmatpush.msra.mxu0 %v153
  %278 = vmatmul.f32.gmra.mxu0 %v66
  %v279 = vpop.f32.mrf.mxu0
  %v280 = vadd.f32 %v251, %v279
  %281 = vmatmul.f32.gmra.mxu0 %v68
  %v282 = vpop.f32.mrf.mxu0
  %v283 = vadd.f32 %v254, %v282
  %284 = vmatmul.f32.gmra.mxu0 %v70
  %v285 = vpop.f32.mrf.mxu0
  %v286 = vadd.f32 %v257, %v285
  %287 = vmatmul.f32.gmra.mxu0 %v72
  %v288 = vpop.f32.mrf.mxu0
  %v289 = vadd.f32 %v260, %v288
  %290 = vdwg.mxu0
  %291 = vmatpush.msra.mxu0 %v149
  %292 = vmatpush.msra.mxu0 %v144
  %293 = vmatpush.msra.mxu0 %v139
  %294 = vmatpush.msra.mxu0 %v134
  %295 = vmatpush.msra.mxu0 %v129
  %296 = vmatpush.msra.mxu0 %v124
  %297 = vmatpush.msra.mxu0 %v119
  %298 = vmatpush.msra.mxu0 %v114
  %299 = vmatpush.msra.mxu0 %v109
  %300 = vmatpush.msra.mxu0 %v104
  %301 = vmatpush.msra.mxu0 %v99
  %302 = vmatpush.msra.mxu0 %v94
  %303 = vmatpush.msra.mxu0 %v89
  %304 = vmatpush.msra.mxu0 %v84
  %305 = vmatpush.msra.mxu0 %v79
  %306 = vmatpush.msra.mxu0 %v74
  %307 = vmatmul.f32.gmra.mxu0 %v65
  %v308 = vpop.f32.mrf.mxu0
  %v309 = vadd.f32 0.0, %v308
  %310 = vmatmul.f32.gmra.mxu0 %v67
  %v311 = vpop.f32.mrf.mxu0
  %v312 = vadd.f32 0.0, %v311
  %313 = vmatmul.f32.gmra.mxu0 %v69
  %v314 = vpop.f32.mrf.mxu0
  %v315 = vadd.f32 0.0, %v314
  %316 = vmatmul.f32.gmra.mxu0 %v71
  %v317 = vpop.f32.mrf.mxu0
  %v318 = vadd.f32 0.0, %v317
  %319 = vdwg.mxu0
  %320 = vmatpush.msra.mxu0 %v229
  %321 = vmatpush.msra.mxu0 %v224
  %322 = vmatpush.msra.mxu0 %v219
  %323 = vmatpush.msra.mxu0 %v214
  %324 = vmatpush.msra.mxu0 %v209
  %325 = vmatpush.msra.mxu0 %v204
  %326 = vmatpush.msra.mxu0 %v199
  %327 = vmatpush.msra.mxu0 %v194
  %328 = vmatpush.msra.mxu0 %v189
  %329 = vmatpush.msra.mxu0 %v184
  %330 = vmatpush.msra.mxu0 %v179
  %331 = vmatpush.msra.mxu0 %v174
  %332 = vmatpush.msra.mxu0 %v169
  %333 = vmatpush.msra.mxu0 %v164
  %334 = vmatpush.msra.mxu0 %v159
  %335 = vmatpush.msra.mxu0 %v154
  %336 = vmatmul.f32.gmra.mxu0 %v66
  %v337 = vpop.f32.mrf.mxu0
  %v338 = vadd.f32 %v309, %v337
  %339 = vmatmul.f32.gmra.mxu0 %v68
  %v340 = vpop.f32.mrf.mxu0
  %v341 = vadd.f32 %v312, %v340
  %342 = vmatmul.f32.gmra.mxu0 %v70
  %v343 = vpop.f32.mrf.mxu0
  %v344 = vadd.f32 %v315, %v343
  %345 = vmatmul.f32.gmra.mxu0 %v72
  %v346 = vpop.f32.mrf.mxu0
  %v347 = vadd.f32 %v318, %v346
  %348 = vdwg.mxu0
  %349 = vmatpush.msra.mxu0 %v150
  %350 = vmatpush.msra.mxu0 %v145
  %351 = vmatpush.msra.mxu0 %v140
  %352 = vmatpush.msra.mxu0 %v135
  %353 = vmatpush.msra.mxu0 %v130
  %354 = vmatpush.msra.mxu0 %v125
  %355 = vmatpush.msra.mxu0 %v120
  %356 = vmatpush.msra.mxu0 %v115
  %357 = vmatpush.msra.mxu0 %v110
  %358 = vmatpush.msra.mxu0 %v105
  %359 = vmatpush.msra.mxu0 %v100
  %360 = vmatpush.msra.mxu0 %v95
  %361 = vmatpush.msra.mxu0 %v90
  %362 = vmatpush.msra.mxu0 %v85
  %363 = vmatpush.msra.mxu0 %v80
  %364 = vmatpush.msra.mxu0 %v75
  %365 = vmatmul.f32.gmra.mxu0 %v65
  %v366 = vpop.f32.mrf.mxu0
  %v367 = vadd.f32 0.0, %v366
  %368 = vmatmul.f32.gmra.mxu0 %v67
  %v369 = vpop.f32.mrf.mxu0
  %v370 = vadd.f32 0.0, %v369
  %371 = vmatmul.f32.gmra.mxu0 %v69
  %v372 = vpop.f32.mrf.mxu0
  %v373 = vadd.f32 0.0, %v372
  %374 = vmatmul.f32.gmra.mxu0 %v71
  %v375 = vpop.f32.mrf.mxu0
  %v376 = vadd.f32 0.0, %v375
  %377 = vdwg.mxu0
  %378 = vmatpush.msra.mxu0 %v230
  %379 = vmatpush.msra.mxu0 %v225
  %380 = vmatpush.msra.mxu0 %v220
  %381 = vmatpush.msra.mxu0 %v215
  %382 = vmatpush.msra.mxu0 %v210
  %383 = vmatpush.msra.mxu0 %v205
  %384 = vmatpush.msra.mxu0 %v200
  %385 = vmatpush.msra.mxu0 %v195
  %386 = vmatpush.msra.mxu0 %v190
  %387 = vmatpush.msra.mxu0 %v185
  %388 = vmatpush.msra.mxu0 %v180
  %389 = vmatpush.msra.mxu0 %v175
  %390 = vmatpush.msra.mxu0 %v170
  %391 = vmatpush.msra.mxu0 %v165
  %392 = vmatpush.msra.mxu0 %v160
  %393 = vmatpush.msra.mxu0 %v155
  %394 = vmatmul.f32.gmra.mxu0 %v66
  %v395 = vpop.f32.mrf.mxu0
  %v396 = vadd.f32 %v367, %v395
  %397 = vmatmul.f32.gmra.mxu0 %v68
  %v398 = vpop.f32.mrf.mxu0
  %v399 = vadd.f32 %v370, %v398
  %400 = vmatmul.f32.gmra.mxu0 %v70
  %v401 = vpop.f32.mrf.mxu0
  %v402 = vadd.f32 %v373, %v401
  %403 = vmatmul.f32.gmra.mxu0 %v72
  %v404 = vpop.f32.mrf.mxu0
  %v405 = vadd.f32 %v376, %v404
  %406 = vdwg.mxu0
  %407 = vmatpush.msra.mxu0 %v151
  %408 = vmatpush.msra.mxu0 %v146
  %409 = vmatpush.msra.mxu0 %v141
  %410 = vmatpush.msra.mxu0 %v136
  %411 = vmatpush.msra.mxu0 %v131
  %412 = vmatpush.msra.mxu0 %v126
  %413 = vmatpush.msra.mxu0 %v121
  %414 = vmatpush.msra.mxu0 %v116
  %415 = vmatpush.msra.mxu0 %v111
  %416 = vmatpush.msra.mxu0 %v106
  %417 = vmatpush.msra.mxu0 %v101
  %418 = vmatpush.msra.mxu0 %v96
  %419 = vmatpush.msra.mxu0 %v91
  %420 = vmatpush.msra.mxu0 %v86
  %421 = vmatpush.msra.mxu0 %v81
  %422 = vmatpush.msra.mxu0 %v76
  %423 = vmatmul.f32.gmra.mxu0 %v65
  %v424 = vpop.f32.mrf.mxu0
  %v425 = vadd.f32 0.0, %v424
  %426 = vmatmul.f32.gmra.mxu0 %v67
  %v427 = vpop.f32.mrf.mxu0
  %v428 = vadd.f32 0.0, %v427
  %429 = vmatmul.f32.gmra.mxu0 %v69
  %v430 = vpop.f32.mrf.mxu0
  %v431 = vadd.f32 0.0, %v430
  %432 = vmatmul.f32.gmra.mxu0 %v71
  %v433 = vpop.f32.mrf.mxu0
  %v434 = vadd.f32 0.0, %v433
  %435 = vdwg.mxu0
  %436 = vmatpush.msra.mxu0 %v231
  %437 = vmatpush.msra.mxu0 %v226
  %438 = vmatpush.msra.mxu0 %v221
  %439 = vmatpush.msra.mxu0 %v216
  %440 = vmatpush.msra.mxu0 %v211
  %441 = vmatpush.msra.mxu0 %v206
  %442 = vmatpush.msra.mxu0 %v201
  %443 = vmatpush.msra.mxu0 %v196
  %444 = vmatpush.msra.mxu0 %v191
  %445 = vmatpush.msra.mxu0 %v186
  %446 = vmatpush.msra.mxu0 %v181
  %447 = vmatpush.msra.mxu0 %v176
  %448 = vmatpush.msra.mxu0 %v171
  %449 = vmatpush.msra.mxu0 %v166
  %450 = vmatpush.msra.mxu0 %v161
  %451 = vmatpush.msra.mxu0 %v156
  %452 = vmatmul.f32.gmra.mxu0 %v66
  %v453 = vpop.f32.mrf.mxu0
  %v454 = vadd.f32 %v425, %v453
  %455 = vmatmul.f32.gmra.mxu0 %v68
  %v456 = vpop.f32.mrf.mxu0
  %v457 = vadd.f32 %v428, %v456
  %458 = vmatmul.f32.gmra.mxu0 %v70
  %v459 = vpop.f32.mrf.mxu0
  %v460 = vadd.f32 %v431, %v459
  %461 = vmatmul.f32.gmra.mxu0 %v72
  %v462 = vpop.f32.mrf.mxu0
  %v463 = vadd.f32 %v434, %v462
  %464 = vdwg.mxu0
  %465 = vmatpush.msra.mxu0 %v152
  %466 = vmatpush.msra.mxu0 %v147
  %467 = vmatpush.msra.mxu0 %v142
  %468 = vmatpush.msra.mxu0 %v137
  %469 = vmatpush.msra.mxu0 %v132
  %470 = vmatpush.msra.mxu0 %v127
  %471 = vmatpush.msra.mxu0 %v122
  %472 = vmatpush.msra.mxu0 %v117
  %473 = vmatpush.msra.mxu0 %v112
  %474 = vmatpush.msra.mxu0 %v107
  %475 = vmatpush.msra.mxu0 %v102
  %476 = vmatpush.msra.mxu0 %v97
  %477 = vmatpush.msra.mxu0 %v92
  %478 = vmatpush.msra.mxu0 %v87
  %479 = vmatpush.msra.mxu0 %v82
  %480 = vmatpush.msra.mxu0 %v77
  %481 = vmatmul.f32.gmra.mxu0 %v65
  %v482 = vpop.f32.mrf.mxu0
  %v483 = vadd.f32 0.0, %v482
  %484 = vmatmul.f32.gmra.mxu0 %v67
  %v485 = vpop.f32.mrf.mxu0
  %v486 = vadd.f32 0.0, %v485
  %487 = vmatmul.f32.gmra.mxu0 %v69
  %v488 = vpop.f32.mrf.mxu0
  %v489 = vadd.f32 0.0, %v488
  %490 = vmatmul.f32.gmra.mxu0 %v71
  %v491 = vpop.f32.mrf.mxu0
  %v492 = vadd.f32 0.0, %v491
  %493 = vdwg.mxu0
  %494 = vmatpush.msra.mxu0 %v232
  %495 = vmatpush.msra.mxu0 %v227
  %496 = vmatpush.msra.mxu0 %v222
  %497 = vmatpush.msra.mxu0 %v217
  %498 = vmatpush.msra.mxu0 %v212
  %499 = vmatpush.msra.mxu0 %v207
  %500 = vmatpush.msra.mxu0 %v202
  %501 = vmatpush.msra.mxu0 %v197
  %502 = vmatpush.msra.mxu0 %v192
  %503 = vmatpush.msra.mxu0 %v187
  %504 = vmatpush.msra.mxu0 %v182
  %505 = vmatpush.msra.mxu0 %v177
  %506 = vmatpush.msra.mxu0 %v172
  %507 = vmatpush.msra.mxu0 %v167
  %508 = vmatpush.msra.mxu0 %v162
  %509 = vmatpush.msra.mxu0 %v157
  %510 = vmatmul.f32.gmra.mxu0 %v66
  %v511 = vpop.f32.mrf.mxu0
  %v512 = vadd.f32 %v483, %v511
  %513 = vmatmul.f32.gmra.mxu0 %v68
  %v514 = vpop.f32.mrf.mxu0
  %v515 = vadd.f32 %v486, %v514
  %516 = vmatmul.f32.gmra.mxu0 %v70
  %v517 = vpop.f32.mrf.mxu0
  %v518 = vadd.f32 %v489, %v517
  %519 = vmatmul.f32.gmra.mxu0 %v72
  %v520 = vpop.f32.mrf.mxu0
  %v521 = vadd.f32 %v492, %v520
  %522 = vdwg.mxu0
  %v523 = vld [vmem:[%s4] sm:$0xff]
  %v524 = vld [vmem:[%s4 + $0x8] sm:$0xff]
  %v526 = vperm.slane %v63, 0
  %v527 = vperm.slane %v63, 1
  %v528 = vperm.slane %v63, 2
  %v529 = vperm.slane %v63, 3
  %v530 = vperm.slane %v63, 4
  %v536 = vmul.f32 %v280, %v526
  %v537 = vmul.f32 %v338, %v527
  %v538 = vmul.f32 %v396, %v528
  %v539 = vmul.f32 %v454, %v529
  %v540 = vmul.f32 %v512, %v530
  %v541 = vmul.f32 %v283, %v526
  %v542 = vmul.f32 %v341, %v527
  %v543 = vmul.f32 %v399, %v528
  %v544 = vmul.f32 %v457, %v529
  %v545 = vmul.f32 %v515, %v530
  %v546 = vadd.f32 %v536, %v537
  %v547 = vadd.f32 %v546, %v538
  %v548 = vadd.f32 %v547, %v539
  %vm549 = vcmask 924672
  %v550 = vsel %vm549, %v540, 0.0
  %v551 = vadd.f32 %v548, %v550
  %552 = vadd.xlane.f32.xlu0 %v551
  %v553 = vpop.xlane.xlu0 %552
  %v554 = vadd.f32 %v541, %v542
  %v555 = vadd.f32 %v554, %v543
  %v556 = vadd.f32 %v555, %v544
  %v557 = vsel %vm549, %v545, 0.0
  %v558 = vadd.f32 %v556, %v557
  %559 = vadd.xlane.f32.xlu0 %v558
  %v560 = vpop.xlane.xlu0 %559
  %v561 = vmul.f32 %v286, %v526
  %v562 = vmul.f32 %v344, %v527
  %v563 = vmul.f32 %v402, %v528
  %v564 = vmul.f32 %v460, %v529
  %v565 = vmul.f32 %v518, %v530
  %v566 = vmul.f32 %v289, %v526
  %v567 = vmul.f32 %v347, %v527
  %v568 = vmul.f32 %v405, %v528
  %v569 = vmul.f32 %v463, %v529
  %v570 = vmul.f32 %v521, %v530
  %v571 = vadd.f32 %v561, %v562
  %v572 = vadd.f32 %v571, %v563
  %v573 = vadd.f32 %v572, %v564
  %v574 = vsel %vm549, %v565, 0.0
  %v575 = vadd.f32 %v573, %v574
  %576 = vadd.xlane.f32.xlu0 %v575
  %v577 = vpop.xlane.xlu0 %576
  %v578 = vadd.f32 %v566, %v567
  %v579 = vadd.f32 %v578, %v568
  %v580 = vadd.f32 %v579, %v569
  %v581 = vsel %vm549, %v570, 0.0
  %v582 = vadd.f32 %v580, %v581
  %583 = vadd.xlane.f32.xlu0 %v582
  %v584 = vpop.xlane.xlu0 %583
  %v585 = vadd.f32 %v553, %v577
  %v586 = vadd.f32 %v560, %v584
  %v587 = vrcp.pop 162.0
  %v588 = vmul.f32 162.0, %v587
  %v589 = vsub.f32 1.0, %v588
  %v590 = vmul.f32 %v587, %v589
  %v591 = vadd.f32 %v587, %v590
  %vm592 = vweird.f32 %v587
  %v593 = vsel %vm592, %v587, %v591
  %v594 = vmul.f32 %v585, %v593
  %v595 = vmul.f32 %v586, %v593
  %v596 = vsub.f32 %v280, %v594
  %v597 = vsub.f32 %v338, %v594
  %v598 = vsub.f32 %v396, %v594
  %v599 = vsub.f32 %v454, %v594
  %v600 = vsub.f32 %v512, %v594
  %v601 = vsub.f32 %v283, %v595
  %v602 = vsub.f32 %v341, %v595
  %v603 = vsub.f32 %v399, %v595
  %v604 = vsub.f32 %v457, %v595
  %v605 = vsub.f32 %v515, %v595
  %v606 = vmul.f32 %v596, %v526
  %v607 = vmul.f32 %v597, %v527
  %v608 = vmul.f32 %v598, %v528
  %v609 = vmul.f32 %v599, %v529
  %v610 = vmul.f32 %v600, %v530
  %v611 = vmul.f32 %v601, %v526
  %v612 = vmul.f32 %v602, %v527
  %v613 = vmul.f32 %v603, %v528
  %v614 = vmul.f32 %v604, %v529
  %v615 = vmul.f32 %v605, %v530
  %v616 = vmul.f32 %v606, %v606
  %v617 = vmul.f32 %v607, %v607
  %v618 = vmul.f32 %v608, %v608
  %v619 = vmul.f32 %v609, %v609
  %v620 = vmul.f32 %v610, %v610
  %v621 = vmul.f32 %v611, %v611
  %v622 = vmul.f32 %v612, %v612
  %v623 = vmul.f32 %v613, %v613
  %v624 = vmul.f32 %v614, %v614
  %v625 = vmul.f32 %v615, %v615
  %v626 = vadd.f32 %v616, %v617
  %v627 = vadd.f32 %v626, %v618
  %v628 = vadd.f32 %v627, %v619
  %v629 = vsel %vm549, %v620, 0.0
  %v630 = vadd.f32 %v628, %v629
  %631 = vadd.xlane.f32.xlu0 %v630
  %v632 = vpop.xlane.xlu0 %631
  %v633 = vadd.f32 %v621, %v622
  %v634 = vadd.f32 %v633, %v623
  %v635 = vadd.f32 %v634, %v624
  %v636 = vsel %vm549, %v625, 0.0
  %v637 = vadd.f32 %v635, %v636
  %638 = vadd.xlane.f32.xlu0 %v637
  %v639 = vpop.xlane.xlu0 %638
  %v640 = vsub.f32 %v286, %v594
  %v641 = vsub.f32 %v344, %v594
  %v642 = vsub.f32 %v402, %v594
  %v643 = vsub.f32 %v460, %v594
  %v644 = vsub.f32 %v518, %v594
  %v645 = vsub.f32 %v289, %v595
  %v646 = vsub.f32 %v347, %v595
  %v647 = vsub.f32 %v405, %v595
  %v648 = vsub.f32 %v463, %v595
  %v649 = vsub.f32 %v521, %v595
  %v650 = vmul.f32 %v640, %v526
  %v651 = vmul.f32 %v641, %v527
  %v652 = vmul.f32 %v642, %v528
  %v653 = vmul.f32 %v643, %v529
  %v654 = vmul.f32 %v644, %v530
  %v655 = vmul.f32 %v645, %v526
  %v656 = vmul.f32 %v646, %v527
  %v657 = vmul.f32 %v647, %v528
  %v658 = vmul.f32 %v648, %v529
  %v659 = vmul.f32 %v649, %v530
  %v660 = vmul.f32 %v650, %v650
  %v661 = vmul.f32 %v651, %v651
  %v662 = vmul.f32 %v652, %v652
  %v663 = vmul.f32 %v653, %v653
  %v664 = vmul.f32 %v654, %v654
  %v665 = vmul.f32 %v655, %v655
  %v666 = vmul.f32 %v656, %v656
  %v667 = vmul.f32 %v657, %v657
  %v668 = vmul.f32 %v658, %v658
  %v669 = vmul.f32 %v659, %v659
  %v670 = vadd.f32 %v660, %v661
  %v671 = vadd.f32 %v670, %v662
  %v672 = vadd.f32 %v671, %v663
  %v673 = vsel %vm549, %v664, 0.0
  %v674 = vadd.f32 %v672, %v673
  %675 = vadd.xlane.f32.xlu0 %v674
  %v676 = vpop.xlane.xlu0 %675
  %v677 = vadd.f32 %v665, %v666
  %v678 = vadd.f32 %v677, %v667
  %v679 = vadd.f32 %v678, %v668
  %v680 = vsel %vm549, %v669, 0.0
  %v681 = vadd.f32 %v679, %v680
  %682 = vadd.xlane.f32.xlu0 %v681
  %v683 = vpop.xlane.xlu0 %682
  %v684 = vadd.f32 %v632, %v676
  %v685 = vadd.f32 %v639, %v683
  %v686 = vmul.f32 %v684, %v593
  %v687 = vmul.f32 %v685, %v593
  %v688 = vadd.f32 %v686, 1e-05
  %v689 = vadd.f32 %v687, 1e-05
  %v690 = vrsqrt.pop %v688
  %v691 = vmul.f32 %v690, %v688
  %v692 = vmul.f32 %v691, %v690
  %v693 = vmul.f32 0.5, %v692
  %v694 = vsub.f32 1.5, %v693
  %v695 = vmul.f32 %v690, %v694
  %vm696 = vweird.f32 %v688
  %vm697 = vweird.f32 %v690
  %vm698 = vmor %vm696, %vm697
  %v699 = vsel %vm698, %v690, %v695
  %v700 = vrsqrt.pop %v689
  %v701 = vmul.f32 %v700, %v689
  %v702 = vmul.f32 %v701, %v700
  %v703 = vmul.f32 0.5, %v702
  %v704 = vsub.f32 1.5, %v703
  %v705 = vmul.f32 %v700, %v704
  %vm706 = vweird.f32 %v689
  %vm707 = vweird.f32 %v700
  %vm708 = vmor %vm706, %vm707
  %v709 = vsel %vm708, %v700, %v705
  %v710 = vmul.f32 %v699, %v523
  %v711 = vmul.f32 %v709, %v524
  %713 = vset.pattern.permute.xlu0 0
  %714 = vperm.xlu0 %713, %v710
  %v715 = vpop.permute.xlu0 %714
  %718 = vset.pattern.permute.xlu0 0
  %719 = vperm.xlu0 %718, %v711
  %v720 = vpop.permute.xlu0 %719
  %v722 = vmul.f32 %v596, %v715
  %v723 = vmul.f32 %v597, %v715
  %v724 = vmul.f32 %v598, %v715
  %v725 = vmul.f32 %v599, %v715
  %v726 = vmul.f32 %v600, %v715
  %v727 = vmul.f32 %v601, %v720
  %v728 = vmul.f32 %v602, %v720
  %v729 = vmul.f32 %v603, %v720
  %v730 = vmul.f32 %v604, %v720
  %v731 = vmul.f32 %v605, %v720
  %733 = vset.pattern.permute.xlu0 1
  %734 = vperm.xlu0 %733, %v523
  %v735 = vpop.permute.xlu0 %734
  %738 = vset.pattern.permute.xlu0 1
  %739 = vperm.xlu0 %738, %v524
  %v740 = vpop.permute.xlu0 %739
  %v742 = vadd.f32 %v722, %v735
  %v743 = vadd.f32 %v723, %v735
  %v744 = vadd.f32 %v724, %v735
  %v745 = vadd.f32 %v725, %v735
  %v746 = vadd.f32 %v726, %v735
  %v747 = vadd.f32 %v727, %v740
  %v748 = vadd.f32 %v728, %v740
  %v749 = vadd.f32 %v729, %v740
  %v750 = vadd.f32 %v730, %v740
  %v751 = vadd.f32 %v731, %v740
  %v752 = vmax.f32 %v742, 0.0
  %v753 = vmax.f32 %v743, 0.0
  %v754 = vmax.f32 %v744, 0.0
  %v755 = vmax.f32 %v745, 0.0
  %v756 = vmax.f32 %v746, 0.0
  %v757 = vmax.f32 %v747, 0.0
  %v758 = vmax.f32 %v748, 0.0
  %v759 = vmax.f32 %v749, 0.0
  %v760 = vmax.f32 %v750, 0.0
  %v761 = vmax.f32 %v751, 0.0
  %v762 = vmul.f32 %v752, %v526
  %v763 = vmul.f32 %v753, %v527
  %v764 = vmul.f32 %v754, %v528
  %v765 = vmul.f32 %v755, %v529
  %v766 = vmul.f32 %v756, %v530
  %v767 = vmul.f32 %v757, %v526
  %v768 = vmul.f32 %v758, %v527
  %v769 = vmul.f32 %v759, %v528
  %v770 = vmul.f32 %v760, %v529
  %v771 = vmul.f32 %v761, %v530
  %772 = vst [vmem:[#allocation2] sm:$0xff] %v762
  %773 = vst [vmem:[#allocation2 + $0x8] sm:$0xff] %v763
  %774 = vst [vmem:[#allocation2 + $0x10] sm:$0xff] %v764
  %775 = vst [vmem:[#allocation2 + $0x18] sm:$0xff] %v765
  %776 = vst.msk [vmem:[#allocation2 + $0x20] sm:$0xff] %vm549, %v766
  %777 = vst [vmem:[#allocation2 + $0x30] sm:$0xff] %v767
  %778 = vst [vmem:[#allocation2 + $0x38] sm:$0xff] %v768
  %779 = vst [vmem:[#allocation2 + $0x40] sm:$0xff] %v769
  %780 = vst [vmem:[#allocation2 + $0x48] sm:$0xff] %v770
  %781 = vst.msk [vmem:[#allocation2 + $0x50] sm:$0xff] %vm549, %v771
  %v782 = vmul.f32 %v640, %v715
  %v783 = vmul.f32 %v641, %v715
  %v784 = vmul.f32 %v642, %v715
  %v785 = vmul.f32 %v643, %v715
  %v786 = vmul.f32 %v644, %v715
  %v787 = vmul.f32 %v645, %v720
  %v788 = vmul.f32 %v646, %v720
  %v789 = vmul.f32 %v647, %v720
  %v790 = vmul.f32 %v648, %v720
  %v791 = vmul.f32 %v649, %v720
  %v792 = vadd.f32 %v782, %v735
  %v793 = vadd.f32 %v783, %v735
  %v794 = vadd.f32 %v784, %v735
  %v795 = vadd.f32 %v785, %v735
  %v796 = vadd.f32 %v786, %v735
  %v797 = vadd.f32 %v787, %v740
  %v798 = vadd.f32 %v788, %v740
  %v799 = vadd.f32 %v789, %v740
  %v800 = vadd.f32 %v790, %v740
  %v801 = vadd.f32 %v791, %v740
  %v802 = vmax.f32 %v792, 0.0
  %v803 = vmax.f32 %v793, 0.0
  %v804 = vmax.f32 %v794, 0.0
  %v805 = vmax.f32 %v795, 0.0
  %v806 = vmax.f32 %v796, 0.0
  %v807 = vmax.f32 %v797, 0.0
  %v808 = vmax.f32 %v798, 0.0
  %v809 = vmax.f32 %v799, 0.0
  %v810 = vmax.f32 %v800, 0.0
  %v811 = vmax.f32 %v801, 0.0
  %v812 = vmul.f32 %v802, %v526
  %v813 = vmul.f32 %v803, %v527
  %v814 = vmul.f32 %v804, %v528
  %v815 = vmul.f32 %v805, %v529
  %v816 = vmul.f32 %v806, %v530
  %v817 = vmul.f32 %v807, %v526
  %v818 = vmul.f32 %v808, %v527
  %v819 = vmul.f32 %v809, %v528
  %v820 = vmul.f32 %v810, %v529
  %v821 = vmul.f32 %v811, %v530
  %822 = vst [vmem:[#allocation2 + $0x60] sm:$0xff] %v812
  %823 = vst [vmem:[#allocation2 + $0x68] sm:$0xff] %v813
  %824 = vst [vmem:[#allocation2 + $0x70] sm:$0xff] %v814
  %825 = vst [vmem:[#allocation2 + $0x78] sm:$0xff] %v815
  %826 = vst.msk [vmem:[#allocation2 + $0x80] sm:$0xff] %vm549, %v816
  %827 = vst [vmem:[#allocation2 + $0x90] sm:$0xff] %v817
  %828 = vst [vmem:[#allocation2 + $0x98] sm:$0xff] %v818
  %829 = vst [vmem:[#allocation2 + $0xa0] sm:$0xff] %v819
  %830 = vst [vmem:[#allocation2 + $0xa8] sm:$0xff] %v820
  %831 = vst.msk [vmem:[#allocation2 + $0xb0] sm:$0xff] %vm549, %v821
  %v832 = vld [vmem:[#allocation2] sm:$0xff]
  %v833 = vld [vmem:[#allocation2 + $0x8] sm:$0xff]
  %v834 = vld [vmem:[#allocation2 + $0x10] sm:$0xff]
  %v835 = vld [vmem:[#allocation2 + $0x18] sm:$0xff]
  %v836 = vld [vmem:[#allocation2 + $0x20] sm:$0xff]
  %v837 = vld [vmem:[#allocation2 + $0x30] sm:$0xff]
  %v838 = vld [vmem:[#allocation2 + $0x38] sm:$0xff]
  %v839 = vld [vmem:[#allocation2 + $0x40] sm:$0xff]
  %v840 = vld [vmem:[#allocation2 + $0x48] sm:$0xff]
  %v841 = vld [vmem:[#allocation2 + $0x50] sm:$0xff]
  %v842 = vld [vmem:[#allocation2 + $0x60] sm:$0xff]
  %v843 = vld [vmem:[#allocation2 + $0x68] sm:$0xff]
  %v844 = vld [vmem:[#allocation2 + $0x70] sm:$0xff]
  %v845 = vld [vmem:[#allocation2 + $0x78] sm:$0xff]
  %v846 = vld [vmem:[#allocation2 + $0x80] sm:$0xff]
  %v847 = vld [vmem:[#allocation2 + $0x90] sm:$0xff]
  %v848 = vld [vmem:[#allocation2 + $0x98] sm:$0xff]
  %v849 = vld [vmem:[#allocation2 + $0xa0] sm:$0xff]
  %v850 = vld [vmem:[#allocation2 + $0xa8] sm:$0xff]
  %v851 = vld [vmem:[#allocation2 + $0xb0] sm:$0xff]
  %v852 = vld [vmem:[%s2] sm:$0xff]
  %v853 = vld [vmem:[%s2 + $0x8] sm:$0xff]
  %s854 = scalar_lea.vmem %s2, 16
  %v855 = vld [vmem:[%s854] sm:$0xff]
  %v856 = vld [vmem:[%s854 + $0x8] sm:$0xff]
  %877 = vrot.lane.b32.xlu0 %v832, 127
  %v878 = vpop.permute.xlu0 %877
  %879 = vrot.lane.b32.xlu0 %v833, 127
  %v880 = vpop.permute.xlu0 %879
  %881 = vrot.lane.b32.xlu0 %v834, 127
  %v882 = vpop.permute.xlu0 %881
  %883 = vrot.lane.b32.xlu0 %v835, 127
  %v884 = vpop.permute.xlu0 %883
  %885 = vrot.lane.b32.xlu0 %v836, 127
  %v886 = vpop.permute.xlu0 %885
  %887 = vrot.lane.b32.xlu0 %v837, 127
  %v888 = vpop.permute.xlu0 %887
  %889 = vrot.lane.b32.xlu0 %v838, 127
  %v890 = vpop.permute.xlu0 %889
  %891 = vrot.lane.b32.xlu0 %v839, 127
  %v892 = vpop.permute.xlu0 %891
  %893 = vrot.lane.b32.xlu0 %v840, 127
  %v894 = vpop.permute.xlu0 %893
  %895 = vrot.lane.b32.xlu0 %v841, 127
  %v896 = vpop.permute.xlu0 %895
  %897 = vrot.lane.b32.xlu0 %v842, 127
  %v898 = vpop.permute.xlu0 %897
  %899 = vrot.lane.b32.xlu0 %v843, 127
  %v900 = vpop.permute.xlu0 %899
  %901 = vrot.lane.b32.xlu0 %v844, 127
  %v902 = vpop.permute.xlu0 %901
  %903 = vrot.lane.b32.xlu0 %v845, 127
  %v904 = vpop.permute.xlu0 %903
  %905 = vrot.lane.b32.xlu0 %v846, 127
  %v906 = vpop.permute.xlu0 %905
  %907 = vrot.lane.b32.xlu0 %v847, 127
  %v908 = vpop.permute.xlu0 %907
  %909 = vrot.lane.b32.xlu0 %v848, 127
  %v910 = vpop.permute.xlu0 %909
  %911 = vrot.lane.b32.xlu0 %v849, 127
  %v912 = vpop.permute.xlu0 %911
  %913 = vrot.lane.b32.xlu0 %v850, 127
  %v914 = vpop.permute.xlu0 %913
  %915 = vrot.lane.b32.xlu0 %v851, 127
  %v916 = vpop.permute.xlu0 %915
  %vm917 = vcmask 1039360
  %v918 = vsel %vm917, %v878, %v880
  %v919 = vsel %vm917, %v880, %v882
  %v920 = vsel %vm917, %v882, %v884
  %v921 = vsel %vm917, %v884, %v886
  %v922 = vsel %vm917, %v888, %v890
  %v923 = vsel %vm917, %v890, %v892
  %v924 = vsel %vm917, %v892, %v894
  %v925 = vsel %vm917, %v894, %v896
  %v926 = vsel %vm917, %v898, %v900
  %v927 = vsel %vm917, %v900, %v902
  %v928 = vsel %vm917, %v902, %v904
  %v929 = vsel %vm917, %v904, %v906
  %v930 = vsel %vm917, %v908, %v910
  %v931 = vsel %vm917, %v910, %v912
  %v932 = vsel %vm917, %v912, %v914
  %v933 = vsel %vm917, %v914, %v916
  %vm954 = vcmask 261120
  %v956 = vsel %vm954, %v855, 0
  %v959 = vsel %vm954, %v856, 0
  %961 = vmatpush.msra.mxu0 0.0
  %962 = vmatpush.msra.mxu0 0.0
  %963 = vmatpush.msra.mxu0 0.0
  %964 = vmatpush.msra.mxu0 0.0
  %965 = vmatpush.msra.mxu0 0.0
  %966 = vmatpush.msra.mxu0 0.0
  %967 = vmatpush.msra.mxu0 0.0
  %968 = vmatpush.msra.mxu0 0.0
  %969 = vmatpush.msra.mxu0 0.0
  %970 = vmatpush.msra.mxu0 0.0
  %971 = vmatpush.msra.mxu0 0.0
  %972 = vmatpush.msra.mxu0 0.0
  %973 = vmatpush.msra.mxu0 %v930
  %974 = vmatpush.msra.mxu0 %v926
  %975 = vmatpush.msra.mxu0 %v922
  %976 = vmatpush.msra.mxu0 %v918
  %977 = vmatmul.f32.gmra.mxu0 %v956
  %v978 = vpop.f32.mrf.mxu0
  %v979 = vadd.f32 0.0, %v978
  %980 = vmatmul.f32.gmra.mxu0 %v959
  %v981 = vpop.f32.mrf.mxu0
  %v982 = vadd.f32 0.0, %v981
  %983 = vdwg.mxu0
  %984 = vmatpush.msra.mxu0 0.0
  %985 = vmatpush.msra.mxu0 0.0
  %986 = vmatpush.msra.mxu0 0.0
  %987 = vmatpush.msra.mxu0 0.0
  %988 = vmatpush.msra.mxu0 0.0
  %989 = vmatpush.msra.mxu0 0.0
  %990 = vmatpush.msra.mxu0 0.0
  %991 = vmatpush.msra.mxu0 0.0
  %992 = vmatpush.msra.mxu0 0.0
  %993 = vmatpush.msra.mxu0 0.0
  %994 = vmatpush.msra.mxu0 0.0
  %995 = vmatpush.msra.mxu0 0.0
  %996 = vmatpush.msra.mxu0 %v931
  %997 = vmatpush.msra.mxu0 %v927
  %998 = vmatpush.msra.mxu0 %v923
  %999 = vmatpush.msra.mxu0 %v919
  %1000 = vmatmul.f32.gmra.mxu0 %v956
  %v1001 = vpop.f32.mrf.mxu0
  %v1002 = vadd.f32 0.0, %v1001
  %1003 = vmatmul.f32.gmra.mxu0 %v959
  %v1004 = vpop.f32.mrf.mxu0
  %v1005 = vadd.f32 0.0, %v1004
  %1006 = vdwg.mxu0
  %1007 = vmatpush.msra.mxu0 0.0
  %1008 = vmatpush.msra.mxu0 0.0
  %1009 = vmatpush.msra.mxu0 0.0
  %1010 = vmatpush.msra.mxu0 0.0
  %1011 = vmatpush.msra.mxu0 0.0
  %1012 = vmatpush.msra.mxu0 0.0
  %1013 = vmatpush.msra.mxu0 0.0
  %1014 = vmatpush.msra.mxu0 0.0
  %1015 = vmatpush.msra.mxu0 0.0
  %1016 = vmatpush.msra.mxu0 0.0
  %1017 = vmatpush.msra.mxu0 0.0
  %1018 = vmatpush.msra.mxu0 0.0
  %1019 = vmatpush.msra.mxu0 %v932
  %1020 = vmatpush.msra.mxu0 %v928
  %1021 = vmatpush.msra.mxu0 %v924
  %1022 = vmatpush.msra.mxu0 %v920
  %1023 = vmatmul.f32.gmra.mxu0 %v956
  %v1024 = vpop.f32.mrf.mxu0
  %v1025 = vadd.f32 0.0, %v1024
  %1026 = vmatmul.f32.gmra.mxu0 %v959
  %v1027 = vpop.f32.mrf.mxu0
  %v1028 = vadd.f32 0.0, %v1027
  %1029 = vdwg.mxu0
  %1030 = vmatpush.msra.mxu0 0.0
  %1031 = vmatpush.msra.mxu0 0.0
  %1032 = vmatpush.msra.mxu0 0.0
  %1033 = vmatpush.msra.mxu0 0.0
  %1034 = vmatpush.msra.mxu0 0.0
  %1035 = vmatpush.msra.mxu0 0.0
  %1036 = vmatpush.msra.mxu0 0.0
  %1037 = vmatpush.msra.mxu0 0.0
  %1038 = vmatpush.msra.mxu0 0.0
  %1039 = vmatpush.msra.mxu0 0.0
  %1040 = vmatpush.msra.mxu0 0.0
  %1041 = vmatpush.msra.mxu0 0.0
  %1042 = vmatpush.msra.mxu0 %v933
  %1043 = vmatpush.msra.mxu0 %v929
  %1044 = vmatpush.msra.mxu0 %v925
  %1045 = vmatpush.msra.mxu0 %v921
  %1046 = vmatmul.f32.gmra.mxu0 %v956
  %v1047 = vpop.f32.mrf.mxu0
  %v1048 = vadd.f32 0.0, %v1047
  %1049 = vmatmul.f32.gmra.mxu0 %v959
  %v1050 = vpop.f32.mrf.mxu0
  %v1051 = vadd.f32 0.0, %v1050
  %1052 = vdwg.mxu0
  %1053 = vmatpush.msra.mxu0 0.0
  %1054 = vmatpush.msra.mxu0 0.0
  %1055 = vmatpush.msra.mxu0 0.0
  %1056 = vmatpush.msra.mxu0 0.0
  %1057 = vmatpush.msra.mxu0 0.0
  %1058 = vmatpush.msra.mxu0 0.0
  %1059 = vmatpush.msra.mxu0 0.0
  %1060 = vmatpush.msra.mxu0 0.0
  %1061 = vmatpush.msra.mxu0 0.0
  %1062 = vmatpush.msra.mxu0 0.0
  %1063 = vmatpush.msra.mxu0 0.0
  %1064 = vmatpush.msra.mxu0 0.0
  %1065 = vmatpush.msra.mxu0 %v916
  %1066 = vmatpush.msra.mxu0 %v906
  %1067 = vmatpush.msra.mxu0 %v896
  %1068 = vmatpush.msra.mxu0 %v886
  %1069 = vmatmul.f32.gmra.mxu0 %v956
  %v1070 = vpop.f32.mrf.mxu0
  %v1071 = vadd.f32 0.0, %v1070
  %1072 = vmatmul.f32.gmra.mxu0 %v959
  %v1073 = vpop.f32.mrf.mxu0
  %v1074 = vadd.f32 0.0, %v1073
  %1075 = vdwg.mxu0
  %v1077 = vsel %vm954, %v852, 0
  %v1080 = vsel %vm954, %v853, 0
  %1082 = vmatpush.msra.mxu0 0.0
  %1083 = vmatpush.msra.mxu0 0.0
  %1084 = vmatpush.msra.mxu0 0.0
  %1085 = vmatpush.msra.mxu0 0.0
  %1086 = vmatpush.msra.mxu0 0.0
  %1087 = vmatpush.msra.mxu0 0.0
  %1088 = vmatpush.msra.mxu0 0.0
  %1089 = vmatpush.msra.mxu0 0.0
  %1090 = vmatpush.msra.mxu0 0.0
  %1091 = vmatpush.msra.mxu0 0.0
  %1092 = vmatpush.msra.mxu0 0.0
  %1093 = vmatpush.msra.mxu0 0.0
  %1094 = vmatpush.msra.mxu0 %v847
  %1095 = vmatpush.msra.mxu0 %v842
  %1096 = vmatpush.msra.mxu0 %v837
  %1097 = vmatpush.msra.mxu0 %v832
  %1098 = vmatmul.f32.gmra.mxu0 %v1077
  %v1099 = vpop.f32.mrf.mxu0
  %v1100 = vadd.f32 %v979, %v1099
  %1101 = vmatmul.f32.gmra.mxu0 %v1080
  %v1102 = vpop.f32.mrf.mxu0
  %v1103 = vadd.f32 %v982, %v1102
  %1104 = vdwg.mxu0
  %1105 = vmatpush.msra.mxu0 0.0
  %1106 = vmatpush.msra.mxu0 0.0
  %1107 = vmatpush.msra.mxu0 0.0
  %1108 = vmatpush.msra.mxu0 0.0
  %1109 = vmatpush.msra.mxu0 0.0
  %1110 = vmatpush.msra.mxu0 0.0
  %1111 = vmatpush.msra.mxu0 0.0
  %1112 = vmatpush.msra.mxu0 0.0
  %1113 = vmatpush.msra.mxu0 0.0
  %1114 = vmatpush.msra.mxu0 0.0
  %1115 = vmatpush.msra.mxu0 0.0
  %1116 = vmatpush.msra.mxu0 0.0
  %1117 = vmatpush.msra.mxu0 %v848
  %1118 = vmatpush.msra.mxu0 %v843
  %1119 = vmatpush.msra.mxu0 %v838
  %1120 = vmatpush.msra.mxu0 %v833
  %1121 = vmatmul.f32.gmra.mxu0 %v1077
  %v1122 = vpop.f32.mrf.mxu0
  %v1123 = vadd.f32 %v1002, %v1122
  %1124 = vmatmul.f32.gmra.mxu0 %v1080
  %v1125 = vpop.f32.mrf.mxu0
  %v1126 = vadd.f32 %v1005, %v1125
  %1127 = vdwg.mxu0
  %1128 = vmatpush.msra.mxu0 0.0
  %1129 = vmatpush.msra.mxu0 0.0
  %1130 = vmatpush.msra.mxu0 0.0
  %1131 = vmatpush.msra.mxu0 0.0
  %1132 = vmatpush.msra.mxu0 0.0
  %1133 = vmatpush.msra.mxu0 0.0
  %1134 = vmatpush.msra.mxu0 0.0
  %1135 = vmatpush.msra.mxu0 0.0
  %1136 = vmatpush.msra.mxu0 0.0
  %1137 = vmatpush.msra.mxu0 0.0
  %1138 = vmatpush.msra.mxu0 0.0
  %1139 = vmatpush.msra.mxu0 0.0
  %1140 = vmatpush.msra.mxu0 %v849
  %1141 = vmatpush.msra.mxu0 %v844
  %1142 = vmatpush.msra.mxu0 %v839
  %1143 = vmatpush.msra.mxu0 %v834
  %1144 = vmatmul.f32.gmra.mxu0 %v1077
  %v1145 = vpop.f32.mrf.mxu0
  %v1146 = vadd.f32 %v1025, %v1145
  %1147 = vmatmul.f32.gmra.mxu0 %v1080
  %v1148 = vpop.f32.mrf.mxu0
  %v1149 = vadd.f32 %v1028, %v1148
  %1150 = vdwg.mxu0
  %1151 = vmatpush.msra.mxu0 0.0
  %1152 = vmatpush.msra.mxu0 0.0
  %1153 = vmatpush.msra.mxu0 0.0
  %1154 = vmatpush.msra.mxu0 0.0
  %1155 = vmatpush.msra.mxu0 0.0
  %1156 = vmatpush.msra.mxu0 0.0
  %1157 = vmatpush.msra.mxu0 0.0
  %1158 = vmatpush.msra.mxu0 0.0
  %1159 = vmatpush.msra.mxu0 0.0
  %1160 = vmatpush.msra.mxu0 0.0
  %1161 = vmatpush.msra.mxu0 0.0
  %1162 = vmatpush.msra.mxu0 0.0
  %1163 = vmatpush.msra.mxu0 %v850
  %1164 = vmatpush.msra.mxu0 %v845
  %1165 = vmatpush.msra.mxu0 %v840
  %1166 = vmatpush.msra.mxu0 %v835
  %1167 = vmatmul.f32.gmra.mxu0 %v1077
  %v1168 = vpop.f32.mrf.mxu0
  %v1169 = vadd.f32 %v1048, %v1168
  %1170 = vmatmul.f32.gmra.mxu0 %v1080
  %v1171 = vpop.f32.mrf.mxu0
  %v1172 = vadd.f32 %v1051, %v1171
  %1173 = vdwg.mxu0
  %1174 = vmatpush.msra.mxu0 0.0
  %1175 = vmatpush.msra.mxu0 0.0
  %1176 = vmatpush.msra.mxu0 0.0
  %1177 = vmatpush.msra.mxu0 0.0
  %1178 = vmatpush.msra.mxu0 0.0
  %1179 = vmatpush.msra.mxu0 0.0
  %1180 = vmatpush.msra.mxu0 0.0
  %1181 = vmatpush.msra.mxu0 0.0
  %1182 = vmatpush.msra.mxu0 0.0
  %1183 = vmatpush.msra.mxu0 0.0
  %1184 = vmatpush.msra.mxu0 0.0
  %1185 = vmatpush.msra.mxu0 0.0
  %1186 = vmatpush.msra.mxu0 %v851
  %1187 = vmatpush.msra.mxu0 %v846
  %1188 = vmatpush.msra.mxu0 %v841
  %1189 = vmatpush.msra.mxu0 %v836
  %1190 = vmatmul.f32.gmra.mxu0 %v1077
  %v1191 = vpop.f32.mrf.mxu0
  %v1192 = vadd.f32 %v1071, %v1191
  %1193 = vmatmul.f32.gmra.mxu0 %v1080
  %v1194 = vpop.f32.mrf.mxu0
  %v1195 = vadd.f32 %v1074, %v1194
  %1196 = vdwg.mxu0
  %s1197 = scalar_lea.vmem %s2, 32
  %v1198 = vld [vmem:[%s1197] sm:$0xff]
  %v1199 = vld [vmem:[%s1197 + $0x8] sm:$0xff]
  %1200 = vrot.lane.b32.xlu0 %v832, 126
  %v1201 = vpop.permute.xlu0 %1200
  %1202 = vrot.lane.b32.xlu0 %v833, 126
  %v1203 = vpop.permute.xlu0 %1202
  %1204 = vrot.lane.b32.xlu0 %v834, 126
  %v1205 = vpop.permute.xlu0 %1204
  %1206 = vrot.lane.b32.xlu0 %v835, 126
  %v1207 = vpop.permute.xlu0 %1206
  %1208 = vrot.lane.b32.xlu0 %v836, 126
  %v1209 = vpop.permute.xlu0 %1208
  %1210 = vrot.lane.b32.xlu0 %v837, 126
  %v1211 = vpop.permute.xlu0 %1210
  %1212 = vrot.lane.b32.xlu0 %v838, 126
  %v1213 = vpop.permute.xlu0 %1212
  %1214 = vrot.lane.b32.xlu0 %v839, 126
  %v1215 = vpop.permute.xlu0 %1214
  %1216 = vrot.lane.b32.xlu0 %v840, 126
  %v1217 = vpop.permute.xlu0 %1216
  %1218 = vrot.lane.b32.xlu0 %v841, 126
  %v1219 = vpop.permute.xlu0 %1218
  %1220 = vrot.lane.b32.xlu0 %v842, 126
  %v1221 = vpop.permute.xlu0 %1220
  %1222 = vrot.lane.b32.xlu0 %v843, 126
  %v1223 = vpop.permute.xlu0 %1222
  %1224 = vrot.lane.b32.xlu0 %v844, 126
  %v1225 = vpop.permute.xlu0 %1224
  %1226 = vrot.lane.b32.xlu0 %v845, 126
  %v1227 = vpop.permute.xlu0 %1226
  %1228 = vrot.lane.b32.xlu0 %v846, 126
  %v1229 = vpop.permute.xlu0 %1228
  %1230 = vrot.lane.b32.xlu0 %v847, 126
  %v1231 = vpop.permute.xlu0 %1230
  %1232 = vrot.lane.b32.xlu0 %v848, 126
  %v1233 = vpop.permute.xlu0 %1232
  %1234 = vrot.lane.b32.xlu0 %v849, 126
  %v1235 = vpop.permute.xlu0 %1234
  %1236 = vrot.lane.b32.xlu0 %v850, 126
  %v1237 = vpop.permute.xlu0 %1236
  %1238 = vrot.lane.b32.xlu0 %v851, 126
  %v1239 = vpop.permute.xlu0 %1238
  %vm1240 = vcmask 1031168
  %v1241 = vsel %vm1240, %v1201, %v1203
  %v1242 = vsel %vm1240, %v1203, %v1205
  %v1243 = vsel %vm1240, %v1205, %v1207
  %v1244 = vsel %vm1240, %v1207, %v1209
  %v1245 = vsel %vm1240, %v1211, %v1213
  %v1246 = vsel %vm1240, %v1213, %v1215
  %v1247 = vsel %vm1240, %v1215, %v1217
  %v1248 = vsel %vm1240, %v1217, %v1219
  %v1249 = vsel %vm1240, %v1221, %v1223
  %v1250 = vsel %vm1240, %v1223, %v1225
  %v1251 = vsel %vm1240, %v1225, %v1227
  %v1252 = vsel %vm1240, %v1227, %v1229
  %v1253 = vsel %vm1240, %v1231, %v1233
  %v1254 = vsel %vm1240, %v1233, %v1235
  %v1255 = vsel %vm1240, %v1235, %v1237
  %v1256 = vsel %vm1240, %v1237, %v1239
  %v1278 = vsel %vm954, %v1198, 0
  %v1281 = vsel %vm954, %v1199, 0
  %1283 = vmatpush.msra.mxu0 0.0
  %1284 = vmatpush.msra.mxu0 0.0
  %1285 = vmatpush.msra.mxu0 0.0
  %1286 = vmatpush.msra.mxu0 0.0
  %1287 = vmatpush.msra.mxu0 0.0
  %1288 = vmatpush.msra.mxu0 0.0
  %1289 = vmatpush.msra.mxu0 0.0
  %1290 = vmatpush.msra.mxu0 0.0
  %1291 = vmatpush.msra.mxu0 0.0
  %1292 = vmatpush.msra.mxu0 0.0
  %1293 = vmatpush.msra.mxu0 0.0
  %1294 = vmatpush.msra.mxu0 0.0
  %1295 = vmatpush.msra.mxu0 %v1253
  %1296 = vmatpush.msra.mxu0 %v1249
  %1297 = vmatpush.msra.mxu0 %v1245
  %1298 = vmatpush.msra.mxu0 %v1241
  %1299 = vmatmul.f32.gmra.mxu0 %v1278
  %v1300 = vpop.f32.mrf.mxu0
  %v1301 = vadd.f32 0.0, %v1300
  %1302 = vmatmul.f32.gmra.mxu0 %v1281
  %v1303 = vpop.f32.mrf.mxu0
  %v1304 = vadd.f32 0.0, %v1303
  %1305 = vdwg.mxu0
  %1306 = vmatpush.msra.mxu0 0.0
  %1307 = vmatpush.msra.mxu0 0.0
  %1308 = vmatpush.msra.mxu0 0.0
  %1309 = vmatpush.msra.mxu0 0.0
  %1310 = vmatpush.msra.mxu0 0.0
  %1311 = vmatpush.msra.mxu0 0.0
  %1312 = vmatpush.msra.mxu0 0.0
  %1313 = vmatpush.msra.mxu0 0.0
  %1314 = vmatpush.msra.mxu0 0.0
  %1315 = vmatpush.msra.mxu0 0.0
  %1316 = vmatpush.msra.mxu0 0.0
  %1317 = vmatpush.msra.mxu0 0.0
  %1318 = vmatpush.msra.mxu0 %v1254
  %1319 = vmatpush.msra.mxu0 %v1250
  %1320 = vmatpush.msra.mxu0 %v1246
  %1321 = vmatpush.msra.mxu0 %v1242
  %1322 = vmatmul.f32.gmra.mxu0 %v1278
  %v1323 = vpop.f32.mrf.mxu0
  %v1324 = vadd.f32 0.0, %v1323
  %1325 = vmatmul.f32.gmra.mxu0 %v1281
  %v1326 = vpop.f32.mrf.mxu0
  %v1327 = vadd.f32 0.0, %v1326
  %1328 = vdwg.mxu0
  %1329 = vmatpush.msra.mxu0 0.0
  %1330 = vmatpush.msra.mxu0 0.0
  %1331 = vmatpush.msra.mxu0 0.0
  %1332 = vmatpush.msra.mxu0 0.0
  %1333 = vmatpush.msra.mxu0 0.0
  %1334 = vmatpush.msra.mxu0 0.0
  %1335 = vmatpush.msra.mxu0 0.0
  %1336 = vmatpush.msra.mxu0 0.0
  %1337 = vmatpush.msra.mxu0 0.0
  %1338 = vmatpush.msra.mxu0 0.0
  %1339 = vmatpush.msra.mxu0 0.0
  %1340 = vmatpush.msra.mxu0 0.0
  %1341 = vmatpush.msra.mxu0 %v1255
  %1342 = vmatpush.msra.mxu0 %v1251
  %1343 = vmatpush.msra.mxu0 %v1247
  %1344 = vmatpush.msra.mxu0 %v1243
  %1345 = vmatmul.f32.gmra.mxu0 %v1278
  %v1346 = vpop.f32.mrf.mxu0
  %v1347 = vadd.f32 0.0, %v1346
  %1348 = vmatmul.f32.gmra.mxu0 %v1281
  %v1349 = vpop.f32.mrf.mxu0
  %v1350 = vadd.f32 0.0, %v1349
  %1351 = vdwg.mxu0
  %1352 = vmatpush.msra.mxu0 0.0
  %1353 = vmatpush.msra.mxu0 0.0
  %1354 = vmatpush.msra.mxu0 0.0
  %1355 = vmatpush.msra.mxu0 0.0
  %1356 = vmatpush.msra.mxu0 0.0
  %1357 = vmatpush.msra.mxu0 0.0
  %1358 = vmatpush.msra.mxu0 0.0
  %1359 = vmatpush.msra.mxu0 0.0
  %1360 = vmatpush.msra.mxu0 0.0
  %1361 = vmatpush.msra.mxu0 0.0
  %1362 = vmatpush.msra.mxu0 0.0
  %1363 = vmatpush.msra.mxu0 0.0
  %1364 = vmatpush.msra.mxu0 %v1256
  %1365 = vmatpush.msra.mxu0 %v1252
  %1366 = vmatpush.msra.mxu0 %v1248
  %1367 = vmatpush.msra.mxu0 %v1244
  %1368 = vmatmul.f32.gmra.mxu0 %v1278
  %v1369 = vpop.f32.mrf.mxu0
  %v1370 = vadd.f32 0.0, %v1369
  %1371 = vmatmul.f32.gmra.mxu0 %v1281
  %v1372 = vpop.f32.mrf.mxu0
  %v1373 = vadd.f32 0.0, %v1372
  %1374 = vdwg.mxu0
  %1375 = vmatpush.msra.mxu0 0.0
  %1376 = vmatpush.msra.mxu0 0.0
  %1377 = vmatpush.msra.mxu0 0.0
  %1378 = vmatpush.msra.mxu0 0.0
  %1379 = vmatpush.msra.mxu0 0.0
  %1380 = vmatpush.msra.mxu0 0.0
  %1381 = vmatpush.msra.mxu0 0.0
  %1382 = vmatpush.msra.mxu0 0.0
  %1383 = vmatpush.msra.mxu0 0.0
  %1384 = vmatpush.msra.mxu0 0.0
  %1385 = vmatpush.msra.mxu0 0.0
  %1386 = vmatpush.msra.mxu0 0.0
  %1387 = vmatpush.msra.mxu0 %v1239
  %1388 = vmatpush.msra.mxu0 %v1229
  %1389 = vmatpush.msra.mxu0 %v1219
  %1390 = vmatpush.msra.mxu0 %v1209
  %1391 = vmatmul.f32.gmra.mxu0 %v1278
  %v1392 = vpop.f32.mrf.mxu0
  %v1393 = vadd.f32 0.0, %v1392
  %1394 = vmatmul.f32.gmra.mxu0 %v1281
  %v1395 = vpop.f32.mrf.mxu0
  %v1396 = vadd.f32 0.0, %v1395
  %1397 = vdwg.mxu0
  %v1398 = vadd.f32 %v1100, %v1301
  %v1399 = vadd.f32 %v1123, %v1324
  %v1400 = vadd.f32 %v1146, %v1347
  %v1401 = vadd.f32 %v1169, %v1370
  %v1402 = vadd.f32 %v1192, %v1393
  %v1403 = vadd.f32 %v1103, %v1304
  %v1404 = vadd.f32 %v1126, %v1327
  %v1405 = vadd.f32 %v1149, %v1350
  %v1406 = vadd.f32 %v1172, %v1373
  %v1407 = vadd.f32 %v1195, %v1396
  %s1408 = scalar_lea.vmem %s2, 48
  %v1409 = vld [vmem:[%s1408] sm:$0xff]
  %v1410 = vld [vmem:[%s1408 + $0x8] sm:$0xff]
  %1411 = vrot.lane.b32.xlu0 %v832, 125
  %v1412 = vpop.permute.xlu0 %1411
  %1413 = vrot.lane.b32.xlu0 %v833, 125
  %v1414 = vpop.permute.xlu0 %1413
  %1415 = vrot.lane.b32.xlu0 %v834, 125
  %v1416 = vpop.permute.xlu0 %1415
  %1417 = vrot.lane.b32.xlu0 %v835, 125
  %v1418 = vpop.permute.xlu0 %1417
  %1419 = vrot.lane.b32.xlu0 %v836, 125
  %v1420 = vpop.permute.xlu0 %1419
  %1421 = vrot.lane.b32.xlu0 %v837, 125
  %v1422 = vpop.permute.xlu0 %1421
  %1423 = vrot.lane.b32.xlu0 %v838, 125
  %v1424 = vpop.permute.xlu0 %1423
  %1425 = vrot.lane.b32.xlu0 %v839, 125
  %v1426 = vpop.permute.xlu0 %1425
  %1427 = vrot.lane.b32.xlu0 %v840, 125
  %v1428 = vpop.permute.xlu0 %1427
  %1429 = vrot.lane.b32.xlu0 %v841, 125
  %v1430 = vpop.permute.xlu0 %1429
  %1431 = vrot.lane.b32.xlu0 %v842, 125
  %v1432 = vpop.permute.xlu0 %1431
  %1433 = vrot.lane.b32.xlu0 %v843, 125
  %v1434 = vpop.permute.xlu0 %1433
  %1435 = vrot.lane.b32.xlu0 %v844, 125
  %v1436 = vpop.permute.xlu0 %1435
  %1437 = vrot.lane.b32.xlu0 %v845, 125
  %v1438 = vpop.permute.xlu0 %1437
  %1439 = vrot.lane.b32.xlu0 %v846, 125
  %v1440 = vpop.permute.xlu0 %1439
  %1441 = vrot.lane.b32.xlu0 %v847, 125
  %v1442 = vpop.permute.xlu0 %1441
  %1443 = vrot.lane.b32.xlu0 %v848, 125
  %v1444 = vpop.permute.xlu0 %1443
  %1445 = vrot.lane.b32.xlu0 %v849, 125
  %v1446 = vpop.permute.xlu0 %1445
  %1447 = vrot.lane.b32.xlu0 %v850, 125
  %v1448 = vpop.permute.xlu0 %1447
  %1449 = vrot.lane.b32.xlu0 %v851, 125
  %v1450 = vpop.permute.xlu0 %1449
  %vm1451 = vcmask 1022976
  %v1452 = vsel %vm1451, %v1412, %v1414
  %v1453 = vsel %vm1451, %v1414, %v1416
  %v1454 = vsel %vm1451, %v1416, %v1418
  %v1455 = vsel %vm1451, %v1418, %v1420
  %v1456 = vsel %vm1451, %v1422, %v1424
  %v1457 = vsel %vm1451, %v1424, %v1426
  %v1458 = vsel %vm1451, %v1426, %v1428
  %v1459 = vsel %vm1451, %v1428, %v1430
  %v1460 = vsel %vm1451, %v1432, %v1434
  %v1461 = vsel %vm1451, %v1434, %v1436
  %v1462 = vsel %vm1451, %v1436, %v1438
  %v1463 = vsel %vm1451, %v1438, %v1440
  %v1464 = vsel %vm1451, %v1442, %v1444
  %v1465 = vsel %vm1451, %v1444, %v1446
  %v1466 = vsel %vm1451, %v1446, %v1448
  %v1467 = vsel %vm1451, %v1448, %v1450
  %v1489 = vsel %vm954, %v1409, 0
  %v1492 = vsel %vm954, %v1410, 0
  %1494 = vmatpush.msra.mxu0 0.0
  %1495 = vmatpush.msra.mxu0 0.0
  %1496 = vmatpush.msra.mxu0 0.0
  %1497 = vmatpush.msra.mxu0 0.0
  %1498 = vmatpush.msra.mxu0 0.0
  %1499 = vmatpush.msra.mxu0 0.0
  %1500 = vmatpush.msra.mxu0 0.0
  %1501 = vmatpush.msra.mxu0 0.0
  %1502 = vmatpush.msra.mxu0 0.0
  %1503 = vmatpush.msra.mxu0 0.0
  %1504 = vmatpush.msra.mxu0 0.0
  %1505 = vmatpush.msra.mxu0 0.0
  %1506 = vmatpush.msra.mxu0 %v1464
  %1507 = vmatpush.msra.mxu0 %v1460
  %1508 = vmatpush.msra.mxu0 %v1456
  %1509 = vmatpush.msra.mxu0 %v1452
  %1510 = vmatmul.f32.gmra.mxu0 %v1489
  %v1511 = vpop.f32.mrf.mxu0
  %v1512 = vadd.f32 0.0, %v1511
  %1513 = vmatmul.f32.gmra.mxu0 %v1492
  %v1514 = vpop.f32.mrf.mxu0
  %v1515 = vadd.f32 0.0, %v1514
  %1516 = vdwg.mxu0
  %1517 = vmatpush.msra.mxu0 0.0
  %1518 = vmatpush.msra.mxu0 0.0
  %1519 = vmatpush.msra.mxu0 0.0
  %1520 = vmatpush.msra.mxu0 0.0
  %1521 = vmatpush.msra.mxu0 0.0
  %1522 = vmatpush.msra.mxu0 0.0
  %1523 = vmatpush.msra.mxu0 0.0
  %1524 = vmatpush.msra.mxu0 0.0
  %1525 = vmatpush.msra.mxu0 0.0
  %1526 = vmatpush.msra.mxu0 0.0
  %1527 = vmatpush.msra.mxu0 0.0
  %1528 = vmatpush.msra.mxu0 0.0
  %1529 = vmatpush.msra.mxu0 %v1465
  %1530 = vmatpush.msra.mxu0 %v1461
  %1531 = vmatpush.msra.mxu0 %v1457
  %1532 = vmatpush.msra.mxu0 %v1453
  %1533 = vmatmul.f32.gmra.mxu0 %v1489
  %v1534 = vpop.f32.mrf.mxu0
  %v1535 = vadd.f32 0.0, %v1534
  %1536 = vmatmul.f32.gmra.mxu0 %v1492
  %v1537 = vpop.f32.mrf.mxu0
  %v1538 = vadd.f32 0.0, %v1537
  %1539 = vdwg.mxu0
  %1540 = vmatpush.msra.mxu0 0.0
  %1541 = vmatpush.msra.mxu0 0.0
  %1542 = vmatpush.msra.mxu0 0.0
  %1543 = vmatpush.msra.mxu0 0.0
  %1544 = vmatpush.msra.mxu0 0.0
  %1545 = vmatpush.msra.mxu0 0.0
  %1546 = vmatpush.msra.mxu0 0.0
  %1547 = vmatpush.msra.mxu0 0.0
  %1548 = vmatpush.msra.mxu0 0.0
  %1549 = vmatpush.msra.mxu0 0.0
  %1550 = vmatpush.msra.mxu0 0.0
  %1551 = vmatpush.msra.mxu0 0.0
  %1552 = vmatpush.msra.mxu0 %v1466
  %1553 = vmatpush.msra.mxu0 %v1462
  %1554 = vmatpush.msra.mxu0 %v1458
  %1555 = vmatpush.msra.mxu0 %v1454
  %1556 = vmatmul.f32.gmra.mxu0 %v1489
  %v1557 = vpop.f32.mrf.mxu0
  %v1558 = vadd.f32 0.0, %v1557
  %1559 = vmatmul.f32.gmra.mxu0 %v1492
  %v1560 = vpop.f32.mrf.mxu0
  %v1561 = vadd.f32 0.0, %v1560
  %1562 = vdwg.mxu0
  %1563 = vmatpush.msra.mxu0 0.0
  %1564 = vmatpush.msra.mxu0 0.0
  %1565 = vmatpush.msra.mxu0 0.0
  %1566 = vmatpush.msra.mxu0 0.0
  %1567 = vmatpush.msra.mxu0 0.0
  %1568 = vmatpush.msra.mxu0 0.0
  %1569 = vmatpush.msra.mxu0 0.0
  %1570 = vmatpush.msra.mxu0 0.0
  %1571 = vmatpush.msra.mxu0 0.0
  %1572 = vmatpush.msra.mxu0 0.0
  %1573 = vmatpush.msra.mxu0 0.0
  %1574 = vmatpush.msra.mxu0 0.0
  %1575 = vmatpush.msra.mxu0 %v1467
  %1576 = vmatpush.msra.mxu0 %v1463
  %1577 = vmatpush.msra.mxu0 %v1459
  %1578 = vmatpush.msra.mxu0 %v1455
  %1579 = vmatmul.f32.gmra.mxu0 %v1489
  %v1580 = vpop.f32.mrf.mxu0
  %v1581 = vadd.f32 0.0, %v1580
  %1582 = vmatmul.f32.gmra.mxu0 %v1492
  %v1583 = vpop.f32.mrf.mxu0
  %v1584 = vadd.f32 0.0, %v1583
  %1585 = vdwg.mxu0
  %1586 = vmatpush.msra.mxu0 0.0
  %1587 = vmatpush.msra.mxu0 0.0
  %1588 = vmatpush.msra.mxu0 0.0
  %1589 = vmatpush.msra.mxu0 0.0
  %1590 = vmatpush.msra.mxu0 0.0
  %1591 = vmatpush.msra.mxu0 0.0
  %1592 = vmatpush.msra.mxu0 0.0
  %1593 = vmatpush.msra.mxu0 0.0
  %1594 = vmatpush.msra.mxu0 0.0
  %1595 = vmatpush.msra.mxu0 0.0
  %1596 = vmatpush.msra.mxu0 0.0
  %1597 = vmatpush.msra.mxu0 0.0
  %1598 = vmatpush.msra.mxu0 %v1450
  %1599 = vmatpush.msra.mxu0 %v1440
  %1600 = vmatpush.msra.mxu0 %v1430
  %1601 = vmatpush.msra.mxu0 %v1420
  %1602 = vmatmul.f32.gmra.mxu0 %v1489
  %v1603 = vpop.f32.mrf.mxu0
  %v1604 = vadd.f32 0.0, %v1603
  %1605 = vmatmul.f32.gmra.mxu0 %v1492
  %v1606 = vpop.f32.mrf.mxu0
  %v1607 = vadd.f32 0.0, %v1606
  %1608 = vdwg.mxu0
  %v1609 = vadd.f32 %v1398, %v1512
  %v1610 = vadd.f32 %v1399, %v1535
  %v1611 = vadd.f32 %v1400, %v1558
  %v1612 = vadd.f32 %v1401, %v1581
  %v1613 = vadd.f32 %v1402, %v1604
  %v1614 = vadd.f32 %v1403, %v1515
  %v1615 = vadd.f32 %v1404, %v1538
  %v1616 = vadd.f32 %v1405, %v1561
  %v1617 = vadd.f32 %v1406, %v1584
  %v1618 = vadd.f32 %v1407, %v1607
  %s1619 = scalar_lea.vmem %s2, 64
  %v1620 = vld [vmem:[%s1619] sm:$0xff]
  %v1621 = vld [vmem:[%s1619 + $0x8] sm:$0xff]
  %1622 = vrot.lane.b32.xlu0 %v832, 124
  %v1623 = vpop.permute.xlu0 %1622
  %1624 = vrot.lane.b32.xlu0 %v833, 124
  %v1625 = vpop.permute.xlu0 %1624
  %1626 = vrot.lane.b32.xlu0 %v834, 124
  %v1627 = vpop.permute.xlu0 %1626
  %1628 = vrot.lane.b32.xlu0 %v835, 124
  %v1629 = vpop.permute.xlu0 %1628
  %1630 = vrot.lane.b32.xlu0 %v836, 124
  %v1631 = vpop.permute.xlu0 %1630
  %1632 = vrot.lane.b32.xlu0 %v837, 124
  %v1633 = vpop.permute.xlu0 %1632
  %1634 = vrot.lane.b32.xlu0 %v838, 124
  %v1635 = vpop.permute.xlu0 %1634
  %1636 = vrot.lane.b32.xlu0 %v839, 124
  %v1637 = vpop.permute.xlu0 %1636
  %1638 = vrot.lane.b32.xlu0 %v840, 124
  %v1639 = vpop.permute.xlu0 %1638
  %1640 = vrot.lane.b32.xlu0 %v841, 124
  %v1641 = vpop.permute.xlu0 %1640
  %1642 = vrot.lane.b32.xlu0 %v842, 124
  %v1643 = vpop.permute.xlu0 %1642
  %1644 = vrot.lane.b32.xlu0 %v843, 124
  %v1645 = vpop.permute.xlu0 %1644
  %1646 = vrot.lane.b32.xlu0 %v844, 124
  %v1647 = vpop.permute.xlu0 %1646
  %1648 = vrot.lane.b32.xlu0 %v845, 124
  %v1649 = vpop.permute.xlu0 %1648
  %1650 = vrot.lane.b32.xlu0 %v846, 124
  %v1651 = vpop.permute.xlu0 %1650
  %1652 = vrot.lane.b32.xlu0 %v847, 124
  %v1653 = vpop.permute.xlu0 %1652
  %1654 = vrot.lane.b32.xlu0 %v848, 124
  %v1655 = vpop.permute.xlu0 %1654
  %1656 = vrot.lane.b32.xlu0 %v849, 124
  %v1657 = vpop.permute.xlu0 %1656
  %1658 = vrot.lane.b32.xlu0 %v850, 124
  %v1659 = vpop.permute.xlu0 %1658
  %1660 = vrot.lane.b32.xlu0 %v851, 124
  %v1661 = vpop.permute.xlu0 %1660
  %vm1662 = vcmask 1014784
  %v1663 = vsel %vm1662, %v1623, %v1625
  %v1664 = vsel %vm1662, %v1625, %v1627
  %v1665 = vsel %vm1662, %v1627, %v1629
  %v1666 = vsel %vm1662, %v1629, %v1631
  %v1667 = vsel %vm1662, %v1633, %v1635
  %v1668 = vsel %vm1662, %v1635, %v1637
  %v1669 = vsel %vm1662, %v1637, %v1639
  %v1670 = vsel %vm1662, %v1639, %v1641
  %v1671 = vsel %vm1662, %v1643, %v1645
  %v1672 = vsel %vm1662, %v1645, %v1647
  %v1673 = vsel %vm1662, %v1647, %v1649
  %v1674 = vsel %vm1662, %v1649, %v1651
  %v1675 = vsel %vm1662, %v1653, %v1655
  %v1676 = vsel %vm1662, %v1655, %v1657
  %v1677 = vsel %vm1662, %v1657, %v1659
  %v1678 = vsel %vm1662, %v1659, %v1661
  %v1700 = vsel %vm954, %v1620, 0
  %v1703 = vsel %vm954, %v1621, 0
  %1705 = vmatpush.msra.mxu0 0.0
  %1706 = vmatpush.msra.mxu0 0.0
  %1707 = vmatpush.msra.mxu0 0.0
  %1708 = vmatpush.msra.mxu0 0.0
  %1709 = vmatpush.msra.mxu0 0.0
  %1710 = vmatpush.msra.mxu0 0.0
  %1711 = vmatpush.msra.mxu0 0.0
  %1712 = vmatpush.msra.mxu0 0.0
  %1713 = vmatpush.msra.mxu0 0.0
  %1714 = vmatpush.msra.mxu0 0.0
  %1715 = vmatpush.msra.mxu0 0.0
  %1716 = vmatpush.msra.mxu0 0.0
  %1717 = vmatpush.msra.mxu0 %v1675
  %1718 = vmatpush.msra.mxu0 %v1671
  %1719 = vmatpush.msra.mxu0 %v1667
  %1720 = vmatpush.msra.mxu0 %v1663
  %1721 = vmatmul.f32.gmra.mxu0 %v1700
  %v1722 = vpop.f32.mrf.mxu0
  %v1723 = vadd.f32 0.0, %v1722
  %1724 = vmatmul.f32.gmra.mxu0 %v1703
  %v1725 = vpop.f32.mrf.mxu0
  %v1726 = vadd.f32 0.0, %v1725
  %1727 = vdwg.mxu0
  %1728 = vmatpush.msra.mxu0 0.0
  %1729 = vmatpush.msra.mxu0 0.0
  %1730 = vmatpush.msra.mxu0 0.0
  %1731 = vmatpush.msra.mxu0 0.0
  %1732 = vmatpush.msra.mxu0 0.0
  %1733 = vmatpush.msra.mxu0 0.0
  %1734 = vmatpush.msra.mxu0 0.0
  %1735 = vmatpush.msra.mxu0 0.0
  %1736 = vmatpush.msra.mxu0 0.0
  %1737 = vmatpush.msra.mxu0 0.0
  %1738 = vmatpush.msra.mxu0 0.0
  %1739 = vmatpush.msra.mxu0 0.0
  %1740 = vmatpush.msra.mxu0 %v1676
  %1741 = vmatpush.msra.mxu0 %v1672
  %1742 = vmatpush.msra.mxu0 %v1668
  %1743 = vmatpush.msra.mxu0 %v1664
  %1744 = vmatmul.f32.gmra.mxu0 %v1700
  %v1745 = vpop.f32.mrf.mxu0
  %v1746 = vadd.f32 0.0, %v1745
  %1747 = vmatmul.f32.gmra.mxu0 %v1703
  %v1748 = vpop.f32.mrf.mxu0
  %v1749 = vadd.f32 0.0, %v1748
  %1750 = vdwg.mxu0
  %1751 = vmatpush.msra.mxu0 0.0
  %1752 = vmatpush.msra.mxu0 0.0
  %1753 = vmatpush.msra.mxu0 0.0
  %1754 = vmatpush.msra.mxu0 0.0
  %1755 = vmatpush.msra.mxu0 0.0
  %1756 = vmatpush.msra.mxu0 0.0
  %1757 = vmatpush.msra.mxu0 0.0
  %1758 = vmatpush.msra.mxu0 0.0
  %1759 = vmatpush.msra.mxu0 0.0
  %1760 = vmatpush.msra.mxu0 0.0
  %1761 = vmatpush.msra.mxu0 0.0
  %1762 = vmatpush.msra.mxu0 0.0
  %1763 = vmatpush.msra.mxu0 %v1677
  %1764 = vmatpush.msra.mxu0 %v1673
  %1765 = vmatpush.msra.mxu0 %v1669
  %1766 = vmatpush.msra.mxu0 %v1665
  %1767 = vmatmul.f32.gmra.mxu0 %v1700
  %v1768 = vpop.f32.mrf.mxu0
  %v1769 = vadd.f32 0.0, %v1768
  %1770 = vmatmul.f32.gmra.mxu0 %v1703
  %v1771 = vpop.f32.mrf.mxu0
  %v1772 = vadd.f32 0.0, %v1771
  %1773 = vdwg.mxu0
  %1774 = vmatpush.msra.mxu0 0.0
  %1775 = vmatpush.msra.mxu0 0.0
  %1776 = vmatpush.msra.mxu0 0.0
  %1777 = vmatpush.msra.mxu0 0.0
  %1778 = vmatpush.msra.mxu0 0.0
  %1779 = vmatpush.msra.mxu0 0.0
  %1780 = vmatpush.msra.mxu0 0.0
  %1781 = vmatpush.msra.mxu0 0.0
  %1782 = vmatpush.msra.mxu0 0.0
  %1783 = vmatpush.msra.mxu0 0.0
  %1784 = vmatpush.msra.mxu0 0.0
  %1785 = vmatpush.msra.mxu0 0.0
  %1786 = vmatpush.msra.mxu0 %v1678
  %1787 = vmatpush.msra.mxu0 %v1674
  %1788 = vmatpush.msra.mxu0 %v1670
  %1789 = vmatpush.msra.mxu0 %v1666
  %1790 = vmatmul.f32.gmra.mxu0 %v1700
  %v1791 = vpop.f32.mrf.mxu0
  %v1792 = vadd.f32 0.0, %v1791
  %1793 = vmatmul.f32.gmra.mxu0 %v1703
  %v1794 = vpop.f32.mrf.mxu0
  %v1795 = vadd.f32 0.0, %v1794
  %1796 = vdwg.mxu0
  %1797 = vmatpush.msra.mxu0 0.0
  %1798 = vmatpush.msra.mxu0 0.0
  %1799 = vmatpush.msra.mxu0 0.0
  %1800 = vmatpush.msra.mxu0 0.0
  %1801 = vmatpush.msra.mxu0 0.0
  %1802 = vmatpush.msra.mxu0 0.0
  %1803 = vmatpush.msra.mxu0 0.0
  %1804 = vmatpush.msra.mxu0 0.0
  %1805 = vmatpush.msra.mxu0 0.0
  %1806 = vmatpush.msra.mxu0 0.0
  %1807 = vmatpush.msra.mxu0 0.0
  %1808 = vmatpush.msra.mxu0 0.0
  %1809 = vmatpush.msra.mxu0 %v1661
  %1810 = vmatpush.msra.mxu0 %v1651
  %1811 = vmatpush.msra.mxu0 %v1641
  %1812 = vmatpush.msra.mxu0 %v1631
  %1813 = vmatmul.f32.gmra.mxu0 %v1700
  %v1814 = vpop.f32.mrf.mxu0
  %v1815 = vadd.f32 0.0, %v1814
  %1816 = vmatmul.f32.gmra.mxu0 %v1703
  %v1817 = vpop.f32.mrf.mxu0
  %v1818 = vadd.f32 0.0, %v1817
  %1819 = vdwg.mxu0
  %v1820 = vadd.f32 %v1609, %v1723
  %v1821 = vadd.f32 %v1610, %v1746
  %v1822 = vadd.f32 %v1611, %v1769
  %v1823 = vadd.f32 %v1612, %v1792
  %v1824 = vadd.f32 %v1613, %v1815
  %v1825 = vadd.f32 %v1614, %v1726
  %v1826 = vadd.f32 %v1615, %v1749
  %v1827 = vadd.f32 %v1616, %v1772
  %v1828 = vadd.f32 %v1617, %v1795
  %v1829 = vadd.f32 %v1618, %v1818
  %v1830 = vld [vmem:[#allocation2] sm:$0xff]
  %v1831 = vld [vmem:[#allocation2 + $0x8] sm:$0xff]
  %v1832 = vld [vmem:[#allocation2 + $0x10] sm:$0xff]
  %v1833 = vld [vmem:[#allocation2 + $0x18] sm:$0xff]
  %v1834 = vld [vmem:[#allocation2 + $0x20] sm:$0xff]
  %v1835 = vld [vmem:[#allocation2 + $0x28] sm:$0xff]
  %v1836 = vld [vmem:[#allocation2 + $0x30] sm:$0xff]
  %v1837 = vld [vmem:[#allocation2 + $0x38] sm:$0xff]
  %v1838 = vld [vmem:[#allocation2 + $0x40] sm:$0xff]
  %v1839 = vld [vmem:[#allocation2 + $0x48] sm:$0xff]
  %v1840 = vld [vmem:[#allocation2 + $0x50] sm:$0xff]
  %v1841 = vld [vmem:[#allocation2 + $0x58] sm:$0xff]
  %v1842 = vld [vmem:[#allocation2 + $0x60] sm:$0xff]
  %v1843 = vld [vmem:[#allocation2 + $0x68] sm:$0xff]
  %v1844 = vld [vmem:[#allocation2 + $0x70] sm:$0xff]
  %v1845 = vld [vmem:[#allocation2 + $0x78] sm:$0xff]
  %v1846 = vld [vmem:[#allocation2 + $0x80] sm:$0xff]
  %v1847 = vld [vmem:[#allocation2 + $0x88] sm:$0xff]
  %v1848 = vld [vmem:[#allocation2 + $0x90] sm:$0xff]
  %v1849 = vld [vmem:[#allocation2 + $0x98] sm:$0xff]
  %v1850 = vld [vmem:[#allocation2 + $0xa0] sm:$0xff]
  %v1851 = vld [vmem:[#allocation2 + $0xa8] sm:$0xff]
  %v1852 = vld [vmem:[#allocation2 + $0xb0] sm:$0xff]
  %v1853 = vld [vmem:[#allocation2 + $0xb8] sm:$0xff]
  %s1854 = scalar_lea.vmem %s2, 80
  %v1855 = vld [vmem:[%s1854] sm:$0xff]
  %v1856 = vld [vmem:[%s1854 + $0x8] sm:$0xff]
  %1881 = vrot.lane.b32.xlu0 %v1830, 103
  %v1882 = vpop.permute.xlu0 %1881
  %1883 = vrot.lane.b32.xlu0 %v1831, 103
  %v1884 = vpop.permute.xlu0 %1883
  %1885 = vrot.lane.b32.xlu0 %v1832, 103
  %v1886 = vpop.permute.xlu0 %1885
  %1887 = vrot.lane.b32.xlu0 %v1833, 103
  %v1888 = vpop.permute.xlu0 %1887
  %1889 = vrot.lane.b32.xlu0 %v1834, 103
  %v1890 = vpop.permute.xlu0 %1889
  %1891 = vrot.lane.b32.xlu0 %v1835, 103
  %v1892 = vpop.permute.xlu0 %1891
  %1893 = vrot.lane.b32.xlu0 %v1836, 103
  %v1894 = vpop.permute.xlu0 %1893
  %1895 = vrot.lane.b32.xlu0 %v1837, 103
  %v1896 = vpop.permute.xlu0 %1895
  %1897 = vrot.lane.b32.xlu0 %v1838, 103
  %v1898 = vpop.permute.xlu0 %1897
  %1899 = vrot.lane.b32.xlu0 %v1839, 103
  %v1900 = vpop.permute.xlu0 %1899
  %1901 = vrot.lane.b32.xlu0 %v1840, 103
  %v1902 = vpop.permute.xlu0 %1901
  %1903 = vrot.lane.b32.xlu0 %v1841, 103
  %v1904 = vpop.permute.xlu0 %1903
  %1905 = vrot.lane.b32.xlu0 %v1842, 103
  %v1906 = vpop.permute.xlu0 %1905
  %1907 = vrot.lane.b32.xlu0 %v1843, 103
  %v1908 = vpop.permute.xlu0 %1907
  %1909 = vrot.lane.b32.xlu0 %v1844, 103
  %v1910 = vpop.permute.xlu0 %1909
  %1911 = vrot.lane.b32.xlu0 %v1845, 103
  %v1912 = vpop.permute.xlu0 %1911
  %1913 = vrot.lane.b32.xlu0 %v1846, 103
  %v1914 = vpop.permute.xlu0 %1913
  %1915 = vrot.lane.b32.xlu0 %v1847, 103
  %v1916 = vpop.permute.xlu0 %1915
  %1917 = vrot.lane.b32.xlu0 %v1848, 103
  %v1918 = vpop.permute.xlu0 %1917
  %1919 = vrot.lane.b32.xlu0 %v1849, 103
  %v1920 = vpop.permute.xlu0 %1919
  %1921 = vrot.lane.b32.xlu0 %v1850, 103
  %v1922 = vpop.permute.xlu0 %1921
  %1923 = vrot.lane.b32.xlu0 %v1851, 103
  %v1924 = vpop.permute.xlu0 %1923
  %1925 = vrot.lane.b32.xlu0 %v1852, 103
  %v1926 = vpop.permute.xlu0 %1925
  %1927 = vrot.lane.b32.xlu0 %v1853, 103
  %v1928 = vpop.permute.xlu0 %1927
  %vm1929 = vcmask 842752
  %v1930 = vsel %vm1929, %v1882, %v1884
  %v1931 = vsel %vm1929, %v1884, %v1886
  %v1932 = vsel %vm1929, %v1886, %v1888
  %v1933 = vsel %vm1929, %v1888, %v1890
  %v1934 = vsel %vm1929, %v1890, %v1892
  %v1935 = vsel %vm1929, %v1894, %v1896
  %v1936 = vsel %vm1929, %v1896, %v1898
  %v1937 = vsel %vm1929, %v1898, %v1900
  %v1938 = vsel %vm1929, %v1900, %v1902
  %v1939 = vsel %vm1929, %v1902, %v1904
  %v1940 = vsel %vm1929, %v1906, %v1908
  %v1941 = vsel %vm1929, %v1908, %v1910
  %v1942 = vsel %vm1929, %v1910, %v1912
  %v1943 = vsel %vm1929, %v1912, %v1914
  %v1944 = vsel %vm1929, %v1914, %v1916
  %v1945 = vsel %vm1929, %v1918, %v1920
  %v1946 = vsel %vm1929, %v1920, %v1922
  %v1947 = vsel %vm1929, %v1922, %v1924
  %v1948 = vsel %vm1929, %v1924, %v1926
  %v1949 = vsel %vm1929, %v1926, %v1928
  %v1971 = vsel %vm954, %v1855, 0
  %v1974 = vsel %vm954, %v1856, 0
  %1976 = vmatpush.msra.mxu0 0.0
  %1977 = vmatpush.msra.mxu0 0.0
  %1978 = vmatpush.msra.mxu0 0.0
  %1979 = vmatpush.msra.mxu0 0.0
  %1980 = vmatpush.msra.mxu0 0.0
  %1981 = vmatpush.msra.mxu0 0.0
  %1982 = vmatpush.msra.mxu0 0.0
  %1983 = vmatpush.msra.mxu0 0.0
  %1984 = vmatpush.msra.mxu0 0.0
  %1985 = vmatpush.msra.mxu0 0.0
  %1986 = vmatpush.msra.mxu0 0.0
  %1987 = vmatpush.msra.mxu0 0.0
  %1988 = vmatpush.msra.mxu0 %v1945
  %1989 = vmatpush.msra.mxu0 %v1940
  %1990 = vmatpush.msra.mxu0 %v1935
  %1991 = vmatpush.msra.mxu0 %v1930
  %1992 = vmatmul.f32.gmra.mxu0 %v1971
  %v1993 = vpop.f32.mrf.mxu0
  %v1994 = vadd.f32 0.0, %v1993
  %1995 = vmatmul.f32.gmra.mxu0 %v1974
  %v1996 = vpop.f32.mrf.mxu0
  %v1997 = vadd.f32 0.0, %v1996
  %1998 = vdwg.mxu0
  %1999 = vmatpush.msra.mxu0 0.0
  %2000 = vmatpush.msra.mxu0 0.0
  %2001 = vmatpush.msra.mxu0 0.0
  %2002 = vmatpush.msra.mxu0 0.0
  %2003 = vmatpush.msra.mxu0 0.0
  %2004 = vmatpush.msra.mxu0 0.0
  %2005 = vmatpush.msra.mxu0 0.0
  %2006 = vmatpush.msra.mxu0 0.0
  %2007 = vmatpush.msra.mxu0 0.0
  %2008 = vmatpush.msra.mxu0 0.0
  %2009 = vmatpush.msra.mxu0 0.0
  %2010 = vmatpush.msra.mxu0 0.0
  %2011 = vmatpush.msra.mxu0 %v1946
  %2012 = vmatpush.msra.mxu0 %v1941
  %2013 = vmatpush.msra.mxu0 %v1936
  %2014 = vmatpush.msra.mxu0 %v1931
  %2015 = vmatmul.f32.gmra.mxu0 %v1971
  %v2016 = vpop.f32.mrf.mxu0
  %v2017 = vadd.f32 0.0, %v2016
  %2018 = vmatmul.f32.gmra.mxu0 %v1974
  %v2019 = vpop.f32.mrf.mxu0
  %v2020 = vadd.f32 0.0, %v2019
  %2021 = vdwg.mxu0
  %2022 = vmatpush.msra.mxu0 0.0
  %2023 = vmatpush.msra.mxu0 0.0
  %2024 = vmatpush.msra.mxu0 0.0
  %2025 = vmatpush.msra.mxu0 0.0
  %2026 = vmatpush.msra.mxu0 0.0
  %2027 = vmatpush.msra.mxu0 0.0
  %2028 = vmatpush.msra.mxu0 0.0
  %2029 = vmatpush.msra.mxu0 0.0
  %2030 = vmatpush.msra.mxu0 0.0
  %2031 = vmatpush.msra.mxu0 0.0
  %2032 = vmatpush.msra.mxu0 0.0
  %2033 = vmatpush.msra.mxu0 0.0
  %2034 = vmatpush.msra.mxu0 %v1947
  %2035 = vmatpush.msra.mxu0 %v1942
  %2036 = vmatpush.msra.mxu0 %v1937
  %2037 = vmatpush.msra.mxu0 %v1932
  %2038 = vmatmul.f32.gmra.mxu0 %v1971
  %v2039 = vpop.f32.mrf.mxu0
  %v2040 = vadd.f32 0.0, %v2039
  %2041 = vmatmul.f32.gmra.mxu0 %v1974
  %v2042 = vpop.f32.mrf.mxu0
  %v2043 = vadd.f32 0.0, %v2042
  %2044 = vdwg.mxu0
  %2045 = vmatpush.msra.mxu0 0.0
  %2046 = vmatpush.msra.mxu0 0.0
  %2047 = vmatpush.msra.mxu0 0.0
  %2048 = vmatpush.msra.mxu0 0.0
  %2049 = vmatpush.msra.mxu0 0.0
  %2050 = vmatpush.msra.mxu0 0.0
  %2051 = vmatpush.msra.mxu0 0.0
  %2052 = vmatpush.msra.mxu0 0.0
  %2053 = vmatpush.msra.mxu0 0.0
  %2054 = vmatpush.msra.mxu0 0.0
  %2055 = vmatpush.msra.mxu0 0.0
  %2056 = vmatpush.msra.mxu0 0.0
  %2057 = vmatpush.msra.mxu0 %v1948
  %2058 = vmatpush.msra.mxu0 %v1943
  %2059 = vmatpush.msra.mxu0 %v1938
  %2060 = vmatpush.msra.mxu0 %v1933
  %2061 = vmatmul.f32.gmra.mxu0 %v1971
  %v2062 = vpop.f32.mrf.mxu0
  %v2063 = vadd.f32 0.0, %v2062
  %2064 = vmatmul.f32.gmra.mxu0 %v1974
  %v2065 = vpop.f32.mrf.mxu0
  %v2066 = vadd.f32 0.0, %v2065
  %2067 = vdwg.mxu0
  %2068 = vmatpush.msra.mxu0 0.0
  %2069 = vmatpush.msra.mxu0 0.0
  %2070 = vmatpush.msra.mxu0 0.0
  %2071 = vmatpush.msra.mxu0 0.0
  %2072 = vmatpush.msra.mxu0 0.0
  %2073 = vmatpush.msra.mxu0 0.0
  %2074 = vmatpush.msra.mxu0 0.0
  %2075 = vmatpush.msra.mxu0 0.0
  %2076 = vmatpush.msra.mxu0 0.0
  %2077 = vmatpush.msra.mxu0 0.0
  %2078 = vmatpush.msra.mxu0 0.0
  %2079 = vmatpush.msra.mxu0 0.0
  %2080 = vmatpush.msra.mxu0 %v1949
  %2081 = vmatpush.msra.mxu0 %v1944
  %2082 = vmatpush.msra.mxu0 %v1939
  %2083 = vmatpush.msra.mxu0 %v1934
  %2084 = vmatmul.f32.gmra.mxu0 %v1971
  %v2085 = vpop.f32.mrf.mxu0
  %v2086 = vadd.f32 0.0, %v2085
  %2087 = vmatmul.f32.gmra.mxu0 %v1974
  %v2088 = vpop.f32.mrf.mxu0
  %v2089 = vadd.f32 0.0, %v2088
  %2090 = vdwg.mxu0
  %v2091 = vadd.f32 %v1820, %v1994
  %v2092 = vadd.f32 %v1821, %v2017
  %v2093 = vadd.f32 %v1822, %v2040
  %v2094 = vadd.f32 %v1823, %v2063
  %v2095 = vadd.f32 %v1824, %v2086
  %v2096 = vadd.f32 %v1825, %v1997
  %v2097 = vadd.f32 %v1826, %v2020
  %v2098 = vadd.f32 %v1827, %v2043
  %v2099 = vadd.f32 %v1828, %v2066
  %v2100 = vadd.f32 %v1829, %v2089
  %s2101 = scalar_lea.vmem %s2, 96
  %v2102 = vld [vmem:[%s2101] sm:$0xff]
  %v2103 = vld [vmem:[%s2101 + $0x8] sm:$0xff]
  %2104 = vrot.lane.b32.xlu0 %v1830, 102
  %v2105 = vpop.permute.xlu0 %2104
  %2106 = vrot.lane.b32.xlu0 %v1831, 102
  %v2107 = vpop.permute.xlu0 %2106
  %2108 = vrot.lane.b32.xlu0 %v1832, 102
  %v2109 = vpop.permute.xlu0 %2108
  %2110 = vrot.lane.b32.xlu0 %v1833, 102
  %v2111 = vpop.permute.xlu0 %2110
  %2112 = vrot.lane.b32.xlu0 %v1834, 102
  %v2113 = vpop.permute.xlu0 %2112
  %2114 = vrot.lane.b32.xlu0 %v1835, 102
  %v2115 = vpop.permute.xlu0 %2114
  %2116 = vrot.lane.b32.xlu0 %v1836, 102
  %v2117 = vpop.permute.xlu0 %2116
  %2118 = vrot.lane.b32.xlu0 %v1837, 102
  %v2119 = vpop.permute.xlu0 %2118
  %2120 = vrot.lane.b32.xlu0 %v1838, 102
  %v2121 = vpop.permute.xlu0 %2120
  %2122 = vrot.lane.b32.xlu0 %v1839, 102
  %v2123 = vpop.permute.xlu0 %2122
  %2124 = vrot.lane.b32.xlu0 %v1840, 102
  %v2125 = vpop.permute.xlu0 %2124
  %2126 = vrot.lane.b32.xlu0 %v1841, 102
  %v2127 = vpop.permute.xlu0 %2126
  %2128 = vrot.lane.b32.xlu0 %v1842, 102
  %v2129 = vpop.permute.xlu0 %2128
  %2130 = vrot.lane.b32.xlu0 %v1843, 102
  %v2131 = vpop.permute.xlu0 %2130
  %2132 = vrot.lane.b32.xlu0 %v1844, 102
  %v2133 = vpop.permute.xlu0 %2132
  %2134 = vrot.lane.b32.xlu0 %v1845, 102
  %v2135 = vpop.permute.xlu0 %2134
  %2136 = vrot.lane.b32.xlu0 %v1846, 102
  %v2137 = vpop.permute.xlu0 %2136
  %2138 = vrot.lane.b32.xlu0 %v1847, 102
  %v2139 = vpop.permute.xlu0 %2138
  %2140 = vrot.lane.b32.xlu0 %v1848, 102
  %v2141 = vpop.permute.xlu0 %2140
  %2142 = vrot.lane.b32.xlu0 %v1849, 102
  %v2143 = vpop.permute.xlu0 %2142
  %2144 = vrot.lane.b32.xlu0 %v1850, 102
  %v2145 = vpop.permute.xlu0 %2144
  %2146 = vrot.lane.b32.xlu0 %v1851, 102
  %v2147 = vpop.permute.xlu0 %2146
  %2148 = vrot.lane.b32.xlu0 %v1852, 102
  %v2149 = vpop.permute.xlu0 %2148
  %2150 = vrot.lane.b32.xlu0 %v1853, 102
  %v2151 = vpop.permute.xlu0 %2150
  %vm2152 = vcmask 834560
  %v2153 = vsel %vm2152, %v2105, %v2107
  %v2154 = vsel %vm2152, %v2107, %v2109
  %v2155 = vsel %vm2152, %v2109, %v2111
  %v2156 = vsel %vm2152, %v2111, %v2113
  %v2157 = vsel %vm2152, %v2113, %v2115
  %v2158 = vsel %vm2152, %v2117, %v2119
  %v2159 = vsel %vm2152, %v2119, %v2121
  %v2160 = vsel %vm2152, %v2121, %v2123
  %v2161 = vsel %vm2152, %v2123, %v2125
  %v2162 = vsel %vm2152, %v2125, %v2127
  %v2163 = vsel %vm2152, %v2129, %v2131
  %v2164 = vsel %vm2152, %v2131, %v2133
  %v2165 = vsel %vm2152, %v2133, %v2135
  %v2166 = vsel %vm2152, %v2135, %v2137
  %v2167 = vsel %vm2152, %v2137, %v2139
  %v2168 = vsel %vm2152, %v2141, %v2143
  %v2169 = vsel %vm2152, %v2143, %v2145
  %v2170 = vsel %vm2152, %v2145, %v2147
  %v2171 = vsel %vm2152, %v2147, %v2149
  %v2172 = vsel %vm2152, %v2149, %v2151
  %v2194 = vsel %vm954, %v2102, 0
  %v2197 = vsel %vm954, %v2103, 0
  %2199 = vmatpush.msra.mxu0 0.0
  %2200 = vmatpush.msra.mxu0 0.0
  %2201 = vmatpush.msra.mxu0 0.0
  %2202 = vmatpush.msra.mxu0 0.0
  %2203 = vmatpush.msra.mxu0 0.0
  %2204 = vmatpush.msra.mxu0 0.0
  %2205 = vmatpush.msra.mxu0 0.0
  %2206 = vmatpush.msra.mxu0 0.0
  %2207 = vmatpush.msra.mxu0 0.0
  %2208 = vmatpush.msra.mxu0 0.0
  %2209 = vmatpush.msra.mxu0 0.0
  %2210 = vmatpush.msra.mxu0 0.0
  %2211 = vmatpush.msra.mxu0 %v2168
  %2212 = vmatpush.msra.mxu0 %v2163
  %2213 = vmatpush.msra.mxu0 %v2158
  %2214 = vmatpush.msra.mxu0 %v2153
  %2215 = vmatmul.f32.gmra.mxu0 %v2194
  %v2216 = vpop.f32.mrf.mxu0
  %v2217 = vadd.f32 0.0, %v2216
  %2218 = vmatmul.f32.gmra.mxu0 %v2197
  %v2219 = vpop.f32.mrf.mxu0
  %v2220 = vadd.f32 0.0, %v2219
  %2221 = vdwg.mxu0
  %2222 = vmatpush.msra.mxu0 0.0
  %2223 = vmatpush.msra.mxu0 0.0
  %2224 = vmatpush.msra.mxu0 0.0
  %2225 = vmatpush.msra.mxu0 0.0
  %2226 = vmatpush.msra.mxu0 0.0
  %2227 = vmatpush.msra.mxu0 0.0
  %2228 = vmatpush.msra.mxu0 0.0
  %2229 = vmatpush.msra.mxu0 0.0
  %2230 = vmatpush.msra.mxu0 0.0
  %2231 = vmatpush.msra.mxu0 0.0
  %2232 = vmatpush.msra.mxu0 0.0
  %2233 = vmatpush.msra.mxu0 0.0
  %2234 = vmatpush.msra.mxu0 %v2169
  %2235 = vmatpush.msra.mxu0 %v2164
  %2236 = vmatpush.msra.mxu0 %v2159
  %2237 = vmatpush.msra.mxu0 %v2154
  %2238 = vmatmul.f32.gmra.mxu0 %v2194
  %v2239 = vpop.f32.mrf.mxu0
  %v2240 = vadd.f32 0.0, %v2239
  %2241 = vmatmul.f32.gmra.mxu0 %v2197
  %v2242 = vpop.f32.mrf.mxu0
  %v2243 = vadd.f32 0.0, %v2242
  %2244 = vdwg.mxu0
  %2245 = vmatpush.msra.mxu0 0.0
  %2246 = vmatpush.msra.mxu0 0.0
  %2247 = vmatpush.msra.mxu0 0.0
  %2248 = vmatpush.msra.mxu0 0.0
  %2249 = vmatpush.msra.mxu0 0.0
  %2250 = vmatpush.msra.mxu0 0.0
  %2251 = vmatpush.msra.mxu0 0.0
  %2252 = vmatpush.msra.mxu0 0.0
  %2253 = vmatpush.msra.mxu0 0.0
  %2254 = vmatpush.msra.mxu0 0.0
  %2255 = vmatpush.msra.mxu0 0.0
  %2256 = vmatpush.msra.mxu0 0.0
  %2257 = vmatpush.msra.mxu0 %v2170
  %2258 = vmatpush.msra.mxu0 %v2165
  %2259 = vmatpush.msra.mxu0 %v2160
  %2260 = vmatpush.msra.mxu0 %v2155
  %2261 = vmatmul.f32.gmra.mxu0 %v2194
  %v2262 = vpop.f32.mrf.mxu0
  %v2263 = vadd.f32 0.0, %v2262
  %2264 = vmatmul.f32.gmra.mxu0 %v2197
  %v2265 = vpop.f32.mrf.mxu0
  %v2266 = vadd.f32 0.0, %v2265
  %2267 = vdwg.mxu0
  %2268 = vmatpush.msra.mxu0 0.0
  %2269 = vmatpush.msra.mxu0 0.0
  %2270 = vmatpush.msra.mxu0 0.0
  %2271 = vmatpush.msra.mxu0 0.0
  %2272 = vmatpush.msra.mxu0 0.0
  %2273 = vmatpush.msra.mxu0 0.0
  %2274 = vmatpush.msra.mxu0 0.0
  %2275 = vmatpush.msra.mxu0 0.0
  %2276 = vmatpush.msra.mxu0 0.0
  %2277 = vmatpush.msra.mxu0 0.0
  %2278 = vmatpush.msra.mxu0 0.0
  %2279 = vmatpush.msra.mxu0 0.0
  %2280 = vmatpush.msra.mxu0 %v2171
  %2281 = vmatpush.msra.mxu0 %v2166
  %2282 = vmatpush.msra.mxu0 %v2161
  %2283 = vmatpush.msra.mxu0 %v2156
  %2284 = vmatmul.f32.gmra.mxu0 %v2194
  %v2285 = vpop.f32.mrf.mxu0
  %v2286 = vadd.f32 0.0, %v2285
  %2287 = vmatmul.f32.gmra.mxu0 %v2197
  %v2288 = vpop.f32.mrf.mxu0
  %v2289 = vadd.f32 0.0, %v2288
  %2290 = vdwg.mxu0
  %2291 = vmatpush.msra.mxu0 0.0
  %2292 = vmatpush.msra.mxu0 0.0
  %2293 = vmatpush.msra.mxu0 0.0
  %2294 = vmatpush.msra.mxu0 0.0
  %2295 = vmatpush.msra.mxu0 0.0
  %2296 = vmatpush.msra.mxu0 0.0
  %2297 = vmatpush.msra.mxu0 0.0
  %2298 = vmatpush.msra.mxu0 0.0
  %2299 = vmatpush.msra.mxu0 0.0
  %2300 = vmatpush.msra.mxu0 0.0
  %2301 = vmatpush.msra.mxu0 0.0
  %2302 = vmatpush.msra.mxu0 0.0
  %2303 = vmatpush.msra.mxu0 %v2172
  %2304 = vmatpush.msra.mxu0 %v2167
  %2305 = vmatpush.msra.mxu0 %v2162
  %2306 = vmatpush.msra.mxu0 %v2157
  %2307 = vmatmul.f32.gmra.mxu0 %v2194
  %v2308 = vpop.f32.mrf.mxu0
  %v2309 = vadd.f32 0.0, %v2308
  %2310 = vmatmul.f32.gmra.mxu0 %v2197
  %v2311 = vpop.f32.mrf.mxu0
  %v2312 = vadd.f32 0.0, %v2311
  %2313 = vdwg.mxu0
  %v2314 = vadd.f32 %v2091, %v2217
  %v2315 = vadd.f32 %v2092, %v2240
  %v2316 = vadd.f32 %v2093, %v2263
  %v2317 = vadd.f32 %v2094, %v2286
  %v2318 = vadd.f32 %v2095, %v2309
  %v2319 = vadd.f32 %v2096, %v2220
  %v2320 = vadd.f32 %v2097, %v2243
  %v2321 = vadd.f32 %v2098, %v2266
  %v2322 = vadd.f32 %v2099, %v2289
  %v2323 = vadd.f32 %v2100, %v2312
  %s2324 = scalar_lea.vmem %s2, 112
  %v2325 = vld [vmem:[%s2324] sm:$0xff]
  %v2326 = vld [vmem:[%s2324 + $0x8] sm:$0xff]
  %2327 = vrot.lane.b32.xlu0 %v1830, 101
  %v2328 = vpop.permute.xlu0 %2327
  %2329 = vrot.lane.b32.xlu0 %v1831, 101
  %v2330 = vpop.permute.xlu0 %2329
  %2331 = vrot.lane.b32.xlu0 %v1832, 101
  %v2332 = vpop.permute.xlu0 %2331
  %2333 = vrot.lane.b32.xlu0 %v1833, 101
  %v2334 = vpop.permute.xlu0 %2333
  %2335 = vrot.lane.b32.xlu0 %v1834, 101
  %v2336 = vpop.permute.xlu0 %2335
  %2337 = vrot.lane.b32.xlu0 %v1835, 101
  %v2338 = vpop.permute.xlu0 %2337
  %2339 = vrot.lane.b32.xlu0 %v1836, 101
  %v2340 = vpop.permute.xlu0 %2339
  %2341 = vrot.lane.b32.xlu0 %v1837, 101
  %v2342 = vpop.permute.xlu0 %2341
  %2343 = vrot.lane.b32.xlu0 %v1838, 101
  %v2344 = vpop.permute.xlu0 %2343
  %2345 = vrot.lane.b32.xlu0 %v1839, 101
  %v2346 = vpop.permute.xlu0 %2345
  %2347 = vrot.lane.b32.xlu0 %v1840, 101
  %v2348 = vpop.permute.xlu0 %2347
  %2349 = vrot.lane.b32.xlu0 %v1841, 101
  %v2350 = vpop.permute.xlu0 %2349
  %2351 = vrot.lane.b32.xlu0 %v1842, 101
  %v2352 = vpop.permute.xlu0 %2351
  %2353 = vrot.lane.b32.xlu0 %v1843, 101
  %v2354 = vpop.permute.xlu0 %2353
  %2355 = vrot.lane.b32.xlu0 %v1844, 101
  %v2356 = vpop.permute.xlu0 %2355
  %2357 = vrot.lane.b32.xlu0 %v1845, 101
  %v2358 = vpop.permute.xlu0 %2357
  %2359 = vrot.lane.b32.xlu0 %v1846, 101
  %v2360 = vpop.permute.xlu0 %2359
  %2361 = vrot.lane.b32.xlu0 %v1847, 101
  %v2362 = vpop.permute.xlu0 %2361
  %2363 = vrot.lane.b32.xlu0 %v1848, 101
  %v2364 = vpop.permute.xlu0 %2363
  %2365 = vrot.lane.b32.xlu0 %v1849, 101
  %v2366 = vpop.permute.xlu0 %2365
  %2367 = vrot.lane.b32.xlu0 %v1850, 101
  %v2368 = vpop.permute.xlu0 %2367
  %2369 = vrot.lane.b32.xlu0 %v1851, 101
  %v2370 = vpop.permute.xlu0 %2369
  %2371 = vrot.lane.b32.xlu0 %v1852, 101
  %v2372 = vpop.permute.xlu0 %2371
  %2373 = vrot.lane.b32.xlu0 %v1853, 101
  %v2374 = vpop.permute.xlu0 %2373
  %vm2375 = vcmask 826368
  %v2376 = vsel %vm2375, %v2328, %v2330
  %v2377 = vsel %vm2375, %v2330, %v2332
  %v2378 = vsel %vm2375, %v2332, %v2334
  %v2379 = vsel %vm2375, %v2334, %v2336
  %v2380 = vsel %vm2375, %v2336, %v2338
  %v2381 = vsel %vm2375, %v2340, %v2342
  %v2382 = vsel %vm2375, %v2342, %v2344
  %v2383 = vsel %vm2375, %v2344, %v2346
  %v2384 = vsel %vm2375, %v2346, %v2348
  %v2385 = vsel %vm2375, %v2348, %v2350
  %v2386 = vsel %vm2375, %v2352, %v2354
  %v2387 = vsel %vm2375, %v2354, %v2356
  %v2388 = vsel %vm2375, %v2356, %v2358
  %v2389 = vsel %vm2375, %v2358, %v2360
  %v2390 = vsel %vm2375, %v2360, %v2362
  %v2391 = vsel %vm2375, %v2364, %v2366
  %v2392 = vsel %vm2375, %v2366, %v2368
  %v2393 = vsel %vm2375, %v2368, %v2370
  %v2394 = vsel %vm2375, %v2370, %v2372
  %v2395 = vsel %vm2375, %v2372, %v2374
  %v2417 = vsel %vm954, %v2325, 0
  %v2420 = vsel %vm954, %v2326, 0
  %2422 = vmatpush.msra.mxu0 0.0
  %2423 = vmatpush.msra.mxu0 0.0
  %2424 = vmatpush.msra.mxu0 0.0
  %2425 = vmatpush.msra.mxu0 0.0
  %2426 = vmatpush.msra.mxu0 0.0
  %2427 = vmatpush.msra.mxu0 0.0
  %2428 = vmatpush.msra.mxu0 0.0
  %2429 = vmatpush.msra.mxu0 0.0
  %2430 = vmatpush.msra.mxu0 0.0
  %2431 = vmatpush.msra.mxu0 0.0
  %2432 = vmatpush.msra.mxu0 0.0
  %2433 = vmatpush.msra.mxu0 0.0
  %2434 = vmatpush.msra.mxu0 %v2391
  %2435 = vmatpush.msra.mxu0 %v2386
  %2436 = vmatpush.msra.mxu0 %v2381
  %2437 = vmatpush.msra.mxu0 %v2376
  %2438 = vmatmul.f32.gmra.mxu0 %v2417
  %v2439 = vpop.f32.mrf.mxu0
  %v2440 = vadd.f32 0.0, %v2439
  %2441 = vmatmul.f32.gmra.mxu0 %v2420
  %v2442 = vpop.f32.mrf.mxu0
  %v2443 = vadd.f32 0.0, %v2442
  %2444 = vdwg.mxu0
  %2445 = vmatpush.msra.mxu0 0.0
  %2446 = vmatpush.msra.mxu0 0.0
  %2447 = vmatpush.msra.mxu0 0.0
  %2448 = vmatpush.msra.mxu0 0.0
  %2449 = vmatpush.msra.mxu0 0.0
  %2450 = vmatpush.msra.mxu0 0.0
  %2451 = vmatpush.msra.mxu0 0.0
  %2452 = vmatpush.msra.mxu0 0.0
  %2453 = vmatpush.msra.mxu0 0.0
  %2454 = vmatpush.msra.mxu0 0.0
  %2455 = vmatpush.msra.mxu0 0.0
  %2456 = vmatpush.msra.mxu0 0.0
  %2457 = vmatpush.msra.mxu0 %v2392
  %2458 = vmatpush.msra.mxu0 %v2387
  %2459 = vmatpush.msra.mxu0 %v2382
  %2460 = vmatpush.msra.mxu0 %v2377
  %2461 = vmatmul.f32.gmra.mxu0 %v2417
  %v2462 = vpop.f32.mrf.mxu0
  %v2463 = vadd.f32 0.0, %v2462
  %2464 = vmatmul.f32.gmra.mxu0 %v2420
  %v2465 = vpop.f32.mrf.mxu0
  %v2466 = vadd.f32 0.0, %v2465
  %2467 = vdwg.mxu0
  %2468 = vmatpush.msra.mxu0 0.0
  %2469 = vmatpush.msra.mxu0 0.0
  %2470 = vmatpush.msra.mxu0 0.0
  %2471 = vmatpush.msra.mxu0 0.0
  %2472 = vmatpush.msra.mxu0 0.0
  %2473 = vmatpush.msra.mxu0 0.0
  %2474 = vmatpush.msra.mxu0 0.0
  %2475 = vmatpush.msra.mxu0 0.0
  %2476 = vmatpush.msra.mxu0 0.0
  %2477 = vmatpush.msra.mxu0 0.0
  %2478 = vmatpush.msra.mxu0 0.0
  %2479 = vmatpush.msra.mxu0 0.0
  %2480 = vmatpush.msra.mxu0 %v2393
  %2481 = vmatpush.msra.mxu0 %v2388
  %2482 = vmatpush.msra.mxu0 %v2383
  %2483 = vmatpush.msra.mxu0 %v2378
  %2484 = vmatmul.f32.gmra.mxu0 %v2417
  %v2485 = vpop.f32.mrf.mxu0
  %v2486 = vadd.f32 0.0, %v2485
  %2487 = vmatmul.f32.gmra.mxu0 %v2420
  %v2488 = vpop.f32.mrf.mxu0
  %v2489 = vadd.f32 0.0, %v2488
  %2490 = vdwg.mxu0
  %2491 = vmatpush.msra.mxu0 0.0
  %2492 = vmatpush.msra.mxu0 0.0
  %2493 = vmatpush.msra.mxu0 0.0
  %2494 = vmatpush.msra.mxu0 0.0
  %2495 = vmatpush.msra.mxu0 0.0
  %2496 = vmatpush.msra.mxu0 0.0
  %2497 = vmatpush.msra.mxu0 0.0
  %2498 = vmatpush.msra.mxu0 0.0
  %2499 = vmatpush.msra.mxu0 0.0
  %2500 = vmatpush.msra.mxu0 0.0
  %2501 = vmatpush.msra.mxu0 0.0
  %2502 = vmatpush.msra.mxu0 0.0
  %2503 = vmatpush.msra.mxu0 %v2394
  %2504 = vmatpush.msra.mxu0 %v2389
  %2505 = vmatpush.msra.mxu0 %v2384
  %2506 = vmatpush.msra.mxu0 %v2379
  %2507 = vmatmul.f32.gmra.mxu0 %v2417
  %v2508 = vpop.f32.mrf.mxu0
  %v2509 = vadd.f32 0.0, %v2508
  %2510 = vmatmul.f32.gmra.mxu0 %v2420
  %v2511 = vpop.f32.mrf.mxu0
  %v2512 = vadd.f32 0.0, %v2511
  %2513 = vdwg.mxu0
  %2514 = vmatpush.msra.mxu0 0.0
  %2515 = vmatpush.msra.mxu0 0.0
  %2516 = vmatpush.msra.mxu0 0.0
  %2517 = vmatpush.msra.mxu0 0.0
  %2518 = vmatpush.msra.mxu0 0.0
  %2519 = vmatpush.msra.mxu0 0.0
  %2520 = vmatpush.msra.mxu0 0.0
  %2521 = vmatpush.msra.mxu0 0.0
  %2522 = vmatpush.msra.mxu0 0.0
  %2523 = vmatpush.msra.mxu0 0.0
  %2524 = vmatpush.msra.mxu0 0.0
  %2525 = vmatpush.msra.mxu0 0.0
  %2526 = vmatpush.msra.mxu0 %v2395
  %2527 = vmatpush.msra.mxu0 %v2390
  %2528 = vmatpush.msra.mxu0 %v2385
  %2529 = vmatpush.msra.mxu0 %v2380
  %2530 = vmatmul.f32.gmra.mxu0 %v2417
  %v2531 = vpop.f32.mrf.mxu0
  %v2532 = vadd.f32 0.0, %v2531
  %2533 = vmatmul.f32.gmra.mxu0 %v2420
  %v2534 = vpop.f32.mrf.mxu0
  %v2535 = vadd.f32 0.0, %v2534
  %2536 = vdwg.mxu0
  %v2537 = vadd.f32 %v2314, %v2440
  %v2538 = vadd.f32 %v2315, %v2463
  %v2539 = vadd.f32 %v2316, %v2486
  %v2540 = vadd.f32 %v2317, %v2509
  %v2541 = vadd.f32 %v2318, %v2532
  %v2542 = vadd.f32 %v2319, %v2443
  %v2543 = vadd.f32 %v2320, %v2466
  %v2544 = vadd.f32 %v2321, %v2489
  %v2545 = vadd.f32 %v2322, %v2512
  %v2546 = vadd.f32 %v2323, %v2535
  %s2547 = scalar_lea.vmem %s2, 128
  %v2548 = vld [vmem:[%s2547] sm:$0xff]
  %v2549 = vld [vmem:[%s2547 + $0x8] sm:$0xff]
  %2550 = vrot.lane.b32.xlu0 %v1830, 100
  %v2551 = vpop.permute.xlu0 %2550
  %2552 = vrot.lane.b32.xlu0 %v1831, 100
  %v2553 = vpop.permute.xlu0 %2552
  %2554 = vrot.lane.b32.xlu0 %v1832, 100
  %v2555 = vpop.permute.xlu0 %2554
  %2556 = vrot.lane.b32.xlu0 %v1833, 100
  %v2557 = vpop.permute.xlu0 %2556
  %2558 = vrot.lane.b32.xlu0 %v1834, 100
  %v2559 = vpop.permute.xlu0 %2558
  %2560 = vrot.lane.b32.xlu0 %v1835, 100
  %v2561 = vpop.permute.xlu0 %2560
  %2562 = vrot.lane.b32.xlu0 %v1836, 100
  %v2563 = vpop.permute.xlu0 %2562
  %2564 = vrot.lane.b32.xlu0 %v1837, 100
  %v2565 = vpop.permute.xlu0 %2564
  %2566 = vrot.lane.b32.xlu0 %v1838, 100
  %v2567 = vpop.permute.xlu0 %2566
  %2568 = vrot.lane.b32.xlu0 %v1839, 100
  %v2569 = vpop.permute.xlu0 %2568
  %2570 = vrot.lane.b32.xlu0 %v1840, 100
  %v2571 = vpop.permute.xlu0 %2570
  %2572 = vrot.lane.b32.xlu0 %v1841, 100
  %v2573 = vpop.permute.xlu0 %2572
  %2574 = vrot.lane.b32.xlu0 %v1842, 100
  %v2575 = vpop.permute.xlu0 %2574
  %2576 = vrot.lane.b32.xlu0 %v1843, 100
  %v2577 = vpop.permute.xlu0 %2576
  %2578 = vrot.lane.b32.xlu0 %v1844, 100
  %v2579 = vpop.permute.xlu0 %2578
  %2580 = vrot.lane.b32.xlu0 %v1845, 100
  %v2581 = vpop.permute.xlu0 %2580
  %2582 = vrot.lane.b32.xlu0 %v1846, 100
  %v2583 = vpop.permute.xlu0 %2582
  %2584 = vrot.lane.b32.xlu0 %v1847, 100
  %v2585 = vpop.permute.xlu0 %2584
  %2586 = vrot.lane.b32.xlu0 %v1848, 100
  %v2587 = vpop.permute.xlu0 %2586
  %2588 = vrot.lane.b32.xlu0 %v1849, 100
  %v2589 = vpop.permute.xlu0 %2588
  %2590 = vrot.lane.b32.xlu0 %v1850, 100
  %v2591 = vpop.permute.xlu0 %2590
  %2592 = vrot.lane.b32.xlu0 %v1851, 100
  %v2593 = vpop.permute.xlu0 %2592
  %2594 = vrot.lane.b32.xlu0 %v1852, 100
  %v2595 = vpop.permute.xlu0 %2594
  %2596 = vrot.lane.b32.xlu0 %v1853, 100
  %v2597 = vpop.permute.xlu0 %2596
  %vm2598 = vcmask 818176
  %v2599 = vsel %vm2598, %v2551, %v2553
  %v2600 = vsel %vm2598, %v2553, %v2555
  %v2601 = vsel %vm2598, %v2555, %v2557
  %v2602 = vsel %vm2598, %v2557, %v2559
  %v2603 = vsel %vm2598, %v2559, %v2561
  %v2604 = vsel %vm2598, %v2563, %v2565
  %v2605 = vsel %vm2598, %v2565, %v2567
  %v2606 = vsel %vm2598, %v2567, %v2569
  %v2607 = vsel %vm2598, %v2569, %v2571
  %v2608 = vsel %vm2598, %v2571, %v2573
  %v2609 = vsel %vm2598, %v2575, %v2577
  %v2610 = vsel %vm2598, %v2577, %v2579
  %v2611 = vsel %vm2598, %v2579, %v2581
  %v2612 = vsel %vm2598, %v2581, %v2583
  %v2613 = vsel %vm2598, %v2583, %v2585
  %v2614 = vsel %vm2598, %v2587, %v2589
  %v2615 = vsel %vm2598, %v2589, %v2591
  %v2616 = vsel %vm2598, %v2591, %v2593
  %v2617 = vsel %vm2598, %v2593, %v2595
  %v2618 = vsel %vm2598, %v2595, %v2597
  %v2640 = vsel %vm954, %v2548, 0
  %v2643 = vsel %vm954, %v2549, 0
  %2645 = vmatpush.msra.mxu0 0.0
  %2646 = vmatpush.msra.mxu0 0.0
  %2647 = vmatpush.msra.mxu0 0.0
  %2648 = vmatpush.msra.mxu0 0.0
  %2649 = vmatpush.msra.mxu0 0.0
  %2650 = vmatpush.msra.mxu0 0.0
  %2651 = vmatpush.msra.mxu0 0.0
  %2652 = vmatpush.msra.mxu0 0.0
  %2653 = vmatpush.msra.mxu0 0.0
  %2654 = vmatpush.msra.mxu0 0.0
  %2655 = vmatpush.msra.mxu0 0.0
  %2656 = vmatpush.msra.mxu0 0.0
  %2657 = vmatpush.msra.mxu0 %v2614
  %2658 = vmatpush.msra.mxu0 %v2609
  %2659 = vmatpush.msra.mxu0 %v2604
  %2660 = vmatpush.msra.mxu0 %v2599
  %2661 = vmatmul.f32.gmra.mxu0 %v2640
  %v2662 = vpop.f32.mrf.mxu0
  %v2663 = vadd.f32 0.0, %v2662
  %2664 = vmatmul.f32.gmra.mxu0 %v2643
  %v2665 = vpop.f32.mrf.mxu0
  %v2666 = vadd.f32 0.0, %v2665
  %2667 = vdwg.mxu0
  %2668 = vmatpush.msra.mxu0 0.0
  %2669 = vmatpush.msra.mxu0 0.0
  %2670 = vmatpush.msra.mxu0 0.0
  %2671 = vmatpush.msra.mxu0 0.0
  %2672 = vmatpush.msra.mxu0 0.0
  %2673 = vmatpush.msra.mxu0 0.0
  %2674 = vmatpush.msra.mxu0 0.0
  %2675 = vmatpush.msra.mxu0 0.0
  %2676 = vmatpush.msra.mxu0 0.0
  %2677 = vmatpush.msra.mxu0 0.0
  %2678 = vmatpush.msra.mxu0 0.0
  %2679 = vmatpush.msra.mxu0 0.0
  %2680 = vmatpush.msra.mxu0 %v2615
  %2681 = vmatpush.msra.mxu0 %v2610
  %2682 = vmatpush.msra.mxu0 %v2605
  %2683 = vmatpush.msra.mxu0 %v2600
  %2684 = vmatmul.f32.gmra.mxu0 %v2640
  %v2685 = vpop.f32.mrf.mxu0
  %v2686 = vadd.f32 0.0, %v2685
  %2687 = vmatmul.f32.gmra.mxu0 %v2643
  %v2688 = vpop.f32.mrf.mxu0
  %v2689 = vadd.f32 0.0, %v2688
  %2690 = vdwg.mxu0
  %2691 = vmatpush.msra.mxu0 0.0
  %2692 = vmatpush.msra.mxu0 0.0
  %2693 = vmatpush.msra.mxu0 0.0
  %2694 = vmatpush.msra.mxu0 0.0
  %2695 = vmatpush.msra.mxu0 0.0
  %2696 = vmatpush.msra.mxu0 0.0
  %2697 = vmatpush.msra.mxu0 0.0
  %2698 = vmatpush.msra.mxu0 0.0
  %2699 = vmatpush.msra.mxu0 0.0
  %2700 = vmatpush.msra.mxu0 0.0
  %2701 = vmatpush.msra.mxu0 0.0
  %2702 = vmatpush.msra.mxu0 0.0
  %2703 = vmatpush.msra.mxu0 %v2616
  %2704 = vmatpush.msra.mxu0 %v2611
  %2705 = vmatpush.msra.mxu0 %v2606
  %2706 = vmatpush.msra.mxu0 %v2601
  %2707 = vmatmul.f32.gmra.mxu0 %v2640
  %v2708 = vpop.f32.mrf.mxu0
  %v2709 = vadd.f32 0.0, %v2708
  %2710 = vmatmul.f32.gmra.mxu0 %v2643
  %v2711 = vpop.f32.mrf.mxu0
  %v2712 = vadd.f32 0.0, %v2711
  %2713 = vdwg.mxu0
  %2714 = vmatpush.msra.mxu0 0.0
  %2715 = vmatpush.msra.mxu0 0.0
  %2716 = vmatpush.msra.mxu0 0.0
  %2717 = vmatpush.msra.mxu0 0.0
  %2718 = vmatpush.msra.mxu0 0.0
  %2719 = vmatpush.msra.mxu0 0.0
  %2720 = vmatpush.msra.mxu0 0.0
  %2721 = vmatpush.msra.mxu0 0.0
  %2722 = vmatpush.msra.mxu0 0.0
  %2723 = vmatpush.msra.mxu0 0.0
  %2724 = vmatpush.msra.mxu0 0.0
  %2725 = vmatpush.msra.mxu0 0.0
  %2726 = vmatpush.msra.mxu0 %v2617
  %2727 = vmatpush.msra.mxu0 %v2612
  %2728 = vmatpush.msra.mxu0 %v2607
  %2729 = vmatpush.msra.mxu0 %v2602
  %2730 = vmatmul.f32.gmra.mxu0 %v2640
  %v2731 = vpop.f32.mrf.mxu0
  %v2732 = vadd.f32 0.0, %v2731
  %2733 = vmatmul.f32.gmra.mxu0 %v2643
  %v2734 = vpop.f32.mrf.mxu0
  %v2735 = vadd.f32 0.0, %v2734
  %2736 = vdwg.mxu0
  %2737 = vmatpush.msra.mxu0 0.0
  %2738 = vmatpush.msra.mxu0 0.0
  %2739 = vmatpush.msra.mxu0 0.0
  %2740 = vmatpush.msra.mxu0 0.0
  %2741 = vmatpush.msra.mxu0 0.0
  %2742 = vmatpush.msra.mxu0 0.0
  %2743 = vmatpush.msra.mxu0 0.0
  %2744 = vmatpush.msra.mxu0 0.0
  %2745 = vmatpush.msra.mxu0 0.0
  %2746 = vmatpush.msra.mxu0 0.0
  %2747 = vmatpush.msra.mxu0 0.0
  %2748 = vmatpush.msra.mxu0 0.0
  %2749 = vmatpush.msra.mxu0 %v2618
  %2750 = vmatpush.msra.mxu0 %v2613
  %2751 = vmatpush.msra.mxu0 %v2608
  %2752 = vmatpush.msra.mxu0 %v2603
  %2753 = vmatmul.f32.gmra.mxu0 %v2640
  %v2754 = vpop.f32.mrf.mxu0
  %v2755 = vadd.f32 0.0, %v2754
  %2756 = vmatmul.f32.gmra.mxu0 %v2643
  %v2757 = vpop.f32.mrf.mxu0
  %v2758 = vadd.f32 0.0, %v2757
  %2759 = vdwg.mxu0
  %v2760 = vadd.f32 %v2537, %v2663
  %v2761 = vadd.f32 %v2538, %v2686
  %v2762 = vadd.f32 %v2539, %v2709
  %v2763 = vadd.f32 %v2540, %v2732
  %v2764 = vadd.f32 %v2541, %v2755
  %v2765 = vadd.f32 %v2542, %v2666
  %v2766 = vadd.f32 %v2543, %v2689
  %v2767 = vadd.f32 %v2544, %v2712
  %v2768 = vadd.f32 %v2545, %v2735
  %v2769 = vadd.f32 %v2546, %v2758
  %s2770 = scalar_lea.vmem %s2, 144
  %v2771 = vld [vmem:[%s2770] sm:$0xff]
  %v2772 = vld [vmem:[%s2770 + $0x8] sm:$0xff]
  %2773 = vrot.lane.b32.xlu0 %v1830, 99
  %v2774 = vpop.permute.xlu0 %2773
  %2775 = vrot.lane.b32.xlu0 %v1831, 99
  %v2776 = vpop.permute.xlu0 %2775
  %2777 = vrot.lane.b32.xlu0 %v1832, 99
  %v2778 = vpop.permute.xlu0 %2777
  %2779 = vrot.lane.b32.xlu0 %v1833, 99
  %v2780 = vpop.permute.xlu0 %2779
  %2781 = vrot.lane.b32.xlu0 %v1834, 99
  %v2782 = vpop.permute.xlu0 %2781
  %2783 = vrot.lane.b32.xlu0 %v1835, 99
  %v2784 = vpop.permute.xlu0 %2783
  %2785 = vrot.lane.b32.xlu0 %v1836, 99
  %v2786 = vpop.permute.xlu0 %2785
  %2787 = vrot.lane.b32.xlu0 %v1837, 99
  %v2788 = vpop.permute.xlu0 %2787
  %2789 = vrot.lane.b32.xlu0 %v1838, 99
  %v2790 = vpop.permute.xlu0 %2789
  %2791 = vrot.lane.b32.xlu0 %v1839, 99
  %v2792 = vpop.permute.xlu0 %2791
  %2793 = vrot.lane.b32.xlu0 %v1840, 99
  %v2794 = vpop.permute.xlu0 %2793
  %2795 = vrot.lane.b32.xlu0 %v1841, 99
  %v2796 = vpop.permute.xlu0 %2795
  %2797 = vrot.lane.b32.xlu0 %v1842, 99
  %v2798 = vpop.permute.xlu0 %2797
  %2799 = vrot.lane.b32.xlu0 %v1843, 99
  %v2800 = vpop.permute.xlu0 %2799
  %2801 = vrot.lane.b32.xlu0 %v1844, 99
  %v2802 = vpop.permute.xlu0 %2801
  %2803 = vrot.lane.b32.xlu0 %v1845, 99
  %v2804 = vpop.permute.xlu0 %2803
  %2805 = vrot.lane.b32.xlu0 %v1846, 99
  %v2806 = vpop.permute.xlu0 %2805
  %2807 = vrot.lane.b32.xlu0 %v1847, 99
  %v2808 = vpop.permute.xlu0 %2807
  %2809 = vrot.lane.b32.xlu0 %v1848, 99
  %v2810 = vpop.permute.xlu0 %2809
  %2811 = vrot.lane.b32.xlu0 %v1849, 99
  %v2812 = vpop.permute.xlu0 %2811
  %2813 = vrot.lane.b32.xlu0 %v1850, 99
  %v2814 = vpop.permute.xlu0 %2813
  %2815 = vrot.lane.b32.xlu0 %v1851, 99
  %v2816 = vpop.permute.xlu0 %2815
  %2817 = vrot.lane.b32.xlu0 %v1852, 99
  %v2818 = vpop.permute.xlu0 %2817
  %2819 = vrot.lane.b32.xlu0 %v1853, 99
  %v2820 = vpop.permute.xlu0 %2819
  %vm2821 = vcmask 809984
  %v2822 = vsel %vm2821, %v2774, %v2776
  %v2823 = vsel %vm2821, %v2776, %v2778
  %v2824 = vsel %vm2821, %v2778, %v2780
  %v2825 = vsel %vm2821, %v2780, %v2782
  %v2826 = vsel %vm2821, %v2782, %v2784
  %v2827 = vsel %vm2821, %v2786, %v2788
  %v2828 = vsel %vm2821, %v2788, %v2790
  %v2829 = vsel %vm2821, %v2790, %v2792
  %v2830 = vsel %vm2821, %v2792, %v2794
  %v2831 = vsel %vm2821, %v2794, %v2796
  %v2832 = vsel %vm2821, %v2798, %v2800
  %v2833 = vsel %vm2821, %v2800, %v2802
  %v2834 = vsel %vm2821, %v2802, %v2804
  %v2835 = vsel %vm2821, %v2804, %v2806
  %v2836 = vsel %vm2821, %v2806, %v2808
  %v2837 = vsel %vm2821, %v2810, %v2812
  %v2838 = vsel %vm2821, %v2812, %v2814
  %v2839 = vsel %vm2821, %v2814, %v2816
  %v2840 = vsel %vm2821, %v2816, %v2818
  %v2841 = vsel %vm2821, %v2818, %v2820
  %v2863 = vsel %vm954, %v2771, 0
  %v2866 = vsel %vm954, %v2772, 0
  %2868 = vmatpush.msra.mxu0 0.0
  %2869 = vmatpush.msra.mxu0 0.0
  %2870 = vmatpush.msra.mxu0 0.0
  %2871 = vmatpush.msra.mxu0 0.0
  %2872 = vmatpush.msra.mxu0 0.0
  %2873 = vmatpush.msra.mxu0 0.0
  %2874 = vmatpush.msra.mxu0 0.0
  %2875 = vmatpush.msra.mxu0 0.0
  %2876 = vmatpush.msra.mxu0 0.0
  %2877 = vmatpush.msra.mxu0 0.0
  %2878 = vmatpush.msra.mxu0 0.0
  %2879 = vmatpush.msra.mxu0 0.0
  %2880 = vmatpush.msra.mxu0 %v2837
  %2881 = vmatpush.msra.mxu0 %v2832
  %2882 = vmatpush.msra.mxu0 %v2827
  %2883 = vmatpush.msra.mxu0 %v2822
  %2884 = vmatmul.f32.gmra.mxu0 %v2863
  %v2885 = vpop.f32.mrf.mxu0
  %v2886 = vadd.f32 0.0, %v2885
  %2887 = vmatmul.f32.gmra.mxu0 %v2866
  %v2888 = vpop.f32.mrf.mxu0
  %v2889 = vadd.f32 0.0, %v2888
  %2890 = vdwg.mxu0
  %2891 = vmatpush.msra.mxu0 0.0
  %2892 = vmatpush.msra.mxu0 0.0
  %2893 = vmatpush.msra.mxu0 0.0
  %2894 = vmatpush.msra.mxu0 0.0
  %2895 = vmatpush.msra.mxu0 0.0
  %2896 = vmatpush.msra.mxu0 0.0
  %2897 = vmatpush.msra.mxu0 0.0
  %2898 = vmatpush.msra.mxu0 0.0
  %2899 = vmatpush.msra.mxu0 0.0
  %2900 = vmatpush.msra.mxu0 0.0
  %2901 = vmatpush.msra.mxu0 0.0
  %2902 = vmatpush.msra.mxu0 0.0
  %2903 = vmatpush.msra.mxu0 %v2838
  %2904 = vmatpush.msra.mxu0 %v2833
  %2905 = vmatpush.msra.mxu0 %v2828
  %2906 = vmatpush.msra.mxu0 %v2823
  %2907 = vmatmul.f32.gmra.mxu0 %v2863
  %v2908 = vpop.f32.mrf.mxu0
  %v2909 = vadd.f32 0.0, %v2908
  %2910 = vmatmul.f32.gmra.mxu0 %v2866
  %v2911 = vpop.f32.mrf.mxu0
  %v2912 = vadd.f32 0.0, %v2911
  %2913 = vdwg.mxu0
  %2914 = vmatpush.msra.mxu0 0.0
  %2915 = vmatpush.msra.mxu0 0.0
  %2916 = vmatpush.msra.mxu0 0.0
  %2917 = vmatpush.msra.mxu0 0.0
  %2918 = vmatpush.msra.mxu0 0.0
  %2919 = vmatpush.msra.mxu0 0.0
  %2920 = vmatpush.msra.mxu0 0.0
  %2921 = vmatpush.msra.mxu0 0.0
  %2922 = vmatpush.msra.mxu0 0.0
  %2923 = vmatpush.msra.mxu0 0.0
  %2924 = vmatpush.msra.mxu0 0.0
  %2925 = vmatpush.msra.mxu0 0.0
  %2926 = vmatpush.msra.mxu0 %v2839
  %2927 = vmatpush.msra.mxu0 %v2834
  %2928 = vmatpush.msra.mxu0 %v2829
  %2929 = vmatpush.msra.mxu0 %v2824
  %2930 = vmatmul.f32.gmra.mxu0 %v2863
  %v2931 = vpop.f32.mrf.mxu0
  %v2932 = vadd.f32 0.0, %v2931
  %2933 = vmatmul.f32.gmra.mxu0 %v2866
  %v2934 = vpop.f32.mrf.mxu0
  %v2935 = vadd.f32 0.0, %v2934
  %2936 = vdwg.mxu0
  %2937 = vmatpush.msra.mxu0 0.0
  %2938 = vmatpush.msra.mxu0 0.0
  %2939 = vmatpush.msra.mxu0 0.0
  %2940 = vmatpush.msra.mxu0 0.0
  %2941 = vmatpush.msra.mxu0 0.0
  %2942 = vmatpush.msra.mxu0 0.0
  %2943 = vmatpush.msra.mxu0 0.0
  %2944 = vmatpush.msra.mxu0 0.0
  %2945 = vmatpush.msra.mxu0 0.0
  %2946 = vmatpush.msra.mxu0 0.0
  %2947 = vmatpush.msra.mxu0 0.0
  %2948 = vmatpush.msra.mxu0 0.0
  %2949 = vmatpush.msra.mxu0 %v2840
  %2950 = vmatpush.msra.mxu0 %v2835
  %2951 = vmatpush.msra.mxu0 %v2830
  %2952 = vmatpush.msra.mxu0 %v2825
  %2953 = vmatmul.f32.gmra.mxu0 %v2863
  %v2954 = vpop.f32.mrf.mxu0
  %v2955 = vadd.f32 0.0, %v2954
  %2956 = vmatmul.f32.gmra.mxu0 %v2866
  %v2957 = vpop.f32.mrf.mxu0
  %v2958 = vadd.f32 0.0, %v2957
  %2959 = vdwg.mxu0
  %2960 = vmatpush.msra.mxu0 0.0
  %2961 = vmatpush.msra.mxu0 0.0
  %2962 = vmatpush.msra.mxu0 0.0
  %2963 = vmatpush.msra.mxu0 0.0
  %2964 = vmatpush.msra.mxu0 0.0
  %2965 = vmatpush.msra.mxu0 0.0
  %2966 = vmatpush.msra.mxu0 0.0
  %2967 = vmatpush.msra.mxu0 0.0
  %2968 = vmatpush.msra.mxu0 0.0
  %2969 = vmatpush.msra.mxu0 0.0
  %2970 = vmatpush.msra.mxu0 0.0
  %2971 = vmatpush.msra.mxu0 0.0
  %2972 = vmatpush.msra.mxu0 %v2841
  %2973 = vmatpush.msra.mxu0 %v2836
  %2974 = vmatpush.msra.mxu0 %v2831
  %2975 = vmatpush.msra.mxu0 %v2826
  %2976 = vmatmul.f32.gmra.mxu0 %v2863
  %v2977 = vpop.f32.mrf.mxu0
  %v2978 = vadd.f32 0.0, %v2977
  %2979 = vmatmul.f32.gmra.mxu0 %v2866
  %v2980 = vpop.f32.mrf.mxu0
  %v2981 = vadd.f32 0.0, %v2980
  %2982 = vdwg.mxu0
  %v2983 = vadd.f32 %v2760, %v2886
  %v2984 = vadd.f32 %v2761, %v2909
  %v2985 = vadd.f32 %v2762, %v2932
  %v2986 = vadd.f32 %v2763, %v2955
  %v2987 = vadd.f32 %v2764, %v2978
  %v2988 = vadd.f32 %v2765, %v2889
  %v2989 = vadd.f32 %v2766, %v2912
  %v2990 = vadd.f32 %v2767, %v2935
  %v2991 = vadd.f32 %v2768, %v2958
  %v2992 = vadd.f32 %v2769, %v2981
  %s2993 = scalar_lea.vmem %s2, 160
  %v2994 = vld [vmem:[%s2993] sm:$0xff]
  %v2995 = vld [vmem:[%s2993 + $0x8] sm:$0xff]
  %2996 = vrot.lane.b32.xlu0 %v1830, 78
  %v2997 = vpop.permute.xlu0 %2996
  %2998 = vrot.lane.b32.xlu0 %v1831, 78
  %v2999 = vpop.permute.xlu0 %2998
  %3000 = vrot.lane.b32.xlu0 %v1832, 78
  %v3001 = vpop.permute.xlu0 %3000
  %3002 = vrot.lane.b32.xlu0 %v1833, 78
  %v3003 = vpop.permute.xlu0 %3002
  %3004 = vrot.lane.b32.xlu0 %v1834, 78
  %v3005 = vpop.permute.xlu0 %3004
  %3006 = vrot.lane.b32.xlu0 %v1835, 78
  %v3007 = vpop.permute.xlu0 %3006
  %3008 = vrot.lane.b32.xlu0 %v1836, 78
  %v3009 = vpop.permute.xlu0 %3008
  %3010 = vrot.lane.b32.xlu0 %v1837, 78
  %v3011 = vpop.permute.xlu0 %3010
  %3012 = vrot.lane.b32.xlu0 %v1838, 78
  %v3013 = vpop.permute.xlu0 %3012
  %3014 = vrot.lane.b32.xlu0 %v1839, 78
  %v3015 = vpop.permute.xlu0 %3014
  %3016 = vrot.lane.b32.xlu0 %v1840, 78
  %v3017 = vpop.permute.xlu0 %3016
  %3018 = vrot.lane.b32.xlu0 %v1841, 78
  %v3019 = vpop.permute.xlu0 %3018
  %3020 = vrot.lane.b32.xlu0 %v1842, 78
  %v3021 = vpop.permute.xlu0 %3020
  %3022 = vrot.lane.b32.xlu0 %v1843, 78
  %v3023 = vpop.permute.xlu0 %3022
  %3024 = vrot.lane.b32.xlu0 %v1844, 78
  %v3025 = vpop.permute.xlu0 %3024
  %3026 = vrot.lane.b32.xlu0 %v1845, 78
  %v3027 = vpop.permute.xlu0 %3026
  %3028 = vrot.lane.b32.xlu0 %v1846, 78
  %v3029 = vpop.permute.xlu0 %3028
  %3030 = vrot.lane.b32.xlu0 %v1847, 78
  %v3031 = vpop.permute.xlu0 %3030
  %3032 = vrot.lane.b32.xlu0 %v1848, 78
  %v3033 = vpop.permute.xlu0 %3032
  %3034 = vrot.lane.b32.xlu0 %v1849, 78
  %v3035 = vpop.permute.xlu0 %3034
  %3036 = vrot.lane.b32.xlu0 %v1850, 78
  %v3037 = vpop.permute.xlu0 %3036
  %3038 = vrot.lane.b32.xlu0 %v1851, 78
  %v3039 = vpop.permute.xlu0 %3038
  %3040 = vrot.lane.b32.xlu0 %v1852, 78
  %v3041 = vpop.permute.xlu0 %3040
  %3042 = vrot.lane.b32.xlu0 %v1853, 78
  %v3043 = vpop.permute.xlu0 %3042
  %vm3044 = vcmask 637952
  %v3045 = vsel %vm3044, %v2997, %v2999
  %v3046 = vsel %vm3044, %v2999, %v3001
  %v3047 = vsel %vm3044, %v3001, %v3003
  %v3048 = vsel %vm3044, %v3003, %v3005
  %v3049 = vsel %vm3044, %v3005, %v3007
  %v3050 = vsel %vm3044, %v3009, %v3011
  %v3051 = vsel %vm3044, %v3011, %v3013
  %v3052 = vsel %vm3044, %v3013, %v3015
  %v3053 = vsel %vm3044, %v3015, %v3017
  %v3054 = vsel %vm3044, %v3017, %v3019
  %v3055 = vsel %vm3044, %v3021, %v3023
  %v3056 = vsel %vm3044, %v3023, %v3025
  %v3057 = vsel %vm3044, %v3025, %v3027
  %v3058 = vsel %vm3044, %v3027, %v3029
  %v3059 = vsel %vm3044, %v3029, %v3031
  %v3060 = vsel %vm3044, %v3033, %v3035
  %v3061 = vsel %vm3044, %v3035, %v3037
  %v3062 = vsel %vm3044, %v3037, %v3039
  %v3063 = vsel %vm3044, %v3039, %v3041
  %v3064 = vsel %vm3044, %v3041, %v3043
  %v3086 = vsel %vm954, %v2994, 0
  %v3089 = vsel %vm954, %v2995, 0
  %3091 = vmatpush.msra.mxu0 0.0
  %3092 = vmatpush.msra.mxu0 0.0
  %3093 = vmatpush.msra.mxu0 0.0
  %3094 = vmatpush.msra.mxu0 0.0
  %3095 = vmatpush.msra.mxu0 0.0
  %3096 = vmatpush.msra.mxu0 0.0
  %3097 = vmatpush.msra.mxu0 0.0
  %3098 = vmatpush.msra.mxu0 0.0
  %3099 = vmatpush.msra.mxu0 0.0
  %3100 = vmatpush.msra.mxu0 0.0
  %3101 = vmatpush.msra.mxu0 0.0
  %3102 = vmatpush.msra.mxu0 0.0
  %3103 = vmatpush.msra.mxu0 %v3060
  %3104 = vmatpush.msra.mxu0 %v3055
  %3105 = vmatpush.msra.mxu0 %v3050
  %3106 = vmatpush.msra.mxu0 %v3045
  %3107 = vmatmul.f32.gmra.mxu0 %v3086
  %v3108 = vpop.f32.mrf.mxu0
  %v3109 = vadd.f32 0.0, %v3108
  %3110 = vmatmul.f32.gmra.mxu0 %v3089
  %v3111 = vpop.f32.mrf.mxu0
  %v3112 = vadd.f32 0.0, %v3111
  %3113 = vdwg.mxu0
  %3114 = vmatpush.msra.mxu0 0.0
  %3115 = vmatpush.msra.mxu0 0.0
  %3116 = vmatpush.msra.mxu0 0.0
  %3117 = vmatpush.msra.mxu0 0.0
  %3118 = vmatpush.msra.mxu0 0.0
  %3119 = vmatpush.msra.mxu0 0.0
  %3120 = vmatpush.msra.mxu0 0.0
  %3121 = vmatpush.msra.mxu0 0.0
  %3122 = vmatpush.msra.mxu0 0.0
  %3123 = vmatpush.msra.mxu0 0.0
  %3124 = vmatpush.msra.mxu0 0.0
  %3125 = vmatpush.msra.mxu0 0.0
  %3126 = vmatpush.msra.mxu0 %v3061
  %3127 = vmatpush.msra.mxu0 %v3056
  %3128 = vmatpush.msra.mxu0 %v3051
  %3129 = vmatpush.msra.mxu0 %v3046
  %3130 = vmatmul.f32.gmra.mxu0 %v3086
  %v3131 = vpop.f32.mrf.mxu0
  %v3132 = vadd.f32 0.0, %v3131
  %3133 = vmatmul.f32.gmra.mxu0 %v3089
  %v3134 = vpop.f32.mrf.mxu0
  %v3135 = vadd.f32 0.0, %v3134
  %3136 = vdwg.mxu0
  %3137 = vmatpush.msra.mxu0 0.0
  %3138 = vmatpush.msra.mxu0 0.0
  %3139 = vmatpush.msra.mxu0 0.0
  %3140 = vmatpush.msra.mxu0 0.0
  %3141 = vmatpush.msra.mxu0 0.0
  %3142 = vmatpush.msra.mxu0 0.0
  %3143 = vmatpush.msra.mxu0 0.0
  %3144 = vmatpush.msra.mxu0 0.0
  %3145 = vmatpush.msra.mxu0 0.0
  %3146 = vmatpush.msra.mxu0 0.0
  %3147 = vmatpush.msra.mxu0 0.0
  %3148 = vmatpush.msra.mxu0 0.0
  %3149 = vmatpush.msra.mxu0 %v3062
  %3150 = vmatpush.msra.mxu0 %v3057
  %3151 = vmatpush.msra.mxu0 %v3052
  %3152 = vmatpush.msra.mxu0 %v3047
  %3153 = vmatmul.f32.gmra.mxu0 %v3086
  %v3154 = vpop.f32.mrf.mxu0
  %v3155 = vadd.f32 0.0, %v3154
  %3156 = vmatmul.f32.gmra.mxu0 %v3089
  %v3157 = vpop.f32.mrf.mxu0
  %v3158 = vadd.f32 0.0, %v3157
  %3159 = vdwg.mxu0
  %3160 = vmatpush.msra.mxu0 0.0
  %3161 = vmatpush.msra.mxu0 0.0
  %3162 = vmatpush.msra.mxu0 0.0
  %3163 = vmatpush.msra.mxu0 0.0
  %3164 = vmatpush.msra.mxu0 0.0
  %3165 = vmatpush.msra.mxu0 0.0
  %3166 = vmatpush.msra.mxu0 0.0
  %3167 = vmatpush.msra.mxu0 0.0
  %3168 = vmatpush.msra.mxu0 0.0
  %3169 = vmatpush.msra.mxu0 0.0
  %3170 = vmatpush.msra.mxu0 0.0
  %3171 = vmatpush.msra.mxu0 0.0
  %3172 = vmatpush.msra.mxu0 %v3063
  %3173 = vmatpush.msra.mxu0 %v3058
  %3174 = vmatpush.msra.mxu0 %v3053
  %3175 = vmatpush.msra.mxu0 %v3048
  %3176 = vmatmul.f32.gmra.mxu0 %v3086
  %v3177 = vpop.f32.mrf.mxu0
  %v3178 = vadd.f32 0.0, %v3177
  %3179 = vmatmul.f32.gmra.mxu0 %v3089
  %v3180 = vpop.f32.mrf.mxu0
  %v3181 = vadd.f32 0.0, %v3180
  %3182 = vdwg.mxu0
  %3183 = vmatpush.msra.mxu0 0.0
  %3184 = vmatpush.msra.mxu0 0.0
  %3185 = vmatpush.msra.mxu0 0.0
  %3186 = vmatpush.msra.mxu0 0.0
  %3187 = vmatpush.msra.mxu0 0.0
  %3188 = vmatpush.msra.mxu0 0.0
  %3189 = vmatpush.msra.mxu0 0.0
  %3190 = vmatpush.msra.mxu0 0.0
  %3191 = vmatpush.msra.mxu0 0.0
  %3192 = vmatpush.msra.mxu0 0.0
  %3193 = vmatpush.msra.mxu0 0.0
  %3194 = vmatpush.msra.mxu0 0.0
  %3195 = vmatpush.msra.mxu0 %v3064
  %3196 = vmatpush.msra.mxu0 %v3059
  %3197 = vmatpush.msra.mxu0 %v3054
  %3198 = vmatpush.msra.mxu0 %v3049
  %3199 = vmatmul.f32.gmra.mxu0 %v3086
  %v3200 = vpop.f32.mrf.mxu0
  %v3201 = vadd.f32 0.0, %v3200
  %3202 = vmatmul.f32.gmra.mxu0 %v3089
  %v3203 = vpop.f32.mrf.mxu0
  %v3204 = vadd.f32 0.0, %v3203
  %3205 = vdwg.mxu0
  %v3206 = vadd.f32 %v2983, %v3109
  %v3207 = vadd.f32 %v2984, %v3132
  %v3208 = vadd.f32 %v2985, %v3155
  %v3209 = vadd.f32 %v2986, %v3178
  %v3210 = vadd.f32 %v2987, %v3201
  %v3211 = vadd.f32 %v2988, %v3112
  %v3212 = vadd.f32 %v2989, %v3135
  %v3213 = vadd.f32 %v2990, %v3158
  %v3214 = vadd.f32 %v2991, %v3181
  %v3215 = vadd.f32 %v2992, %v3204
  %s3216 = scalar_lea.vmem %s2, 176
  %v3217 = vld [vmem:[%s3216] sm:$0xff]
  %v3218 = vld [vmem:[%s3216 + $0x8] sm:$0xff]
  %3219 = vrot.lane.b32.xlu0 %v1830, 77
  %v3220 = vpop.permute.xlu0 %3219
  %3221 = vrot.lane.b32.xlu0 %v1831, 77
  %v3222 = vpop.permute.xlu0 %3221
  %3223 = vrot.lane.b32.xlu0 %v1832, 77
  %v3224 = vpop.permute.xlu0 %3223
  %3225 = vrot.lane.b32.xlu0 %v1833, 77
  %v3226 = vpop.permute.xlu0 %3225
  %3227 = vrot.lane.b32.xlu0 %v1834, 77
  %v3228 = vpop.permute.xlu0 %3227
  %3229 = vrot.lane.b32.xlu0 %v1835, 77
  %v3230 = vpop.permute.xlu0 %3229
  %3231 = vrot.lane.b32.xlu0 %v1836, 77
  %v3232 = vpop.permute.xlu0 %3231
  %3233 = vrot.lane.b32.xlu0 %v1837, 77
  %v3234 = vpop.permute.xlu0 %3233
  %3235 = vrot.lane.b32.xlu0 %v1838, 77
  %v3236 = vpop.permute.xlu0 %3235
  %3237 = vrot.lane.b32.xlu0 %v1839, 77
  %v3238 = vpop.permute.xlu0 %3237
  %3239 = vrot.lane.b32.xlu0 %v1840, 77
  %v3240 = vpop.permute.xlu0 %3239
  %3241 = vrot.lane.b32.xlu0 %v1841, 77
  %v3242 = vpop.permute.xlu0 %3241
  %3243 = vrot.lane.b32.xlu0 %v1842, 77
  %v3244 = vpop.permute.xlu0 %3243
  %3245 = vrot.lane.b32.xlu0 %v1843, 77
  %v3246 = vpop.permute.xlu0 %3245
  %3247 = vrot.lane.b32.xlu0 %v1844, 77
  %v3248 = vpop.permute.xlu0 %3247
  %3249 = vrot.lane.b32.xlu0 %v1845, 77
  %v3250 = vpop.permute.xlu0 %3249
  %3251 = vrot.lane.b32.xlu0 %v1846, 77
  %v3252 = vpop.permute.xlu0 %3251
  %3253 = vrot.lane.b32.xlu0 %v1847, 77
  %v3254 = vpop.permute.xlu0 %3253
  %3255 = vrot.lane.b32.xlu0 %v1848, 77
  %v3256 = vpop.permute.xlu0 %3255
  %3257 = vrot.lane.b32.xlu0 %v1849, 77
  %v3258 = vpop.permute.xlu0 %3257
  %3259 = vrot.lane.b32.xlu0 %v1850, 77
  %v3260 = vpop.permute.xlu0 %3259
  %3261 = vrot.lane.b32.xlu0 %v1851, 77
  %v3262 = vpop.permute.xlu0 %3261
  %3263 = vrot.lane.b32.xlu0 %v1852, 77
  %v3264 = vpop.permute.xlu0 %3263
  %3265 = vrot.lane.b32.xlu0 %v1853, 77
  %v3266 = vpop.permute.xlu0 %3265
  %vm3267 = vcmask 629760
  %v3268 = vsel %vm3267, %v3220, %v3222
  %v3269 = vsel %vm3267, %v3222, %v3224
  %v3270 = vsel %vm3267, %v3224, %v3226
  %v3271 = vsel %vm3267, %v3226, %v3228
  %v3272 = vsel %vm3267, %v3228, %v3230
  %v3273 = vsel %vm3267, %v3232, %v3234
  %v3274 = vsel %vm3267, %v3234, %v3236
  %v3275 = vsel %vm3267, %v3236, %v3238
  %v3276 = vsel %vm3267, %v3238, %v3240
  %v3277 = vsel %vm3267, %v3240, %v3242
  %v3278 = vsel %vm3267, %v3244, %v3246
  %v3279 = vsel %vm3267, %v3246, %v3248
  %v3280 = vsel %vm3267, %v3248, %v3250
  %v3281 = vsel %vm3267, %v3250, %v3252
  %v3282 = vsel %vm3267, %v3252, %v3254
  %v3283 = vsel %vm3267, %v3256, %v3258
  %v3284 = vsel %vm3267, %v3258, %v3260
  %v3285 = vsel %vm3267, %v3260, %v3262
  %v3286 = vsel %vm3267, %v3262, %v3264
  %v3287 = vsel %vm3267, %v3264, %v3266
  %v3309 = vsel %vm954, %v3217, 0
  %v3312 = vsel %vm954, %v3218, 0
  %3314 = vmatpush.msra.mxu0 0.0
  %3315 = vmatpush.msra.mxu0 0.0
  %3316 = vmatpush.msra.mxu0 0.0
  %3317 = vmatpush.msra.mxu0 0.0
  %3318 = vmatpush.msra.mxu0 0.0
  %3319 = vmatpush.msra.mxu0 0.0
  %3320 = vmatpush.msra.mxu0 0.0
  %3321 = vmatpush.msra.mxu0 0.0
  %3322 = vmatpush.msra.mxu0 0.0
  %3323 = vmatpush.msra.mxu0 0.0
  %3324 = vmatpush.msra.mxu0 0.0
  %3325 = vmatpush.msra.mxu0 0.0
  %3326 = vmatpush.msra.mxu0 %v3283
  %3327 = vmatpush.msra.mxu0 %v3278
  %3328 = vmatpush.msra.mxu0 %v3273
  %3329 = vmatpush.msra.mxu0 %v3268
  %3330 = vmatmul.f32.gmra.mxu0 %v3309
  %v3331 = vpop.f32.mrf.mxu0
  %v3332 = vadd.f32 0.0, %v3331
  %3333 = vmatmul.f32.gmra.mxu0 %v3312
  %v3334 = vpop.f32.mrf.mxu0
  %v3335 = vadd.f32 0.0, %v3334
  %3336 = vdwg.mxu0
  %3337 = vmatpush.msra.mxu0 0.0
  %3338 = vmatpush.msra.mxu0 0.0
  %3339 = vmatpush.msra.mxu0 0.0
  %3340 = vmatpush.msra.mxu0 0.0
  %3341 = vmatpush.msra.mxu0 0.0
  %3342 = vmatpush.msra.mxu0 0.0
  %3343 = vmatpush.msra.mxu0 0.0
  %3344 = vmatpush.msra.mxu0 0.0
  %3345 = vmatpush.msra.mxu0 0.0
  %3346 = vmatpush.msra.mxu0 0.0
  %3347 = vmatpush.msra.mxu0 0.0
  %3348 = vmatpush.msra.mxu0 0.0
  %3349 = vmatpush.msra.mxu0 %v3284
  %3350 = vmatpush.msra.mxu0 %v3279
  %3351 = vmatpush.msra.mxu0 %v3274
  %3352 = vmatpush.msra.mxu0 %v3269
  %3353 = vmatmul.f32.gmra.mxu0 %v3309
  %v3354 = vpop.f32.mrf.mxu0
  %v3355 = vadd.f32 0.0, %v3354
  %3356 = vmatmul.f32.gmra.mxu0 %v3312
  %v3357 = vpop.f32.mrf.mxu0
  %v3358 = vadd.f32 0.0, %v3357
  %3359 = vdwg.mxu0
  %3360 = vmatpush.msra.mxu0 0.0
  %3361 = vmatpush.msra.mxu0 0.0
  %3362 = vmatpush.msra.mxu0 0.0
  %3363 = vmatpush.msra.mxu0 0.0
  %3364 = vmatpush.msra.mxu0 0.0
  %3365 = vmatpush.msra.mxu0 0.0
  %3366 = vmatpush.msra.mxu0 0.0
  %3367 = vmatpush.msra.mxu0 0.0
  %3368 = vmatpush.msra.mxu0 0.0
  %3369 = vmatpush.msra.mxu0 0.0
  %3370 = vmatpush.msra.mxu0 0.0
  %3371 = vmatpush.msra.mxu0 0.0
  %3372 = vmatpush.msra.mxu0 %v3285
  %3373 = vmatpush.msra.mxu0 %v3280
  %3374 = vmatpush.msra.mxu0 %v3275
  %3375 = vmatpush.msra.mxu0 %v3270
  %3376 = vmatmul.f32.gmra.mxu0 %v3309
  %v3377 = vpop.f32.mrf.mxu0
  %v3378 = vadd.f32 0.0, %v3377
  %3379 = vmatmul.f32.gmra.mxu0 %v3312
  %v3380 = vpop.f32.mrf.mxu0
  %v3381 = vadd.f32 0.0, %v3380
  %3382 = vdwg.mxu0
  %3383 = vmatpush.msra.mxu0 0.0
  %3384 = vmatpush.msra.mxu0 0.0
  %3385 = vmatpush.msra.mxu0 0.0
  %3386 = vmatpush.msra.mxu0 0.0
  %3387 = vmatpush.msra.mxu0 0.0
  %3388 = vmatpush.msra.mxu0 0.0
  %3389 = vmatpush.msra.mxu0 0.0
  %3390 = vmatpush.msra.mxu0 0.0
  %3391 = vmatpush.msra.mxu0 0.0
  %3392 = vmatpush.msra.mxu0 0.0
  %3393 = vmatpush.msra.mxu0 0.0
  %3394 = vmatpush.msra.mxu0 0.0
  %3395 = vmatpush.msra.mxu0 %v3286
  %3396 = vmatpush.msra.mxu0 %v3281
  %3397 = vmatpush.msra.mxu0 %v3276
  %3398 = vmatpush.msra.mxu0 %v3271
  %3399 = vmatmul.f32.gmra.mxu0 %v3309
  %v3400 = vpop.f32.mrf.mxu0
  %v3401 = vadd.f32 0.0, %v3400
  %3402 = vmatmul.f32.gmra.mxu0 %v3312
  %v3403 = vpop.f32.mrf.mxu0
  %v3404 = vadd.f32 0.0, %v3403
  %3405 = vdwg.mxu0
  %3406 = vmatpush.msra.mxu0 0.0
  %3407 = vmatpush.msra.mxu0 0.0
  %3408 = vmatpush.msra.mxu0 0.0
  %3409 = vmatpush.msra.mxu0 0.0
  %3410 = vmatpush.msra.mxu0 0.0
  %3411 = vmatpush.msra.mxu0 0.0
  %3412 = vmatpush.msra.mxu0 0.0
  %3413 = vmatpush.msra.mxu0 0.0
  %3414 = vmatpush.msra.mxu0 0.0
  %3415 = vmatpush.msra.mxu0 0.0
  %3416 = vmatpush.msra.mxu0 0.0
  %3417 = vmatpush.msra.mxu0 0.0
  %3418 = vmatpush.msra.mxu0 %v3287
  %3419 = vmatpush.msra.mxu0 %v3282
  %3420 = vmatpush.msra.mxu0 %v3277
  %3421 = vmatpush.msra.mxu0 %v3272
  %3422 = vmatmul.f32.gmra.mxu0 %v3309
  %v3423 = vpop.f32.mrf.mxu0
  %v3424 = vadd.f32 0.0, %v3423
  %3425 = vmatmul.f32.gmra.mxu0 %v3312
  %v3426 = vpop.f32.mrf.mxu0
  %v3427 = vadd.f32 0.0, %v3426
  %3428 = vdwg.mxu0
  %v3429 = vadd.f32 %v3206, %v3332
  %v3430 = vadd.f32 %v3207, %v3355
  %v3431 = vadd.f32 %v3208, %v3378
  %v3432 = vadd.f32 %v3209, %v3401
  %v3433 = vadd.f32 %v3210, %v3424
  %v3434 = vadd.f32 %v3211, %v3335
  %v3435 = vadd.f32 %v3212, %v3358
  %v3436 = vadd.f32 %v3213, %v3381
  %v3437 = vadd.f32 %v3214, %v3404
  %v3438 = vadd.f32 %v3215, %v3427
  %s3439 = scalar_lea.vmem %s2, 192
  %v3440 = vld [vmem:[%s3439] sm:$0xff]
  %v3441 = vld [vmem:[%s3439 + $0x8] sm:$0xff]
  %3442 = vrot.lane.b32.xlu0 %v1830, 76
  %v3443 = vpop.permute.xlu0 %3442
  %3444 = vrot.lane.b32.xlu0 %v1831, 76
  %v3445 = vpop.permute.xlu0 %3444
  %3446 = vrot.lane.b32.xlu0 %v1832, 76
  %v3447 = vpop.permute.xlu0 %3446
  %3448 = vrot.lane.b32.xlu0 %v1833, 76
  %v3449 = vpop.permute.xlu0 %3448
  %3450 = vrot.lane.b32.xlu0 %v1834, 76
  %v3451 = vpop.permute.xlu0 %3450
  %3452 = vrot.lane.b32.xlu0 %v1835, 76
  %v3453 = vpop.permute.xlu0 %3452
  %3454 = vrot.lane.b32.xlu0 %v1836, 76
  %v3455 = vpop.permute.xlu0 %3454
  %3456 = vrot.lane.b32.xlu0 %v1837, 76
  %v3457 = vpop.permute.xlu0 %3456
  %3458 = vrot.lane.b32.xlu0 %v1838, 76
  %v3459 = vpop.permute.xlu0 %3458
  %3460 = vrot.lane.b32.xlu0 %v1839, 76
  %v3461 = vpop.permute.xlu0 %3460
  %3462 = vrot.lane.b32.xlu0 %v1840, 76
  %v3463 = vpop.permute.xlu0 %3462
  %3464 = vrot.lane.b32.xlu0 %v1841, 76
  %v3465 = vpop.permute.xlu0 %3464
  %3466 = vrot.lane.b32.xlu0 %v1842, 76
  %v3467 = vpop.permute.xlu0 %3466
  %3468 = vrot.lane.b32.xlu0 %v1843, 76
  %v3469 = vpop.permute.xlu0 %3468
  %3470 = vrot.lane.b32.xlu0 %v1844, 76
  %v3471 = vpop.permute.xlu0 %3470
  %3472 = vrot.lane.b32.xlu0 %v1845, 76
  %v3473 = vpop.permute.xlu0 %3472
  %3474 = vrot.lane.b32.xlu0 %v1846, 76
  %v3475 = vpop.permute.xlu0 %3474
  %3476 = vrot.lane.b32.xlu0 %v1847, 76
  %v3477 = vpop.permute.xlu0 %3476
  %3478 = vrot.lane.b32.xlu0 %v1848, 76
  %v3479 = vpop.permute.xlu0 %3478
  %3480 = vrot.lane.b32.xlu0 %v1849, 76
  %v3481 = vpop.permute.xlu0 %3480
  %3482 = vrot.lane.b32.xlu0 %v1850, 76
  %v3483 = vpop.permute.xlu0 %3482
  %3484 = vrot.lane.b32.xlu0 %v1851, 76
  %v3485 = vpop.permute.xlu0 %3484
  %3486 = vrot.lane.b32.xlu0 %v1852, 76
  %v3487 = vpop.permute.xlu0 %3486
  %3488 = vrot.lane.b32.xlu0 %v1853, 76
  %v3489 = vpop.permute.xlu0 %3488
  %vm3490 = vcmask 621568
  %v3491 = vsel %vm3490, %v3443, %v3445
  %v3492 = vsel %vm3490, %v3445, %v3447
  %v3493 = vsel %vm3490, %v3447, %v3449
  %v3494 = vsel %vm3490, %v3449, %v3451
  %v3495 = vsel %vm3490, %v3451, %v3453
  %v3496 = vsel %vm3490, %v3455, %v3457
  %v3497 = vsel %vm3490, %v3457, %v3459
  %v3498 = vsel %vm3490, %v3459, %v3461
  %v3499 = vsel %vm3490, %v3461, %v3463
  %v3500 = vsel %vm3490, %v3463, %v3465
  %v3501 = vsel %vm3490, %v3467, %v3469
  %v3502 = vsel %vm3490, %v3469, %v3471
  %v3503 = vsel %vm3490, %v3471, %v3473
  %v3504 = vsel %vm3490, %v3473, %v3475
  %v3505 = vsel %vm3490, %v3475, %v3477
  %v3506 = vsel %vm3490, %v3479, %v3481
  %v3507 = vsel %vm3490, %v3481, %v3483
  %v3508 = vsel %vm3490, %v3483, %v3485
  %v3509 = vsel %vm3490, %v3485, %v3487
  %v3510 = vsel %vm3490, %v3487, %v3489
  %v3532 = vsel %vm954, %v3440, 0
  %v3535 = vsel %vm954, %v3441, 0
  %3537 = vmatpush.msra.mxu0 0.0
  %3538 = vmatpush.msra.mxu0 0.0
  %3539 = vmatpush.msra.mxu0 0.0
  %3540 = vmatpush.msra.mxu0 0.0
  %3541 = vmatpush.msra.mxu0 0.0
  %3542 = vmatpush.msra.mxu0 0.0
  %3543 = vmatpush.msra.mxu0 0.0
  %3544 = vmatpush.msra.mxu0 0.0
  %3545 = vmatpush.msra.mxu0 0.0
  %3546 = vmatpush.msra.mxu0 0.0
  %3547 = vmatpush.msra.mxu0 0.0
  %3548 = vmatpush.msra.mxu0 0.0
  %3549 = vmatpush.msra.mxu0 %v3506
  %3550 = vmatpush.msra.mxu0 %v3501
  %3551 = vmatpush.msra.mxu0 %v3496
  %3552 = vmatpush.msra.mxu0 %v3491
  %3553 = vmatmul.f32.gmra.mxu0 %v3532
  %v3554 = vpop.f32.mrf.mxu0
  %v3555 = vadd.f32 0.0, %v3554
  %3556 = vmatmul.f32.gmra.mxu0 %v3535
  %v3557 = vpop.f32.mrf.mxu0
  %v3558 = vadd.f32 0.0, %v3557
  %3559 = vdwg.mxu0
  %3560 = vmatpush.msra.mxu0 0.0
  %3561 = vmatpush.msra.mxu0 0.0
  %3562 = vmatpush.msra.mxu0 0.0
  %3563 = vmatpush.msra.mxu0 0.0
  %3564 = vmatpush.msra.mxu0 0.0
  %3565 = vmatpush.msra.mxu0 0.0
  %3566 = vmatpush.msra.mxu0 0.0
  %3567 = vmatpush.msra.mxu0 0.0
  %3568 = vmatpush.msra.mxu0 0.0
  %3569 = vmatpush.msra.mxu0 0.0
  %3570 = vmatpush.msra.mxu0 0.0
  %3571 = vmatpush.msra.mxu0 0.0
  %3572 = vmatpush.msra.mxu0 %v3507
  %3573 = vmatpush.msra.mxu0 %v3502
  %3574 = vmatpush.msra.mxu0 %v3497
  %3575 = vmatpush.msra.mxu0 %v3492
  %3576 = vmatmul.f32.gmra.mxu0 %v3532
  %v3577 = vpop.f32.mrf.mxu0
  %v3578 = vadd.f32 0.0, %v3577
  %3579 = vmatmul.f32.gmra.mxu0 %v3535
  %v3580 = vpop.f32.mrf.mxu0
  %v3581 = vadd.f32 0.0, %v3580
  %3582 = vdwg.mxu0
  %3583 = vmatpush.msra.mxu0 0.0
  %3584 = vmatpush.msra.mxu0 0.0
  %3585 = vmatpush.msra.mxu0 0.0
  %3586 = vmatpush.msra.mxu0 0.0
  %3587 = vmatpush.msra.mxu0 0.0
  %3588 = vmatpush.msra.mxu0 0.0
  %3589 = vmatpush.msra.mxu0 0.0
  %3590 = vmatpush.msra.mxu0 0.0
  %3591 = vmatpush.msra.mxu0 0.0
  %3592 = vmatpush.msra.mxu0 0.0
  %3593 = vmatpush.msra.mxu0 0.0
  %3594 = vmatpush.msra.mxu0 0.0
  %3595 = vmatpush.msra.mxu0 %v3508
  %3596 = vmatpush.msra.mxu0 %v3503
  %3597 = vmatpush.msra.mxu0 %v3498
  %3598 = vmatpush.msra.mxu0 %v3493
  %3599 = vmatmul.f32.gmra.mxu0 %v3532
  %v3600 = vpop.f32.mrf.mxu0
  %v3601 = vadd.f32 0.0, %v3600
  %3602 = vmatmul.f32.gmra.mxu0 %v3535
  %v3603 = vpop.f32.mrf.mxu0
  %v3604 = vadd.f32 0.0, %v3603
  %3605 = vdwg.mxu0
  %3606 = vmatpush.msra.mxu0 0.0
  %3607 = vmatpush.msra.mxu0 0.0
  %3608 = vmatpush.msra.mxu0 0.0
  %3609 = vmatpush.msra.mxu0 0.0
  %3610 = vmatpush.msra.mxu0 0.0
  %3611 = vmatpush.msra.mxu0 0.0
  %3612 = vmatpush.msra.mxu0 0.0
  %3613 = vmatpush.msra.mxu0 0.0
  %3614 = vmatpush.msra.mxu0 0.0
  %3615 = vmatpush.msra.mxu0 0.0
  %3616 = vmatpush.msra.mxu0 0.0
  %3617 = vmatpush.msra.mxu0 0.0
  %3618 = vmatpush.msra.mxu0 %v3509
  %3619 = vmatpush.msra.mxu0 %v3504
  %3620 = vmatpush.msra.mxu0 %v3499
  %3621 = vmatpush.msra.mxu0 %v3494
  %3622 = vmatmul.f32.gmra.mxu0 %v3532
  %v3623 = vpop.f32.mrf.mxu0
  %v3624 = vadd.f32 0.0, %v3623
  %3625 = vmatmul.f32.gmra.mxu0 %v3535
  %v3626 = vpop.f32.mrf.mxu0
  %v3627 = vadd.f32 0.0, %v3626
  %3628 = vdwg.mxu0
  %3629 = vmatpush.msra.mxu0 0.0
  %3630 = vmatpush.msra.mxu0 0.0
  %3631 = vmatpush.msra.mxu0 0.0
  %3632 = vmatpush.msra.mxu0 0.0
  %3633 = vmatpush.msra.mxu0 0.0
  %3634 = vmatpush.msra.mxu0 0.0
  %3635 = vmatpush.msra.mxu0 0.0
  %3636 = vmatpush.msra.mxu0 0.0
  %3637 = vmatpush.msra.mxu0 0.0
  %3638 = vmatpush.msra.mxu0 0.0
  %3639 = vmatpush.msra.mxu0 0.0
  %3640 = vmatpush.msra.mxu0 0.0
  %3641 = vmatpush.msra.mxu0 %v3510
  %3642 = vmatpush.msra.mxu0 %v3505
  %3643 = vmatpush.msra.mxu0 %v3500
  %3644 = vmatpush.msra.mxu0 %v3495
  %3645 = vmatmul.f32.gmra.mxu0 %v3532
  %v3646 = vpop.f32.mrf.mxu0
  %v3647 = vadd.f32 0.0, %v3646
  %3648 = vmatmul.f32.gmra.mxu0 %v3535
  %v3649 = vpop.f32.mrf.mxu0
  %v3650 = vadd.f32 0.0, %v3649
  %3651 = vdwg.mxu0
  %v3652 = vadd.f32 %v3429, %v3555
  %v3653 = vadd.f32 %v3430, %v3578
  %v3654 = vadd.f32 %v3431, %v3601
  %v3655 = vadd.f32 %v3432, %v3624
  %v3656 = vadd.f32 %v3433, %v3647
  %v3657 = vadd.f32 %v3434, %v3558
  %v3658 = vadd.f32 %v3435, %v3581
  %v3659 = vadd.f32 %v3436, %v3604
  %v3660 = vadd.f32 %v3437, %v3627
  %v3661 = vadd.f32 %v3438, %v3650
  %s3662 = scalar_lea.vmem %s2, 208
  %v3663 = vld [vmem:[%s3662] sm:$0xff]
  %v3664 = vld [vmem:[%s3662 + $0x8] sm:$0xff]
  %3665 = vrot.lane.b32.xlu0 %v1830, 75
  %v3666 = vpop.permute.xlu0 %3665
  %3667 = vrot.lane.b32.xlu0 %v1831, 75
  %v3668 = vpop.permute.xlu0 %3667
  %3669 = vrot.lane.b32.xlu0 %v1832, 75
  %v3670 = vpop.permute.xlu0 %3669
  %3671 = vrot.lane.b32.xlu0 %v1833, 75
  %v3672 = vpop.permute.xlu0 %3671
  %3673 = vrot.lane.b32.xlu0 %v1834, 75
  %v3674 = vpop.permute.xlu0 %3673
  %3675 = vrot.lane.b32.xlu0 %v1835, 75
  %v3676 = vpop.permute.xlu0 %3675
  %3677 = vrot.lane.b32.xlu0 %v1836, 75
  %v3678 = vpop.permute.xlu0 %3677
  %3679 = vrot.lane.b32.xlu0 %v1837, 75
  %v3680 = vpop.permute.xlu0 %3679
  %3681 = vrot.lane.b32.xlu0 %v1838, 75
  %v3682 = vpop.permute.xlu0 %3681
  %3683 = vrot.lane.b32.xlu0 %v1839, 75
  %v3684 = vpop.permute.xlu0 %3683
  %3685 = vrot.lane.b32.xlu0 %v1840, 75
  %v3686 = vpop.permute.xlu0 %3685
  %3687 = vrot.lane.b32.xlu0 %v1841, 75
  %v3688 = vpop.permute.xlu0 %3687
  %3689 = vrot.lane.b32.xlu0 %v1842, 75
  %v3690 = vpop.permute.xlu0 %3689
  %3691 = vrot.lane.b32.xlu0 %v1843, 75
  %v3692 = vpop.permute.xlu0 %3691
  %3693 = vrot.lane.b32.xlu0 %v1844, 75
  %v3694 = vpop.permute.xlu0 %3693
  %3695 = vrot.lane.b32.xlu0 %v1845, 75
  %v3696 = vpop.permute.xlu0 %3695
  %3697 = vrot.lane.b32.xlu0 %v1846, 75
  %v3698 = vpop.permute.xlu0 %3697
  %3699 = vrot.lane.b32.xlu0 %v1847, 75
  %v3700 = vpop.permute.xlu0 %3699
  %3701 = vrot.lane.b32.xlu0 %v1848, 75
  %v3702 = vpop.permute.xlu0 %3701
  %3703 = vrot.lane.b32.xlu0 %v1849, 75
  %v3704 = vpop.permute.xlu0 %3703
  %3705 = vrot.lane.b32.xlu0 %v1850, 75
  %v3706 = vpop.permute.xlu0 %3705
  %3707 = vrot.lane.b32.xlu0 %v1851, 75
  %v3708 = vpop.permute.xlu0 %3707
  %3709 = vrot.lane.b32.xlu0 %v1852, 75
  %v3710 = vpop.permute.xlu0 %3709
  %3711 = vrot.lane.b32.xlu0 %v1853, 75
  %v3712 = vpop.permute.xlu0 %3711
  %vm3713 = vcmask 613376
  %v3714 = vsel %vm3713, %v3666, %v3668
  %v3715 = vsel %vm3713, %v3668, %v3670
  %v3716 = vsel %vm3713, %v3670, %v3672
  %v3717 = vsel %vm3713, %v3672, %v3674
  %v3718 = vsel %vm3713, %v3674, %v3676
  %v3719 = vsel %vm3713, %v3678, %v3680
  %v3720 = vsel %vm3713, %v3680, %v3682
  %v3721 = vsel %vm3713, %v3682, %v3684
  %v3722 = vsel %vm3713, %v3684, %v3686
  %v3723 = vsel %vm3713, %v3686, %v3688
  %v3724 = vsel %vm3713, %v3690, %v3692
  %v3725 = vsel %vm3713, %v3692, %v3694
  %v3726 = vsel %vm3713, %v3694, %v3696
  %v3727 = vsel %vm3713, %v3696, %v3698
  %v3728 = vsel %vm3713, %v3698, %v3700
  %v3729 = vsel %vm3713, %v3702, %v3704
  %v3730 = vsel %vm3713, %v3704, %v3706
  %v3731 = vsel %vm3713, %v3706, %v3708
  %v3732 = vsel %vm3713, %v3708, %v3710
  %v3733 = vsel %vm3713, %v3710, %v3712
  %v3755 = vsel %vm954, %v3663, 0
  %v3758 = vsel %vm954, %v3664, 0
  %3760 = vmatpush.msra.mxu0 0.0
  %3761 = vmatpush.msra.mxu0 0.0
  %3762 = vmatpush.msra.mxu0 0.0
  %3763 = vmatpush.msra.mxu0 0.0
  %3764 = vmatpush.msra.mxu0 0.0
  %3765 = vmatpush.msra.mxu0 0.0
  %3766 = vmatpush.msra.mxu0 0.0
  %3767 = vmatpush.msra.mxu0 0.0
  %3768 = vmatpush.msra.mxu0 0.0
  %3769 = vmatpush.msra.mxu0 0.0
  %3770 = vmatpush.msra.mxu0 0.0
  %3771 = vmatpush.msra.mxu0 0.0
  %3772 = vmatpush.msra.mxu0 %v3729
  %3773 = vmatpush.msra.mxu0 %v3724
  %3774 = vmatpush.msra.mxu0 %v3719
  %3775 = vmatpush.msra.mxu0 %v3714
  %3776 = vmatmul.f32.gmra.mxu0 %v3755
  %v3777 = vpop.f32.mrf.mxu0
  %v3778 = vadd.f32 0.0, %v3777
  %3779 = vmatmul.f32.gmra.mxu0 %v3758
  %v3780 = vpop.f32.mrf.mxu0
  %v3781 = vadd.f32 0.0, %v3780
  %3782 = vdwg.mxu0
  %3783 = vmatpush.msra.mxu0 0.0
  %3784 = vmatpush.msra.mxu0 0.0
  %3785 = vmatpush.msra.mxu0 0.0
  %3786 = vmatpush.msra.mxu0 0.0
  %3787 = vmatpush.msra.mxu0 0.0
  %3788 = vmatpush.msra.mxu0 0.0
  %3789 = vmatpush.msra.mxu0 0.0
  %3790 = vmatpush.msra.mxu0 0.0
  %3791 = vmatpush.msra.mxu0 0.0
  %3792 = vmatpush.msra.mxu0 0.0
  %3793 = vmatpush.msra.mxu0 0.0
  %3794 = vmatpush.msra.mxu0 0.0
  %3795 = vmatpush.msra.mxu0 %v3730
  %3796 = vmatpush.msra.mxu0 %v3725
  %3797 = vmatpush.msra.mxu0 %v3720
  %3798 = vmatpush.msra.mxu0 %v3715
  %3799 = vmatmul.f32.gmra.mxu0 %v3755
  %v3800 = vpop.f32.mrf.mxu0
  %v3801 = vadd.f32 0.0, %v3800
  %3802 = vmatmul.f32.gmra.mxu0 %v3758
  %v3803 = vpop.f32.mrf.mxu0
  %v3804 = vadd.f32 0.0, %v3803
  %3805 = vdwg.mxu0
  %3806 = vmatpush.msra.mxu0 0.0
  %3807 = vmatpush.msra.mxu0 0.0
  %3808 = vmatpush.msra.mxu0 0.0
  %3809 = vmatpush.msra.mxu0 0.0
  %3810 = vmatpush.msra.mxu0 0.0
  %3811 = vmatpush.msra.mxu0 0.0
  %3812 = vmatpush.msra.mxu0 0.0
  %3813 = vmatpush.msra.mxu0 0.0
  %3814 = vmatpush.msra.mxu0 0.0
  %3815 = vmatpush.msra.mxu0 0.0
  %3816 = vmatpush.msra.mxu0 0.0
  %3817 = vmatpush.msra.mxu0 0.0
  %3818 = vmatpush.msra.mxu0 %v3731
  %3819 = vmatpush.msra.mxu0 %v3726
  %3820 = vmatpush.msra.mxu0 %v3721
  %3821 = vmatpush.msra.mxu0 %v3716
  %3822 = vmatmul.f32.gmra.mxu0 %v3755
  %v3823 = vpop.f32.mrf.mxu0
  %v3824 = vadd.f32 0.0, %v3823
  %3825 = vmatmul.f32.gmra.mxu0 %v3758
  %v3826 = vpop.f32.mrf.mxu0
  %v3827 = vadd.f32 0.0, %v3826
  %3828 = vdwg.mxu0
  %3829 = vmatpush.msra.mxu0 0.0
  %3830 = vmatpush.msra.mxu0 0.0
  %3831 = vmatpush.msra.mxu0 0.0
  %3832 = vmatpush.msra.mxu0 0.0
  %3833 = vmatpush.msra.mxu0 0.0
  %3834 = vmatpush.msra.mxu0 0.0
  %3835 = vmatpush.msra.mxu0 0.0
  %3836 = vmatpush.msra.mxu0 0.0
  %3837 = vmatpush.msra.mxu0 0.0
  %3838 = vmatpush.msra.mxu0 0.0
  %3839 = vmatpush.msra.mxu0 0.0
  %3840 = vmatpush.msra.mxu0 0.0
  %3841 = vmatpush.msra.mxu0 %v3732
  %3842 = vmatpush.msra.mxu0 %v3727
  %3843 = vmatpush.msra.mxu0 %v3722
  %3844 = vmatpush.msra.mxu0 %v3717
  %3845 = vmatmul.f32.gmra.mxu0 %v3755
  %v3846 = vpop.f32.mrf.mxu0
  %v3847 = vadd.f32 0.0, %v3846
  %3848 = vmatmul.f32.gmra.mxu0 %v3758
  %v3849 = vpop.f32.mrf.mxu0
  %v3850 = vadd.f32 0.0, %v3849
  %3851 = vdwg.mxu0
  %3852 = vmatpush.msra.mxu0 0.0
  %3853 = vmatpush.msra.mxu0 0.0
  %3854 = vmatpush.msra.mxu0 0.0
  %3855 = vmatpush.msra.mxu0 0.0
  %3856 = vmatpush.msra.mxu0 0.0
  %3857 = vmatpush.msra.mxu0 0.0
  %3858 = vmatpush.msra.mxu0 0.0
  %3859 = vmatpush.msra.mxu0 0.0
  %3860 = vmatpush.msra.mxu0 0.0
  %3861 = vmatpush.msra.mxu0 0.0
  %3862 = vmatpush.msra.mxu0 0.0
  %3863 = vmatpush.msra.mxu0 0.0
  %3864 = vmatpush.msra.mxu0 %v3733
  %3865 = vmatpush.msra.mxu0 %v3728
  %3866 = vmatpush.msra.mxu0 %v3723
  %3867 = vmatpush.msra.mxu0 %v3718
  %3868 = vmatmul.f32.gmra.mxu0 %v3755
  %v3869 = vpop.f32.mrf.mxu0
  %v3870 = vadd.f32 0.0, %v3869
  %3871 = vmatmul.f32.gmra.mxu0 %v3758
  %v3872 = vpop.f32.mrf.mxu0
  %v3873 = vadd.f32 0.0, %v3872
  %3874 = vdwg.mxu0
  %v3875 = vadd.f32 %v3652, %v3778
  %v3876 = vadd.f32 %v3653, %v3801
  %v3877 = vadd.f32 %v3654, %v3824
  %v3878 = vadd.f32 %v3655, %v3847
  %v3879 = vadd.f32 %v3656, %v3870
  %v3880 = vadd.f32 %v3657, %v3781
  %v3881 = vadd.f32 %v3658, %v3804
  %v3882 = vadd.f32 %v3659, %v3827
  %v3883 = vadd.f32 %v3660, %v3850
  %v3884 = vadd.f32 %v3661, %v3873
  %s3885 = scalar_lea.vmem %s2, 224
  %v3886 = vld [vmem:[%s3885] sm:$0xff]
  %v3887 = vld [vmem:[%s3885 + $0x8] sm:$0xff]
  %3888 = vrot.lane.b32.xlu0 %v1830, 74
  %v3889 = vpop.permute.xlu0 %3888
  %3890 = vrot.lane.b32.xlu0 %v1831, 74
  %v3891 = vpop.permute.xlu0 %3890
  %3892 = vrot.lane.b32.xlu0 %v1832, 74
  %v3893 = vpop.permute.xlu0 %3892
  %3894 = vrot.lane.b32.xlu0 %v1833, 74
  %v3895 = vpop.permute.xlu0 %3894
  %3896 = vrot.lane.b32.xlu0 %v1834, 74
  %v3897 = vpop.permute.xlu0 %3896
  %3898 = vrot.lane.b32.xlu0 %v1835, 74
  %v3899 = vpop.permute.xlu0 %3898
  %3900 = vrot.lane.b32.xlu0 %v1836, 74
  %v3901 = vpop.permute.xlu0 %3900
  %3902 = vrot.lane.b32.xlu0 %v1837, 74
  %v3903 = vpop.permute.xlu0 %3902
  %3904 = vrot.lane.b32.xlu0 %v1838, 74
  %v3905 = vpop.permute.xlu0 %3904
  %3906 = vrot.lane.b32.xlu0 %v1839, 74
  %v3907 = vpop.permute.xlu0 %3906
  %3908 = vrot.lane.b32.xlu0 %v1840, 74
  %v3909 = vpop.permute.xlu0 %3908
  %3910 = vrot.lane.b32.xlu0 %v1841, 74
  %v3911 = vpop.permute.xlu0 %3910
  %3912 = vrot.lane.b32.xlu0 %v1842, 74
  %v3913 = vpop.permute.xlu0 %3912
  %3914 = vrot.lane.b32.xlu0 %v1843, 74
  %v3915 = vpop.permute.xlu0 %3914
  %3916 = vrot.lane.b32.xlu0 %v1844, 74
  %v3917 = vpop.permute.xlu0 %3916
  %3918 = vrot.lane.b32.xlu0 %v1845, 74
  %v3919 = vpop.permute.xlu0 %3918
  %3920 = vrot.lane.b32.xlu0 %v1846, 74
  %v3921 = vpop.permute.xlu0 %3920
  %3922 = vrot.lane.b32.xlu0 %v1847, 74
  %v3923 = vpop.permute.xlu0 %3922
  %3924 = vrot.lane.b32.xlu0 %v1848, 74
  %v3925 = vpop.permute.xlu0 %3924
  %3926 = vrot.lane.b32.xlu0 %v1849, 74
  %v3927 = vpop.permute.xlu0 %3926
  %3928 = vrot.lane.b32.xlu0 %v1850, 74
  %v3929 = vpop.permute.xlu0 %3928
  %3930 = vrot.lane.b32.xlu0 %v1851, 74
  %v3931 = vpop.permute.xlu0 %3930
  %3932 = vrot.lane.b32.xlu0 %v1852, 74
  %v3933 = vpop.permute.xlu0 %3932
  %3934 = vrot.lane.b32.xlu0 %v1853, 74
  %v3935 = vpop.permute.xlu0 %3934
  %vm3936 = vcmask 605184
  %v3937 = vsel %vm3936, %v3889, %v3891
  %v3938 = vsel %vm3936, %v3891, %v3893
  %v3939 = vsel %vm3936, %v3893, %v3895
  %v3940 = vsel %vm3936, %v3895, %v3897
  %v3941 = vsel %vm3936, %v3897, %v3899
  %v3942 = vsel %vm3936, %v3901, %v3903
  %v3943 = vsel %vm3936, %v3903, %v3905
  %v3944 = vsel %vm3936, %v3905, %v3907
  %v3945 = vsel %vm3936, %v3907, %v3909
  %v3946 = vsel %vm3936, %v3909, %v3911
  %v3947 = vsel %vm3936, %v3913, %v3915
  %v3948 = vsel %vm3936, %v3915, %v3917
  %v3949 = vsel %vm3936, %v3917, %v3919
  %v3950 = vsel %vm3936, %v3919, %v3921
  %v3951 = vsel %vm3936, %v3921, %v3923
  %v3952 = vsel %vm3936, %v3925, %v3927
  %v3953 = vsel %vm3936, %v3927, %v3929
  %v3954 = vsel %vm3936, %v3929, %v3931
  %v3955 = vsel %vm3936, %v3931, %v3933
  %v3956 = vsel %vm3936, %v3933, %v3935
  %v3978 = vsel %vm954, %v3886, 0
  %v3981 = vsel %vm954, %v3887, 0
  %3983 = vmatpush.msra.mxu0 0.0
  %3984 = vmatpush.msra.mxu0 0.0
  %3985 = vmatpush.msra.mxu0 0.0
  %3986 = vmatpush.msra.mxu0 0.0
  %3987 = vmatpush.msra.mxu0 0.0
  %3988 = vmatpush.msra.mxu0 0.0
  %3989 = vmatpush.msra.mxu0 0.0
  %3990 = vmatpush.msra.mxu0 0.0
  %3991 = vmatpush.msra.mxu0 0.0
  %3992 = vmatpush.msra.mxu0 0.0
  %3993 = vmatpush.msra.mxu0 0.0
  %3994 = vmatpush.msra.mxu0 0.0
  %3995 = vmatpush.msra.mxu0 %v3952
  %3996 = vmatpush.msra.mxu0 %v3947
  %3997 = vmatpush.msra.mxu0 %v3942
  %3998 = vmatpush.msra.mxu0 %v3937
  %3999 = vmatmul.f32.gmra.mxu0 %v3978
  %v4000 = vpop.f32.mrf.mxu0
  %v4001 = vadd.f32 0.0, %v4000
  %4002 = vmatmul.f32.gmra.mxu0 %v3981
  %v4003 = vpop.f32.mrf.mxu0
  %v4004 = vadd.f32 0.0, %v4003
  %4005 = vdwg.mxu0
  %4006 = vmatpush.msra.mxu0 0.0
  %4007 = vmatpush.msra.mxu0 0.0
  %4008 = vmatpush.msra.mxu0 0.0
  %4009 = vmatpush.msra.mxu0 0.0
  %4010 = vmatpush.msra.mxu0 0.0
  %4011 = vmatpush.msra.mxu0 0.0
  %4012 = vmatpush.msra.mxu0 0.0
  %4013 = vmatpush.msra.mxu0 0.0
  %4014 = vmatpush.msra.mxu0 0.0
  %4015 = vmatpush.msra.mxu0 0.0
  %4016 = vmatpush.msra.mxu0 0.0
  %4017 = vmatpush.msra.mxu0 0.0
  %4018 = vmatpush.msra.mxu0 %v3953
  %4019 = vmatpush.msra.mxu0 %v3948
  %4020 = vmatpush.msra.mxu0 %v3943
  %4021 = vmatpush.msra.mxu0 %v3938
  %4022 = vmatmul.f32.gmra.mxu0 %v3978
  %v4023 = vpop.f32.mrf.mxu0
  %v4024 = vadd.f32 0.0, %v4023
  %4025 = vmatmul.f32.gmra.mxu0 %v3981
  %v4026 = vpop.f32.mrf.mxu0
  %v4027 = vadd.f32 0.0, %v4026
  %4028 = vdwg.mxu0
  %4029 = vmatpush.msra.mxu0 0.0
  %4030 = vmatpush.msra.mxu0 0.0
  %4031 = vmatpush.msra.mxu0 0.0
  %4032 = vmatpush.msra.mxu0 0.0
  %4033 = vmatpush.msra.mxu0 0.0
  %4034 = vmatpush.msra.mxu0 0.0
  %4035 = vmatpush.msra.mxu0 0.0
  %4036 = vmatpush.msra.mxu0 0.0
  %4037 = vmatpush.msra.mxu0 0.0
  %4038 = vmatpush.msra.mxu0 0.0
  %4039 = vmatpush.msra.mxu0 0.0
  %4040 = vmatpush.msra.mxu0 0.0
  %4041 = vmatpush.msra.mxu0 %v3954
  %4042 = vmatpush.msra.mxu0 %v3949
  %4043 = vmatpush.msra.mxu0 %v3944
  %4044 = vmatpush.msra.mxu0 %v3939
  %4045 = vmatmul.f32.gmra.mxu0 %v3978
  %v4046 = vpop.f32.mrf.mxu0
  %v4047 = vadd.f32 0.0, %v4046
  %4048 = vmatmul.f32.gmra.mxu0 %v3981
  %v4049 = vpop.f32.mrf.mxu0
  %v4050 = vadd.f32 0.0, %v4049
  %4051 = vdwg.mxu0
  %4052 = vmatpush.msra.mxu0 0.0
  %4053 = vmatpush.msra.mxu0 0.0
  %4054 = vmatpush.msra.mxu0 0.0
  %4055 = vmatpush.msra.mxu0 0.0
  %4056 = vmatpush.msra.mxu0 0.0
  %4057 = vmatpush.msra.mxu0 0.0
  %4058 = vmatpush.msra.mxu0 0.0
  %4059 = vmatpush.msra.mxu0 0.0
  %4060 = vmatpush.msra.mxu0 0.0
  %4061 = vmatpush.msra.mxu0 0.0
  %4062 = vmatpush.msra.mxu0 0.0
  %4063 = vmatpush.msra.mxu0 0.0
  %4064 = vmatpush.msra.mxu0 %v3955
  %4065 = vmatpush.msra.mxu0 %v3950
  %4066 = vmatpush.msra.mxu0 %v3945
  %4067 = vmatpush.msra.mxu0 %v3940
  %4068 = vmatmul.f32.gmra.mxu0 %v3978
  %v4069 = vpop.f32.mrf.mxu0
  %v4070 = vadd.f32 0.0, %v4069
  %4071 = vmatmul.f32.gmra.mxu0 %v3981
  %v4072 = vpop.f32.mrf.mxu0
  %v4073 = vadd.f32 0.0, %v4072
  %4074 = vdwg.mxu0
  %4075 = vmatpush.msra.mxu0 0.0
  %4076 = vmatpush.msra.mxu0 0.0
  %4077 = vmatpush.msra.mxu0 0.0
  %4078 = vmatpush.msra.mxu0 0.0
  %4079 = vmatpush.msra.mxu0 0.0
  %4080 = vmatpush.msra.mxu0 0.0
  %4081 = vmatpush.msra.mxu0 0.0
  %4082 = vmatpush.msra.mxu0 0.0
  %4083 = vmatpush.msra.mxu0 0.0
  %4084 = vmatpush.msra.mxu0 0.0
  %4085 = vmatpush.msra.mxu0 0.0
  %4086 = vmatpush.msra.mxu0 0.0
  %4087 = vmatpush.msra.mxu0 %v3956
  %4088 = vmatpush.msra.mxu0 %v3951
  %4089 = vmatpush.msra.mxu0 %v3946
  %4090 = vmatpush.msra.mxu0 %v3941
  %4091 = vmatmul.f32.gmra.mxu0 %v3978
  %v4092 = vpop.f32.mrf.mxu0
  %v4093 = vadd.f32 0.0, %v4092
  %4094 = vmatmul.f32.gmra.mxu0 %v3981
  %v4095 = vpop.f32.mrf.mxu0
  %v4096 = vadd.f32 0.0, %v4095
  %4097 = vdwg.mxu0
  %v4098 = vadd.f32 %v3875, %v4001
  %v4099 = vadd.f32 %v3876, %v4024
  %v4100 = vadd.f32 %v3877, %v4047
  %v4101 = vadd.f32 %v3878, %v4070
  %v4102 = vadd.f32 %v3879, %v4093
  %v4103 = vadd.f32 %v3880, %v4004
  %v4104 = vadd.f32 %v3881, %v4027
  %v4105 = vadd.f32 %v3882, %v4050
  %v4106 = vadd.f32 %v3883, %v4073
  %v4107 = vadd.f32 %v3884, %v4096
  %s4108 = scalar_lea.vmem %s2, 240
  %v4109 = vld [vmem:[%s4108] sm:$0xff]
  %v4110 = vld [vmem:[%s4108 + $0x8] sm:$0xff]
  %4111 = vrot.lane.b32.xlu0 %v1830, 53
  %v4112 = vpop.permute.xlu0 %4111
  %4113 = vrot.lane.b32.xlu0 %v1831, 53
  %v4114 = vpop.permute.xlu0 %4113
  %4115 = vrot.lane.b32.xlu0 %v1832, 53
  %v4116 = vpop.permute.xlu0 %4115
  %4117 = vrot.lane.b32.xlu0 %v1833, 53
  %v4118 = vpop.permute.xlu0 %4117
  %4119 = vrot.lane.b32.xlu0 %v1834, 53
  %v4120 = vpop.permute.xlu0 %4119
  %4121 = vrot.lane.b32.xlu0 %v1835, 53
  %v4122 = vpop.permute.xlu0 %4121
  %4123 = vrot.lane.b32.xlu0 %v1836, 53
  %v4124 = vpop.permute.xlu0 %4123
  %4125 = vrot.lane.b32.xlu0 %v1837, 53
  %v4126 = vpop.permute.xlu0 %4125
  %4127 = vrot.lane.b32.xlu0 %v1838, 53
  %v4128 = vpop.permute.xlu0 %4127
  %4129 = vrot.lane.b32.xlu0 %v1839, 53
  %v4130 = vpop.permute.xlu0 %4129
  %4131 = vrot.lane.b32.xlu0 %v1840, 53
  %v4132 = vpop.permute.xlu0 %4131
  %4133 = vrot.lane.b32.xlu0 %v1841, 53
  %v4134 = vpop.permute.xlu0 %4133
  %4135 = vrot.lane.b32.xlu0 %v1842, 53
  %v4136 = vpop.permute.xlu0 %4135
  %4137 = vrot.lane.b32.xlu0 %v1843, 53
  %v4138 = vpop.permute.xlu0 %4137
  %4139 = vrot.lane.b32.xlu0 %v1844, 53
  %v4140 = vpop.permute.xlu0 %4139
  %4141 = vrot.lane.b32.xlu0 %v1845, 53
  %v4142 = vpop.permute.xlu0 %4141
  %4143 = vrot.lane.b32.xlu0 %v1846, 53
  %v4144 = vpop.permute.xlu0 %4143
  %4145 = vrot.lane.b32.xlu0 %v1847, 53
  %v4146 = vpop.permute.xlu0 %4145
  %4147 = vrot.lane.b32.xlu0 %v1848, 53
  %v4148 = vpop.permute.xlu0 %4147
  %4149 = vrot.lane.b32.xlu0 %v1849, 53
  %v4150 = vpop.permute.xlu0 %4149
  %4151 = vrot.lane.b32.xlu0 %v1850, 53
  %v4152 = vpop.permute.xlu0 %4151
  %4153 = vrot.lane.b32.xlu0 %v1851, 53
  %v4154 = vpop.permute.xlu0 %4153
  %4155 = vrot.lane.b32.xlu0 %v1852, 53
  %v4156 = vpop.permute.xlu0 %4155
  %4157 = vrot.lane.b32.xlu0 %v1853, 53
  %v4158 = vpop.permute.xlu0 %4157
  %vm4159 = vcmask 433152
  %v4160 = vsel %vm4159, %v4112, %v4114
  %v4161 = vsel %vm4159, %v4114, %v4116
  %v4162 = vsel %vm4159, %v4116, %v4118
  %v4163 = vsel %vm4159, %v4118, %v4120
  %v4164 = vsel %vm4159, %v4120, %v4122
  %v4165 = vsel %vm4159, %v4124, %v4126
  %v4166 = vsel %vm4159, %v4126, %v4128
  %v4167 = vsel %vm4159, %v4128, %v4130
  %v4168 = vsel %vm4159, %v4130, %v4132
  %v4169 = vsel %vm4159, %v4132, %v4134
  %v4170 = vsel %vm4159, %v4136, %v4138
  %v4171 = vsel %vm4159, %v4138, %v4140
  %v4172 = vsel %vm4159, %v4140, %v4142
  %v4173 = vsel %vm4159, %v4142, %v4144
  %v4174 = vsel %vm4159, %v4144, %v4146
  %v4175 = vsel %vm4159, %v4148, %v4150
  %v4176 = vsel %vm4159, %v4150, %v4152
  %v4177 = vsel %vm4159, %v4152, %v4154
  %v4178 = vsel %vm4159, %v4154, %v4156
  %v4179 = vsel %vm4159, %v4156, %v4158
  %v4201 = vsel %vm954, %v4109, 0
  %v4204 = vsel %vm954, %v4110, 0
  %4206 = vmatpush.msra.mxu0 0.0
  %4207 = vmatpush.msra.mxu0 0.0
  %4208 = vmatpush.msra.mxu0 0.0
  %4209 = vmatpush.msra.mxu0 0.0
  %4210 = vmatpush.msra.mxu0 0.0
  %4211 = vmatpush.msra.mxu0 0.0
  %4212 = vmatpush.msra.mxu0 0.0
  %4213 = vmatpush.msra.mxu0 0.0
  %4214 = vmatpush.msra.mxu0 0.0
  %4215 = vmatpush.msra.mxu0 0.0
  %4216 = vmatpush.msra.mxu0 0.0
  %4217 = vmatpush.msra.mxu0 0.0
  %4218 = vmatpush.msra.mxu0 %v4175
  %4219 = vmatpush.msra.mxu0 %v4170
  %4220 = vmatpush.msra.mxu0 %v4165
  %4221 = vmatpush.msra.mxu0 %v4160
  %4222 = vmatmul.f32.gmra.mxu0 %v4201
  %v4223 = vpop.f32.mrf.mxu0
  %v4224 = vadd.f32 0.0, %v4223
  %4225 = vmatmul.f32.gmra.mxu0 %v4204
  %v4226 = vpop.f32.mrf.mxu0
  %v4227 = vadd.f32 0.0, %v4226
  %4228 = vdwg.mxu0
  %4229 = vmatpush.msra.mxu0 0.0
  %4230 = vmatpush.msra.mxu0 0.0
  %4231 = vmatpush.msra.mxu0 0.0
  %4232 = vmatpush.msra.mxu0 0.0
  %4233 = vmatpush.msra.mxu0 0.0
  %4234 = vmatpush.msra.mxu0 0.0
  %4235 = vmatpush.msra.mxu0 0.0
  %4236 = vmatpush.msra.mxu0 0.0
  %4237 = vmatpush.msra.mxu0 0.0
  %4238 = vmatpush.msra.mxu0 0.0
  %4239 = vmatpush.msra.mxu0 0.0
  %4240 = vmatpush.msra.mxu0 0.0
  %4241 = vmatpush.msra.mxu0 %v4176
  %4242 = vmatpush.msra.mxu0 %v4171
  %4243 = vmatpush.msra.mxu0 %v4166
  %4244 = vmatpush.msra.mxu0 %v4161
  %4245 = vmatmul.f32.gmra.mxu0 %v4201
  %v4246 = vpop.f32.mrf.mxu0
  %v4247 = vadd.f32 0.0, %v4246
  %4248 = vmatmul.f32.gmra.mxu0 %v4204
  %v4249 = vpop.f32.mrf.mxu0
  %v4250 = vadd.f32 0.0, %v4249
  %4251 = vdwg.mxu0
  %4252 = vmatpush.msra.mxu0 0.0
  %4253 = vmatpush.msra.mxu0 0.0
  %4254 = vmatpush.msra.mxu0 0.0
  %4255 = vmatpush.msra.mxu0 0.0
  %4256 = vmatpush.msra.mxu0 0.0
  %4257 = vmatpush.msra.mxu0 0.0
  %4258 = vmatpush.msra.mxu0 0.0
  %4259 = vmatpush.msra.mxu0 0.0
  %4260 = vmatpush.msra.mxu0 0.0
  %4261 = vmatpush.msra.mxu0 0.0
  %4262 = vmatpush.msra.mxu0 0.0
  %4263 = vmatpush.msra.mxu0 0.0
  %4264 = vmatpush.msra.mxu0 %v4177
  %4265 = vmatpush.msra.mxu0 %v4172
  %4266 = vmatpush.msra.mxu0 %v4167
  %4267 = vmatpush.msra.mxu0 %v4162
  %4268 = vmatmul.f32.gmra.mxu0 %v4201
  %v4269 = vpop.f32.mrf.mxu0
  %v4270 = vadd.f32 0.0, %v4269
  %4271 = vmatmul.f32.gmra.mxu0 %v4204
  %v4272 = vpop.f32.mrf.mxu0
  %v4273 = vadd.f32 0.0, %v4272
  %4274 = vdwg.mxu0
  %4275 = vmatpush.msra.mxu0 0.0
  %4276 = vmatpush.msra.mxu0 0.0
  %4277 = vmatpush.msra.mxu0 0.0
  %4278 = vmatpush.msra.mxu0 0.0
  %4279 = vmatpush.msra.mxu0 0.0
  %4280 = vmatpush.msra.mxu0 0.0
  %4281 = vmatpush.msra.mxu0 0.0
  %4282 = vmatpush.msra.mxu0 0.0
  %4283 = vmatpush.msra.mxu0 0.0
  %4284 = vmatpush.msra.mxu0 0.0
  %4285 = vmatpush.msra.mxu0 0.0
  %4286 = vmatpush.msra.mxu0 0.0
  %4287 = vmatpush.msra.mxu0 %v4178
  %4288 = vmatpush.msra.mxu0 %v4173
  %4289 = vmatpush.msra.mxu0 %v4168
  %4290 = vmatpush.msra.mxu0 %v4163
  %4291 = vmatmul.f32.gmra.mxu0 %v4201
  %v4292 = vpop.f32.mrf.mxu0
  %v4293 = vadd.f32 0.0, %v4292
  %4294 = vmatmul.f32.gmra.mxu0 %v4204
  %v4295 = vpop.f32.mrf.mxu0
  %v4296 = vadd.f32 0.0, %v4295
  %4297 = vdwg.mxu0
  %4298 = vmatpush.msra.mxu0 0.0
  %4299 = vmatpush.msra.mxu0 0.0
  %4300 = vmatpush.msra.mxu0 0.0
  %4301 = vmatpush.msra.mxu0 0.0
  %4302 = vmatpush.msra.mxu0 0.0
  %4303 = vmatpush.msra.mxu0 0.0
  %4304 = vmatpush.msra.mxu0 0.0
  %4305 = vmatpush.msra.mxu0 0.0
  %4306 = vmatpush.msra.mxu0 0.0
  %4307 = vmatpush.msra.mxu0 0.0
  %4308 = vmatpush.msra.mxu0 0.0
  %4309 = vmatpush.msra.mxu0 0.0
  %4310 = vmatpush.msra.mxu0 %v4179
  %4311 = vmatpush.msra.mxu0 %v4174
  %4312 = vmatpush.msra.mxu0 %v4169
  %4313 = vmatpush.msra.mxu0 %v4164
  %4314 = vmatmul.f32.gmra.mxu0 %v4201
  %v4315 = vpop.f32.mrf.mxu0
  %v4316 = vadd.f32 0.0, %v4315
  %4317 = vmatmul.f32.gmra.mxu0 %v4204
  %v4318 = vpop.f32.mrf.mxu0
  %v4319 = vadd.f32 0.0, %v4318
  %4320 = vdwg.mxu0
  %v4321 = vadd.f32 %v4098, %v4224
  %v4322 = vadd.f32 %v4099, %v4247
  %v4323 = vadd.f32 %v4100, %v4270
  %v4324 = vadd.f32 %v4101, %v4293
  %v4325 = vadd.f32 %v4102, %v4316
  %v4326 = vadd.f32 %v4103, %v4227
  %v4327 = vadd.f32 %v4104, %v4250
  %v4328 = vadd.f32 %v4105, %v4273
  %v4329 = vadd.f32 %v4106, %v4296
  %v4330 = vadd.f32 %v4107, %v4319
  %s4331 = scalar_lea.vmem %s2, 256
  %v4332 = vld [vmem:[%s4331] sm:$0xff]
  %v4333 = vld [vmem:[%s4331 + $0x8] sm:$0xff]
  %4334 = vrot.lane.b32.xlu0 %v1830, 52
  %v4335 = vpop.permute.xlu0 %4334
  %4336 = vrot.lane.b32.xlu0 %v1831, 52
  %v4337 = vpop.permute.xlu0 %4336
  %4338 = vrot.lane.b32.xlu0 %v1832, 52
  %v4339 = vpop.permute.xlu0 %4338
  %4340 = vrot.lane.b32.xlu0 %v1833, 52
  %v4341 = vpop.permute.xlu0 %4340
  %4342 = vrot.lane.b32.xlu0 %v1834, 52
  %v4343 = vpop.permute.xlu0 %4342
  %4344 = vrot.lane.b32.xlu0 %v1835, 52
  %v4345 = vpop.permute.xlu0 %4344
  %4346 = vrot.lane.b32.xlu0 %v1836, 52
  %v4347 = vpop.permute.xlu0 %4346
  %4348 = vrot.lane.b32.xlu0 %v1837, 52
  %v4349 = vpop.permute.xlu0 %4348
  %4350 = vrot.lane.b32.xlu0 %v1838, 52
  %v4351 = vpop.permute.xlu0 %4350
  %4352 = vrot.lane.b32.xlu0 %v1839, 52
  %v4353 = vpop.permute.xlu0 %4352
  %4354 = vrot.lane.b32.xlu0 %v1840, 52
  %v4355 = vpop.permute.xlu0 %4354
  %4356 = vrot.lane.b32.xlu0 %v1841, 52
  %v4357 = vpop.permute.xlu0 %4356
  %4358 = vrot.lane.b32.xlu0 %v1842, 52
  %v4359 = vpop.permute.xlu0 %4358
  %4360 = vrot.lane.b32.xlu0 %v1843, 52
  %v4361 = vpop.permute.xlu0 %4360
  %4362 = vrot.lane.b32.xlu0 %v1844, 52
  %v4363 = vpop.permute.xlu0 %4362
  %4364 = vrot.lane.b32.xlu0 %v1845, 52
  %v4365 = vpop.permute.xlu0 %4364
  %4366 = vrot.lane.b32.xlu0 %v1846, 52
  %v4367 = vpop.permute.xlu0 %4366
  %4368 = vrot.lane.b32.xlu0 %v1847, 52
  %v4369 = vpop.permute.xlu0 %4368
  %4370 = vrot.lane.b32.xlu0 %v1848, 52
  %v4371 = vpop.permute.xlu0 %4370
  %4372 = vrot.lane.b32.xlu0 %v1849, 52
  %v4373 = vpop.permute.xlu0 %4372
  %4374 = vrot.lane.b32.xlu0 %v1850, 52
  %v4375 = vpop.permute.xlu0 %4374
  %4376 = vrot.lane.b32.xlu0 %v1851, 52
  %v4377 = vpop.permute.xlu0 %4376
  %4378 = vrot.lane.b32.xlu0 %v1852, 52
  %v4379 = vpop.permute.xlu0 %4378
  %4380 = vrot.lane.b32.xlu0 %v1853, 52
  %v4381 = vpop.permute.xlu0 %4380
  %vm4382 = vcmask 424960
  %v4383 = vsel %vm4382, %v4335, %v4337
  %v4384 = vsel %vm4382, %v4337, %v4339
  %v4385 = vsel %vm4382, %v4339, %v4341
  %v4386 = vsel %vm4382, %v4341, %v4343
  %v4387 = vsel %vm4382, %v4343, %v4345
  %v4388 = vsel %vm4382, %v4347, %v4349
  %v4389 = vsel %vm4382, %v4349, %v4351
  %v4390 = vsel %vm4382, %v4351, %v4353
  %v4391 = vsel %vm4382, %v4353, %v4355
  %v4392 = vsel %vm4382, %v4355, %v4357
  %v4393 = vsel %vm4382, %v4359, %v4361
  %v4394 = vsel %vm4382, %v4361, %v4363
  %v4395 = vsel %vm4382, %v4363, %v4365
  %v4396 = vsel %vm4382, %v4365, %v4367
  %v4397 = vsel %vm4382, %v4367, %v4369
  %v4398 = vsel %vm4382, %v4371, %v4373
  %v4399 = vsel %vm4382, %v4373, %v4375
  %v4400 = vsel %vm4382, %v4375, %v4377
  %v4401 = vsel %vm4382, %v4377, %v4379
  %v4402 = vsel %vm4382, %v4379, %v4381
  %v4424 = vsel %vm954, %v4332, 0
  %v4427 = vsel %vm954, %v4333, 0
  %4429 = vmatpush.msra.mxu0 0.0
  %4430 = vmatpush.msra.mxu0 0.0
  %4431 = vmatpush.msra.mxu0 0.0
  %4432 = vmatpush.msra.mxu0 0.0
  %4433 = vmatpush.msra.mxu0 0.0
  %4434 = vmatpush.msra.mxu0 0.0
  %4435 = vmatpush.msra.mxu0 0.0
  %4436 = vmatpush.msra.mxu0 0.0
  %4437 = vmatpush.msra.mxu0 0.0
  %4438 = vmatpush.msra.mxu0 0.0
  %4439 = vmatpush.msra.mxu0 0.0
  %4440 = vmatpush.msra.mxu0 0.0
  %4441 = vmatpush.msra.mxu0 %v4398
  %4442 = vmatpush.msra.mxu0 %v4393
  %4443 = vmatpush.msra.mxu0 %v4388
  %4444 = vmatpush.msra.mxu0 %v4383
  %4445 = vmatmul.f32.gmra.mxu0 %v4424
  %v4446 = vpop.f32.mrf.mxu0
  %v4447 = vadd.f32 0.0, %v4446
  %4448 = vmatmul.f32.gmra.mxu0 %v4427
  %v4449 = vpop.f32.mrf.mxu0
  %v4450 = vadd.f32 0.0, %v4449
  %4451 = vdwg.mxu0
  %4452 = vmatpush.msra.mxu0 0.0
  %4453 = vmatpush.msra.mxu0 0.0
  %4454 = vmatpush.msra.mxu0 0.0
  %4455 = vmatpush.msra.mxu0 0.0
  %4456 = vmatpush.msra.mxu0 0.0
  %4457 = vmatpush.msra.mxu0 0.0
  %4458 = vmatpush.msra.mxu0 0.0
  %4459 = vmatpush.msra.mxu0 0.0
  %4460 = vmatpush.msra.mxu0 0.0
  %4461 = vmatpush.msra.mxu0 0.0
  %4462 = vmatpush.msra.mxu0 0.0
  %4463 = vmatpush.msra.mxu0 0.0
  %4464 = vmatpush.msra.mxu0 %v4399
  %4465 = vmatpush.msra.mxu0 %v4394
  %4466 = vmatpush.msra.mxu0 %v4389
  %4467 = vmatpush.msra.mxu0 %v4384
  %4468 = vmatmul.f32.gmra.mxu0 %v4424
  %v4469 = vpop.f32.mrf.mxu0
  %v4470 = vadd.f32 0.0, %v4469
  %4471 = vmatmul.f32.gmra.mxu0 %v4427
  %v4472 = vpop.f32.mrf.mxu0
  %v4473 = vadd.f32 0.0, %v4472
  %4474 = vdwg.mxu0
  %4475 = vmatpush.msra.mxu0 0.0
  %4476 = vmatpush.msra.mxu0 0.0
  %4477 = vmatpush.msra.mxu0 0.0
  %4478 = vmatpush.msra.mxu0 0.0
  %4479 = vmatpush.msra.mxu0 0.0
  %4480 = vmatpush.msra.mxu0 0.0
  %4481 = vmatpush.msra.mxu0 0.0
  %4482 = vmatpush.msra.mxu0 0.0
  %4483 = vmatpush.msra.mxu0 0.0
  %4484 = vmatpush.msra.mxu0 0.0
  %4485 = vmatpush.msra.mxu0 0.0
  %4486 = vmatpush.msra.mxu0 0.0
  %4487 = vmatpush.msra.mxu0 %v4400
  %4488 = vmatpush.msra.mxu0 %v4395
  %4489 = vmatpush.msra.mxu0 %v4390
  %4490 = vmatpush.msra.mxu0 %v4385
  %4491 = vmatmul.f32.gmra.mxu0 %v4424
  %v4492 = vpop.f32.mrf.mxu0
  %v4493 = vadd.f32 0.0, %v4492
  %4494 = vmatmul.f32.gmra.mxu0 %v4427
  %v4495 = vpop.f32.mrf.mxu0
  %v4496 = vadd.f32 0.0, %v4495
  %4497 = vdwg.mxu0
  %4498 = vmatpush.msra.mxu0 0.0
  %4499 = vmatpush.msra.mxu0 0.0
  %4500 = vmatpush.msra.mxu0 0.0
  %4501 = vmatpush.msra.mxu0 0.0
  %4502 = vmatpush.msra.mxu0 0.0
  %4503 = vmatpush.msra.mxu0 0.0
  %4504 = vmatpush.msra.mxu0 0.0
  %4505 = vmatpush.msra.mxu0 0.0
  %4506 = vmatpush.msra.mxu0 0.0
  %4507 = vmatpush.msra.mxu0 0.0
  %4508 = vmatpush.msra.mxu0 0.0
  %4509 = vmatpush.msra.mxu0 0.0
  %4510 = vmatpush.msra.mxu0 %v4401
  %4511 = vmatpush.msra.mxu0 %v4396
  %4512 = vmatpush.msra.mxu0 %v4391
  %4513 = vmatpush.msra.mxu0 %v4386
  %4514 = vmatmul.f32.gmra.mxu0 %v4424
  %v4515 = vpop.f32.mrf.mxu0
  %v4516 = vadd.f32 0.0, %v4515
  %4517 = vmatmul.f32.gmra.mxu0 %v4427
  %v4518 = vpop.f32.mrf.mxu0
  %v4519 = vadd.f32 0.0, %v4518
  %4520 = vdwg.mxu0
  %4521 = vmatpush.msra.mxu0 0.0
  %4522 = vmatpush.msra.mxu0 0.0
  %4523 = vmatpush.msra.mxu0 0.0
  %4524 = vmatpush.msra.mxu0 0.0
  %4525 = vmatpush.msra.mxu0 0.0
  %4526 = vmatpush.msra.mxu0 0.0
  %4527 = vmatpush.msra.mxu0 0.0
  %4528 = vmatpush.msra.mxu0 0.0
  %4529 = vmatpush.msra.mxu0 0.0
  %4530 = vmatpush.msra.mxu0 0.0
  %4531 = vmatpush.msra.mxu0 0.0
  %4532 = vmatpush.msra.mxu0 0.0
  %4533 = vmatpush.msra.mxu0 %v4402
  %4534 = vmatpush.msra.mxu0 %v4397
  %4535 = vmatpush.msra.mxu0 %v4392
  %4536 = vmatpush.msra.mxu0 %v4387
  %4537 = vmatmul.f32.gmra.mxu0 %v4424
  %v4538 = vpop.f32.mrf.mxu0
  %v4539 = vadd.f32 0.0, %v4538
  %4540 = vmatmul.f32.gmra.mxu0 %v4427
  %v4541 = vpop.f32.mrf.mxu0
  %v4542 = vadd.f32 0.0, %v4541
  %4543 = vdwg.mxu0
  %v4544 = vadd.f32 %v4321, %v4447
  %v4545 = vadd.f32 %v4322, %v4470
  %v4546 = vadd.f32 %v4323, %v4493
  %v4547 = vadd.f32 %v4324, %v4516
  %v4548 = vadd.f32 %v4325, %v4539
  %v4549 = vadd.f32 %v4326, %v4450
  %v4550 = vadd.f32 %v4327, %v4473
  %v4551 = vadd.f32 %v4328, %v4496
  %v4552 = vadd.f32 %v4329, %v4519
  %v4553 = vadd.f32 %v4330, %v4542
  %s4554 = scalar_lea.vmem %s2, 272
  %v4555 = vld [vmem:[%s4554] sm:$0xff]
  %v4556 = vld [vmem:[%s4554 + $0x8] sm:$0xff]
  %4557 = vrot.lane.b32.xlu0 %v1830, 51
  %v4558 = vpop.permute.xlu0 %4557
  %4559 = vrot.lane.b32.xlu0 %v1831, 51
  %v4560 = vpop.permute.xlu0 %4559
  %4561 = vrot.lane.b32.xlu0 %v1832, 51
  %v4562 = vpop.permute.xlu0 %4561
  %4563 = vrot.lane.b32.xlu0 %v1833, 51
  %v4564 = vpop.permute.xlu0 %4563
  %4565 = vrot.lane.b32.xlu0 %v1834, 51
  %v4566 = vpop.permute.xlu0 %4565
  %4567 = vrot.lane.b32.xlu0 %v1835, 51
  %v4568 = vpop.permute.xlu0 %4567
  %4569 = vrot.lane.b32.xlu0 %v1836, 51
  %v4570 = vpop.permute.xlu0 %4569
  %4571 = vrot.lane.b32.xlu0 %v1837, 51
  %v4572 = vpop.permute.xlu0 %4571
  %4573 = vrot.lane.b32.xlu0 %v1838, 51
  %v4574 = vpop.permute.xlu0 %4573
  %4575 = vrot.lane.b32.xlu0 %v1839, 51
  %v4576 = vpop.permute.xlu0 %4575
  %4577 = vrot.lane.b32.xlu0 %v1840, 51
  %v4578 = vpop.permute.xlu0 %4577
  %4579 = vrot.lane.b32.xlu0 %v1841, 51
  %v4580 = vpop.permute.xlu0 %4579
  %4581 = vrot.lane.b32.xlu0 %v1842, 51
  %v4582 = vpop.permute.xlu0 %4581
  %4583 = vrot.lane.b32.xlu0 %v1843, 51
  %v4584 = vpop.permute.xlu0 %4583
  %4585 = vrot.lane.b32.xlu0 %v1844, 51
  %v4586 = vpop.permute.xlu0 %4585
  %4587 = vrot.lane.b32.xlu0 %v1845, 51
  %v4588 = vpop.permute.xlu0 %4587
  %4589 = vrot.lane.b32.xlu0 %v1846, 51
  %v4590 = vpop.permute.xlu0 %4589
  %4591 = vrot.lane.b32.xlu0 %v1847, 51
  %v4592 = vpop.permute.xlu0 %4591
  %4593 = vrot.lane.b32.xlu0 %v1848, 51
  %v4594 = vpop.permute.xlu0 %4593
  %4595 = vrot.lane.b32.xlu0 %v1849, 51
  %v4596 = vpop.permute.xlu0 %4595
  %4597 = vrot.lane.b32.xlu0 %v1850, 51
  %v4598 = vpop.permute.xlu0 %4597
  %4599 = vrot.lane.b32.xlu0 %v1851, 51
  %v4600 = vpop.permute.xlu0 %4599
  %4601 = vrot.lane.b32.xlu0 %v1852, 51
  %v4602 = vpop.permute.xlu0 %4601
  %4603 = vrot.lane.b32.xlu0 %v1853, 51
  %v4604 = vpop.permute.xlu0 %4603
  %vm4605 = vcmask 416768
  %v4606 = vsel %vm4605, %v4558, %v4560
  %v4607 = vsel %vm4605, %v4560, %v4562
  %v4608 = vsel %vm4605, %v4562, %v4564
  %v4609 = vsel %vm4605, %v4564, %v4566
  %v4610 = vsel %vm4605, %v4566, %v4568
  %v4611 = vsel %vm4605, %v4570, %v4572
  %v4612 = vsel %vm4605, %v4572, %v4574
  %v4613 = vsel %vm4605, %v4574, %v4576
  %v4614 = vsel %vm4605, %v4576, %v4578
  %v4615 = vsel %vm4605, %v4578, %v4580
  %v4616 = vsel %vm4605, %v4582, %v4584
  %v4617 = vsel %vm4605, %v4584, %v4586
  %v4618 = vsel %vm4605, %v4586, %v4588
  %v4619 = vsel %vm4605, %v4588, %v4590
  %v4620 = vsel %vm4605, %v4590, %v4592
  %v4621 = vsel %vm4605, %v4594, %v4596
  %v4622 = vsel %vm4605, %v4596, %v4598
  %v4623 = vsel %vm4605, %v4598, %v4600
  %v4624 = vsel %vm4605, %v4600, %v4602
  %v4625 = vsel %vm4605, %v4602, %v4604
  %v4647 = vsel %vm954, %v4555, 0
  %v4650 = vsel %vm954, %v4556, 0
  %4652 = vmatpush.msra.mxu0 0.0
  %4653 = vmatpush.msra.mxu0 0.0
  %4654 = vmatpush.msra.mxu0 0.0
  %4655 = vmatpush.msra.mxu0 0.0
  %4656 = vmatpush.msra.mxu0 0.0
  %4657 = vmatpush.msra.mxu0 0.0
  %4658 = vmatpush.msra.mxu0 0.0
  %4659 = vmatpush.msra.mxu0 0.0
  %4660 = vmatpush.msra.mxu0 0.0
  %4661 = vmatpush.msra.mxu0 0.0
  %4662 = vmatpush.msra.mxu0 0.0
  %4663 = vmatpush.msra.mxu0 0.0
  %4664 = vmatpush.msra.mxu0 %v4621
  %4665 = vmatpush.msra.mxu0 %v4616
  %4666 = vmatpush.msra.mxu0 %v4611
  %4667 = vmatpush.msra.mxu0 %v4606
  %4668 = vmatmul.f32.gmra.mxu0 %v4647
  %v4669 = vpop.f32.mrf.mxu0
  %v4670 = vadd.f32 0.0, %v4669
  %4671 = vmatmul.f32.gmra.mxu0 %v4650
  %v4672 = vpop.f32.mrf.mxu0
  %v4673 = vadd.f32 0.0, %v4672
  %4674 = vdwg.mxu0
  %4675 = vmatpush.msra.mxu0 0.0
  %4676 = vmatpush.msra.mxu0 0.0
  %4677 = vmatpush.msra.mxu0 0.0
  %4678 = vmatpush.msra.mxu0 0.0
  %4679 = vmatpush.msra.mxu0 0.0
  %4680 = vmatpush.msra.mxu0 0.0
  %4681 = vmatpush.msra.mxu0 0.0
  %4682 = vmatpush.msra.mxu0 0.0
  %4683 = vmatpush.msra.mxu0 0.0
  %4684 = vmatpush.msra.mxu0 0.0
  %4685 = vmatpush.msra.mxu0 0.0
  %4686 = vmatpush.msra.mxu0 0.0
  %4687 = vmatpush.msra.mxu0 %v4622
  %4688 = vmatpush.msra.mxu0 %v4617
  %4689 = vmatpush.msra.mxu0 %v4612
  %4690 = vmatpush.msra.mxu0 %v4607
  %4691 = vmatmul.f32.gmra.mxu0 %v4647
  %v4692 = vpop.f32.mrf.mxu0
  %v4693 = vadd.f32 0.0, %v4692
  %4694 = vmatmul.f32.gmra.mxu0 %v4650
  %v4695 = vpop.f32.mrf.mxu0
  %v4696 = vadd.f32 0.0, %v4695
  %4697 = vdwg.mxu0
  %4698 = vmatpush.msra.mxu0 0.0
  %4699 = vmatpush.msra.mxu0 0.0
  %4700 = vmatpush.msra.mxu0 0.0
  %4701 = vmatpush.msra.mxu0 0.0
  %4702 = vmatpush.msra.mxu0 0.0
  %4703 = vmatpush.msra.mxu0 0.0
  %4704 = vmatpush.msra.mxu0 0.0
  %4705 = vmatpush.msra.mxu0 0.0
  %4706 = vmatpush.msra.mxu0 0.0
  %4707 = vmatpush.msra.mxu0 0.0
  %4708 = vmatpush.msra.mxu0 0.0
  %4709 = vmatpush.msra.mxu0 0.0
  %4710 = vmatpush.msra.mxu0 %v4623
  %4711 = vmatpush.msra.mxu0 %v4618
  %4712 = vmatpush.msra.mxu0 %v4613
  %4713 = vmatpush.msra.mxu0 %v4608
  %4714 = vmatmul.f32.gmra.mxu0 %v4647
  %v4715 = vpop.f32.mrf.mxu0
  %v4716 = vadd.f32 0.0, %v4715
  %4717 = vmatmul.f32.gmra.mxu0 %v4650
  %v4718 = vpop.f32.mrf.mxu0
  %v4719 = vadd.f32 0.0, %v4718
  %4720 = vdwg.mxu0
  %4721 = vmatpush.msra.mxu0 0.0
  %4722 = vmatpush.msra.mxu0 0.0
  %4723 = vmatpush.msra.mxu0 0.0
  %4724 = vmatpush.msra.mxu0 0.0
  %4725 = vmatpush.msra.mxu0 0.0
  %4726 = vmatpush.msra.mxu0 0.0
  %4727 = vmatpush.msra.mxu0 0.0
  %4728 = vmatpush.msra.mxu0 0.0
  %4729 = vmatpush.msra.mxu0 0.0
  %4730 = vmatpush.msra.mxu0 0.0
  %4731 = vmatpush.msra.mxu0 0.0
  %4732 = vmatpush.msra.mxu0 0.0
  %4733 = vmatpush.msra.mxu0 %v4624
  %4734 = vmatpush.msra.mxu0 %v4619
  %4735 = vmatpush.msra.mxu0 %v4614
  %4736 = vmatpush.msra.mxu0 %v4609
  %4737 = vmatmul.f32.gmra.mxu0 %v4647
  %v4738 = vpop.f32.mrf.mxu0
  %v4739 = vadd.f32 0.0, %v4738
  %4740 = vmatmul.f32.gmra.mxu0 %v4650
  %v4741 = vpop.f32.mrf.mxu0
  %v4742 = vadd.f32 0.0, %v4741
  %4743 = vdwg.mxu0
  %4744 = vmatpush.msra.mxu0 0.0
  %4745 = vmatpush.msra.mxu0 0.0
  %4746 = vmatpush.msra.mxu0 0.0
  %4747 = vmatpush.msra.mxu0 0.0
  %4748 = vmatpush.msra.mxu0 0.0
  %4749 = vmatpush.msra.mxu0 0.0
  %4750 = vmatpush.msra.mxu0 0.0
  %4751 = vmatpush.msra.mxu0 0.0
  %4752 = vmatpush.msra.mxu0 0.0
  %4753 = vmatpush.msra.mxu0 0.0
  %4754 = vmatpush.msra.mxu0 0.0
  %4755 = vmatpush.msra.mxu0 0.0
  %4756 = vmatpush.msra.mxu0 %v4625
  %4757 = vmatpush.msra.mxu0 %v4620
  %4758 = vmatpush.msra.mxu0 %v4615
  %4759 = vmatpush.msra.mxu0 %v4610
  %4760 = vmatmul.f32.gmra.mxu0 %v4647
  %v4761 = vpop.f32.mrf.mxu0
  %v4762 = vadd.f32 0.0, %v4761
  %4763 = vmatmul.f32.gmra.mxu0 %v4650
  %v4764 = vpop.f32.mrf.mxu0
  %v4765 = vadd.f32 0.0, %v4764
  %4766 = vdwg.mxu0
  %v4767 = vadd.f32 %v4544, %v4670
  %v4768 = vadd.f32 %v4545, %v4693
  %v4769 = vadd.f32 %v4546, %v4716
  %v4770 = vadd.f32 %v4547, %v4739
  %v4771 = vadd.f32 %v4548, %v4762
  %v4772 = vadd.f32 %v4549, %v4673
  %v4773 = vadd.f32 %v4550, %v4696
  %v4774 = vadd.f32 %v4551, %v4719
  %v4775 = vadd.f32 %v4552, %v4742
  %v4776 = vadd.f32 %v4553, %v4765
  %s4777 = scalar_lea.vmem %s2, 288
  %v4778 = vld [vmem:[%s4777] sm:$0xff]
  %v4779 = vld [vmem:[%s4777 + $0x8] sm:$0xff]
  %4780 = vrot.lane.b32.xlu0 %v1830, 50
  %v4781 = vpop.permute.xlu0 %4780
  %4782 = vrot.lane.b32.xlu0 %v1831, 50
  %v4783 = vpop.permute.xlu0 %4782
  %4784 = vrot.lane.b32.xlu0 %v1832, 50
  %v4785 = vpop.permute.xlu0 %4784
  %4786 = vrot.lane.b32.xlu0 %v1833, 50
  %v4787 = vpop.permute.xlu0 %4786
  %4788 = vrot.lane.b32.xlu0 %v1834, 50
  %v4789 = vpop.permute.xlu0 %4788
  %4790 = vrot.lane.b32.xlu0 %v1835, 50
  %v4791 = vpop.permute.xlu0 %4790
  %4792 = vrot.lane.b32.xlu0 %v1836, 50
  %v4793 = vpop.permute.xlu0 %4792
  %4794 = vrot.lane.b32.xlu0 %v1837, 50
  %v4795 = vpop.permute.xlu0 %4794
  %4796 = vrot.lane.b32.xlu0 %v1838, 50
  %v4797 = vpop.permute.xlu0 %4796
  %4798 = vrot.lane.b32.xlu0 %v1839, 50
  %v4799 = vpop.permute.xlu0 %4798
  %4800 = vrot.lane.b32.xlu0 %v1840, 50
  %v4801 = vpop.permute.xlu0 %4800
  %4802 = vrot.lane.b32.xlu0 %v1841, 50
  %v4803 = vpop.permute.xlu0 %4802
  %4804 = vrot.lane.b32.xlu0 %v1842, 50
  %v4805 = vpop.permute.xlu0 %4804
  %4806 = vrot.lane.b32.xlu0 %v1843, 50
  %v4807 = vpop.permute.xlu0 %4806
  %4808 = vrot.lane.b32.xlu0 %v1844, 50
  %v4809 = vpop.permute.xlu0 %4808
  %4810 = vrot.lane.b32.xlu0 %v1845, 50
  %v4811 = vpop.permute.xlu0 %4810
  %4812 = vrot.lane.b32.xlu0 %v1846, 50
  %v4813 = vpop.permute.xlu0 %4812
  %4814 = vrot.lane.b32.xlu0 %v1847, 50
  %v4815 = vpop.permute.xlu0 %4814
  %4816 = vrot.lane.b32.xlu0 %v1848, 50
  %v4817 = vpop.permute.xlu0 %4816
  %4818 = vrot.lane.b32.xlu0 %v1849, 50
  %v4819 = vpop.permute.xlu0 %4818
  %4820 = vrot.lane.b32.xlu0 %v1850, 50
  %v4821 = vpop.permute.xlu0 %4820
  %4822 = vrot.lane.b32.xlu0 %v1851, 50
  %v4823 = vpop.permute.xlu0 %4822
  %4824 = vrot.lane.b32.xlu0 %v1852, 50
  %v4825 = vpop.permute.xlu0 %4824
  %4826 = vrot.lane.b32.xlu0 %v1853, 50
  %v4827 = vpop.permute.xlu0 %4826
  %vm4828 = vcmask 408576
  %v4829 = vsel %vm4828, %v4781, %v4783
  %v4830 = vsel %vm4828, %v4783, %v4785
  %v4831 = vsel %vm4828, %v4785, %v4787
  %v4832 = vsel %vm4828, %v4787, %v4789
  %v4833 = vsel %vm4828, %v4789, %v4791
  %v4834 = vsel %vm4828, %v4793, %v4795
  %v4835 = vsel %vm4828, %v4795, %v4797
  %v4836 = vsel %vm4828, %v4797, %v4799
  %v4837 = vsel %vm4828, %v4799, %v4801
  %v4838 = vsel %vm4828, %v4801, %v4803
  %v4839 = vsel %vm4828, %v4805, %v4807
  %v4840 = vsel %vm4828, %v4807, %v4809
  %v4841 = vsel %vm4828, %v4809, %v4811
  %v4842 = vsel %vm4828, %v4811, %v4813
  %v4843 = vsel %vm4828, %v4813, %v4815
  %v4844 = vsel %vm4828, %v4817, %v4819
  %v4845 = vsel %vm4828, %v4819, %v4821
  %v4846 = vsel %vm4828, %v4821, %v4823
  %v4847 = vsel %vm4828, %v4823, %v4825
  %v4848 = vsel %vm4828, %v4825, %v4827
  %v4870 = vsel %vm954, %v4778, 0
  %v4873 = vsel %vm954, %v4779, 0
  %4875 = vmatpush.msra.mxu0 0.0
  %4876 = vmatpush.msra.mxu0 0.0
  %4877 = vmatpush.msra.mxu0 0.0
  %4878 = vmatpush.msra.mxu0 0.0
  %4879 = vmatpush.msra.mxu0 0.0
  %4880 = vmatpush.msra.mxu0 0.0
  %4881 = vmatpush.msra.mxu0 0.0
  %4882 = vmatpush.msra.mxu0 0.0
  %4883 = vmatpush.msra.mxu0 0.0
  %4884 = vmatpush.msra.mxu0 0.0
  %4885 = vmatpush.msra.mxu0 0.0
  %4886 = vmatpush.msra.mxu0 0.0
  %4887 = vmatpush.msra.mxu0 %v4844
  %4888 = vmatpush.msra.mxu0 %v4839
  %4889 = vmatpush.msra.mxu0 %v4834
  %4890 = vmatpush.msra.mxu0 %v4829
  %4891 = vmatmul.f32.gmra.mxu0 %v4870
  %v4892 = vpop.f32.mrf.mxu0
  %v4893 = vadd.f32 0.0, %v4892
  %4894 = vmatmul.f32.gmra.mxu0 %v4873
  %v4895 = vpop.f32.mrf.mxu0
  %v4896 = vadd.f32 0.0, %v4895
  %4897 = vdwg.mxu0
  %4898 = vmatpush.msra.mxu0 0.0
  %4899 = vmatpush.msra.mxu0 0.0
  %4900 = vmatpush.msra.mxu0 0.0
  %4901 = vmatpush.msra.mxu0 0.0
  %4902 = vmatpush.msra.mxu0 0.0
  %4903 = vmatpush.msra.mxu0 0.0
  %4904 = vmatpush.msra.mxu0 0.0
  %4905 = vmatpush.msra.mxu0 0.0
  %4906 = vmatpush.msra.mxu0 0.0
  %4907 = vmatpush.msra.mxu0 0.0
  %4908 = vmatpush.msra.mxu0 0.0
  %4909 = vmatpush.msra.mxu0 0.0
  %4910 = vmatpush.msra.mxu0 %v4845
  %4911 = vmatpush.msra.mxu0 %v4840
  %4912 = vmatpush.msra.mxu0 %v4835
  %4913 = vmatpush.msra.mxu0 %v4830
  %4914 = vmatmul.f32.gmra.mxu0 %v4870
  %v4915 = vpop.f32.mrf.mxu0
  %v4916 = vadd.f32 0.0, %v4915
  %4917 = vmatmul.f32.gmra.mxu0 %v4873
  %v4918 = vpop.f32.mrf.mxu0
  %v4919 = vadd.f32 0.0, %v4918
  %4920 = vdwg.mxu0
  %4921 = vmatpush.msra.mxu0 0.0
  %4922 = vmatpush.msra.mxu0 0.0
  %4923 = vmatpush.msra.mxu0 0.0
  %4924 = vmatpush.msra.mxu0 0.0
  %4925 = vmatpush.msra.mxu0 0.0
  %4926 = vmatpush.msra.mxu0 0.0
  %4927 = vmatpush.msra.mxu0 0.0
  %4928 = vmatpush.msra.mxu0 0.0
  %4929 = vmatpush.msra.mxu0 0.0
  %4930 = vmatpush.msra.mxu0 0.0
  %4931 = vmatpush.msra.mxu0 0.0
  %4932 = vmatpush.msra.mxu0 0.0
  %4933 = vmatpush.msra.mxu0 %v4846
  %4934 = vmatpush.msra.mxu0 %v4841
  %4935 = vmatpush.msra.mxu0 %v4836
  %4936 = vmatpush.msra.mxu0 %v4831
  %4937 = vmatmul.f32.gmra.mxu0 %v4870
  %v4938 = vpop.f32.mrf.mxu0
  %v4939 = vadd.f32 0.0, %v4938
  %4940 = vmatmul.f32.gmra.mxu0 %v4873
  %v4941 = vpop.f32.mrf.mxu0
  %v4942 = vadd.f32 0.0, %v4941
  %4943 = vdwg.mxu0
  %4944 = vmatpush.msra.mxu0 0.0
  %4945 = vmatpush.msra.mxu0 0.0
  %4946 = vmatpush.msra.mxu0 0.0
  %4947 = vmatpush.msra.mxu0 0.0
  %4948 = vmatpush.msra.mxu0 0.0
  %4949 = vmatpush.msra.mxu0 0.0
  %4950 = vmatpush.msra.mxu0 0.0
  %4951 = vmatpush.msra.mxu0 0.0
  %4952 = vmatpush.msra.mxu0 0.0
  %4953 = vmatpush.msra.mxu0 0.0
  %4954 = vmatpush.msra.mxu0 0.0
  %4955 = vmatpush.msra.mxu0 0.0
  %4956 = vmatpush.msra.mxu0 %v4847
  %4957 = vmatpush.msra.mxu0 %v4842
  %4958 = vmatpush.msra.mxu0 %v4837
  %4959 = vmatpush.msra.mxu0 %v4832
  %4960 = vmatmul.f32.gmra.mxu0 %v4870
  %v4961 = vpop.f32.mrf.mxu0
  %v4962 = vadd.f32 0.0, %v4961
  %4963 = vmatmul.f32.gmra.mxu0 %v4873
  %v4964 = vpop.f32.mrf.mxu0
  %v4965 = vadd.f32 0.0, %v4964
  %4966 = vdwg.mxu0
  %4967 = vmatpush.msra.mxu0 0.0
  %4968 = vmatpush.msra.mxu0 0.0
  %4969 = vmatpush.msra.mxu0 0.0
  %4970 = vmatpush.msra.mxu0 0.0
  %4971 = vmatpush.msra.mxu0 0.0
  %4972 = vmatpush.msra.mxu0 0.0
  %4973 = vmatpush.msra.mxu0 0.0
  %4974 = vmatpush.msra.mxu0 0.0
  %4975 = vmatpush.msra.mxu0 0.0
  %4976 = vmatpush.msra.mxu0 0.0
  %4977 = vmatpush.msra.mxu0 0.0
  %4978 = vmatpush.msra.mxu0 0.0
  %4979 = vmatpush.msra.mxu0 %v4848
  %4980 = vmatpush.msra.mxu0 %v4843
  %4981 = vmatpush.msra.mxu0 %v4838
  %4982 = vmatpush.msra.mxu0 %v4833
  %4983 = vmatmul.f32.gmra.mxu0 %v4870
  %v4984 = vpop.f32.mrf.mxu0
  %v4985 = vadd.f32 0.0, %v4984
  %4986 = vmatmul.f32.gmra.mxu0 %v4873
  %v4987 = vpop.f32.mrf.mxu0
  %v4988 = vadd.f32 0.0, %v4987
  %4989 = vdwg.mxu0
  %v4990 = vadd.f32 %v4767, %v4893
  %v4991 = vadd.f32 %v4768, %v4916
  %v4992 = vadd.f32 %v4769, %v4939
  %v4993 = vadd.f32 %v4770, %v4962
  %v4994 = vadd.f32 %v4771, %v4985
  %v4995 = vadd.f32 %v4772, %v4896
  %v4996 = vadd.f32 %v4773, %v4919
  %v4997 = vadd.f32 %v4774, %v4942
  %v4998 = vadd.f32 %v4775, %v4965
  %v4999 = vadd.f32 %v4776, %v4988
  %s5000 = scalar_lea.vmem %s2, 304
  %v5001 = vld [vmem:[%s5000] sm:$0xff]
  %v5002 = vld [vmem:[%s5000 + $0x8] sm:$0xff]
  %5003 = vrot.lane.b32.xlu0 %v1830, 49
  %v5004 = vpop.permute.xlu0 %5003
  %5005 = vrot.lane.b32.xlu0 %v1831, 49
  %v5006 = vpop.permute.xlu0 %5005
  %5007 = vrot.lane.b32.xlu0 %v1832, 49
  %v5008 = vpop.permute.xlu0 %5007
  %5009 = vrot.lane.b32.xlu0 %v1833, 49
  %v5010 = vpop.permute.xlu0 %5009
  %5011 = vrot.lane.b32.xlu0 %v1834, 49
  %v5012 = vpop.permute.xlu0 %5011
  %5013 = vrot.lane.b32.xlu0 %v1835, 49
  %v5014 = vpop.permute.xlu0 %5013
  %5015 = vrot.lane.b32.xlu0 %v1836, 49
  %v5016 = vpop.permute.xlu0 %5015
  %5017 = vrot.lane.b32.xlu0 %v1837, 49
  %v5018 = vpop.permute.xlu0 %5017
  %5019 = vrot.lane.b32.xlu0 %v1838, 49
  %v5020 = vpop.permute.xlu0 %5019
  %5021 = vrot.lane.b32.xlu0 %v1839, 49
  %v5022 = vpop.permute.xlu0 %5021
  %5023 = vrot.lane.b32.xlu0 %v1840, 49
  %v5024 = vpop.permute.xlu0 %5023
  %5025 = vrot.lane.b32.xlu0 %v1841, 49
  %v5026 = vpop.permute.xlu0 %5025
  %5027 = vrot.lane.b32.xlu0 %v1842, 49
  %v5028 = vpop.permute.xlu0 %5027
  %5029 = vrot.lane.b32.xlu0 %v1843, 49
  %v5030 = vpop.permute.xlu0 %5029
  %5031 = vrot.lane.b32.xlu0 %v1844, 49
  %v5032 = vpop.permute.xlu0 %5031
  %5033 = vrot.lane.b32.xlu0 %v1845, 49
  %v5034 = vpop.permute.xlu0 %5033
  %5035 = vrot.lane.b32.xlu0 %v1846, 49
  %v5036 = vpop.permute.xlu0 %5035
  %5037 = vrot.lane.b32.xlu0 %v1847, 49
  %v5038 = vpop.permute.xlu0 %5037
  %5039 = vrot.lane.b32.xlu0 %v1848, 49
  %v5040 = vpop.permute.xlu0 %5039
  %5041 = vrot.lane.b32.xlu0 %v1849, 49
  %v5042 = vpop.permute.xlu0 %5041
  %5043 = vrot.lane.b32.xlu0 %v1850, 49
  %v5044 = vpop.permute.xlu0 %5043
  %5045 = vrot.lane.b32.xlu0 %v1851, 49
  %v5046 = vpop.permute.xlu0 %5045
  %5047 = vrot.lane.b32.xlu0 %v1852, 49
  %v5048 = vpop.permute.xlu0 %5047
  %5049 = vrot.lane.b32.xlu0 %v1853, 49
  %v5050 = vpop.permute.xlu0 %5049
  %vm5051 = vcmask 400384
  %v5052 = vsel %vm5051, %v5004, %v5006
  %v5053 = vsel %vm5051, %v5006, %v5008
  %v5054 = vsel %vm5051, %v5008, %v5010
  %v5055 = vsel %vm5051, %v5010, %v5012
  %v5056 = vsel %vm5051, %v5012, %v5014
  %v5057 = vsel %vm5051, %v5016, %v5018
  %v5058 = vsel %vm5051, %v5018, %v5020
  %v5059 = vsel %vm5051, %v5020, %v5022
  %v5060 = vsel %vm5051, %v5022, %v5024
  %v5061 = vsel %vm5051, %v5024, %v5026
  %v5062 = vsel %vm5051, %v5028, %v5030
  %v5063 = vsel %vm5051, %v5030, %v5032
  %v5064 = vsel %vm5051, %v5032, %v5034
  %v5065 = vsel %vm5051, %v5034, %v5036
  %v5066 = vsel %vm5051, %v5036, %v5038
  %v5067 = vsel %vm5051, %v5040, %v5042
  %v5068 = vsel %vm5051, %v5042, %v5044
  %v5069 = vsel %vm5051, %v5044, %v5046
  %v5070 = vsel %vm5051, %v5046, %v5048
  %v5071 = vsel %vm5051, %v5048, %v5050
  %v5093 = vsel %vm954, %v5001, 0
  %v5096 = vsel %vm954, %v5002, 0
  %5098 = vmatpush.msra.mxu0 0.0
  %5099 = vmatpush.msra.mxu0 0.0
  %5100 = vmatpush.msra.mxu0 0.0
  %5101 = vmatpush.msra.mxu0 0.0
  %5102 = vmatpush.msra.mxu0 0.0
  %5103 = vmatpush.msra.mxu0 0.0
  %5104 = vmatpush.msra.mxu0 0.0
  %5105 = vmatpush.msra.mxu0 0.0
  %5106 = vmatpush.msra.mxu0 0.0
  %5107 = vmatpush.msra.mxu0 0.0
  %5108 = vmatpush.msra.mxu0 0.0
  %5109 = vmatpush.msra.mxu0 0.0
  %5110 = vmatpush.msra.mxu0 %v5067
  %5111 = vmatpush.msra.mxu0 %v5062
  %5112 = vmatpush.msra.mxu0 %v5057
  %5113 = vmatpush.msra.mxu0 %v5052
  %5114 = vmatmul.f32.gmra.mxu0 %v5093
  %v5115 = vpop.f32.mrf.mxu0
  %v5116 = vadd.f32 0.0, %v5115
  %5117 = vmatmul.f32.gmra.mxu0 %v5096
  %v5118 = vpop.f32.mrf.mxu0
  %v5119 = vadd.f32 0.0, %v5118
  %5120 = vdwg.mxu0
  %5121 = vmatpush.msra.mxu0 0.0
  %5122 = vmatpush.msra.mxu0 0.0
  %5123 = vmatpush.msra.mxu0 0.0
  %5124 = vmatpush.msra.mxu0 0.0
  %5125 = vmatpush.msra.mxu0 0.0
  %5126 = vmatpush.msra.mxu0 0.0
  %5127 = vmatpush.msra.mxu0 0.0
  %5128 = vmatpush.msra.mxu0 0.0
  %5129 = vmatpush.msra.mxu0 0.0
  %5130 = vmatpush.msra.mxu0 0.0
  %5131 = vmatpush.msra.mxu0 0.0
  %5132 = vmatpush.msra.mxu0 0.0
  %5133 = vmatpush.msra.mxu0 %v5068
  %5134 = vmatpush.msra.mxu0 %v5063
  %5135 = vmatpush.msra.mxu0 %v5058
  %5136 = vmatpush.msra.mxu0 %v5053
  %5137 = vmatmul.f32.gmra.mxu0 %v5093
  %v5138 = vpop.f32.mrf.mxu0
  %v5139 = vadd.f32 0.0, %v5138
  %5140 = vmatmul.f32.gmra.mxu0 %v5096
  %v5141 = vpop.f32.mrf.mxu0
  %v5142 = vadd.f32 0.0, %v5141
  %5143 = vdwg.mxu0
  %5144 = vmatpush.msra.mxu0 0.0
  %5145 = vmatpush.msra.mxu0 0.0
  %5146 = vmatpush.msra.mxu0 0.0
  %5147 = vmatpush.msra.mxu0 0.0
  %5148 = vmatpush.msra.mxu0 0.0
  %5149 = vmatpush.msra.mxu0 0.0
  %5150 = vmatpush.msra.mxu0 0.0
  %5151 = vmatpush.msra.mxu0 0.0
  %5152 = vmatpush.msra.mxu0 0.0
  %5153 = vmatpush.msra.mxu0 0.0
  %5154 = vmatpush.msra.mxu0 0.0
  %5155 = vmatpush.msra.mxu0 0.0
  %5156 = vmatpush.msra.mxu0 %v5069
  %5157 = vmatpush.msra.mxu0 %v5064
  %5158 = vmatpush.msra.mxu0 %v5059
  %5159 = vmatpush.msra.mxu0 %v5054
  %5160 = vmatmul.f32.gmra.mxu0 %v5093
  %v5161 = vpop.f32.mrf.mxu0
  %v5162 = vadd.f32 0.0, %v5161
  %5163 = vmatmul.f32.gmra.mxu0 %v5096
  %v5164 = vpop.f32.mrf.mxu0
  %v5165 = vadd.f32 0.0, %v5164
  %5166 = vdwg.mxu0
  %5167 = vmatpush.msra.mxu0 0.0
  %5168 = vmatpush.msra.mxu0 0.0
  %5169 = vmatpush.msra.mxu0 0.0
  %5170 = vmatpush.msra.mxu0 0.0
  %5171 = vmatpush.msra.mxu0 0.0
  %5172 = vmatpush.msra.mxu0 0.0
  %5173 = vmatpush.msra.mxu0 0.0
  %5174 = vmatpush.msra.mxu0 0.0
  %5175 = vmatpush.msra.mxu0 0.0
  %5176 = vmatpush.msra.mxu0 0.0
  %5177 = vmatpush.msra.mxu0 0.0
  %5178 = vmatpush.msra.mxu0 0.0
  %5179 = vmatpush.msra.mxu0 %v5070
  %5180 = vmatpush.msra.mxu0 %v5065
  %5181 = vmatpush.msra.mxu0 %v5060
  %5182 = vmatpush.msra.mxu0 %v5055
  %5183 = vmatmul.f32.gmra.mxu0 %v5093
  %v5184 = vpop.f32.mrf.mxu0
  %v5185 = vadd.f32 0.0, %v5184
  %5186 = vmatmul.f32.gmra.mxu0 %v5096
  %v5187 = vpop.f32.mrf.mxu0
  %v5188 = vadd.f32 0.0, %v5187
  %5189 = vdwg.mxu0
  %5190 = vmatpush.msra.mxu0 0.0
  %5191 = vmatpush.msra.mxu0 0.0
  %5192 = vmatpush.msra.mxu0 0.0
  %5193 = vmatpush.msra.mxu0 0.0
  %5194 = vmatpush.msra.mxu0 0.0
  %5195 = vmatpush.msra.mxu0 0.0
  %5196 = vmatpush.msra.mxu0 0.0
  %5197 = vmatpush.msra.mxu0 0.0
  %5198 = vmatpush.msra.mxu0 0.0
  %5199 = vmatpush.msra.mxu0 0.0
  %5200 = vmatpush.msra.mxu0 0.0
  %5201 = vmatpush.msra.mxu0 0.0
  %5202 = vmatpush.msra.mxu0 %v5071
  %5203 = vmatpush.msra.mxu0 %v5066
  %5204 = vmatpush.msra.mxu0 %v5061
  %5205 = vmatpush.msra.mxu0 %v5056
  %5206 = vmatmul.f32.gmra.mxu0 %v5093
  %v5207 = vpop.f32.mrf.mxu0
  %v5208 = vadd.f32 0.0, %v5207
  %5209 = vmatmul.f32.gmra.mxu0 %v5096
  %v5210 = vpop.f32.mrf.mxu0
  %v5211 = vadd.f32 0.0, %v5210
  %5212 = vdwg.mxu0
  %v5213 = vadd.f32 %v4990, %v5116
  %v5214 = vadd.f32 %v4991, %v5139
  %v5215 = vadd.f32 %v4992, %v5162
  %v5216 = vadd.f32 %v4993, %v5185
  %v5217 = vadd.f32 %v4994, %v5208
  %v5218 = vadd.f32 %v4995, %v5119
  %v5219 = vadd.f32 %v4996, %v5142
  %v5220 = vadd.f32 %v4997, %v5165
  %v5221 = vadd.f32 %v4998, %v5188
  %v5222 = vadd.f32 %v4999, %v5211
  %s5223 = scalar_lea.vmem %s2, 320
  %v5224 = vld [vmem:[%s5223] sm:$0xff]
  %v5225 = vld [vmem:[%s5223 + $0x8] sm:$0xff]
  %5226 = vrot.lane.b32.xlu0 %v1830, 28
  %v5227 = vpop.permute.xlu0 %5226
  %5228 = vrot.lane.b32.xlu0 %v1831, 28
  %v5229 = vpop.permute.xlu0 %5228
  %5230 = vrot.lane.b32.xlu0 %v1832, 28
  %v5231 = vpop.permute.xlu0 %5230
  %5232 = vrot.lane.b32.xlu0 %v1833, 28
  %v5233 = vpop.permute.xlu0 %5232
  %5234 = vrot.lane.b32.xlu0 %v1834, 28
  %v5235 = vpop.permute.xlu0 %5234
  %5236 = vrot.lane.b32.xlu0 %v1835, 28
  %v5237 = vpop.permute.xlu0 %5236
  %5238 = vrot.lane.b32.xlu0 %v1836, 28
  %v5239 = vpop.permute.xlu0 %5238
  %5240 = vrot.lane.b32.xlu0 %v1837, 28
  %v5241 = vpop.permute.xlu0 %5240
  %5242 = vrot.lane.b32.xlu0 %v1838, 28
  %v5243 = vpop.permute.xlu0 %5242
  %5244 = vrot.lane.b32.xlu0 %v1839, 28
  %v5245 = vpop.permute.xlu0 %5244
  %5246 = vrot.lane.b32.xlu0 %v1840, 28
  %v5247 = vpop.permute.xlu0 %5246
  %5248 = vrot.lane.b32.xlu0 %v1841, 28
  %v5249 = vpop.permute.xlu0 %5248
  %5250 = vrot.lane.b32.xlu0 %v1842, 28
  %v5251 = vpop.permute.xlu0 %5250
  %5252 = vrot.lane.b32.xlu0 %v1843, 28
  %v5253 = vpop.permute.xlu0 %5252
  %5254 = vrot.lane.b32.xlu0 %v1844, 28
  %v5255 = vpop.permute.xlu0 %5254
  %5256 = vrot.lane.b32.xlu0 %v1845, 28
  %v5257 = vpop.permute.xlu0 %5256
  %5258 = vrot.lane.b32.xlu0 %v1846, 28
  %v5259 = vpop.permute.xlu0 %5258
  %5260 = vrot.lane.b32.xlu0 %v1847, 28
  %v5261 = vpop.permute.xlu0 %5260
  %5262 = vrot.lane.b32.xlu0 %v1848, 28
  %v5263 = vpop.permute.xlu0 %5262
  %5264 = vrot.lane.b32.xlu0 %v1849, 28
  %v5265 = vpop.permute.xlu0 %5264
  %5266 = vrot.lane.b32.xlu0 %v1850, 28
  %v5267 = vpop.permute.xlu0 %5266
  %5268 = vrot.lane.b32.xlu0 %v1851, 28
  %v5269 = vpop.permute.xlu0 %5268
  %5270 = vrot.lane.b32.xlu0 %v1852, 28
  %v5271 = vpop.permute.xlu0 %5270
  %5272 = vrot.lane.b32.xlu0 %v1853, 28
  %v5273 = vpop.permute.xlu0 %5272
  %vm5274 = vcmask 228352
  %v5275 = vsel %vm5274, %v5227, %v5229
  %v5276 = vsel %vm5274, %v5229, %v5231
  %v5277 = vsel %vm5274, %v5231, %v5233
  %v5278 = vsel %vm5274, %v5233, %v5235
  %v5279 = vsel %vm5274, %v5235, %v5237
  %v5280 = vsel %vm5274, %v5239, %v5241
  %v5281 = vsel %vm5274, %v5241, %v5243
  %v5282 = vsel %vm5274, %v5243, %v5245
  %v5283 = vsel %vm5274, %v5245, %v5247
  %v5284 = vsel %vm5274, %v5247, %v5249
  %v5285 = vsel %vm5274, %v5251, %v5253
  %v5286 = vsel %vm5274, %v5253, %v5255
  %v5287 = vsel %vm5274, %v5255, %v5257
  %v5288 = vsel %vm5274, %v5257, %v5259
  %v5289 = vsel %vm5274, %v5259, %v5261
  %v5290 = vsel %vm5274, %v5263, %v5265
  %v5291 = vsel %vm5274, %v5265, %v5267
  %v5292 = vsel %vm5274, %v5267, %v5269
  %v5293 = vsel %vm5274, %v5269, %v5271
  %v5294 = vsel %vm5274, %v5271, %v5273
  %v5316 = vsel %vm954, %v5224, 0
  %v5319 = vsel %vm954, %v5225, 0
  %5321 = vmatpush.msra.mxu0 0.0
  %5322 = vmatpush.msra.mxu0 0.0
  %5323 = vmatpush.msra.mxu0 0.0
  %5324 = vmatpush.msra.mxu0 0.0
  %5325 = vmatpush.msra.mxu0 0.0
  %5326 = vmatpush.msra.mxu0 0.0
  %5327 = vmatpush.msra.mxu0 0.0
  %5328 = vmatpush.msra.mxu0 0.0
  %5329 = vmatpush.msra.mxu0 0.0
  %5330 = vmatpush.msra.mxu0 0.0
  %5331 = vmatpush.msra.mxu0 0.0
  %5332 = vmatpush.msra.mxu0 0.0
  %5333 = vmatpush.msra.mxu0 %v5290
  %5334 = vmatpush.msra.mxu0 %v5285
  %5335 = vmatpush.msra.mxu0 %v5280
  %5336 = vmatpush.msra.mxu0 %v5275
  %5337 = vmatmul.f32.gmra.mxu0 %v5316
  %v5338 = vpop.f32.mrf.mxu0
  %v5339 = vadd.f32 0.0, %v5338
  %5340 = vmatmul.f32.gmra.mxu0 %v5319
  %v5341 = vpop.f32.mrf.mxu0
  %v5342 = vadd.f32 0.0, %v5341
  %5343 = vdwg.mxu0
  %5344 = vmatpush.msra.mxu0 0.0
  %5345 = vmatpush.msra.mxu0 0.0
  %5346 = vmatpush.msra.mxu0 0.0
  %5347 = vmatpush.msra.mxu0 0.0
  %5348 = vmatpush.msra.mxu0 0.0
  %5349 = vmatpush.msra.mxu0 0.0
  %5350 = vmatpush.msra.mxu0 0.0
  %5351 = vmatpush.msra.mxu0 0.0
  %5352 = vmatpush.msra.mxu0 0.0
  %5353 = vmatpush.msra.mxu0 0.0
  %5354 = vmatpush.msra.mxu0 0.0
  %5355 = vmatpush.msra.mxu0 0.0
  %5356 = vmatpush.msra.mxu0 %v5291
  %5357 = vmatpush.msra.mxu0 %v5286
  %5358 = vmatpush.msra.mxu0 %v5281
  %5359 = vmatpush.msra.mxu0 %v5276
  %5360 = vmatmul.f32.gmra.mxu0 %v5316
  %v5361 = vpop.f32.mrf.mxu0
  %v5362 = vadd.f32 0.0, %v5361
  %5363 = vmatmul.f32.gmra.mxu0 %v5319
  %v5364 = vpop.f32.mrf.mxu0
  %v5365 = vadd.f32 0.0, %v5364
  %5366 = vdwg.mxu0
  %5367 = vmatpush.msra.mxu0 0.0
  %5368 = vmatpush.msra.mxu0 0.0
  %5369 = vmatpush.msra.mxu0 0.0
  %5370 = vmatpush.msra.mxu0 0.0
  %5371 = vmatpush.msra.mxu0 0.0
  %5372 = vmatpush.msra.mxu0 0.0
  %5373 = vmatpush.msra.mxu0 0.0
  %5374 = vmatpush.msra.mxu0 0.0
  %5375 = vmatpush.msra.mxu0 0.0
  %5376 = vmatpush.msra.mxu0 0.0
  %5377 = vmatpush.msra.mxu0 0.0
  %5378 = vmatpush.msra.mxu0 0.0
  %5379 = vmatpush.msra.mxu0 %v5292
  %5380 = vmatpush.msra.mxu0 %v5287
  %5381 = vmatpush.msra.mxu0 %v5282
  %5382 = vmatpush.msra.mxu0 %v5277
  %5383 = vmatmul.f32.gmra.mxu0 %v5316
  %v5384 = vpop.f32.mrf.mxu0
  %v5385 = vadd.f32 0.0, %v5384
  %5386 = vmatmul.f32.gmra.mxu0 %v5319
  %v5387 = vpop.f32.mrf.mxu0
  %v5388 = vadd.f32 0.0, %v5387
  %5389 = vdwg.mxu0
  %5390 = vmatpush.msra.mxu0 0.0
  %5391 = vmatpush.msra.mxu0 0.0
  %5392 = vmatpush.msra.mxu0 0.0
  %5393 = vmatpush.msra.mxu0 0.0
  %5394 = vmatpush.msra.mxu0 0.0
  %5395 = vmatpush.msra.mxu0 0.0
  %5396 = vmatpush.msra.mxu0 0.0
  %5397 = vmatpush.msra.mxu0 0.0
  %5398 = vmatpush.msra.mxu0 0.0
  %5399 = vmatpush.msra.mxu0 0.0
  %5400 = vmatpush.msra.mxu0 0.0
  %5401 = vmatpush.msra.mxu0 0.0
  %5402 = vmatpush.msra.mxu0 %v5293
  %5403 = vmatpush.msra.mxu0 %v5288
  %5404 = vmatpush.msra.mxu0 %v5283
  %5405 = vmatpush.msra.mxu0 %v5278
  %5406 = vmatmul.f32.gmra.mxu0 %v5316
  %v5407 = vpop.f32.mrf.mxu0
  %v5408 = vadd.f32 0.0, %v5407
  %5409 = vmatmul.f32.gmra.mxu0 %v5319
  %v5410 = vpop.f32.mrf.mxu0
  %v5411 = vadd.f32 0.0, %v5410
  %5412 = vdwg.mxu0
  %5413 = vmatpush.msra.mxu0 0.0
  %5414 = vmatpush.msra.mxu0 0.0
  %5415 = vmatpush.msra.mxu0 0.0
  %5416 = vmatpush.msra.mxu0 0.0
  %5417 = vmatpush.msra.mxu0 0.0
  %5418 = vmatpush.msra.mxu0 0.0
  %5419 = vmatpush.msra.mxu0 0.0
  %5420 = vmatpush.msra.mxu0 0.0
  %5421 = vmatpush.msra.mxu0 0.0
  %5422 = vmatpush.msra.mxu0 0.0
  %5423 = vmatpush.msra.mxu0 0.0
  %5424 = vmatpush.msra.mxu0 0.0
  %5425 = vmatpush.msra.mxu0 %v5294
  %5426 = vmatpush.msra.mxu0 %v5289
  %5427 = vmatpush.msra.mxu0 %v5284
  %5428 = vmatpush.msra.mxu0 %v5279
  %5429 = vmatmul.f32.gmra.mxu0 %v5316
  %v5430 = vpop.f32.mrf.mxu0
  %v5431 = vadd.f32 0.0, %v5430
  %5432 = vmatmul.f32.gmra.mxu0 %v5319
  %v5433 = vpop.f32.mrf.mxu0
  %v5434 = vadd.f32 0.0, %v5433
  %5435 = vdwg.mxu0
  %v5436 = vadd.f32 %v5213, %v5339
  %v5437 = vadd.f32 %v5214, %v5362
  %v5438 = vadd.f32 %v5215, %v5385
  %v5439 = vadd.f32 %v5216, %v5408
  %v5440 = vadd.f32 %v5217, %v5431
  %v5441 = vadd.f32 %v5218, %v5342
  %v5442 = vadd.f32 %v5219, %v5365
  %v5443 = vadd.f32 %v5220, %v5388
  %v5444 = vadd.f32 %v5221, %v5411
  %v5445 = vadd.f32 %v5222, %v5434
  %s5446 = scalar_lea.vmem %s2, 336
  %v5447 = vld [vmem:[%s5446] sm:$0xff]
  %v5448 = vld [vmem:[%s5446 + $0x8] sm:$0xff]
  %5449 = vrot.lane.b32.xlu0 %v1830, 27
  %v5450 = vpop.permute.xlu0 %5449
  %5451 = vrot.lane.b32.xlu0 %v1831, 27
  %v5452 = vpop.permute.xlu0 %5451
  %5453 = vrot.lane.b32.xlu0 %v1832, 27
  %v5454 = vpop.permute.xlu0 %5453
  %5455 = vrot.lane.b32.xlu0 %v1833, 27
  %v5456 = vpop.permute.xlu0 %5455
  %5457 = vrot.lane.b32.xlu0 %v1834, 27
  %v5458 = vpop.permute.xlu0 %5457
  %5459 = vrot.lane.b32.xlu0 %v1835, 27
  %v5460 = vpop.permute.xlu0 %5459
  %5461 = vrot.lane.b32.xlu0 %v1836, 27
  %v5462 = vpop.permute.xlu0 %5461
  %5463 = vrot.lane.b32.xlu0 %v1837, 27
  %v5464 = vpop.permute.xlu0 %5463
  %5465 = vrot.lane.b32.xlu0 %v1838, 27
  %v5466 = vpop.permute.xlu0 %5465
  %5467 = vrot.lane.b32.xlu0 %v1839, 27
  %v5468 = vpop.permute.xlu0 %5467
  %5469 = vrot.lane.b32.xlu0 %v1840, 27
  %v5470 = vpop.permute.xlu0 %5469
  %5471 = vrot.lane.b32.xlu0 %v1841, 27
  %v5472 = vpop.permute.xlu0 %5471
  %5473 = vrot.lane.b32.xlu0 %v1842, 27
  %v5474 = vpop.permute.xlu0 %5473
  %5475 = vrot.lane.b32.xlu0 %v1843, 27
  %v5476 = vpop.permute.xlu0 %5475
  %5477 = vrot.lane.b32.xlu0 %v1844, 27
  %v5478 = vpop.permute.xlu0 %5477
  %5479 = vrot.lane.b32.xlu0 %v1845, 27
  %v5480 = vpop.permute.xlu0 %5479
  %5481 = vrot.lane.b32.xlu0 %v1846, 27
  %v5482 = vpop.permute.xlu0 %5481
  %5483 = vrot.lane.b32.xlu0 %v1847, 27
  %v5484 = vpop.permute.xlu0 %5483
  %5485 = vrot.lane.b32.xlu0 %v1848, 27
  %v5486 = vpop.permute.xlu0 %5485
  %5487 = vrot.lane.b32.xlu0 %v1849, 27
  %v5488 = vpop.permute.xlu0 %5487
  %5489 = vrot.lane.b32.xlu0 %v1850, 27
  %v5490 = vpop.permute.xlu0 %5489
  %5491 = vrot.lane.b32.xlu0 %v1851, 27
  %v5492 = vpop.permute.xlu0 %5491
  %5493 = vrot.lane.b32.xlu0 %v1852, 27
  %v5494 = vpop.permute.xlu0 %5493
  %5495 = vrot.lane.b32.xlu0 %v1853, 27
  %v5496 = vpop.permute.xlu0 %5495
  %vm5497 = vcmask 220160
  %v5498 = vsel %vm5497, %v5450, %v5452
  %v5499 = vsel %vm5497, %v5452, %v5454
  %v5500 = vsel %vm5497, %v5454, %v5456
  %v5501 = vsel %vm5497, %v5456, %v5458
  %v5502 = vsel %vm5497, %v5458, %v5460
  %v5503 = vsel %vm5497, %v5462, %v5464
  %v5504 = vsel %vm5497, %v5464, %v5466
  %v5505 = vsel %vm5497, %v5466, %v5468
  %v5506 = vsel %vm5497, %v5468, %v5470
  %v5507 = vsel %vm5497, %v5470, %v5472
  %v5508 = vsel %vm5497, %v5474, %v5476
  %v5509 = vsel %vm5497, %v5476, %v5478
  %v5510 = vsel %vm5497, %v5478, %v5480
  %v5511 = vsel %vm5497, %v5480, %v5482
  %v5512 = vsel %vm5497, %v5482, %v5484
  %v5513 = vsel %vm5497, %v5486, %v5488
  %v5514 = vsel %vm5497, %v5488, %v5490
  %v5515 = vsel %vm5497, %v5490, %v5492
  %v5516 = vsel %vm5497, %v5492, %v5494
  %v5517 = vsel %vm5497, %v5494, %v5496
  %v5539 = vsel %vm954, %v5447, 0
  %v5542 = vsel %vm954, %v5448, 0
  %5544 = vmatpush.msra.mxu0 0.0
  %5545 = vmatpush.msra.mxu0 0.0
  %5546 = vmatpush.msra.mxu0 0.0
  %5547 = vmatpush.msra.mxu0 0.0
  %5548 = vmatpush.msra.mxu0 0.0
  %5549 = vmatpush.msra.mxu0 0.0
  %5550 = vmatpush.msra.mxu0 0.0
  %5551 = vmatpush.msra.mxu0 0.0
  %5552 = vmatpush.msra.mxu0 0.0
  %5553 = vmatpush.msra.mxu0 0.0
  %5554 = vmatpush.msra.mxu0 0.0
  %5555 = vmatpush.msra.mxu0 0.0
  %5556 = vmatpush.msra.mxu0 %v5513
  %5557 = vmatpush.msra.mxu0 %v5508
  %5558 = vmatpush.msra.mxu0 %v5503
  %5559 = vmatpush.msra.mxu0 %v5498
  %5560 = vmatmul.f32.gmra.mxu0 %v5539
  %v5561 = vpop.f32.mrf.mxu0
  %v5562 = vadd.f32 0.0, %v5561
  %5563 = vmatmul.f32.gmra.mxu0 %v5542
  %v5564 = vpop.f32.mrf.mxu0
  %v5565 = vadd.f32 0.0, %v5564
  %5566 = vdwg.mxu0
  %5567 = vmatpush.msra.mxu0 0.0
  %5568 = vmatpush.msra.mxu0 0.0
  %5569 = vmatpush.msra.mxu0 0.0
  %5570 = vmatpush.msra.mxu0 0.0
  %5571 = vmatpush.msra.mxu0 0.0
  %5572 = vmatpush.msra.mxu0 0.0
  %5573 = vmatpush.msra.mxu0 0.0
  %5574 = vmatpush.msra.mxu0 0.0
  %5575 = vmatpush.msra.mxu0 0.0
  %5576 = vmatpush.msra.mxu0 0.0
  %5577 = vmatpush.msra.mxu0 0.0
  %5578 = vmatpush.msra.mxu0 0.0
  %5579 = vmatpush.msra.mxu0 %v5514
  %5580 = vmatpush.msra.mxu0 %v5509
  %5581 = vmatpush.msra.mxu0 %v5504
  %5582 = vmatpush.msra.mxu0 %v5499
  %5583 = vmatmul.f32.gmra.mxu0 %v5539
  %v5584 = vpop.f32.mrf.mxu0
  %v5585 = vadd.f32 0.0, %v5584
  %5586 = vmatmul.f32.gmra.mxu0 %v5542
  %v5587 = vpop.f32.mrf.mxu0
  %v5588 = vadd.f32 0.0, %v5587
  %5589 = vdwg.mxu0
  %5590 = vmatpush.msra.mxu0 0.0
  %5591 = vmatpush.msra.mxu0 0.0
  %5592 = vmatpush.msra.mxu0 0.0
  %5593 = vmatpush.msra.mxu0 0.0
  %5594 = vmatpush.msra.mxu0 0.0
  %5595 = vmatpush.msra.mxu0 0.0
  %5596 = vmatpush.msra.mxu0 0.0
  %5597 = vmatpush.msra.mxu0 0.0
  %5598 = vmatpush.msra.mxu0 0.0
  %5599 = vmatpush.msra.mxu0 0.0
  %5600 = vmatpush.msra.mxu0 0.0
  %5601 = vmatpush.msra.mxu0 0.0
  %5602 = vmatpush.msra.mxu0 %v5515
  %5603 = vmatpush.msra.mxu0 %v5510
  %5604 = vmatpush.msra.mxu0 %v5505
  %5605 = vmatpush.msra.mxu0 %v5500
  %5606 = vmatmul.f32.gmra.mxu0 %v5539
  %v5607 = vpop.f32.mrf.mxu0
  %v5608 = vadd.f32 0.0, %v5607
  %5609 = vmatmul.f32.gmra.mxu0 %v5542
  %v5610 = vpop.f32.mrf.mxu0
  %v5611 = vadd.f32 0.0, %v5610
  %5612 = vdwg.mxu0
  %5613 = vmatpush.msra.mxu0 0.0
  %5614 = vmatpush.msra.mxu0 0.0
  %5615 = vmatpush.msra.mxu0 0.0
  %5616 = vmatpush.msra.mxu0 0.0
  %5617 = vmatpush.msra.mxu0 0.0
  %5618 = vmatpush.msra.mxu0 0.0
  %5619 = vmatpush.msra.mxu0 0.0
  %5620 = vmatpush.msra.mxu0 0.0
  %5621 = vmatpush.msra.mxu0 0.0
  %5622 = vmatpush.msra.mxu0 0.0
  %5623 = vmatpush.msra.mxu0 0.0
  %5624 = vmatpush.msra.mxu0 0.0
  %5625 = vmatpush.msra.mxu0 %v5516
  %5626 = vmatpush.msra.mxu0 %v5511
  %5627 = vmatpush.msra.mxu0 %v5506
  %5628 = vmatpush.msra.mxu0 %v5501
  %5629 = vmatmul.f32.gmra.mxu0 %v5539
  %v5630 = vpop.f32.mrf.mxu0
  %v5631 = vadd.f32 0.0, %v5630
  %5632 = vmatmul.f32.gmra.mxu0 %v5542
  %v5633 = vpop.f32.mrf.mxu0
  %v5634 = vadd.f32 0.0, %v5633
  %5635 = vdwg.mxu0
  %5636 = vmatpush.msra.mxu0 0.0
  %5637 = vmatpush.msra.mxu0 0.0
  %5638 = vmatpush.msra.mxu0 0.0
  %5639 = vmatpush.msra.mxu0 0.0
  %5640 = vmatpush.msra.mxu0 0.0
  %5641 = vmatpush.msra.mxu0 0.0
  %5642 = vmatpush.msra.mxu0 0.0
  %5643 = vmatpush.msra.mxu0 0.0
  %5644 = vmatpush.msra.mxu0 0.0
  %5645 = vmatpush.msra.mxu0 0.0
  %5646 = vmatpush.msra.mxu0 0.0
  %5647 = vmatpush.msra.mxu0 0.0
  %5648 = vmatpush.msra.mxu0 %v5517
  %5649 = vmatpush.msra.mxu0 %v5512
  %5650 = vmatpush.msra.mxu0 %v5507
  %5651 = vmatpush.msra.mxu0 %v5502
  %5652 = vmatmul.f32.gmra.mxu0 %v5539
  %v5653 = vpop.f32.mrf.mxu0
  %v5654 = vadd.f32 0.0, %v5653
  %5655 = vmatmul.f32.gmra.mxu0 %v5542
  %v5656 = vpop.f32.mrf.mxu0
  %v5657 = vadd.f32 0.0, %v5656
  %5658 = vdwg.mxu0
  %v5659 = vadd.f32 %v5436, %v5562
  %v5660 = vadd.f32 %v5437, %v5585
  %v5661 = vadd.f32 %v5438, %v5608
  %v5662 = vadd.f32 %v5439, %v5631
  %v5663 = vadd.f32 %v5440, %v5654
  %v5664 = vadd.f32 %v5441, %v5565
  %v5665 = vadd.f32 %v5442, %v5588
  %v5666 = vadd.f32 %v5443, %v5611
  %v5667 = vadd.f32 %v5444, %v5634
  %v5668 = vadd.f32 %v5445, %v5657
  %s5669 = scalar_lea.vmem %s2, 352
  %v5670 = vld [vmem:[%s5669] sm:$0xff]
  %v5671 = vld [vmem:[%s5669 + $0x8] sm:$0xff]
  %5672 = vrot.lane.b32.xlu0 %v1830, 26
  %v5673 = vpop.permute.xlu0 %5672
  %5674 = vrot.lane.b32.xlu0 %v1831, 26
  %v5675 = vpop.permute.xlu0 %5674
  %5676 = vrot.lane.b32.xlu0 %v1832, 26
  %v5677 = vpop.permute.xlu0 %5676
  %5678 = vrot.lane.b32.xlu0 %v1833, 26
  %v5679 = vpop.permute.xlu0 %5678
  %5680 = vrot.lane.b32.xlu0 %v1834, 26
  %v5681 = vpop.permute.xlu0 %5680
  %5682 = vrot.lane.b32.xlu0 %v1835, 26
  %v5683 = vpop.permute.xlu0 %5682
  %5684 = vrot.lane.b32.xlu0 %v1836, 26
  %v5685 = vpop.permute.xlu0 %5684
  %5686 = vrot.lane.b32.xlu0 %v1837, 26
  %v5687 = vpop.permute.xlu0 %5686
  %5688 = vrot.lane.b32.xlu0 %v1838, 26
  %v5689 = vpop.permute.xlu0 %5688
  %5690 = vrot.lane.b32.xlu0 %v1839, 26
  %v5691 = vpop.permute.xlu0 %5690
  %5692 = vrot.lane.b32.xlu0 %v1840, 26
  %v5693 = vpop.permute.xlu0 %5692
  %5694 = vrot.lane.b32.xlu0 %v1841, 26
  %v5695 = vpop.permute.xlu0 %5694
  %5696 = vrot.lane.b32.xlu0 %v1842, 26
  %v5697 = vpop.permute.xlu0 %5696
  %5698 = vrot.lane.b32.xlu0 %v1843, 26
  %v5699 = vpop.permute.xlu0 %5698
  %5700 = vrot.lane.b32.xlu0 %v1844, 26
  %v5701 = vpop.permute.xlu0 %5700
  %5702 = vrot.lane.b32.xlu0 %v1845, 26
  %v5703 = vpop.permute.xlu0 %5702
  %5704 = vrot.lane.b32.xlu0 %v1846, 26
  %v5705 = vpop.permute.xlu0 %5704
  %5706 = vrot.lane.b32.xlu0 %v1847, 26
  %v5707 = vpop.permute.xlu0 %5706
  %5708 = vrot.lane.b32.xlu0 %v1848, 26
  %v5709 = vpop.permute.xlu0 %5708
  %5710 = vrot.lane.b32.xlu0 %v1849, 26
  %v5711 = vpop.permute.xlu0 %5710
  %5712 = vrot.lane.b32.xlu0 %v1850, 26
  %v5713 = vpop.permute.xlu0 %5712
  %5714 = vrot.lane.b32.xlu0 %v1851, 26
  %v5715 = vpop.permute.xlu0 %5714
  %5716 = vrot.lane.b32.xlu0 %v1852, 26
  %v5717 = vpop.permute.xlu0 %5716
  %5718 = vrot.lane.b32.xlu0 %v1853, 26
  %v5719 = vpop.permute.xlu0 %5718
  %vm5720 = vcmask 211968
  %v5721 = vsel %vm5720, %v5673, %v5675
  %v5722 = vsel %vm5720, %v5675, %v5677
  %v5723 = vsel %vm5720, %v5677, %v5679
  %v5724 = vsel %vm5720, %v5679, %v5681
  %v5725 = vsel %vm5720, %v5681, %v5683
  %v5726 = vsel %vm5720, %v5685, %v5687
  %v5727 = vsel %vm5720, %v5687, %v5689
  %v5728 = vsel %vm5720, %v5689, %v5691
  %v5729 = vsel %vm5720, %v5691, %v5693
  %v5730 = vsel %vm5720, %v5693, %v5695
  %v5731 = vsel %vm5720, %v5697, %v5699
  %v5732 = vsel %vm5720, %v5699, %v5701
  %v5733 = vsel %vm5720, %v5701, %v5703
  %v5734 = vsel %vm5720, %v5703, %v5705
  %v5735 = vsel %vm5720, %v5705, %v5707
  %v5736 = vsel %vm5720, %v5709, %v5711
  %v5737 = vsel %vm5720, %v5711, %v5713
  %v5738 = vsel %vm5720, %v5713, %v5715
  %v5739 = vsel %vm5720, %v5715, %v5717
  %v5740 = vsel %vm5720, %v5717, %v5719
  %v5762 = vsel %vm954, %v5670, 0
  %v5765 = vsel %vm954, %v5671, 0
  %5767 = vmatpush.msra.mxu0 0.0
  %5768 = vmatpush.msra.mxu0 0.0
  %5769 = vmatpush.msra.mxu0 0.0
  %5770 = vmatpush.msra.mxu0 0.0
  %5771 = vmatpush.msra.mxu0 0.0
  %5772 = vmatpush.msra.mxu0 0.0
  %5773 = vmatpush.msra.mxu0 0.0
  %5774 = vmatpush.msra.mxu0 0.0
  %5775 = vmatpush.msra.mxu0 0.0
  %5776 = vmatpush.msra.mxu0 0.0
  %5777 = vmatpush.msra.mxu0 0.0
  %5778 = vmatpush.msra.mxu0 0.0
  %5779 = vmatpush.msra.mxu0 %v5736
  %5780 = vmatpush.msra.mxu0 %v5731
  %5781 = vmatpush.msra.mxu0 %v5726
  %5782 = vmatpush.msra.mxu0 %v5721
  %5783 = vmatmul.f32.gmra.mxu0 %v5762
  %v5784 = vpop.f32.mrf.mxu0
  %v5785 = vadd.f32 0.0, %v5784
  %5786 = vmatmul.f32.gmra.mxu0 %v5765
  %v5787 = vpop.f32.mrf.mxu0
  %v5788 = vadd.f32 0.0, %v5787
  %5789 = vdwg.mxu0
  %5790 = vmatpush.msra.mxu0 0.0
  %5791 = vmatpush.msra.mxu0 0.0
  %5792 = vmatpush.msra.mxu0 0.0
  %5793 = vmatpush.msra.mxu0 0.0
  %5794 = vmatpush.msra.mxu0 0.0
  %5795 = vmatpush.msra.mxu0 0.0
  %5796 = vmatpush.msra.mxu0 0.0
  %5797 = vmatpush.msra.mxu0 0.0
  %5798 = vmatpush.msra.mxu0 0.0
  %5799 = vmatpush.msra.mxu0 0.0
  %5800 = vmatpush.msra.mxu0 0.0
  %5801 = vmatpush.msra.mxu0 0.0
  %5802 = vmatpush.msra.mxu0 %v5737
  %5803 = vmatpush.msra.mxu0 %v5732
  %5804 = vmatpush.msra.mxu0 %v5727
  %5805 = vmatpush.msra.mxu0 %v5722
  %5806 = vmatmul.f32.gmra.mxu0 %v5762
  %v5807 = vpop.f32.mrf.mxu0
  %v5808 = vadd.f32 0.0, %v5807
  %5809 = vmatmul.f32.gmra.mxu0 %v5765
  %v5810 = vpop.f32.mrf.mxu0
  %v5811 = vadd.f32 0.0, %v5810
  %5812 = vdwg.mxu0
  %5813 = vmatpush.msra.mxu0 0.0
  %5814 = vmatpush.msra.mxu0 0.0
  %5815 = vmatpush.msra.mxu0 0.0
  %5816 = vmatpush.msra.mxu0 0.0
  %5817 = vmatpush.msra.mxu0 0.0
  %5818 = vmatpush.msra.mxu0 0.0
  %5819 = vmatpush.msra.mxu0 0.0
  %5820 = vmatpush.msra.mxu0 0.0
  %5821 = vmatpush.msra.mxu0 0.0
  %5822 = vmatpush.msra.mxu0 0.0
  %5823 = vmatpush.msra.mxu0 0.0
  %5824 = vmatpush.msra.mxu0 0.0
  %5825 = vmatpush.msra.mxu0 %v5738
  %5826 = vmatpush.msra.mxu0 %v5733
  %5827 = vmatpush.msra.mxu0 %v5728
  %5828 = vmatpush.msra.mxu0 %v5723
  %5829 = vmatmul.f32.gmra.mxu0 %v5762
  %v5830 = vpop.f32.mrf.mxu0
  %v5831 = vadd.f32 0.0, %v5830
  %5832 = vmatmul.f32.gmra.mxu0 %v5765
  %v5833 = vpop.f32.mrf.mxu0
  %v5834 = vadd.f32 0.0, %v5833
  %5835 = vdwg.mxu0
  %5836 = vmatpush.msra.mxu0 0.0
  %5837 = vmatpush.msra.mxu0 0.0
  %5838 = vmatpush.msra.mxu0 0.0
  %5839 = vmatpush.msra.mxu0 0.0
  %5840 = vmatpush.msra.mxu0 0.0
  %5841 = vmatpush.msra.mxu0 0.0
  %5842 = vmatpush.msra.mxu0 0.0
  %5843 = vmatpush.msra.mxu0 0.0
  %5844 = vmatpush.msra.mxu0 0.0
  %5845 = vmatpush.msra.mxu0 0.0
  %5846 = vmatpush.msra.mxu0 0.0
  %5847 = vmatpush.msra.mxu0 0.0
  %5848 = vmatpush.msra.mxu0 %v5739
  %5849 = vmatpush.msra.mxu0 %v5734
  %5850 = vmatpush.msra.mxu0 %v5729
  %5851 = vmatpush.msra.mxu0 %v5724
  %5852 = vmatmul.f32.gmra.mxu0 %v5762
  %v5853 = vpop.f32.mrf.mxu0
  %v5854 = vadd.f32 0.0, %v5853
  %5855 = vmatmul.f32.gmra.mxu0 %v5765
  %v5856 = vpop.f32.mrf.mxu0
  %v5857 = vadd.f32 0.0, %v5856
  %5858 = vdwg.mxu0
  %5859 = vmatpush.msra.mxu0 0.0
  %5860 = vmatpush.msra.mxu0 0.0
  %5861 = vmatpush.msra.mxu0 0.0
  %5862 = vmatpush.msra.mxu0 0.0
  %5863 = vmatpush.msra.mxu0 0.0
  %5864 = vmatpush.msra.mxu0 0.0
  %5865 = vmatpush.msra.mxu0 0.0
  %5866 = vmatpush.msra.mxu0 0.0
  %5867 = vmatpush.msra.mxu0 0.0
  %5868 = vmatpush.msra.mxu0 0.0
  %5869 = vmatpush.msra.mxu0 0.0
  %5870 = vmatpush.msra.mxu0 0.0
  %5871 = vmatpush.msra.mxu0 %v5740
  %5872 = vmatpush.msra.mxu0 %v5735
  %5873 = vmatpush.msra.mxu0 %v5730
  %5874 = vmatpush.msra.mxu0 %v5725
  %5875 = vmatmul.f32.gmra.mxu0 %v5762
  %v5876 = vpop.f32.mrf.mxu0
  %v5877 = vadd.f32 0.0, %v5876
  %5878 = vmatmul.f32.gmra.mxu0 %v5765
  %v5879 = vpop.f32.mrf.mxu0
  %v5880 = vadd.f32 0.0, %v5879
  %5881 = vdwg.mxu0
  %v5882 = vadd.f32 %v5659, %v5785
  %v5883 = vadd.f32 %v5660, %v5808
  %v5884 = vadd.f32 %v5661, %v5831
  %v5885 = vadd.f32 %v5662, %v5854
  %v5886 = vadd.f32 %v5663, %v5877
  %v5887 = vadd.f32 %v5664, %v5788
  %v5888 = vadd.f32 %v5665, %v5811
  %v5889 = vadd.f32 %v5666, %v5834
  %v5890 = vadd.f32 %v5667, %v5857
  %v5891 = vadd.f32 %v5668, %v5880
  %s5892 = scalar_lea.vmem %s2, 368
  %v5893 = vld [vmem:[%s5892] sm:$0xff]
  %v5894 = vld [vmem:[%s5892 + $0x8] sm:$0xff]
  %5895 = vrot.lane.b32.xlu0 %v1830, 25
  %v5896 = vpop.permute.xlu0 %5895
  %5897 = vrot.lane.b32.xlu0 %v1831, 25
  %v5898 = vpop.permute.xlu0 %5897
  %5899 = vrot.lane.b32.xlu0 %v1832, 25
  %v5900 = vpop.permute.xlu0 %5899
  %5901 = vrot.lane.b32.xlu0 %v1833, 25
  %v5902 = vpop.permute.xlu0 %5901
  %5903 = vrot.lane.b32.xlu0 %v1834, 25
  %v5904 = vpop.permute.xlu0 %5903
  %5905 = vrot.lane.b32.xlu0 %v1835, 25
  %v5906 = vpop.permute.xlu0 %5905
  %5907 = vrot.lane.b32.xlu0 %v1836, 25
  %v5908 = vpop.permute.xlu0 %5907
  %5909 = vrot.lane.b32.xlu0 %v1837, 25
  %v5910 = vpop.permute.xlu0 %5909
  %5911 = vrot.lane.b32.xlu0 %v1838, 25
  %v5912 = vpop.permute.xlu0 %5911
  %5913 = vrot.lane.b32.xlu0 %v1839, 25
  %v5914 = vpop.permute.xlu0 %5913
  %5915 = vrot.lane.b32.xlu0 %v1840, 25
  %v5916 = vpop.permute.xlu0 %5915
  %5917 = vrot.lane.b32.xlu0 %v1841, 25
  %v5918 = vpop.permute.xlu0 %5917
  %5919 = vrot.lane.b32.xlu0 %v1842, 25
  %v5920 = vpop.permute.xlu0 %5919
  %5921 = vrot.lane.b32.xlu0 %v1843, 25
  %v5922 = vpop.permute.xlu0 %5921
  %5923 = vrot.lane.b32.xlu0 %v1844, 25
  %v5924 = vpop.permute.xlu0 %5923
  %5925 = vrot.lane.b32.xlu0 %v1845, 25
  %v5926 = vpop.permute.xlu0 %5925
  %5927 = vrot.lane.b32.xlu0 %v1846, 25
  %v5928 = vpop.permute.xlu0 %5927
  %5929 = vrot.lane.b32.xlu0 %v1847, 25
  %v5930 = vpop.permute.xlu0 %5929
  %5931 = vrot.lane.b32.xlu0 %v1848, 25
  %v5932 = vpop.permute.xlu0 %5931
  %5933 = vrot.lane.b32.xlu0 %v1849, 25
  %v5934 = vpop.permute.xlu0 %5933
  %5935 = vrot.lane.b32.xlu0 %v1850, 25
  %v5936 = vpop.permute.xlu0 %5935
  %5937 = vrot.lane.b32.xlu0 %v1851, 25
  %v5938 = vpop.permute.xlu0 %5937
  %5939 = vrot.lane.b32.xlu0 %v1852, 25
  %v5940 = vpop.permute.xlu0 %5939
  %5941 = vrot.lane.b32.xlu0 %v1853, 25
  %v5942 = vpop.permute.xlu0 %5941
  %vm5943 = vcmask 203776
  %v5944 = vsel %vm5943, %v5896, %v5898
  %v5945 = vsel %vm5943, %v5898, %v5900
  %v5946 = vsel %vm5943, %v5900, %v5902
  %v5947 = vsel %vm5943, %v5902, %v5904
  %v5948 = vsel %vm5943, %v5904, %v5906
  %v5949 = vsel %vm5943, %v5908, %v5910
  %v5950 = vsel %vm5943, %v5910, %v5912
  %v5951 = vsel %vm5943, %v5912, %v5914
  %v5952 = vsel %vm5943, %v5914, %v5916
  %v5953 = vsel %vm5943, %v5916, %v5918
  %v5954 = vsel %vm5943, %v5920, %v5922
  %v5955 = vsel %vm5943, %v5922, %v5924
  %v5956 = vsel %vm5943, %v5924, %v5926
  %v5957 = vsel %vm5943, %v5926, %v5928
  %v5958 = vsel %vm5943, %v5928, %v5930
  %v5959 = vsel %vm5943, %v5932, %v5934
  %v5960 = vsel %vm5943, %v5934, %v5936
  %v5961 = vsel %vm5943, %v5936, %v5938
  %v5962 = vsel %vm5943, %v5938, %v5940
  %v5963 = vsel %vm5943, %v5940, %v5942
  %v5985 = vsel %vm954, %v5893, 0
  %v5988 = vsel %vm954, %v5894, 0
  %5990 = vmatpush.msra.mxu0 0.0
  %5991 = vmatpush.msra.mxu0 0.0
  %5992 = vmatpush.msra.mxu0 0.0
  %5993 = vmatpush.msra.mxu0 0.0
  %5994 = vmatpush.msra.mxu0 0.0
  %5995 = vmatpush.msra.mxu0 0.0
  %5996 = vmatpush.msra.mxu0 0.0
  %5997 = vmatpush.msra.mxu0 0.0
  %5998 = vmatpush.msra.mxu0 0.0
  %5999 = vmatpush.msra.mxu0 0.0
  %6000 = vmatpush.msra.mxu0 0.0
  %6001 = vmatpush.msra.mxu0 0.0
  %6002 = vmatpush.msra.mxu0 %v5959
  %6003 = vmatpush.msra.mxu0 %v5954
  %6004 = vmatpush.msra.mxu0 %v5949
  %6005 = vmatpush.msra.mxu0 %v5944
  %6006 = vmatmul.f32.gmra.mxu0 %v5985
  %v6007 = vpop.f32.mrf.mxu0
  %v6008 = vadd.f32 0.0, %v6007
  %6009 = vmatmul.f32.gmra.mxu0 %v5988
  %v6010 = vpop.f32.mrf.mxu0
  %v6011 = vadd.f32 0.0, %v6010
  %6012 = vdwg.mxu0
  %6013 = vmatpush.msra.mxu0 0.0
  %6014 = vmatpush.msra.mxu0 0.0
  %6015 = vmatpush.msra.mxu0 0.0
  %6016 = vmatpush.msra.mxu0 0.0
  %6017 = vmatpush.msra.mxu0 0.0
  %6018 = vmatpush.msra.mxu0 0.0
  %6019 = vmatpush.msra.mxu0 0.0
  %6020 = vmatpush.msra.mxu0 0.0
  %6021 = vmatpush.msra.mxu0 0.0
  %6022 = vmatpush.msra.mxu0 0.0
  %6023 = vmatpush.msra.mxu0 0.0
  %6024 = vmatpush.msra.mxu0 0.0
  %6025 = vmatpush.msra.mxu0 %v5960
  %6026 = vmatpush.msra.mxu0 %v5955
  %6027 = vmatpush.msra.mxu0 %v5950
  %6028 = vmatpush.msra.mxu0 %v5945
  %6029 = vmatmul.f32.gmra.mxu0 %v5985
  %v6030 = vpop.f32.mrf.mxu0
  %v6031 = vadd.f32 0.0, %v6030
  %6032 = vmatmul.f32.gmra.mxu0 %v5988
  %v6033 = vpop.f32.mrf.mxu0
  %v6034 = vadd.f32 0.0, %v6033
  %6035 = vdwg.mxu0
  %6036 = vmatpush.msra.mxu0 0.0
  %6037 = vmatpush.msra.mxu0 0.0
  %6038 = vmatpush.msra.mxu0 0.0
  %6039 = vmatpush.msra.mxu0 0.0
  %6040 = vmatpush.msra.mxu0 0.0
  %6041 = vmatpush.msra.mxu0 0.0
  %6042 = vmatpush.msra.mxu0 0.0
  %6043 = vmatpush.msra.mxu0 0.0
  %6044 = vmatpush.msra.mxu0 0.0
  %6045 = vmatpush.msra.mxu0 0.0
  %6046 = vmatpush.msra.mxu0 0.0
  %6047 = vmatpush.msra.mxu0 0.0
  %6048 = vmatpush.msra.mxu0 %v5961
  %6049 = vmatpush.msra.mxu0 %v5956
  %6050 = vmatpush.msra.mxu0 %v5951
  %6051 = vmatpush.msra.mxu0 %v5946
  %6052 = vmatmul.f32.gmra.mxu0 %v5985
  %v6053 = vpop.f32.mrf.mxu0
  %v6054 = vadd.f32 0.0, %v6053
  %6055 = vmatmul.f32.gmra.mxu0 %v5988
  %v6056 = vpop.f32.mrf.mxu0
  %v6057 = vadd.f32 0.0, %v6056
  %6058 = vdwg.mxu0
  %6059 = vmatpush.msra.mxu0 0.0
  %6060 = vmatpush.msra.mxu0 0.0
  %6061 = vmatpush.msra.mxu0 0.0
  %6062 = vmatpush.msra.mxu0 0.0
  %6063 = vmatpush.msra.mxu0 0.0
  %6064 = vmatpush.msra.mxu0 0.0
  %6065 = vmatpush.msra.mxu0 0.0
  %6066 = vmatpush.msra.mxu0 0.0
  %6067 = vmatpush.msra.mxu0 0.0
  %6068 = vmatpush.msra.mxu0 0.0
  %6069 = vmatpush.msra.mxu0 0.0
  %6070 = vmatpush.msra.mxu0 0.0
  %6071 = vmatpush.msra.mxu0 %v5962
  %6072 = vmatpush.msra.mxu0 %v5957
  %6073 = vmatpush.msra.mxu0 %v5952
  %6074 = vmatpush.msra.mxu0 %v5947
  %6075 = vmatmul.f32.gmra.mxu0 %v5985
  %v6076 = vpop.f32.mrf.mxu0
  %v6077 = vadd.f32 0.0, %v6076
  %6078 = vmatmul.f32.gmra.mxu0 %v5988
  %v6079 = vpop.f32.mrf.mxu0
  %v6080 = vadd.f32 0.0, %v6079
  %6081 = vdwg.mxu0
  %6082 = vmatpush.msra.mxu0 0.0
  %6083 = vmatpush.msra.mxu0 0.0
  %6084 = vmatpush.msra.mxu0 0.0
  %6085 = vmatpush.msra.mxu0 0.0
  %6086 = vmatpush.msra.mxu0 0.0
  %6087 = vmatpush.msra.mxu0 0.0
  %6088 = vmatpush.msra.mxu0 0.0
  %6089 = vmatpush.msra.mxu0 0.0
  %6090 = vmatpush.msra.mxu0 0.0
  %6091 = vmatpush.msra.mxu0 0.0
  %6092 = vmatpush.msra.mxu0 0.0
  %6093 = vmatpush.msra.mxu0 0.0
  %6094 = vmatpush.msra.mxu0 %v5963
  %6095 = vmatpush.msra.mxu0 %v5958
  %6096 = vmatpush.msra.mxu0 %v5953
  %6097 = vmatpush.msra.mxu0 %v5948
  %6098 = vmatmul.f32.gmra.mxu0 %v5985
  %v6099 = vpop.f32.mrf.mxu0
  %v6100 = vadd.f32 0.0, %v6099
  %6101 = vmatmul.f32.gmra.mxu0 %v5988
  %v6102 = vpop.f32.mrf.mxu0
  %v6103 = vadd.f32 0.0, %v6102
  %6104 = vdwg.mxu0
  %v6105 = vadd.f32 %v5882, %v6008
  %v6106 = vadd.f32 %v5883, %v6031
  %v6107 = vadd.f32 %v5884, %v6054
  %v6108 = vadd.f32 %v5885, %v6077
  %v6109 = vadd.f32 %v5886, %v6100
  %v6110 = vadd.f32 %v5887, %v6011
  %v6111 = vadd.f32 %v5888, %v6034
  %v6112 = vadd.f32 %v5889, %v6057
  %v6113 = vadd.f32 %v5890, %v6080
  %v6114 = vadd.f32 %v5891, %v6103
  %s6115 = scalar_lea.vmem %s2, 384
  %v6116 = vld [vmem:[%s6115] sm:$0xff]
  %v6117 = vld [vmem:[%s6115 + $0x8] sm:$0xff]
  %6118 = vrot.lane.b32.xlu0 %v1830, 24
  %v6119 = vpop.permute.xlu0 %6118
  %6120 = vrot.lane.b32.xlu0 %v1831, 24
  %v6121 = vpop.permute.xlu0 %6120
  %6122 = vrot.lane.b32.xlu0 %v1832, 24
  %v6123 = vpop.permute.xlu0 %6122
  %6124 = vrot.lane.b32.xlu0 %v1833, 24
  %v6125 = vpop.permute.xlu0 %6124
  %6126 = vrot.lane.b32.xlu0 %v1834, 24
  %v6127 = vpop.permute.xlu0 %6126
  %6128 = vrot.lane.b32.xlu0 %v1835, 24
  %v6129 = vpop.permute.xlu0 %6128
  %6130 = vrot.lane.b32.xlu0 %v1836, 24
  %v6131 = vpop.permute.xlu0 %6130
  %6132 = vrot.lane.b32.xlu0 %v1837, 24
  %v6133 = vpop.permute.xlu0 %6132
  %6134 = vrot.lane.b32.xlu0 %v1838, 24
  %v6135 = vpop.permute.xlu0 %6134
  %6136 = vrot.lane.b32.xlu0 %v1839, 24
  %v6137 = vpop.permute.xlu0 %6136
  %6138 = vrot.lane.b32.xlu0 %v1840, 24
  %v6139 = vpop.permute.xlu0 %6138
  %6140 = vrot.lane.b32.xlu0 %v1841, 24
  %v6141 = vpop.permute.xlu0 %6140
  %6142 = vrot.lane.b32.xlu0 %v1842, 24
  %v6143 = vpop.permute.xlu0 %6142
  %6144 = vrot.lane.b32.xlu0 %v1843, 24
  %v6145 = vpop.permute.xlu0 %6144
  %6146 = vrot.lane.b32.xlu0 %v1844, 24
  %v6147 = vpop.permute.xlu0 %6146
  %6148 = vrot.lane.b32.xlu0 %v1845, 24
  %v6149 = vpop.permute.xlu0 %6148
  %6150 = vrot.lane.b32.xlu0 %v1846, 24
  %v6151 = vpop.permute.xlu0 %6150
  %6152 = vrot.lane.b32.xlu0 %v1847, 24
  %v6153 = vpop.permute.xlu0 %6152
  %6154 = vrot.lane.b32.xlu0 %v1848, 24
  %v6155 = vpop.permute.xlu0 %6154
  %6156 = vrot.lane.b32.xlu0 %v1849, 24
  %v6157 = vpop.permute.xlu0 %6156
  %6158 = vrot.lane.b32.xlu0 %v1850, 24
  %v6159 = vpop.permute.xlu0 %6158
  %6160 = vrot.lane.b32.xlu0 %v1851, 24
  %v6161 = vpop.permute.xlu0 %6160
  %6162 = vrot.lane.b32.xlu0 %v1852, 24
  %v6163 = vpop.permute.xlu0 %6162
  %6164 = vrot.lane.b32.xlu0 %v1853, 24
  %v6165 = vpop.permute.xlu0 %6164
  %vm6166 = vcmask 195584
  %v6167 = vsel %vm6166, %v6119, %v6121
  %v6168 = vsel %vm6166, %v6121, %v6123
  %v6169 = vsel %vm6166, %v6123, %v6125
  %v6170 = vsel %vm6166, %v6125, %v6127
  %v6171 = vsel %vm6166, %v6127, %v6129
  %v6172 = vsel %vm6166, %v6131, %v6133
  %v6173 = vsel %vm6166, %v6133, %v6135
  %v6174 = vsel %vm6166, %v6135, %v6137
  %v6175 = vsel %vm6166, %v6137, %v6139
  %v6176 = vsel %vm6166, %v6139, %v6141
  %v6177 = vsel %vm6166, %v6143, %v6145
  %v6178 = vsel %vm6166, %v6145, %v6147
  %v6179 = vsel %vm6166, %v6147, %v6149
  %v6180 = vsel %vm6166, %v6149, %v6151
  %v6181 = vsel %vm6166, %v6151, %v6153
  %v6182 = vsel %vm6166, %v6155, %v6157
  %v6183 = vsel %vm6166, %v6157, %v6159
  %v6184 = vsel %vm6166, %v6159, %v6161
  %v6185 = vsel %vm6166, %v6161, %v6163
  %v6186 = vsel %vm6166, %v6163, %v6165
  %v6208 = vsel %vm954, %v6116, 0
  %v6211 = vsel %vm954, %v6117, 0
  %6213 = vmatpush.msra.mxu0 0.0
  %6214 = vmatpush.msra.mxu0 0.0
  %6215 = vmatpush.msra.mxu0 0.0
  %6216 = vmatpush.msra.mxu0 0.0
  %6217 = vmatpush.msra.mxu0 0.0
  %6218 = vmatpush.msra.mxu0 0.0
  %6219 = vmatpush.msra.mxu0 0.0
  %6220 = vmatpush.msra.mxu0 0.0
  %6221 = vmatpush.msra.mxu0 0.0
  %6222 = vmatpush.msra.mxu0 0.0
  %6223 = vmatpush.msra.mxu0 0.0
  %6224 = vmatpush.msra.mxu0 0.0
  %6225 = vmatpush.msra.mxu0 %v6182
  %6226 = vmatpush.msra.mxu0 %v6177
  %6227 = vmatpush.msra.mxu0 %v6172
  %6228 = vmatpush.msra.mxu0 %v6167
  %6229 = vmatmul.f32.gmra.mxu0 %v6208
  %v6230 = vpop.f32.mrf.mxu0
  %v6231 = vadd.f32 0.0, %v6230
  %6232 = vmatmul.f32.gmra.mxu0 %v6211
  %v6233 = vpop.f32.mrf.mxu0
  %v6234 = vadd.f32 0.0, %v6233
  %6235 = vdwg.mxu0
  %6236 = vmatpush.msra.mxu0 0.0
  %6237 = vmatpush.msra.mxu0 0.0
  %6238 = vmatpush.msra.mxu0 0.0
  %6239 = vmatpush.msra.mxu0 0.0
  %6240 = vmatpush.msra.mxu0 0.0
  %6241 = vmatpush.msra.mxu0 0.0
  %6242 = vmatpush.msra.mxu0 0.0
  %6243 = vmatpush.msra.mxu0 0.0
  %6244 = vmatpush.msra.mxu0 0.0
  %6245 = vmatpush.msra.mxu0 0.0
  %6246 = vmatpush.msra.mxu0 0.0
  %6247 = vmatpush.msra.mxu0 0.0
  %6248 = vmatpush.msra.mxu0 %v6183
  %6249 = vmatpush.msra.mxu0 %v6178
  %6250 = vmatpush.msra.mxu0 %v6173
  %6251 = vmatpush.msra.mxu0 %v6168
  %6252 = vmatmul.f32.gmra.mxu0 %v6208
  %v6253 = vpop.f32.mrf.mxu0
  %v6254 = vadd.f32 0.0, %v6253
  %6255 = vmatmul.f32.gmra.mxu0 %v6211
  %v6256 = vpop.f32.mrf.mxu0
  %v6257 = vadd.f32 0.0, %v6256
  %6258 = vdwg.mxu0
  %6259 = vmatpush.msra.mxu0 0.0
  %6260 = vmatpush.msra.mxu0 0.0
  %6261 = vmatpush.msra.mxu0 0.0
  %6262 = vmatpush.msra.mxu0 0.0
  %6263 = vmatpush.msra.mxu0 0.0
  %6264 = vmatpush.msra.mxu0 0.0
  %6265 = vmatpush.msra.mxu0 0.0
  %6266 = vmatpush.msra.mxu0 0.0
  %6267 = vmatpush.msra.mxu0 0.0
  %6268 = vmatpush.msra.mxu0 0.0
  %6269 = vmatpush.msra.mxu0 0.0
  %6270 = vmatpush.msra.mxu0 0.0
  %6271 = vmatpush.msra.mxu0 %v6184
  %6272 = vmatpush.msra.mxu0 %v6179
  %6273 = vmatpush.msra.mxu0 %v6174
  %6274 = vmatpush.msra.mxu0 %v6169
  %6275 = vmatmul.f32.gmra.mxu0 %v6208
  %v6276 = vpop.f32.mrf.mxu0
  %v6277 = vadd.f32 0.0, %v6276
  %6278 = vmatmul.f32.gmra.mxu0 %v6211
  %v6279 = vpop.f32.mrf.mxu0
  %v6280 = vadd.f32 0.0, %v6279
  %6281 = vdwg.mxu0
  %6282 = vmatpush.msra.mxu0 0.0
  %6283 = vmatpush.msra.mxu0 0.0
  %6284 = vmatpush.msra.mxu0 0.0
  %6285 = vmatpush.msra.mxu0 0.0
  %6286 = vmatpush.msra.mxu0 0.0
  %6287 = vmatpush.msra.mxu0 0.0
  %6288 = vmatpush.msra.mxu0 0.0
  %6289 = vmatpush.msra.mxu0 0.0
  %6290 = vmatpush.msra.mxu0 0.0
  %6291 = vmatpush.msra.mxu0 0.0
  %6292 = vmatpush.msra.mxu0 0.0
  %6293 = vmatpush.msra.mxu0 0.0
  %6294 = vmatpush.msra.mxu0 %v6185
  %6295 = vmatpush.msra.mxu0 %v6180
  %6296 = vmatpush.msra.mxu0 %v6175
  %6297 = vmatpush.msra.mxu0 %v6170
  %6298 = vmatmul.f32.gmra.mxu0 %v6208
  %v6299 = vpop.f32.mrf.mxu0
  %v6300 = vadd.f32 0.0, %v6299
  %6301 = vmatmul.f32.gmra.mxu0 %v6211
  %v6302 = vpop.f32.mrf.mxu0
  %v6303 = vadd.f32 0.0, %v6302
  %6304 = vdwg.mxu0
  %6305 = vmatpush.msra.mxu0 0.0
  %6306 = vmatpush.msra.mxu0 0.0
  %6307 = vmatpush.msra.mxu0 0.0
  %6308 = vmatpush.msra.mxu0 0.0
  %6309 = vmatpush.msra.mxu0 0.0
  %6310 = vmatpush.msra.mxu0 0.0
  %6311 = vmatpush.msra.mxu0 0.0
  %6312 = vmatpush.msra.mxu0 0.0
  %6313 = vmatpush.msra.mxu0 0.0
  %6314 = vmatpush.msra.mxu0 0.0
  %6315 = vmatpush.msra.mxu0 0.0
  %6316 = vmatpush.msra.mxu0 0.0
  %6317 = vmatpush.msra.mxu0 %v6186
  %6318 = vmatpush.msra.mxu0 %v6181
  %6319 = vmatpush.msra.mxu0 %v6176
  %6320 = vmatpush.msra.mxu0 %v6171
  %6321 = vmatmul.f32.gmra.mxu0 %v6208
  %v6322 = vpop.f32.mrf.mxu0
  %v6323 = vadd.f32 0.0, %v6322
  %6324 = vmatmul.f32.gmra.mxu0 %v6211
  %v6325 = vpop.f32.mrf.mxu0
  %v6326 = vadd.f32 0.0, %v6325
  %6327 = vdwg.mxu0
  %v6328 = vadd.f32 %v6105, %v6231
  %v6329 = vadd.f32 %v6106, %v6254
  %v6330 = vadd.f32 %v6107, %v6277
  %v6331 = vadd.f32 %v6108, %v6300
  %v6332 = vadd.f32 %v6109, %v6323
  %v6333 = vadd.f32 %v6110, %v6234
  %v6334 = vadd.f32 %v6111, %v6257
  %v6335 = vadd.f32 %v6112, %v6280
  %v6336 = vadd.f32 %v6113, %v6303
  %v6337 = vadd.f32 %v6114, %v6326
  %v6338 = vld [vmem:[%s4] sm:$0xff]
  %v6340 = vperm.slane %v64, 0
  %v6341 = vperm.slane %v64, 1
  %v6342 = vperm.slane %v64, 2
  %v6343 = vperm.slane %v64, 3
  %v6344 = vperm.slane %v64, 4
  %v6350 = vmul.f32 %v6328, %v6340
  %v6351 = vmul.f32 %v6329, %v6341
  %v6352 = vmul.f32 %v6330, %v6342
  %v6353 = vmul.f32 %v6331, %v6343
  %v6354 = vmul.f32 %v6332, %v6344
  %v6355 = vadd.f32 %v6350, %v6351
  %v6356 = vadd.f32 %v6355, %v6352
  %v6357 = vadd.f32 %v6356, %v6353
  %v6358 = vsel %vm549, %v6354, 0.0
  %v6359 = vadd.f32 %v6357, %v6358
  %6360 = vadd.xlane.f32.xlu0 %v6359
  %v6361 = vpop.xlane.xlu0 %6360
  %v6362 = vmul.f32 %v6333, %v6340
  %v6363 = vmul.f32 %v6334, %v6341
  %v6364 = vmul.f32 %v6335, %v6342
  %v6365 = vmul.f32 %v6336, %v6343
  %v6366 = vmul.f32 %v6337, %v6344
  %v6367 = vadd.f32 %v6362, %v6363
  %v6368 = vadd.f32 %v6367, %v6364
  %v6369 = vadd.f32 %v6368, %v6365
  %v6370 = vsel %vm549, %v6366, 0.0
  %v6371 = vadd.f32 %v6369, %v6370
  %6372 = vadd.xlane.f32.xlu0 %v6371
  %v6373 = vpop.xlane.xlu0 %6372
  %v6374 = vadd.f32 %v6361, %v6373
  %v6375 = vrcp.pop 882.0
  %v6376 = vmul.f32 882.0, %v6375
  %v6377 = vsub.f32 1.0, %v6376
  %v6378 = vmul.f32 %v6375, %v6377
  %v6379 = vadd.f32 %v6375, %v6378
  %vm6380 = vweird.f32 %v6375
  %v6381 = vsel %vm6380, %v6375, %v6379
  %v6382 = vmul.f32 %v6374, %v6381
  %v6383 = vsub.f32 %v6328, %v6382
  %v6384 = vsub.f32 %v6329, %v6382
  %v6385 = vsub.f32 %v6330, %v6382
  %v6386 = vsub.f32 %v6331, %v6382
  %v6387 = vsub.f32 %v6332, %v6382
  %v6388 = vmul.f32 %v6383, %v6340
  %v6389 = vmul.f32 %v6384, %v6341
  %v6390 = vmul.f32 %v6385, %v6342
  %v6391 = vmul.f32 %v6386, %v6343
  %v6392 = vmul.f32 %v6387, %v6344
  %v6393 = vmul.f32 %v6388, %v6388
  %v6394 = vmul.f32 %v6389, %v6389
  %v6395 = vmul.f32 %v6390, %v6390
  %v6396 = vmul.f32 %v6391, %v6391
  %v6397 = vmul.f32 %v6392, %v6392
  %v6398 = vadd.f32 %v6393, %v6394
  %v6399 = vadd.f32 %v6398, %v6395
  %v6400 = vadd.f32 %v6399, %v6396
  %v6401 = vsel %vm549, %v6397, 0.0
  %v6402 = vadd.f32 %v6400, %v6401
  %6403 = vadd.xlane.f32.xlu0 %v6402
  %v6404 = vpop.xlane.xlu0 %6403
  %v6405 = vsub.f32 %v6333, %v6382
  %v6406 = vsub.f32 %v6334, %v6382
  %v6407 = vsub.f32 %v6335, %v6382
  %v6408 = vsub.f32 %v6336, %v6382
  %v6409 = vsub.f32 %v6337, %v6382
  %v6410 = vmul.f32 %v6405, %v6340
  %v6411 = vmul.f32 %v6406, %v6341
  %v6412 = vmul.f32 %v6407, %v6342
  %v6413 = vmul.f32 %v6408, %v6343
  %v6414 = vmul.f32 %v6409, %v6344
  %v6415 = vmul.f32 %v6410, %v6410
  %v6416 = vmul.f32 %v6411, %v6411
  %v6417 = vmul.f32 %v6412, %v6412
  %v6418 = vmul.f32 %v6413, %v6413
  %v6419 = vmul.f32 %v6414, %v6414
  %v6420 = vadd.f32 %v6415, %v6416
  %v6421 = vadd.f32 %v6420, %v6417
  %v6422 = vadd.f32 %v6421, %v6418
  %v6423 = vsel %vm549, %v6419, 0.0
  %v6424 = vadd.f32 %v6422, %v6423
  %6425 = vadd.xlane.f32.xlu0 %v6424
  %v6426 = vpop.xlane.xlu0 %6425
  %v6427 = vadd.f32 %v6404, %v6426
  %v6428 = vmul.f32 %v6427, %v6381
  %v6429 = vadd.f32 %v6428, 1e-05
  %v6430 = vrsqrt.pop %v6429
  %v6431 = vmul.f32 %v6430, %v6429
  %v6432 = vmul.f32 %v6431, %v6430
  %v6433 = vmul.f32 0.5, %v6432
  %v6434 = vsub.f32 1.5, %v6433
  %v6435 = vmul.f32 %v6430, %v6434
  %vm6436 = vweird.f32 %v6429
  %vm6437 = vweird.f32 %v6430
  %vm6438 = vmor %vm6436, %vm6437
  %v6439 = vsel %vm6438, %v6430, %v6435
  %v6440 = vmul.f32 %v6439, %v6338
  %6442 = vset.pattern.permute.xlu0 2
  %6443 = vperm.xlu0 %6442, %v6440
  %v6444 = vpop.permute.xlu0 %6443
  %v6446 = vmul.f32 %v6383, %v6444
  %v6447 = vmul.f32 %v6384, %v6444
  %v6448 = vmul.f32 %v6385, %v6444
  %v6449 = vmul.f32 %v6386, %v6444
  %v6450 = vmul.f32 %v6387, %v6444
  %6452 = vset.pattern.permute.xlu0 3
  %6453 = vperm.xlu0 %6452, %v6338
  %v6454 = vpop.permute.xlu0 %6453
  %v6456 = vadd.f32 %v6446, %v6454
  %v6457 = vadd.f32 %v6447, %v6454
  %v6458 = vadd.f32 %v6448, %v6454
  %v6459 = vadd.f32 %v6449, %v6454
  %v6460 = vadd.f32 %v6450, %v6454
  %v6461 = vmax.f32 %v6456, 0.0
  %v6462 = vmax.f32 %v6457, 0.0
  %v6463 = vmax.f32 %v6458, 0.0
  %v6464 = vmax.f32 %v6459, 0.0
  %v6465 = vmax.f32 %v6460, 0.0
  %v6466 = vmul.f32 %v6461, %v6340
  %v6467 = vmul.f32 %v6462, %v6341
  %v6468 = vmul.f32 %v6463, %v6342
  %v6469 = vmul.f32 %v6464, %v6343
  %v6470 = vmul.f32 %v6465, %v6344
  %6471 = vst [vmem:[#allocation3 + $0x8] sm:$0xff] %v6466
  %6472 = vst [vmem:[#allocation3 + $0x10] sm:$0xff] %v6467
  %6473 = vst [vmem:[#allocation3 + $0x18] sm:$0xff] %v6468
  %6474 = vst [vmem:[#allocation3 + $0x20] sm:$0xff] %v6469
  %6475 = vst.msk [vmem:[#allocation3 + $0x28] sm:$0xff] %vm549, %v6470
  %v6476 = vmul.f32 %v6405, %v6444
  %v6477 = vmul.f32 %v6406, %v6444
  %v6478 = vmul.f32 %v6407, %v6444
  %v6479 = vmul.f32 %v6408, %v6444
  %v6480 = vmul.f32 %v6409, %v6444
  %v6481 = vadd.f32 %v6476, %v6454
  %v6482 = vadd.f32 %v6477, %v6454
  %v6483 = vadd.f32 %v6478, %v6454
  %v6484 = vadd.f32 %v6479, %v6454
  %v6485 = vadd.f32 %v6480, %v6454
  %v6486 = vmax.f32 %v6481, 0.0
  %v6487 = vmax.f32 %v6482, 0.0
  %v6488 = vmax.f32 %v6483, 0.0
  %v6489 = vmax.f32 %v6484, 0.0
  %v6490 = vmax.f32 %v6485, 0.0
  %v6491 = vmul.f32 %v6486, %v6340
  %v6492 = vmul.f32 %v6487, %v6341
  %v6493 = vmul.f32 %v6488, %v6342
  %v6494 = vmul.f32 %v6489, %v6343
  %v6495 = vmul.f32 %v6490, %v6344
  %6496 = vst [vmem:[#allocation3 + $0x38] sm:$0xff] %v6491
  %6497 = vst [vmem:[#allocation3 + $0x40] sm:$0xff] %v6492
  %6498 = vst [vmem:[#allocation3 + $0x48] sm:$0xff] %v6493
  %6499 = vst [vmem:[#allocation3 + $0x50] sm:$0xff] %v6494
  %6500 = vst.msk [vmem:[#allocation3 + $0x58] sm:$0xff] %vm549, %v6495
  %v6501 = vld [vmem:[#allocation3] sm:$0xff]
  %v6502 = vld [vmem:[#allocation3 + $0x8] sm:$0xff]
  %v6503 = vld [vmem:[#allocation3 + $0x10] sm:$0xff]
  %v6504 = vld [vmem:[#allocation3 + $0x18] sm:$0xff]
  %v6505 = vld [vmem:[#allocation3 + $0x20] sm:$0xff]
  %v6506 = vld [vmem:[#allocation3 + $0x28] sm:$0xff]
  %v6507 = vld [vmem:[#allocation3 + $0x30] sm:$0xff]
  %v6508 = vld [vmem:[#allocation3 + $0x38] sm:$0xff]
  %v6509 = vld [vmem:[#allocation3 + $0x40] sm:$0xff]
  %v6510 = vld [vmem:[#allocation3 + $0x48] sm:$0xff]
  %v6511 = vld [vmem:[#allocation3 + $0x50] sm:$0xff]
  %v6512 = vld [vmem:[#allocation3 + $0x58] sm:$0xff]
  %v6513 = vld [vmem:[%s3] sm:$0xff]
  %v6514 = vld [vmem:[%s3 + $0x8] sm:$0xff]
  %s6515 = scalar_lea.vmem %s3, 16
  %v6516 = vld [vmem:[%s6515] sm:$0xff]
  %v6517 = vld [vmem:[%s6515 + $0x8] sm:$0xff]
  %6530 = vrot.lane.b32.xlu0 %v6501, 103
  %v6531 = vpop.permute.xlu0 %6530
  %6532 = vrot.lane.b32.xlu0 %v6502, 103
  %v6533 = vpop.permute.xlu0 %6532
  %6534 = vrot.lane.b32.xlu0 %v6503, 103
  %v6535 = vpop.permute.xlu0 %6534
  %6536 = vrot.lane.b32.xlu0 %v6504, 103
  %v6537 = vpop.permute.xlu0 %6536
  %6538 = vrot.lane.b32.xlu0 %v6505, 103
  %v6539 = vpop.permute.xlu0 %6538
  %6540 = vrot.lane.b32.xlu0 %v6506, 103
  %v6541 = vpop.permute.xlu0 %6540
  %6542 = vrot.lane.b32.xlu0 %v6507, 103
  %v6543 = vpop.permute.xlu0 %6542
  %6544 = vrot.lane.b32.xlu0 %v6508, 103
  %v6545 = vpop.permute.xlu0 %6544
  %6546 = vrot.lane.b32.xlu0 %v6509, 103
  %v6547 = vpop.permute.xlu0 %6546
  %6548 = vrot.lane.b32.xlu0 %v6510, 103
  %v6549 = vpop.permute.xlu0 %6548
  %6550 = vrot.lane.b32.xlu0 %v6511, 103
  %v6551 = vpop.permute.xlu0 %6550
  %6552 = vrot.lane.b32.xlu0 %v6512, 103
  %v6553 = vpop.permute.xlu0 %6552
  %v6554 = vsel %vm1929, %v6531, %v6533
  %v6555 = vsel %vm1929, %v6533, %v6535
  %v6556 = vsel %vm1929, %v6535, %v6537
  %v6557 = vsel %vm1929, %v6537, %v6539
  %v6558 = vsel %vm1929, %v6539, %v6541
  %v6559 = vsel %vm1929, %v6543, %v6545
  %v6560 = vsel %vm1929, %v6545, %v6547
  %v6561 = vsel %vm1929, %v6547, %v6549
  %v6562 = vsel %vm1929, %v6549, %v6551
  %v6563 = vsel %vm1929, %v6551, %v6553
  %vm6574 = vcmask 130048
  %v6576 = vsel %vm6574, %v6516, 0
  %v6579 = vsel %vm6574, %v6517, 0
  %6581 = vmatpush.msra.mxu0 0.0
  %6582 = vmatpush.msra.mxu0 0.0
  %6583 = vmatpush.msra.mxu0 0.0
  %6584 = vmatpush.msra.mxu0 0.0
  %6585 = vmatpush.msra.mxu0 0.0
  %6586 = vmatpush.msra.mxu0 0.0
  %6587 = vmatpush.msra.mxu0 0.0
  %6588 = vmatpush.msra.mxu0 0.0
  %6589 = vmatpush.msra.mxu0 0.0
  %6590 = vmatpush.msra.mxu0 0.0
  %6591 = vmatpush.msra.mxu0 0.0
  %6592 = vmatpush.msra.mxu0 0.0
  %6593 = vmatpush.msra.mxu0 0.0
  %6594 = vmatpush.msra.mxu0 0.0
  %6595 = vmatpush.msra.mxu0 %v6559
  %6596 = vmatpush.msra.mxu0 %v6554
  %6597 = vmatmul.f32.gmra.mxu0 %v6576
  %v6598 = vpop.f32.mrf.mxu0
  %v6599 = vadd.f32 0.0, %v6598
  %6600 = vmatmul.f32.gmra.mxu0 %v6579
  %v6601 = vpop.f32.mrf.mxu0
  %v6602 = vadd.f32 0.0, %v6601
  %6603 = vdwg.mxu0
  %6604 = vmatpush.msra.mxu0 0.0
  %6605 = vmatpush.msra.mxu0 0.0
  %6606 = vmatpush.msra.mxu0 0.0
  %6607 = vmatpush.msra.mxu0 0.0
  %6608 = vmatpush.msra.mxu0 0.0
  %6609 = vmatpush.msra.mxu0 0.0
  %6610 = vmatpush.msra.mxu0 0.0
  %6611 = vmatpush.msra.mxu0 0.0
  %6612 = vmatpush.msra.mxu0 0.0
  %6613 = vmatpush.msra.mxu0 0.0
  %6614 = vmatpush.msra.mxu0 0.0
  %6615 = vmatpush.msra.mxu0 0.0
  %6616 = vmatpush.msra.mxu0 0.0
  %6617 = vmatpush.msra.mxu0 0.0
  %6618 = vmatpush.msra.mxu0 %v6560
  %6619 = vmatpush.msra.mxu0 %v6555
  %6620 = vmatmul.f32.gmra.mxu0 %v6576
  %v6621 = vpop.f32.mrf.mxu0
  %v6622 = vadd.f32 0.0, %v6621
  %6623 = vmatmul.f32.gmra.mxu0 %v6579
  %v6624 = vpop.f32.mrf.mxu0
  %v6625 = vadd.f32 0.0, %v6624
  %6626 = vdwg.mxu0
  %6627 = vmatpush.msra.mxu0 0.0
  %6628 = vmatpush.msra.mxu0 0.0
  %6629 = vmatpush.msra.mxu0 0.0
  %6630 = vmatpush.msra.mxu0 0.0
  %6631 = vmatpush.msra.mxu0 0.0
  %6632 = vmatpush.msra.mxu0 0.0
  %6633 = vmatpush.msra.mxu0 0.0
  %6634 = vmatpush.msra.mxu0 0.0
  %6635 = vmatpush.msra.mxu0 0.0
  %6636 = vmatpush.msra.mxu0 0.0
  %6637 = vmatpush.msra.mxu0 0.0
  %6638 = vmatpush.msra.mxu0 0.0
  %6639 = vmatpush.msra.mxu0 0.0
  %6640 = vmatpush.msra.mxu0 0.0
  %6641 = vmatpush.msra.mxu0 %v6561
  %6642 = vmatpush.msra.mxu0 %v6556
  %6643 = vmatmul.f32.gmra.mxu0 %v6576
  %v6644 = vpop.f32.mrf.mxu0
  %v6645 = vadd.f32 0.0, %v6644
  %6646 = vmatmul.f32.gmra.mxu0 %v6579
  %v6647 = vpop.f32.mrf.mxu0
  %v6648 = vadd.f32 0.0, %v6647
  %6649 = vdwg.mxu0
  %6650 = vmatpush.msra.mxu0 0.0
  %6651 = vmatpush.msra.mxu0 0.0
  %6652 = vmatpush.msra.mxu0 0.0
  %6653 = vmatpush.msra.mxu0 0.0
  %6654 = vmatpush.msra.mxu0 0.0
  %6655 = vmatpush.msra.mxu0 0.0
  %6656 = vmatpush.msra.mxu0 0.0
  %6657 = vmatpush.msra.mxu0 0.0
  %6658 = vmatpush.msra.mxu0 0.0
  %6659 = vmatpush.msra.mxu0 0.0
  %6660 = vmatpush.msra.mxu0 0.0
  %6661 = vmatpush.msra.mxu0 0.0
  %6662 = vmatpush.msra.mxu0 0.0
  %6663 = vmatpush.msra.mxu0 0.0
  %6664 = vmatpush.msra.mxu0 %v6562
  %6665 = vmatpush.msra.mxu0 %v6557
  %6666 = vmatmul.f32.gmra.mxu0 %v6576
  %v6667 = vpop.f32.mrf.mxu0
  %v6668 = vadd.f32 0.0, %v6667
  %6669 = vmatmul.f32.gmra.mxu0 %v6579
  %v6670 = vpop.f32.mrf.mxu0
  %v6671 = vadd.f32 0.0, %v6670
  %6672 = vdwg.mxu0
  %6673 = vmatpush.msra.mxu0 0.0
  %6674 = vmatpush.msra.mxu0 0.0
  %6675 = vmatpush.msra.mxu0 0.0
  %6676 = vmatpush.msra.mxu0 0.0
  %6677 = vmatpush.msra.mxu0 0.0
  %6678 = vmatpush.msra.mxu0 0.0
  %6679 = vmatpush.msra.mxu0 0.0
  %6680 = vmatpush.msra.mxu0 0.0
  %6681 = vmatpush.msra.mxu0 0.0
  %6682 = vmatpush.msra.mxu0 0.0
  %6683 = vmatpush.msra.mxu0 0.0
  %6684 = vmatpush.msra.mxu0 0.0
  %6685 = vmatpush.msra.mxu0 0.0
  %6686 = vmatpush.msra.mxu0 0.0
  %6687 = vmatpush.msra.mxu0 %v6563
  %6688 = vmatpush.msra.mxu0 %v6558
  %6689 = vmatmul.f32.gmra.mxu0 %v6576
  %v6690 = vpop.f32.mrf.mxu0
  %v6691 = vadd.f32 0.0, %v6690
  %6692 = vmatmul.f32.gmra.mxu0 %v6579
  %v6693 = vpop.f32.mrf.mxu0
  %v6694 = vadd.f32 0.0, %v6693
  %6695 = vdwg.mxu0
  %6696 = vrot.lane.b32.xlu0 %v6501, 104
  %v6697 = vpop.permute.xlu0 %6696
  %6698 = vrot.lane.b32.xlu0 %v6502, 104
  %v6699 = vpop.permute.xlu0 %6698
  %6700 = vrot.lane.b32.xlu0 %v6503, 104
  %v6701 = vpop.permute.xlu0 %6700
  %6702 = vrot.lane.b32.xlu0 %v6504, 104
  %v6703 = vpop.permute.xlu0 %6702
  %6704 = vrot.lane.b32.xlu0 %v6505, 104
  %v6705 = vpop.permute.xlu0 %6704
  %6706 = vrot.lane.b32.xlu0 %v6506, 104
  %v6707 = vpop.permute.xlu0 %6706
  %6708 = vrot.lane.b32.xlu0 %v6507, 104
  %v6709 = vpop.permute.xlu0 %6708
  %6710 = vrot.lane.b32.xlu0 %v6508, 104
  %v6711 = vpop.permute.xlu0 %6710
  %6712 = vrot.lane.b32.xlu0 %v6509, 104
  %v6713 = vpop.permute.xlu0 %6712
  %6714 = vrot.lane.b32.xlu0 %v6510, 104
  %v6715 = vpop.permute.xlu0 %6714
  %6716 = vrot.lane.b32.xlu0 %v6511, 104
  %v6717 = vpop.permute.xlu0 %6716
  %6718 = vrot.lane.b32.xlu0 %v6512, 104
  %v6719 = vpop.permute.xlu0 %6718
  %vm6720 = vcmask 850944
  %v6721 = vsel %vm6720, %v6697, %v6699
  %v6722 = vsel %vm6720, %v6699, %v6701
  %v6723 = vsel %vm6720, %v6701, %v6703
  %v6724 = vsel %vm6720, %v6703, %v6705
  %v6725 = vsel %vm6720, %v6705, %v6707
  %v6726 = vsel %vm6720, %v6709, %v6711
  %v6727 = vsel %vm6720, %v6711, %v6713
  %v6728 = vsel %vm6720, %v6713, %v6715
  %v6729 = vsel %vm6720, %v6715, %v6717
  %v6730 = vsel %vm6720, %v6717, %v6719
  %v6742 = vsel %vm6574, %v6513, 0
  %v6745 = vsel %vm6574, %v6514, 0
  %6747 = vmatpush.msra.mxu0 0.0
  %6748 = vmatpush.msra.mxu0 0.0
  %6749 = vmatpush.msra.mxu0 0.0
  %6750 = vmatpush.msra.mxu0 0.0
  %6751 = vmatpush.msra.mxu0 0.0
  %6752 = vmatpush.msra.mxu0 0.0
  %6753 = vmatpush.msra.mxu0 0.0
  %6754 = vmatpush.msra.mxu0 0.0
  %6755 = vmatpush.msra.mxu0 0.0
  %6756 = vmatpush.msra.mxu0 0.0
  %6757 = vmatpush.msra.mxu0 0.0
  %6758 = vmatpush.msra.mxu0 0.0
  %6759 = vmatpush.msra.mxu0 0.0
  %6760 = vmatpush.msra.mxu0 0.0
  %6761 = vmatpush.msra.mxu0 %v6726
  %6762 = vmatpush.msra.mxu0 %v6721
  %6763 = vmatmul.f32.gmra.mxu0 %v6742
  %v6764 = vpop.f32.mrf.mxu0
  %v6765 = vadd.f32 %v6599, %v6764
  %6766 = vmatmul.f32.gmra.mxu0 %v6745
  %v6767 = vpop.f32.mrf.mxu0
  %v6768 = vadd.f32 %v6602, %v6767
  %6769 = vdwg.mxu0
  %6770 = vmatpush.msra.mxu0 0.0
  %6771 = vmatpush.msra.mxu0 0.0
  %6772 = vmatpush.msra.mxu0 0.0
  %6773 = vmatpush.msra.mxu0 0.0
  %6774 = vmatpush.msra.mxu0 0.0
  %6775 = vmatpush.msra.mxu0 0.0
  %6776 = vmatpush.msra.mxu0 0.0
  %6777 = vmatpush.msra.mxu0 0.0
  %6778 = vmatpush.msra.mxu0 0.0
  %6779 = vmatpush.msra.mxu0 0.0
  %6780 = vmatpush.msra.mxu0 0.0
  %6781 = vmatpush.msra.mxu0 0.0
  %6782 = vmatpush.msra.mxu0 0.0
  %6783 = vmatpush.msra.mxu0 0.0
  %6784 = vmatpush.msra.mxu0 %v6727
  %6785 = vmatpush.msra.mxu0 %v6722
  %6786 = vmatmul.f32.gmra.mxu0 %v6742
  %v6787 = vpop.f32.mrf.mxu0
  %v6788 = vadd.f32 %v6622, %v6787
  %6789 = vmatmul.f32.gmra.mxu0 %v6745
  %v6790 = vpop.f32.mrf.mxu0
  %v6791 = vadd.f32 %v6625, %v6790
  %6792 = vdwg.mxu0
  %6793 = vmatpush.msra.mxu0 0.0
  %6794 = vmatpush.msra.mxu0 0.0
  %6795 = vmatpush.msra.mxu0 0.0
  %6796 = vmatpush.msra.mxu0 0.0
  %6797 = vmatpush.msra.mxu0 0.0
  %6798 = vmatpush.msra.mxu0 0.0
  %6799 = vmatpush.msra.mxu0 0.0
  %6800 = vmatpush.msra.mxu0 0.0
  %6801 = vmatpush.msra.mxu0 0.0
  %6802 = vmatpush.msra.mxu0 0.0
  %6803 = vmatpush.msra.mxu0 0.0
  %6804 = vmatpush.msra.mxu0 0.0
  %6805 = vmatpush.msra.mxu0 0.0
  %6806 = vmatpush.msra.mxu0 0.0
  %6807 = vmatpush.msra.mxu0 %v6728
  %6808 = vmatpush.msra.mxu0 %v6723
  %6809 = vmatmul.f32.gmra.mxu0 %v6742
  %v6810 = vpop.f32.mrf.mxu0
  %v6811 = vadd.f32 %v6645, %v6810
  %6812 = vmatmul.f32.gmra.mxu0 %v6745
  %v6813 = vpop.f32.mrf.mxu0
  %v6814 = vadd.f32 %v6648, %v6813
  %6815 = vdwg.mxu0
  %6816 = vmatpush.msra.mxu0 0.0
  %6817 = vmatpush.msra.mxu0 0.0
  %6818 = vmatpush.msra.mxu0 0.0
  %6819 = vmatpush.msra.mxu0 0.0
  %6820 = vmatpush.msra.mxu0 0.0
  %6821 = vmatpush.msra.mxu0 0.0
  %6822 = vmatpush.msra.mxu0 0.0
  %6823 = vmatpush.msra.mxu0 0.0
  %6824 = vmatpush.msra.mxu0 0.0
  %6825 = vmatpush.msra.mxu0 0.0
  %6826 = vmatpush.msra.mxu0 0.0
  %6827 = vmatpush.msra.mxu0 0.0
  %6828 = vmatpush.msra.mxu0 0.0
  %6829 = vmatpush.msra.mxu0 0.0
  %6830 = vmatpush.msra.mxu0 %v6729
  %6831 = vmatpush.msra.mxu0 %v6724
  %6832 = vmatmul.f32.gmra.mxu0 %v6742
  %v6833 = vpop.f32.mrf.mxu0
  %v6834 = vadd.f32 %v6668, %v6833
  %6835 = vmatmul.f32.gmra.mxu0 %v6745
  %v6836 = vpop.f32.mrf.mxu0
  %v6837 = vadd.f32 %v6671, %v6836
  %6838 = vdwg.mxu0
  %6839 = vmatpush.msra.mxu0 0.0
  %6840 = vmatpush.msra.mxu0 0.0
  %6841 = vmatpush.msra.mxu0 0.0
  %6842 = vmatpush.msra.mxu0 0.0
  %6843 = vmatpush.msra.mxu0 0.0
  %6844 = vmatpush.msra.mxu0 0.0
  %6845 = vmatpush.msra.mxu0 0.0
  %6846 = vmatpush.msra.mxu0 0.0
  %6847 = vmatpush.msra.mxu0 0.0
  %6848 = vmatpush.msra.mxu0 0.0
  %6849 = vmatpush.msra.mxu0 0.0
  %6850 = vmatpush.msra.mxu0 0.0
  %6851 = vmatpush.msra.mxu0 0.0
  %6852 = vmatpush.msra.mxu0 0.0
  %6853 = vmatpush.msra.mxu0 %v6730
  %6854 = vmatpush.msra.mxu0 %v6725
  %6855 = vmatmul.f32.gmra.mxu0 %v6742
  %v6856 = vpop.f32.mrf.mxu0
  %v6857 = vadd.f32 %v6691, %v6856
  %6858 = vmatmul.f32.gmra.mxu0 %v6745
  %v6859 = vpop.f32.mrf.mxu0
  %v6860 = vadd.f32 %v6694, %v6859
  %6861 = vdwg.mxu0
  %s6862 = scalar_lea.vmem %s3, 32
  %v6863 = vld [vmem:[%s6862] sm:$0xff]
  %v6864 = vld [vmem:[%s6862 + $0x8] sm:$0xff]
  %6865 = vrot.lane.b32.xlu0 %v6501, 102
  %v6866 = vpop.permute.xlu0 %6865
  %6867 = vrot.lane.b32.xlu0 %v6502, 102
  %v6868 = vpop.permute.xlu0 %6867
  %6869 = vrot.lane.b32.xlu0 %v6503, 102
  %v6870 = vpop.permute.xlu0 %6869
  %6871 = vrot.lane.b32.xlu0 %v6504, 102
  %v6872 = vpop.permute.xlu0 %6871
  %6873 = vrot.lane.b32.xlu0 %v6505, 102
  %v6874 = vpop.permute.xlu0 %6873
  %6875 = vrot.lane.b32.xlu0 %v6506, 102
  %v6876 = vpop.permute.xlu0 %6875
  %6877 = vrot.lane.b32.xlu0 %v6507, 102
  %v6878 = vpop.permute.xlu0 %6877
  %6879 = vrot.lane.b32.xlu0 %v6508, 102
  %v6880 = vpop.permute.xlu0 %6879
  %6881 = vrot.lane.b32.xlu0 %v6509, 102
  %v6882 = vpop.permute.xlu0 %6881
  %6883 = vrot.lane.b32.xlu0 %v6510, 102
  %v6884 = vpop.permute.xlu0 %6883
  %6885 = vrot.lane.b32.xlu0 %v6511, 102
  %v6886 = vpop.permute.xlu0 %6885
  %6887 = vrot.lane.b32.xlu0 %v6512, 102
  %v6888 = vpop.permute.xlu0 %6887
  %v6889 = vsel %vm2152, %v6866, %v6868
  %v6890 = vsel %vm2152, %v6868, %v6870
  %v6891 = vsel %vm2152, %v6870, %v6872
  %v6892 = vsel %vm2152, %v6872, %v6874
  %v6893 = vsel %vm2152, %v6874, %v6876
  %v6894 = vsel %vm2152, %v6878, %v6880
  %v6895 = vsel %vm2152, %v6880, %v6882
  %v6896 = vsel %vm2152, %v6882, %v6884
  %v6897 = vsel %vm2152, %v6884, %v6886
  %v6898 = vsel %vm2152, %v6886, %v6888
  %v6910 = vsel %vm6574, %v6863, 0
  %v6913 = vsel %vm6574, %v6864, 0
  %6915 = vmatpush.msra.mxu0 0.0
  %6916 = vmatpush.msra.mxu0 0.0
  %6917 = vmatpush.msra.mxu0 0.0
  %6918 = vmatpush.msra.mxu0 0.0
  %6919 = vmatpush.msra.mxu0 0.0
  %6920 = vmatpush.msra.mxu0 0.0
  %6921 = vmatpush.msra.mxu0 0.0
  %6922 = vmatpush.msra.mxu0 0.0
  %6923 = vmatpush.msra.mxu0 0.0
  %6924 = vmatpush.msra.mxu0 0.0
  %6925 = vmatpush.msra.mxu0 0.0
  %6926 = vmatpush.msra.mxu0 0.0
  %6927 = vmatpush.msra.mxu0 0.0
  %6928 = vmatpush.msra.mxu0 0.0
  %6929 = vmatpush.msra.mxu0 %v6894
  %6930 = vmatpush.msra.mxu0 %v6889
  %6931 = vmatmul.f32.gmra.mxu0 %v6910
  %v6932 = vpop.f32.mrf.mxu0
  %v6933 = vadd.f32 0.0, %v6932
  %6934 = vmatmul.f32.gmra.mxu0 %v6913
  %v6935 = vpop.f32.mrf.mxu0
  %v6936 = vadd.f32 0.0, %v6935
  %6937 = vdwg.mxu0
  %6938 = vmatpush.msra.mxu0 0.0
  %6939 = vmatpush.msra.mxu0 0.0
  %6940 = vmatpush.msra.mxu0 0.0
  %6941 = vmatpush.msra.mxu0 0.0
  %6942 = vmatpush.msra.mxu0 0.0
  %6943 = vmatpush.msra.mxu0 0.0
  %6944 = vmatpush.msra.mxu0 0.0
  %6945 = vmatpush.msra.mxu0 0.0
  %6946 = vmatpush.msra.mxu0 0.0
  %6947 = vmatpush.msra.mxu0 0.0
  %6948 = vmatpush.msra.mxu0 0.0
  %6949 = vmatpush.msra.mxu0 0.0
  %6950 = vmatpush.msra.mxu0 0.0
  %6951 = vmatpush.msra.mxu0 0.0
  %6952 = vmatpush.msra.mxu0 %v6895
  %6953 = vmatpush.msra.mxu0 %v6890
  %6954 = vmatmul.f32.gmra.mxu0 %v6910
  %v6955 = vpop.f32.mrf.mxu0
  %v6956 = vadd.f32 0.0, %v6955
  %6957 = vmatmul.f32.gmra.mxu0 %v6913
  %v6958 = vpop.f32.mrf.mxu0
  %v6959 = vadd.f32 0.0, %v6958
  %6960 = vdwg.mxu0
  %6961 = vmatpush.msra.mxu0 0.0
  %6962 = vmatpush.msra.mxu0 0.0
  %6963 = vmatpush.msra.mxu0 0.0
  %6964 = vmatpush.msra.mxu0 0.0
  %6965 = vmatpush.msra.mxu0 0.0
  %6966 = vmatpush.msra.mxu0 0.0
  %6967 = vmatpush.msra.mxu0 0.0
  %6968 = vmatpush.msra.mxu0 0.0
  %6969 = vmatpush.msra.mxu0 0.0
  %6970 = vmatpush.msra.mxu0 0.0
  %6971 = vmatpush.msra.mxu0 0.0
  %6972 = vmatpush.msra.mxu0 0.0
  %6973 = vmatpush.msra.mxu0 0.0
  %6974 = vmatpush.msra.mxu0 0.0
  %6975 = vmatpush.msra.mxu0 %v6896
  %6976 = vmatpush.msra.mxu0 %v6891
  %6977 = vmatmul.f32.gmra.mxu0 %v6910
  %v6978 = vpop.f32.mrf.mxu0
  %v6979 = vadd.f32 0.0, %v6978
  %6980 = vmatmul.f32.gmra.mxu0 %v6913
  %v6981 = vpop.f32.mrf.mxu0
  %v6982 = vadd.f32 0.0, %v6981
  %6983 = vdwg.mxu0
  %6984 = vmatpush.msra.mxu0 0.0
  %6985 = vmatpush.msra.mxu0 0.0
  %6986 = vmatpush.msra.mxu0 0.0
  %6987 = vmatpush.msra.mxu0 0.0
  %6988 = vmatpush.msra.mxu0 0.0
  %6989 = vmatpush.msra.mxu0 0.0
  %6990 = vmatpush.msra.mxu0 0.0
  %6991 = vmatpush.msra.mxu0 0.0
  %6992 = vmatpush.msra.mxu0 0.0
  %6993 = vmatpush.msra.mxu0 0.0
  %6994 = vmatpush.msra.mxu0 0.0
  %6995 = vmatpush.msra.mxu0 0.0
  %6996 = vmatpush.msra.mxu0 0.0
  %6997 = vmatpush.msra.mxu0 0.0
  %6998 = vmatpush.msra.mxu0 %v6897
  %6999 = vmatpush.msra.mxu0 %v6892
  %7000 = vmatmul.f32.gmra.mxu0 %v6910
  %v7001 = vpop.f32.mrf.mxu0
  %v7002 = vadd.f32 0.0, %v7001
  %7003 = vmatmul.f32.gmra.mxu0 %v6913
  %v7004 = vpop.f32.mrf.mxu0
  %v7005 = vadd.f32 0.0, %v7004
  %7006 = vdwg.mxu0
  %7007 = vmatpush.msra.mxu0 0.0
  %7008 = vmatpush.msra.mxu0 0.0
  %7009 = vmatpush.msra.mxu0 0.0
  %7010 = vmatpush.msra.mxu0 0.0
  %7011 = vmatpush.msra.mxu0 0.0
  %7012 = vmatpush.msra.mxu0 0.0
  %7013 = vmatpush.msra.mxu0 0.0
  %7014 = vmatpush.msra.mxu0 0.0
  %7015 = vmatpush.msra.mxu0 0.0
  %7016 = vmatpush.msra.mxu0 0.0
  %7017 = vmatpush.msra.mxu0 0.0
  %7018 = vmatpush.msra.mxu0 0.0
  %7019 = vmatpush.msra.mxu0 0.0
  %7020 = vmatpush.msra.mxu0 0.0
  %7021 = vmatpush.msra.mxu0 %v6898
  %7022 = vmatpush.msra.mxu0 %v6893
  %7023 = vmatmul.f32.gmra.mxu0 %v6910
  %v7024 = vpop.f32.mrf.mxu0
  %v7025 = vadd.f32 0.0, %v7024
  %7026 = vmatmul.f32.gmra.mxu0 %v6913
  %v7027 = vpop.f32.mrf.mxu0
  %v7028 = vadd.f32 0.0, %v7027
  %7029 = vdwg.mxu0
  %v7030 = vadd.f32 %v6765, %v6933
  %v7031 = vadd.f32 %v6788, %v6956
  %v7032 = vadd.f32 %v6811, %v6979
  %v7033 = vadd.f32 %v6834, %v7002
  %v7034 = vadd.f32 %v6857, %v7025
  %v7035 = vadd.f32 %v6768, %v6936
  %v7036 = vadd.f32 %v6791, %v6959
  %v7037 = vadd.f32 %v6814, %v6982
  %v7038 = vadd.f32 %v6837, %v7005
  %v7039 = vadd.f32 %v6860, %v7028
  %s7040 = scalar_lea.vmem %s3, 48
  %v7041 = vld [vmem:[%s7040] sm:$0xff]
  %v7042 = vld [vmem:[%s7040 + $0x8] sm:$0xff]
  %7043 = vrot.lane.b32.xlu0 %v6501, 101
  %v7044 = vpop.permute.xlu0 %7043
  %7045 = vrot.lane.b32.xlu0 %v6502, 101
  %v7046 = vpop.permute.xlu0 %7045
  %7047 = vrot.lane.b32.xlu0 %v6503, 101
  %v7048 = vpop.permute.xlu0 %7047
  %7049 = vrot.lane.b32.xlu0 %v6504, 101
  %v7050 = vpop.permute.xlu0 %7049
  %7051 = vrot.lane.b32.xlu0 %v6505, 101
  %v7052 = vpop.permute.xlu0 %7051
  %7053 = vrot.lane.b32.xlu0 %v6506, 101
  %v7054 = vpop.permute.xlu0 %7053
  %7055 = vrot.lane.b32.xlu0 %v6507, 101
  %v7056 = vpop.permute.xlu0 %7055
  %7057 = vrot.lane.b32.xlu0 %v6508, 101
  %v7058 = vpop.permute.xlu0 %7057
  %7059 = vrot.lane.b32.xlu0 %v6509, 101
  %v7060 = vpop.permute.xlu0 %7059
  %7061 = vrot.lane.b32.xlu0 %v6510, 101
  %v7062 = vpop.permute.xlu0 %7061
  %7063 = vrot.lane.b32.xlu0 %v6511, 101
  %v7064 = vpop.permute.xlu0 %7063
  %7065 = vrot.lane.b32.xlu0 %v6512, 101
  %v7066 = vpop.permute.xlu0 %7065
  %v7067 = vsel %vm2375, %v7044, %v7046
  %v7068 = vsel %vm2375, %v7046, %v7048
  %v7069 = vsel %vm2375, %v7048, %v7050
  %v7070 = vsel %vm2375, %v7050, %v7052
  %v7071 = vsel %vm2375, %v7052, %v7054
  %v7072 = vsel %vm2375, %v7056, %v7058
  %v7073 = vsel %vm2375, %v7058, %v7060
  %v7074 = vsel %vm2375, %v7060, %v7062
  %v7075 = vsel %vm2375, %v7062, %v7064
  %v7076 = vsel %vm2375, %v7064, %v7066
  %v7088 = vsel %vm6574, %v7041, 0
  %v7091 = vsel %vm6574, %v7042, 0
  %7093 = vmatpush.msra.mxu0 0.0
  %7094 = vmatpush.msra.mxu0 0.0
  %7095 = vmatpush.msra.mxu0 0.0
  %7096 = vmatpush.msra.mxu0 0.0
  %7097 = vmatpush.msra.mxu0 0.0
  %7098 = vmatpush.msra.mxu0 0.0
  %7099 = vmatpush.msra.mxu0 0.0
  %7100 = vmatpush.msra.mxu0 0.0
  %7101 = vmatpush.msra.mxu0 0.0
  %7102 = vmatpush.msra.mxu0 0.0
  %7103 = vmatpush.msra.mxu0 0.0
  %7104 = vmatpush.msra.mxu0 0.0
  %7105 = vmatpush.msra.mxu0 0.0
  %7106 = vmatpush.msra.mxu0 0.0
  %7107 = vmatpush.msra.mxu0 %v7072
  %7108 = vmatpush.msra.mxu0 %v7067
  %7109 = vmatmul.f32.gmra.mxu0 %v7088
  %v7110 = vpop.f32.mrf.mxu0
  %v7111 = vadd.f32 0.0, %v7110
  %7112 = vmatmul.f32.gmra.mxu0 %v7091
  %v7113 = vpop.f32.mrf.mxu0
  %v7114 = vadd.f32 0.0, %v7113
  %7115 = vdwg.mxu0
  %7116 = vmatpush.msra.mxu0 0.0
  %7117 = vmatpush.msra.mxu0 0.0
  %7118 = vmatpush.msra.mxu0 0.0
  %7119 = vmatpush.msra.mxu0 0.0
  %7120 = vmatpush.msra.mxu0 0.0
  %7121 = vmatpush.msra.mxu0 0.0
  %7122 = vmatpush.msra.mxu0 0.0
  %7123 = vmatpush.msra.mxu0 0.0
  %7124 = vmatpush.msra.mxu0 0.0
  %7125 = vmatpush.msra.mxu0 0.0
  %7126 = vmatpush.msra.mxu0 0.0
  %7127 = vmatpush.msra.mxu0 0.0
  %7128 = vmatpush.msra.mxu0 0.0
  %7129 = vmatpush.msra.mxu0 0.0
  %7130 = vmatpush.msra.mxu0 %v7073
  %7131 = vmatpush.msra.mxu0 %v7068
  %7132 = vmatmul.f32.gmra.mxu0 %v7088
  %v7133 = vpop.f32.mrf.mxu0
  %v7134 = vadd.f32 0.0, %v7133
  %7135 = vmatmul.f32.gmra.mxu0 %v7091
  %v7136 = vpop.f32.mrf.mxu0
  %v7137 = vadd.f32 0.0, %v7136
  %7138 = vdwg.mxu0
  %7139 = vmatpush.msra.mxu0 0.0
  %7140 = vmatpush.msra.mxu0 0.0
  %7141 = vmatpush.msra.mxu0 0.0
  %7142 = vmatpush.msra.mxu0 0.0
  %7143 = vmatpush.msra.mxu0 0.0
  %7144 = vmatpush.msra.mxu0 0.0
  %7145 = vmatpush.msra.mxu0 0.0
  %7146 = vmatpush.msra.mxu0 0.0
  %7147 = vmatpush.msra.mxu0 0.0
  %7148 = vmatpush.msra.mxu0 0.0
  %7149 = vmatpush.msra.mxu0 0.0
  %7150 = vmatpush.msra.mxu0 0.0
  %7151 = vmatpush.msra.mxu0 0.0
  %7152 = vmatpush.msra.mxu0 0.0
  %7153 = vmatpush.msra.mxu0 %v7074
  %7154 = vmatpush.msra.mxu0 %v7069
  %7155 = vmatmul.f32.gmra.mxu0 %v7088
  %v7156 = vpop.f32.mrf.mxu0
  %v7157 = vadd.f32 0.0, %v7156
  %7158 = vmatmul.f32.gmra.mxu0 %v7091
  %v7159 = vpop.f32.mrf.mxu0
  %v7160 = vadd.f32 0.0, %v7159
  %7161 = vdwg.mxu0
  %7162 = vmatpush.msra.mxu0 0.0
  %7163 = vmatpush.msra.mxu0 0.0
  %7164 = vmatpush.msra.mxu0 0.0
  %7165 = vmatpush.msra.mxu0 0.0
  %7166 = vmatpush.msra.mxu0 0.0
  %7167 = vmatpush.msra.mxu0 0.0
  %7168 = vmatpush.msra.mxu0 0.0
  %7169 = vmatpush.msra.mxu0 0.0
  %7170 = vmatpush.msra.mxu0 0.0
  %7171 = vmatpush.msra.mxu0 0.0
  %7172 = vmatpush.msra.mxu0 0.0
  %7173 = vmatpush.msra.mxu0 0.0
  %7174 = vmatpush.msra.mxu0 0.0
  %7175 = vmatpush.msra.mxu0 0.0
  %7176 = vmatpush.msra.mxu0 %v7075
  %7177 = vmatpush.msra.mxu0 %v7070
  %7178 = vmatmul.f32.gmra.mxu0 %v7088
  %v7179 = vpop.f32.mrf.mxu0
  %v7180 = vadd.f32 0.0, %v7179
  %7181 = vmatmul.f32.gmra.mxu0 %v7091
  %v7182 = vpop.f32.mrf.mxu0
  %v7183 = vadd.f32 0.0, %v7182
  %7184 = vdwg.mxu0
  %7185 = vmatpush.msra.mxu0 0.0
  %7186 = vmatpush.msra.mxu0 0.0
  %7187 = vmatpush.msra.mxu0 0.0
  %7188 = vmatpush.msra.mxu0 0.0
  %7189 = vmatpush.msra.mxu0 0.0
  %7190 = vmatpush.msra.mxu0 0.0
  %7191 = vmatpush.msra.mxu0 0.0
  %7192 = vmatpush.msra.mxu0 0.0
  %7193 = vmatpush.msra.mxu0 0.0
  %7194 = vmatpush.msra.mxu0 0.0
  %7195 = vmatpush.msra.mxu0 0.0
  %7196 = vmatpush.msra.mxu0 0.0
  %7197 = vmatpush.msra.mxu0 0.0
  %7198 = vmatpush.msra.mxu0 0.0
  %7199 = vmatpush.msra.mxu0 %v7076
  %7200 = vmatpush.msra.mxu0 %v7071
  %7201 = vmatmul.f32.gmra.mxu0 %v7088
  %v7202 = vpop.f32.mrf.mxu0
  %v7203 = vadd.f32 0.0, %v7202
  %7204 = vmatmul.f32.gmra.mxu0 %v7091
  %v7205 = vpop.f32.mrf.mxu0
  %v7206 = vadd.f32 0.0, %v7205
  %7207 = vdwg.mxu0
  %v7208 = vadd.f32 %v7030, %v7111
  %v7209 = vadd.f32 %v7031, %v7134
  %v7210 = vadd.f32 %v7032, %v7157
  %v7211 = vadd.f32 %v7033, %v7180
  %v7212 = vadd.f32 %v7034, %v7203
  %v7213 = vadd.f32 %v7035, %v7114
  %v7214 = vadd.f32 %v7036, %v7137
  %v7215 = vadd.f32 %v7037, %v7160
  %v7216 = vadd.f32 %v7038, %v7183
  %v7217 = vadd.f32 %v7039, %v7206
  %s7218 = scalar_lea.vmem %s3, 64
  %v7219 = vld [vmem:[%s7218] sm:$0xff]
  %v7220 = vld [vmem:[%s7218 + $0x8] sm:$0xff]
  %7221 = vrot.lane.b32.xlu0 %v6501, 100
  %v7222 = vpop.permute.xlu0 %7221
  %7223 = vrot.lane.b32.xlu0 %v6502, 100
  %v7224 = vpop.permute.xlu0 %7223
  %7225 = vrot.lane.b32.xlu0 %v6503, 100
  %v7226 = vpop.permute.xlu0 %7225
  %7227 = vrot.lane.b32.xlu0 %v6504, 100
  %v7228 = vpop.permute.xlu0 %7227
  %7229 = vrot.lane.b32.xlu0 %v6505, 100
  %v7230 = vpop.permute.xlu0 %7229
  %7231 = vrot.lane.b32.xlu0 %v6506, 100
  %v7232 = vpop.permute.xlu0 %7231
  %7233 = vrot.lane.b32.xlu0 %v6507, 100
  %v7234 = vpop.permute.xlu0 %7233
  %7235 = vrot.lane.b32.xlu0 %v6508, 100
  %v7236 = vpop.permute.xlu0 %7235
  %7237 = vrot.lane.b32.xlu0 %v6509, 100
  %v7238 = vpop.permute.xlu0 %7237
  %7239 = vrot.lane.b32.xlu0 %v6510, 100
  %v7240 = vpop.permute.xlu0 %7239
  %7241 = vrot.lane.b32.xlu0 %v6511, 100
  %v7242 = vpop.permute.xlu0 %7241
  %7243 = vrot.lane.b32.xlu0 %v6512, 100
  %v7244 = vpop.permute.xlu0 %7243
  %v7245 = vsel %vm2598, %v7222, %v7224
  %v7246 = vsel %vm2598, %v7224, %v7226
  %v7247 = vsel %vm2598, %v7226, %v7228
  %v7248 = vsel %vm2598, %v7228, %v7230
  %v7249 = vsel %vm2598, %v7230, %v7232
  %v7250 = vsel %vm2598, %v7234, %v7236
  %v7251 = vsel %vm2598, %v7236, %v7238
  %v7252 = vsel %vm2598, %v7238, %v7240
  %v7253 = vsel %vm2598, %v7240, %v7242
  %v7254 = vsel %vm2598, %v7242, %v7244
  %v7266 = vsel %vm6574, %v7219, 0
  %v7269 = vsel %vm6574, %v7220, 0
  %7271 = vmatpush.msra.mxu0 0.0
  %7272 = vmatpush.msra.mxu0 0.0
  %7273 = vmatpush.msra.mxu0 0.0
  %7274 = vmatpush.msra.mxu0 0.0
  %7275 = vmatpush.msra.mxu0 0.0
  %7276 = vmatpush.msra.mxu0 0.0
  %7277 = vmatpush.msra.mxu0 0.0
  %7278 = vmatpush.msra.mxu0 0.0
  %7279 = vmatpush.msra.mxu0 0.0
  %7280 = vmatpush.msra.mxu0 0.0
  %7281 = vmatpush.msra.mxu0 0.0
  %7282 = vmatpush.msra.mxu0 0.0
  %7283 = vmatpush.msra.mxu0 0.0
  %7284 = vmatpush.msra.mxu0 0.0
  %7285 = vmatpush.msra.mxu0 %v7250
  %7286 = vmatpush.msra.mxu0 %v7245
  %7287 = vmatmul.f32.gmra.mxu0 %v7266
  %v7288 = vpop.f32.mrf.mxu0
  %v7289 = vadd.f32 0.0, %v7288
  %7290 = vmatmul.f32.gmra.mxu0 %v7269
  %v7291 = vpop.f32.mrf.mxu0
  %v7292 = vadd.f32 0.0, %v7291
  %7293 = vdwg.mxu0
  %7294 = vmatpush.msra.mxu0 0.0
  %7295 = vmatpush.msra.mxu0 0.0
  %7296 = vmatpush.msra.mxu0 0.0
  %7297 = vmatpush.msra.mxu0 0.0
  %7298 = vmatpush.msra.mxu0 0.0
  %7299 = vmatpush.msra.mxu0 0.0
  %7300 = vmatpush.msra.mxu0 0.0
  %7301 = vmatpush.msra.mxu0 0.0
  %7302 = vmatpush.msra.mxu0 0.0
  %7303 = vmatpush.msra.mxu0 0.0
  %7304 = vmatpush.msra.mxu0 0.0
  %7305 = vmatpush.msra.mxu0 0.0
  %7306 = vmatpush.msra.mxu0 0.0
  %7307 = vmatpush.msra.mxu0 0.0
  %7308 = vmatpush.msra.mxu0 %v7251
  %7309 = vmatpush.msra.mxu0 %v7246
  %7310 = vmatmul.f32.gmra.mxu0 %v7266
  %v7311 = vpop.f32.mrf.mxu0
  %v7312 = vadd.f32 0.0, %v7311
  %7313 = vmatmul.f32.gmra.mxu0 %v7269
  %v7314 = vpop.f32.mrf.mxu0
  %v7315 = vadd.f32 0.0, %v7314
  %7316 = vdwg.mxu0
  %7317 = vmatpush.msra.mxu0 0.0
  %7318 = vmatpush.msra.mxu0 0.0
  %7319 = vmatpush.msra.mxu0 0.0
  %7320 = vmatpush.msra.mxu0 0.0
  %7321 = vmatpush.msra.mxu0 0.0
  %7322 = vmatpush.msra.mxu0 0.0
  %7323 = vmatpush.msra.mxu0 0.0
  %7324 = vmatpush.msra.mxu0 0.0
  %7325 = vmatpush.msra.mxu0 0.0
  %7326 = vmatpush.msra.mxu0 0.0
  %7327 = vmatpush.msra.mxu0 0.0
  %7328 = vmatpush.msra.mxu0 0.0
  %7329 = vmatpush.msra.mxu0 0.0
  %7330 = vmatpush.msra.mxu0 0.0
  %7331 = vmatpush.msra.mxu0 %v7252
  %7332 = vmatpush.msra.mxu0 %v7247
  %7333 = vmatmul.f32.gmra.mxu0 %v7266
  %v7334 = vpop.f32.mrf.mxu0
  %v7335 = vadd.f32 0.0, %v7334
  %7336 = vmatmul.f32.gmra.mxu0 %v7269
  %v7337 = vpop.f32.mrf.mxu0
  %v7338 = vadd.f32 0.0, %v7337
  %7339 = vdwg.mxu0
  %7340 = vmatpush.msra.mxu0 0.0
  %7341 = vmatpush.msra.mxu0 0.0
  %7342 = vmatpush.msra.mxu0 0.0
  %7343 = vmatpush.msra.mxu0 0.0
  %7344 = vmatpush.msra.mxu0 0.0
  %7345 = vmatpush.msra.mxu0 0.0
  %7346 = vmatpush.msra.mxu0 0.0
  %7347 = vmatpush.msra.mxu0 0.0
  %7348 = vmatpush.msra.mxu0 0.0
  %7349 = vmatpush.msra.mxu0 0.0
  %7350 = vmatpush.msra.mxu0 0.0
  %7351 = vmatpush.msra.mxu0 0.0
  %7352 = vmatpush.msra.mxu0 0.0
  %7353 = vmatpush.msra.mxu0 0.0
  %7354 = vmatpush.msra.mxu0 %v7253
  %7355 = vmatpush.msra.mxu0 %v7248
  %7356 = vmatmul.f32.gmra.mxu0 %v7266
  %v7357 = vpop.f32.mrf.mxu0
  %v7358 = vadd.f32 0.0, %v7357
  %7359 = vmatmul.f32.gmra.mxu0 %v7269
  %v7360 = vpop.f32.mrf.mxu0
  %v7361 = vadd.f32 0.0, %v7360
  %7362 = vdwg.mxu0
  %7363 = vmatpush.msra.mxu0 0.0
  %7364 = vmatpush.msra.mxu0 0.0
  %7365 = vmatpush.msra.mxu0 0.0
  %7366 = vmatpush.msra.mxu0 0.0
  %7367 = vmatpush.msra.mxu0 0.0
  %7368 = vmatpush.msra.mxu0 0.0
  %7369 = vmatpush.msra.mxu0 0.0
  %7370 = vmatpush.msra.mxu0 0.0
  %7371 = vmatpush.msra.mxu0 0.0
  %7372 = vmatpush.msra.mxu0 0.0
  %7373 = vmatpush.msra.mxu0 0.0
  %7374 = vmatpush.msra.mxu0 0.0
  %7375 = vmatpush.msra.mxu0 0.0
  %7376 = vmatpush.msra.mxu0 0.0
  %7377 = vmatpush.msra.mxu0 %v7254
  %7378 = vmatpush.msra.mxu0 %v7249
  %7379 = vmatmul.f32.gmra.mxu0 %v7266
  %v7380 = vpop.f32.mrf.mxu0
  %v7381 = vadd.f32 0.0, %v7380
  %7382 = vmatmul.f32.gmra.mxu0 %v7269
  %v7383 = vpop.f32.mrf.mxu0
  %v7384 = vadd.f32 0.0, %v7383
  %7385 = vdwg.mxu0
  %v7386 = vadd.f32 %v7208, %v7289
  %v7387 = vadd.f32 %v7209, %v7312
  %v7388 = vadd.f32 %v7210, %v7335
  %v7389 = vadd.f32 %v7211, %v7358
  %v7390 = vadd.f32 %v7212, %v7381
  %v7391 = vadd.f32 %v7213, %v7292
  %v7392 = vadd.f32 %v7214, %v7315
  %v7393 = vadd.f32 %v7215, %v7338
  %v7394 = vadd.f32 %v7216, %v7361
  %v7395 = vadd.f32 %v7217, %v7384
  %s7396 = scalar_lea.vmem %s3, 80
  %v7397 = vld [vmem:[%s7396] sm:$0xff]
  %v7398 = vld [vmem:[%s7396 + $0x8] sm:$0xff]
  %7399 = vrot.lane.b32.xlu0 %v6501, 79
  %v7400 = vpop.permute.xlu0 %7399
  %7401 = vrot.lane.b32.xlu0 %v6502, 79
  %v7402 = vpop.permute.xlu0 %7401
  %7403 = vrot.lane.b32.xlu0 %v6503, 79
  %v7404 = vpop.permute.xlu0 %7403
  %7405 = vrot.lane.b32.xlu0 %v6504, 79
  %v7406 = vpop.permute.xlu0 %7405
  %7407 = vrot.lane.b32.xlu0 %v6505, 79
  %v7408 = vpop.permute.xlu0 %7407
  %7409 = vrot.lane.b32.xlu0 %v6506, 79
  %v7410 = vpop.permute.xlu0 %7409
  %7411 = vrot.lane.b32.xlu0 %v6507, 79
  %v7412 = vpop.permute.xlu0 %7411
  %7413 = vrot.lane.b32.xlu0 %v6508, 79
  %v7414 = vpop.permute.xlu0 %7413
  %7415 = vrot.lane.b32.xlu0 %v6509, 79
  %v7416 = vpop.permute.xlu0 %7415
  %7417 = vrot.lane.b32.xlu0 %v6510, 79
  %v7418 = vpop.permute.xlu0 %7417
  %7419 = vrot.lane.b32.xlu0 %v6511, 79
  %v7420 = vpop.permute.xlu0 %7419
  %7421 = vrot.lane.b32.xlu0 %v6512, 79
  %v7422 = vpop.permute.xlu0 %7421
  %vm7423 = vcmask 646144
  %v7424 = vsel %vm7423, %v7400, %v7402
  %v7425 = vsel %vm7423, %v7402, %v7404
  %v7426 = vsel %vm7423, %v7404, %v7406
  %v7427 = vsel %vm7423, %v7406, %v7408
  %v7428 = vsel %vm7423, %v7408, %v7410
  %v7429 = vsel %vm7423, %v7412, %v7414
  %v7430 = vsel %vm7423, %v7414, %v7416
  %v7431 = vsel %vm7423, %v7416, %v7418
  %v7432 = vsel %vm7423, %v7418, %v7420
  %v7433 = vsel %vm7423, %v7420, %v7422
  %v7445 = vsel %vm6574, %v7397, 0
  %v7448 = vsel %vm6574, %v7398, 0
  %7450 = vmatpush.msra.mxu0 0.0
  %7451 = vmatpush.msra.mxu0 0.0
  %7452 = vmatpush.msra.mxu0 0.0
  %7453 = vmatpush.msra.mxu0 0.0
  %7454 = vmatpush.msra.mxu0 0.0
  %7455 = vmatpush.msra.mxu0 0.0
  %7456 = vmatpush.msra.mxu0 0.0
  %7457 = vmatpush.msra.mxu0 0.0
  %7458 = vmatpush.msra.mxu0 0.0
  %7459 = vmatpush.msra.mxu0 0.0
  %7460 = vmatpush.msra.mxu0 0.0
  %7461 = vmatpush.msra.mxu0 0.0
  %7462 = vmatpush.msra.mxu0 0.0
  %7463 = vmatpush.msra.mxu0 0.0
  %7464 = vmatpush.msra.mxu0 %v7429
  %7465 = vmatpush.msra.mxu0 %v7424
  %7466 = vmatmul.f32.gmra.mxu0 %v7445
  %v7467 = vpop.f32.mrf.mxu0
  %v7468 = vadd.f32 0.0, %v7467
  %7469 = vmatmul.f32.gmra.mxu0 %v7448
  %v7470 = vpop.f32.mrf.mxu0
  %v7471 = vadd.f32 0.0, %v7470
  %7472 = vdwg.mxu0
  %7473 = vmatpush.msra.mxu0 0.0
  %7474 = vmatpush.msra.mxu0 0.0
  %7475 = vmatpush.msra.mxu0 0.0
  %7476 = vmatpush.msra.mxu0 0.0
  %7477 = vmatpush.msra.mxu0 0.0
  %7478 = vmatpush.msra.mxu0 0.0
  %7479 = vmatpush.msra.mxu0 0.0
  %7480 = vmatpush.msra.mxu0 0.0
  %7481 = vmatpush.msra.mxu0 0.0
  %7482 = vmatpush.msra.mxu0 0.0
  %7483 = vmatpush.msra.mxu0 0.0
  %7484 = vmatpush.msra.mxu0 0.0
  %7485 = vmatpush.msra.mxu0 0.0
  %7486 = vmatpush.msra.mxu0 0.0
  %7487 = vmatpush.msra.mxu0 %v7430
  %7488 = vmatpush.msra.mxu0 %v7425
  %7489 = vmatmul.f32.gmra.mxu0 %v7445
  %v7490 = vpop.f32.mrf.mxu0
  %v7491 = vadd.f32 0.0, %v7490
  %7492 = vmatmul.f32.gmra.mxu0 %v7448
  %v7493 = vpop.f32.mrf.mxu0
  %v7494 = vadd.f32 0.0, %v7493
  %7495 = vdwg.mxu0
  %7496 = vmatpush.msra.mxu0 0.0
  %7497 = vmatpush.msra.mxu0 0.0
  %7498 = vmatpush.msra.mxu0 0.0
  %7499 = vmatpush.msra.mxu0 0.0
  %7500 = vmatpush.msra.mxu0 0.0
  %7501 = vmatpush.msra.mxu0 0.0
  %7502 = vmatpush.msra.mxu0 0.0
  %7503 = vmatpush.msra.mxu0 0.0
  %7504 = vmatpush.msra.mxu0 0.0
  %7505 = vmatpush.msra.mxu0 0.0
  %7506 = vmatpush.msra.mxu0 0.0
  %7507 = vmatpush.msra.mxu0 0.0
  %7508 = vmatpush.msra.mxu0 0.0
  %7509 = vmatpush.msra.mxu0 0.0
  %7510 = vmatpush.msra.mxu0 %v7431
  %7511 = vmatpush.msra.mxu0 %v7426
  %7512 = vmatmul.f32.gmra.mxu0 %v7445
  %v7513 = vpop.f32.mrf.mxu0
  %v7514 = vadd.f32 0.0, %v7513
  %7515 = vmatmul.f32.gmra.mxu0 %v7448
  %v7516 = vpop.f32.mrf.mxu0
  %v7517 = vadd.f32 0.0, %v7516
  %7518 = vdwg.mxu0
  %7519 = vmatpush.msra.mxu0 0.0
  %7520 = vmatpush.msra.mxu0 0.0
  %7521 = vmatpush.msra.mxu0 0.0
  %7522 = vmatpush.msra.mxu0 0.0
  %7523 = vmatpush.msra.mxu0 0.0
  %7524 = vmatpush.msra.mxu0 0.0
  %7525 = vmatpush.msra.mxu0 0.0
  %7526 = vmatpush.msra.mxu0 0.0
  %7527 = vmatpush.msra.mxu0 0.0
  %7528 = vmatpush.msra.mxu0 0.0
  %7529 = vmatpush.msra.mxu0 0.0
  %7530 = vmatpush.msra.mxu0 0.0
  %7531 = vmatpush.msra.mxu0 0.0
  %7532 = vmatpush.msra.mxu0 0.0
  %7533 = vmatpush.msra.mxu0 %v7432
  %7534 = vmatpush.msra.mxu0 %v7427
  %7535 = vmatmul.f32.gmra.mxu0 %v7445
  %v7536 = vpop.f32.mrf.mxu0
  %v7537 = vadd.f32 0.0, %v7536
  %7538 = vmatmul.f32.gmra.mxu0 %v7448
  %v7539 = vpop.f32.mrf.mxu0
  %v7540 = vadd.f32 0.0, %v7539
  %7541 = vdwg.mxu0
  %7542 = vmatpush.msra.mxu0 0.0
  %7543 = vmatpush.msra.mxu0 0.0
  %7544 = vmatpush.msra.mxu0 0.0
  %7545 = vmatpush.msra.mxu0 0.0
  %7546 = vmatpush.msra.mxu0 0.0
  %7547 = vmatpush.msra.mxu0 0.0
  %7548 = vmatpush.msra.mxu0 0.0
  %7549 = vmatpush.msra.mxu0 0.0
  %7550 = vmatpush.msra.mxu0 0.0
  %7551 = vmatpush.msra.mxu0 0.0
  %7552 = vmatpush.msra.mxu0 0.0
  %7553 = vmatpush.msra.mxu0 0.0
  %7554 = vmatpush.msra.mxu0 0.0
  %7555 = vmatpush.msra.mxu0 0.0
  %7556 = vmatpush.msra.mxu0 %v7433
  %7557 = vmatpush.msra.mxu0 %v7428
  %7558 = vmatmul.f32.gmra.mxu0 %v7445
  %v7559 = vpop.f32.mrf.mxu0
  %v7560 = vadd.f32 0.0, %v7559
  %7561 = vmatmul.f32.gmra.mxu0 %v7448
  %v7562 = vpop.f32.mrf.mxu0
  %v7563 = vadd.f32 0.0, %v7562
  %7564 = vdwg.mxu0
  %v7565 = vadd.f32 %v7386, %v7468
  %v7566 = vadd.f32 %v7387, %v7491
  %v7567 = vadd.f32 %v7388, %v7514
  %v7568 = vadd.f32 %v7389, %v7537
  %v7569 = vadd.f32 %v7390, %v7560
  %v7570 = vadd.f32 %v7391, %v7471
  %v7571 = vadd.f32 %v7392, %v7494
  %v7572 = vadd.f32 %v7393, %v7517
  %v7573 = vadd.f32 %v7394, %v7540
  %v7574 = vadd.f32 %v7395, %v7563
  %s7575 = scalar_lea.vmem %s3, 96
  %v7576 = vld [vmem:[%s7575] sm:$0xff]
  %v7577 = vld [vmem:[%s7575 + $0x8] sm:$0xff]
  %7578 = vrot.lane.b32.xlu0 %v6501, 78
  %v7579 = vpop.permute.xlu0 %7578
  %7580 = vrot.lane.b32.xlu0 %v6502, 78
  %v7581 = vpop.permute.xlu0 %7580
  %7582 = vrot.lane.b32.xlu0 %v6503, 78
  %v7583 = vpop.permute.xlu0 %7582
  %7584 = vrot.lane.b32.xlu0 %v6504, 78
  %v7585 = vpop.permute.xlu0 %7584
  %7586 = vrot.lane.b32.xlu0 %v6505, 78
  %v7587 = vpop.permute.xlu0 %7586
  %7588 = vrot.lane.b32.xlu0 %v6506, 78
  %v7589 = vpop.permute.xlu0 %7588
  %7590 = vrot.lane.b32.xlu0 %v6507, 78
  %v7591 = vpop.permute.xlu0 %7590
  %7592 = vrot.lane.b32.xlu0 %v6508, 78
  %v7593 = vpop.permute.xlu0 %7592
  %7594 = vrot.lane.b32.xlu0 %v6509, 78
  %v7595 = vpop.permute.xlu0 %7594
  %7596 = vrot.lane.b32.xlu0 %v6510, 78
  %v7597 = vpop.permute.xlu0 %7596
  %7598 = vrot.lane.b32.xlu0 %v6511, 78
  %v7599 = vpop.permute.xlu0 %7598
  %7600 = vrot.lane.b32.xlu0 %v6512, 78
  %v7601 = vpop.permute.xlu0 %7600
  %v7602 = vsel %vm3044, %v7579, %v7581
  %v7603 = vsel %vm3044, %v7581, %v7583
  %v7604 = vsel %vm3044, %v7583, %v7585
  %v7605 = vsel %vm3044, %v7585, %v7587
  %v7606 = vsel %vm3044, %v7587, %v7589
  %v7607 = vsel %vm3044, %v7591, %v7593
  %v7608 = vsel %vm3044, %v7593, %v7595
  %v7609 = vsel %vm3044, %v7595, %v7597
  %v7610 = vsel %vm3044, %v7597, %v7599
  %v7611 = vsel %vm3044, %v7599, %v7601
  %v7623 = vsel %vm6574, %v7576, 0
  %v7626 = vsel %vm6574, %v7577, 0
  %7628 = vmatpush.msra.mxu0 0.0
  %7629 = vmatpush.msra.mxu0 0.0
  %7630 = vmatpush.msra.mxu0 0.0
  %7631 = vmatpush.msra.mxu0 0.0
  %7632 = vmatpush.msra.mxu0 0.0
  %7633 = vmatpush.msra.mxu0 0.0
  %7634 = vmatpush.msra.mxu0 0.0
  %7635 = vmatpush.msra.mxu0 0.0
  %7636 = vmatpush.msra.mxu0 0.0
  %7637 = vmatpush.msra.mxu0 0.0
  %7638 = vmatpush.msra.mxu0 0.0
  %7639 = vmatpush.msra.mxu0 0.0
  %7640 = vmatpush.msra.mxu0 0.0
  %7641 = vmatpush.msra.mxu0 0.0
  %7642 = vmatpush.msra.mxu0 %v7607
  %7643 = vmatpush.msra.mxu0 %v7602
  %7644 = vmatmul.f32.gmra.mxu0 %v7623
  %v7645 = vpop.f32.mrf.mxu0
  %v7646 = vadd.f32 0.0, %v7645
  %7647 = vmatmul.f32.gmra.mxu0 %v7626
  %v7648 = vpop.f32.mrf.mxu0
  %v7649 = vadd.f32 0.0, %v7648
  %7650 = vdwg.mxu0
  %7651 = vmatpush.msra.mxu0 0.0
  %7652 = vmatpush.msra.mxu0 0.0
  %7653 = vmatpush.msra.mxu0 0.0
  %7654 = vmatpush.msra.mxu0 0.0
  %7655 = vmatpush.msra.mxu0 0.0
  %7656 = vmatpush.msra.mxu0 0.0
  %7657 = vmatpush.msra.mxu0 0.0
  %7658 = vmatpush.msra.mxu0 0.0
  %7659 = vmatpush.msra.mxu0 0.0
  %7660 = vmatpush.msra.mxu0 0.0
  %7661 = vmatpush.msra.mxu0 0.0
  %7662 = vmatpush.msra.mxu0 0.0
  %7663 = vmatpush.msra.mxu0 0.0
  %7664 = vmatpush.msra.mxu0 0.0
  %7665 = vmatpush.msra.mxu0 %v7608
  %7666 = vmatpush.msra.mxu0 %v7603
  %7667 = vmatmul.f32.gmra.mxu0 %v7623
  %v7668 = vpop.f32.mrf.mxu0
  %v7669 = vadd.f32 0.0, %v7668
  %7670 = vmatmul.f32.gmra.mxu0 %v7626
  %v7671 = vpop.f32.mrf.mxu0
  %v7672 = vadd.f32 0.0, %v7671
  %7673 = vdwg.mxu0
  %7674 = vmatpush.msra.mxu0 0.0
  %7675 = vmatpush.msra.mxu0 0.0
  %7676 = vmatpush.msra.mxu0 0.0
  %7677 = vmatpush.msra.mxu0 0.0
  %7678 = vmatpush.msra.mxu0 0.0
  %7679 = vmatpush.msra.mxu0 0.0
  %7680 = vmatpush.msra.mxu0 0.0
  %7681 = vmatpush.msra.mxu0 0.0
  %7682 = vmatpush.msra.mxu0 0.0
  %7683 = vmatpush.msra.mxu0 0.0
  %7684 = vmatpush.msra.mxu0 0.0
  %7685 = vmatpush.msra.mxu0 0.0
  %7686 = vmatpush.msra.mxu0 0.0
  %7687 = vmatpush.msra.mxu0 0.0
  %7688 = vmatpush.msra.mxu0 %v7609
  %7689 = vmatpush.msra.mxu0 %v7604
  %7690 = vmatmul.f32.gmra.mxu0 %v7623
  %v7691 = vpop.f32.mrf.mxu0
  %v7692 = vadd.f32 0.0, %v7691
  %7693 = vmatmul.f32.gmra.mxu0 %v7626
  %v7694 = vpop.f32.mrf.mxu0
  %v7695 = vadd.f32 0.0, %v7694
  %7696 = vdwg.mxu0
  %7697 = vmatpush.msra.mxu0 0.0
  %7698 = vmatpush.msra.mxu0 0.0
  %7699 = vmatpush.msra.mxu0 0.0
  %7700 = vmatpush.msra.mxu0 0.0
  %7701 = vmatpush.msra.mxu0 0.0
  %7702 = vmatpush.msra.mxu0 0.0
  %7703 = vmatpush.msra.mxu0 0.0
  %7704 = vmatpush.msra.mxu0 0.0
  %7705 = vmatpush.msra.mxu0 0.0
  %7706 = vmatpush.msra.mxu0 0.0
  %7707 = vmatpush.msra.mxu0 0.0
  %7708 = vmatpush.msra.mxu0 0.0
  %7709 = vmatpush.msra.mxu0 0.0
  %7710 = vmatpush.msra.mxu0 0.0
  %7711 = vmatpush.msra.mxu0 %v7610
  %7712 = vmatpush.msra.mxu0 %v7605
  %7713 = vmatmul.f32.gmra.mxu0 %v7623
  %v7714 = vpop.f32.mrf.mxu0
  %v7715 = vadd.f32 0.0, %v7714
  %7716 = vmatmul.f32.gmra.mxu0 %v7626
  %v7717 = vpop.f32.mrf.mxu0
  %v7718 = vadd.f32 0.0, %v7717
  %7719 = vdwg.mxu0
  %7720 = vmatpush.msra.mxu0 0.0
  %7721 = vmatpush.msra.mxu0 0.0
  %7722 = vmatpush.msra.mxu0 0.0
  %7723 = vmatpush.msra.mxu0 0.0
  %7724 = vmatpush.msra.mxu0 0.0
  %7725 = vmatpush.msra.mxu0 0.0
  %7726 = vmatpush.msra.mxu0 0.0
  %7727 = vmatpush.msra.mxu0 0.0
  %7728 = vmatpush.msra.mxu0 0.0
  %7729 = vmatpush.msra.mxu0 0.0
  %7730 = vmatpush.msra.mxu0 0.0
  %7731 = vmatpush.msra.mxu0 0.0
  %7732 = vmatpush.msra.mxu0 0.0
  %7733 = vmatpush.msra.mxu0 0.0
  %7734 = vmatpush.msra.mxu0 %v7611
  %7735 = vmatpush.msra.mxu0 %v7606
  %7736 = vmatmul.f32.gmra.mxu0 %v7623
  %v7737 = vpop.f32.mrf.mxu0
  %v7738 = vadd.f32 0.0, %v7737
  %7739 = vmatmul.f32.gmra.mxu0 %v7626
  %v7740 = vpop.f32.mrf.mxu0
  %v7741 = vadd.f32 0.0, %v7740
  %7742 = vdwg.mxu0
  %v7743 = vadd.f32 %v7565, %v7646
  %v7744 = vadd.f32 %v7566, %v7669
  %v7745 = vadd.f32 %v7567, %v7692
  %v7746 = vadd.f32 %v7568, %v7715
  %v7747 = vadd.f32 %v7569, %v7738
  %v7748 = vadd.f32 %v7570, %v7649
  %v7749 = vadd.f32 %v7571, %v7672
  %v7750 = vadd.f32 %v7572, %v7695
  %v7751 = vadd.f32 %v7573, %v7718
  %v7752 = vadd.f32 %v7574, %v7741
  %s7753 = scalar_lea.vmem %s3, 112
  %v7754 = vld [vmem:[%s7753] sm:$0xff]
  %v7755 = vld [vmem:[%s7753 + $0x8] sm:$0xff]
  %7756 = vrot.lane.b32.xlu0 %v6501, 77
  %v7757 = vpop.permute.xlu0 %7756
  %7758 = vrot.lane.b32.xlu0 %v6502, 77
  %v7759 = vpop.permute.xlu0 %7758
  %7760 = vrot.lane.b32.xlu0 %v6503, 77
  %v7761 = vpop.permute.xlu0 %7760
  %7762 = vrot.lane.b32.xlu0 %v6504, 77
  %v7763 = vpop.permute.xlu0 %7762
  %7764 = vrot.lane.b32.xlu0 %v6505, 77
  %v7765 = vpop.permute.xlu0 %7764
  %7766 = vrot.lane.b32.xlu0 %v6506, 77
  %v7767 = vpop.permute.xlu0 %7766
  %7768 = vrot.lane.b32.xlu0 %v6507, 77
  %v7769 = vpop.permute.xlu0 %7768
  %7770 = vrot.lane.b32.xlu0 %v6508, 77
  %v7771 = vpop.permute.xlu0 %7770
  %7772 = vrot.lane.b32.xlu0 %v6509, 77
  %v7773 = vpop.permute.xlu0 %7772
  %7774 = vrot.lane.b32.xlu0 %v6510, 77
  %v7775 = vpop.permute.xlu0 %7774
  %7776 = vrot.lane.b32.xlu0 %v6511, 77
  %v7777 = vpop.permute.xlu0 %7776
  %7778 = vrot.lane.b32.xlu0 %v6512, 77
  %v7779 = vpop.permute.xlu0 %7778
  %v7780 = vsel %vm3267, %v7757, %v7759
  %v7781 = vsel %vm3267, %v7759, %v7761
  %v7782 = vsel %vm3267, %v7761, %v7763
  %v7783 = vsel %vm3267, %v7763, %v7765
  %v7784 = vsel %vm3267, %v7765, %v7767
  %v7785 = vsel %vm3267, %v7769, %v7771
  %v7786 = vsel %vm3267, %v7771, %v7773
  %v7787 = vsel %vm3267, %v7773, %v7775
  %v7788 = vsel %vm3267, %v7775, %v7777
  %v7789 = vsel %vm3267, %v7777, %v7779
  %v7801 = vsel %vm6574, %v7754, 0
  %v7804 = vsel %vm6574, %v7755, 0
  %7806 = vmatpush.msra.mxu0 0.0
  %7807 = vmatpush.msra.mxu0 0.0
  %7808 = vmatpush.msra.mxu0 0.0
  %7809 = vmatpush.msra.mxu0 0.0
  %7810 = vmatpush.msra.mxu0 0.0
  %7811 = vmatpush.msra.mxu0 0.0
  %7812 = vmatpush.msra.mxu0 0.0
  %7813 = vmatpush.msra.mxu0 0.0
  %7814 = vmatpush.msra.mxu0 0.0
  %7815 = vmatpush.msra.mxu0 0.0
  %7816 = vmatpush.msra.mxu0 0.0
  %7817 = vmatpush.msra.mxu0 0.0
  %7818 = vmatpush.msra.mxu0 0.0
  %7819 = vmatpush.msra.mxu0 0.0
  %7820 = vmatpush.msra.mxu0 %v7785
  %7821 = vmatpush.msra.mxu0 %v7780
  %7822 = vmatmul.f32.gmra.mxu0 %v7801
  %v7823 = vpop.f32.mrf.mxu0
  %v7824 = vadd.f32 0.0, %v7823
  %7825 = vmatmul.f32.gmra.mxu0 %v7804
  %v7826 = vpop.f32.mrf.mxu0
  %v7827 = vadd.f32 0.0, %v7826
  %7828 = vdwg.mxu0
  %7829 = vmatpush.msra.mxu0 0.0
  %7830 = vmatpush.msra.mxu0 0.0
  %7831 = vmatpush.msra.mxu0 0.0
  %7832 = vmatpush.msra.mxu0 0.0
  %7833 = vmatpush.msra.mxu0 0.0
  %7834 = vmatpush.msra.mxu0 0.0
  %7835 = vmatpush.msra.mxu0 0.0
  %7836 = vmatpush.msra.mxu0 0.0
  %7837 = vmatpush.msra.mxu0 0.0
  %7838 = vmatpush.msra.mxu0 0.0
  %7839 = vmatpush.msra.mxu0 0.0
  %7840 = vmatpush.msra.mxu0 0.0
  %7841 = vmatpush.msra.mxu0 0.0
  %7842 = vmatpush.msra.mxu0 0.0
  %7843 = vmatpush.msra.mxu0 %v7786
  %7844 = vmatpush.msra.mxu0 %v7781
  %7845 = vmatmul.f32.gmra.mxu0 %v7801
  %v7846 = vpop.f32.mrf.mxu0
  %v7847 = vadd.f32 0.0, %v7846
  %7848 = vmatmul.f32.gmra.mxu0 %v7804
  %v7849 = vpop.f32.mrf.mxu0
  %v7850 = vadd.f32 0.0, %v7849
  %7851 = vdwg.mxu0
  %7852 = vmatpush.msra.mxu0 0.0
  %7853 = vmatpush.msra.mxu0 0.0
  %7854 = vmatpush.msra.mxu0 0.0
  %7855 = vmatpush.msra.mxu0 0.0
  %7856 = vmatpush.msra.mxu0 0.0
  %7857 = vmatpush.msra.mxu0 0.0
  %7858 = vmatpush.msra.mxu0 0.0
  %7859 = vmatpush.msra.mxu0 0.0
  %7860 = vmatpush.msra.mxu0 0.0
  %7861 = vmatpush.msra.mxu0 0.0
  %7862 = vmatpush.msra.mxu0 0.0
  %7863 = vmatpush.msra.mxu0 0.0
  %7864 = vmatpush.msra.mxu0 0.0
  %7865 = vmatpush.msra.mxu0 0.0
  %7866 = vmatpush.msra.mxu0 %v7787
  %7867 = vmatpush.msra.mxu0 %v7782
  %7868 = vmatmul.f32.gmra.mxu0 %v7801
  %v7869 = vpop.f32.mrf.mxu0
  %v7870 = vadd.f32 0.0, %v7869
  %7871 = vmatmul.f32.gmra.mxu0 %v7804
  %v7872 = vpop.f32.mrf.mxu0
  %v7873 = vadd.f32 0.0, %v7872
  %7874 = vdwg.mxu0
  %7875 = vmatpush.msra.mxu0 0.0
  %7876 = vmatpush.msra.mxu0 0.0
  %7877 = vmatpush.msra.mxu0 0.0
  %7878 = vmatpush.msra.mxu0 0.0
  %7879 = vmatpush.msra.mxu0 0.0
  %7880 = vmatpush.msra.mxu0 0.0
  %7881 = vmatpush.msra.mxu0 0.0
  %7882 = vmatpush.msra.mxu0 0.0
  %7883 = vmatpush.msra.mxu0 0.0
  %7884 = vmatpush.msra.mxu0 0.0
  %7885 = vmatpush.msra.mxu0 0.0
  %7886 = vmatpush.msra.mxu0 0.0
  %7887 = vmatpush.msra.mxu0 0.0
  %7888 = vmatpush.msra.mxu0 0.0
  %7889 = vmatpush.msra.mxu0 %v7788
  %7890 = vmatpush.msra.mxu0 %v7783
  %7891 = vmatmul.f32.gmra.mxu0 %v7801
  %v7892 = vpop.f32.mrf.mxu0
  %v7893 = vadd.f32 0.0, %v7892
  %7894 = vmatmul.f32.gmra.mxu0 %v7804
  %v7895 = vpop.f32.mrf.mxu0
  %v7896 = vadd.f32 0.0, %v7895
  %7897 = vdwg.mxu0
  %7898 = vmatpush.msra.mxu0 0.0
  %7899 = vmatpush.msra.mxu0 0.0
  %7900 = vmatpush.msra.mxu0 0.0
  %7901 = vmatpush.msra.mxu0 0.0
  %7902 = vmatpush.msra.mxu0 0.0
  %7903 = vmatpush.msra.mxu0 0.0
  %7904 = vmatpush.msra.mxu0 0.0
  %7905 = vmatpush.msra.mxu0 0.0
  %7906 = vmatpush.msra.mxu0 0.0
  %7907 = vmatpush.msra.mxu0 0.0
  %7908 = vmatpush.msra.mxu0 0.0
  %7909 = vmatpush.msra.mxu0 0.0
  %7910 = vmatpush.msra.mxu0 0.0
  %7911 = vmatpush.msra.mxu0 0.0
  %7912 = vmatpush.msra.mxu0 %v7789
  %7913 = vmatpush.msra.mxu0 %v7784
  %7914 = vmatmul.f32.gmra.mxu0 %v7801
  %v7915 = vpop.f32.mrf.mxu0
  %v7916 = vadd.f32 0.0, %v7915
  %7917 = vmatmul.f32.gmra.mxu0 %v7804
  %v7918 = vpop.f32.mrf.mxu0
  %v7919 = vadd.f32 0.0, %v7918
  %7920 = vdwg.mxu0
  %v7921 = vadd.f32 %v7743, %v7824
  %v7922 = vadd.f32 %v7744, %v7847
  %v7923 = vadd.f32 %v7745, %v7870
  %v7924 = vadd.f32 %v7746, %v7893
  %v7925 = vadd.f32 %v7747, %v7916
  %v7926 = vadd.f32 %v7748, %v7827
  %v7927 = vadd.f32 %v7749, %v7850
  %v7928 = vadd.f32 %v7750, %v7873
  %v7929 = vadd.f32 %v7751, %v7896
  %v7930 = vadd.f32 %v7752, %v7919
  %s7931 = scalar_lea.vmem %s3, 128
  %v7932 = vld [vmem:[%s7931] sm:$0xff]
  %v7933 = vld [vmem:[%s7931 + $0x8] sm:$0xff]
  %7934 = vrot.lane.b32.xlu0 %v6501, 76
  %v7935 = vpop.permute.xlu0 %7934
  %7936 = vrot.lane.b32.xlu0 %v6502, 76
  %v7937 = vpop.permute.xlu0 %7936
  %7938 = vrot.lane.b32.xlu0 %v6503, 76
  %v7939 = vpop.permute.xlu0 %7938
  %7940 = vrot.lane.b32.xlu0 %v6504, 76
  %v7941 = vpop.permute.xlu0 %7940
  %7942 = vrot.lane.b32.xlu0 %v6505, 76
  %v7943 = vpop.permute.xlu0 %7942
  %7944 = vrot.lane.b32.xlu0 %v6506, 76
  %v7945 = vpop.permute.xlu0 %7944
  %7946 = vrot.lane.b32.xlu0 %v6507, 76
  %v7947 = vpop.permute.xlu0 %7946
  %7948 = vrot.lane.b32.xlu0 %v6508, 76
  %v7949 = vpop.permute.xlu0 %7948
  %7950 = vrot.lane.b32.xlu0 %v6509, 76
  %v7951 = vpop.permute.xlu0 %7950
  %7952 = vrot.lane.b32.xlu0 %v6510, 76
  %v7953 = vpop.permute.xlu0 %7952
  %7954 = vrot.lane.b32.xlu0 %v6511, 76
  %v7955 = vpop.permute.xlu0 %7954
  %7956 = vrot.lane.b32.xlu0 %v6512, 76
  %v7957 = vpop.permute.xlu0 %7956
  %v7958 = vsel %vm3490, %v7935, %v7937
  %v7959 = vsel %vm3490, %v7937, %v7939
  %v7960 = vsel %vm3490, %v7939, %v7941
  %v7961 = vsel %vm3490, %v7941, %v7943
  %v7962 = vsel %vm3490, %v7943, %v7945
  %v7963 = vsel %vm3490, %v7947, %v7949
  %v7964 = vsel %vm3490, %v7949, %v7951
  %v7965 = vsel %vm3490, %v7951, %v7953
  %v7966 = vsel %vm3490, %v7953, %v7955
  %v7967 = vsel %vm3490, %v7955, %v7957
  %v7979 = vsel %vm6574, %v7932, 0
  %v7982 = vsel %vm6574, %v7933, 0
  %7984 = vmatpush.msra.mxu0 0.0
  %7985 = vmatpush.msra.mxu0 0.0
  %7986 = vmatpush.msra.mxu0 0.0
  %7987 = vmatpush.msra.mxu0 0.0
  %7988 = vmatpush.msra.mxu0 0.0
  %7989 = vmatpush.msra.mxu0 0.0
  %7990 = vmatpush.msra.mxu0 0.0
  %7991 = vmatpush.msra.mxu0 0.0
  %7992 = vmatpush.msra.mxu0 0.0
  %7993 = vmatpush.msra.mxu0 0.0
  %7994 = vmatpush.msra.mxu0 0.0
  %7995 = vmatpush.msra.mxu0 0.0
  %7996 = vmatpush.msra.mxu0 0.0
  %7997 = vmatpush.msra.mxu0 0.0
  %7998 = vmatpush.msra.mxu0 %v7963
  %7999 = vmatpush.msra.mxu0 %v7958
  %8000 = vmatmul.f32.gmra.mxu0 %v7979
  %v8001 = vpop.f32.mrf.mxu0
  %v8002 = vadd.f32 0.0, %v8001
  %8003 = vmatmul.f32.gmra.mxu0 %v7982
  %v8004 = vpop.f32.mrf.mxu0
  %v8005 = vadd.f32 0.0, %v8004
  %8006 = vdwg.mxu0
  %8007 = vmatpush.msra.mxu0 0.0
  %8008 = vmatpush.msra.mxu0 0.0
  %8009 = vmatpush.msra.mxu0 0.0
  %8010 = vmatpush.msra.mxu0 0.0
  %8011 = vmatpush.msra.mxu0 0.0
  %8012 = vmatpush.msra.mxu0 0.0
  %8013 = vmatpush.msra.mxu0 0.0
  %8014 = vmatpush.msra.mxu0 0.0
  %8015 = vmatpush.msra.mxu0 0.0
  %8016 = vmatpush.msra.mxu0 0.0
  %8017 = vmatpush.msra.mxu0 0.0
  %8018 = vmatpush.msra.mxu0 0.0
  %8019 = vmatpush.msra.mxu0 0.0
  %8020 = vmatpush.msra.mxu0 0.0
  %8021 = vmatpush.msra.mxu0 %v7964
  %8022 = vmatpush.msra.mxu0 %v7959
  %8023 = vmatmul.f32.gmra.mxu0 %v7979
  %v8024 = vpop.f32.mrf.mxu0
  %v8025 = vadd.f32 0.0, %v8024
  %8026 = vmatmul.f32.gmra.mxu0 %v7982
  %v8027 = vpop.f32.mrf.mxu0
  %v8028 = vadd.f32 0.0, %v8027
  %8029 = vdwg.mxu0
  %8030 = vmatpush.msra.mxu0 0.0
  %8031 = vmatpush.msra.mxu0 0.0
  %8032 = vmatpush.msra.mxu0 0.0
  %8033 = vmatpush.msra.mxu0 0.0
  %8034 = vmatpush.msra.mxu0 0.0
  %8035 = vmatpush.msra.mxu0 0.0
  %8036 = vmatpush.msra.mxu0 0.0
  %8037 = vmatpush.msra.mxu0 0.0
  %8038 = vmatpush.msra.mxu0 0.0
  %8039 = vmatpush.msra.mxu0 0.0
  %8040 = vmatpush.msra.mxu0 0.0
  %8041 = vmatpush.msra.mxu0 0.0
  %8042 = vmatpush.msra.mxu0 0.0
  %8043 = vmatpush.msra.mxu0 0.0
  %8044 = vmatpush.msra.mxu0 %v7965
  %8045 = vmatpush.msra.mxu0 %v7960
  %8046 = vmatmul.f32.gmra.mxu0 %v7979
  %v8047 = vpop.f32.mrf.mxu0
  %v8048 = vadd.f32 0.0, %v8047
  %8049 = vmatmul.f32.gmra.mxu0 %v7982
  %v8050 = vpop.f32.mrf.mxu0
  %v8051 = vadd.f32 0.0, %v8050
  %8052 = vdwg.mxu0
  %8053 = vmatpush.msra.mxu0 0.0
  %8054 = vmatpush.msra.mxu0 0.0
  %8055 = vmatpush.msra.mxu0 0.0
  %8056 = vmatpush.msra.mxu0 0.0
  %8057 = vmatpush.msra.mxu0 0.0
  %8058 = vmatpush.msra.mxu0 0.0
  %8059 = vmatpush.msra.mxu0 0.0
  %8060 = vmatpush.msra.mxu0 0.0
  %8061 = vmatpush.msra.mxu0 0.0
  %8062 = vmatpush.msra.mxu0 0.0
  %8063 = vmatpush.msra.mxu0 0.0
  %8064 = vmatpush.msra.mxu0 0.0
  %8065 = vmatpush.msra.mxu0 0.0
  %8066 = vmatpush.msra.mxu0 0.0
  %8067 = vmatpush.msra.mxu0 %v7966
  %8068 = vmatpush.msra.mxu0 %v7961
  %8069 = vmatmul.f32.gmra.mxu0 %v7979
  %v8070 = vpop.f32.mrf.mxu0
  %v8071 = vadd.f32 0.0, %v8070
  %8072 = vmatmul.f32.gmra.mxu0 %v7982
  %v8073 = vpop.f32.mrf.mxu0
  %v8074 = vadd.f32 0.0, %v8073
  %8075 = vdwg.mxu0
  %8076 = vmatpush.msra.mxu0 0.0
  %8077 = vmatpush.msra.mxu0 0.0
  %8078 = vmatpush.msra.mxu0 0.0
  %8079 = vmatpush.msra.mxu0 0.0
  %8080 = vmatpush.msra.mxu0 0.0
  %8081 = vmatpush.msra.mxu0 0.0
  %8082 = vmatpush.msra.mxu0 0.0
  %8083 = vmatpush.msra.mxu0 0.0
  %8084 = vmatpush.msra.mxu0 0.0
  %8085 = vmatpush.msra.mxu0 0.0
  %8086 = vmatpush.msra.mxu0 0.0
  %8087 = vmatpush.msra.mxu0 0.0
  %8088 = vmatpush.msra.mxu0 0.0
  %8089 = vmatpush.msra.mxu0 0.0
  %8090 = vmatpush.msra.mxu0 %v7967
  %8091 = vmatpush.msra.mxu0 %v7962
  %8092 = vmatmul.f32.gmra.mxu0 %v7979
  %v8093 = vpop.f32.mrf.mxu0
  %v8094 = vadd.f32 0.0, %v8093
  %8095 = vmatmul.f32.gmra.mxu0 %v7982
  %v8096 = vpop.f32.mrf.mxu0
  %v8097 = vadd.f32 0.0, %v8096
  %8098 = vdwg.mxu0
  %v8099 = vadd.f32 %v7921, %v8002
  %v8100 = vadd.f32 %v7922, %v8025
  %v8101 = vadd.f32 %v7923, %v8048
  %v8102 = vadd.f32 %v7924, %v8071
  %v8103 = vadd.f32 %v7925, %v8094
  %v8104 = vadd.f32 %v7926, %v8005
  %v8105 = vadd.f32 %v7927, %v8028
  %v8106 = vadd.f32 %v7928, %v8051
  %v8107 = vadd.f32 %v7929, %v8074
  %v8108 = vadd.f32 %v7930, %v8097
  %s8109 = scalar_lea.vmem %s3, 144
  %v8110 = vld [vmem:[%s8109] sm:$0xff]
  %v8111 = vld [vmem:[%s8109 + $0x8] sm:$0xff]
  %8112 = vrot.lane.b32.xlu0 %v6501, 75
  %v8113 = vpop.permute.xlu0 %8112
  %8114 = vrot.lane.b32.xlu0 %v6502, 75
  %v8115 = vpop.permute.xlu0 %8114
  %8116 = vrot.lane.b32.xlu0 %v6503, 75
  %v8117 = vpop.permute.xlu0 %8116
  %8118 = vrot.lane.b32.xlu0 %v6504, 75
  %v8119 = vpop.permute.xlu0 %8118
  %8120 = vrot.lane.b32.xlu0 %v6505, 75
  %v8121 = vpop.permute.xlu0 %8120
  %8122 = vrot.lane.b32.xlu0 %v6506, 75
  %v8123 = vpop.permute.xlu0 %8122
  %8124 = vrot.lane.b32.xlu0 %v6507, 75
  %v8125 = vpop.permute.xlu0 %8124
  %8126 = vrot.lane.b32.xlu0 %v6508, 75
  %v8127 = vpop.permute.xlu0 %8126
  %8128 = vrot.lane.b32.xlu0 %v6509, 75
  %v8129 = vpop.permute.xlu0 %8128
  %8130 = vrot.lane.b32.xlu0 %v6510, 75
  %v8131 = vpop.permute.xlu0 %8130
  %8132 = vrot.lane.b32.xlu0 %v6511, 75
  %v8133 = vpop.permute.xlu0 %8132
  %8134 = vrot.lane.b32.xlu0 %v6512, 75
  %v8135 = vpop.permute.xlu0 %8134
  %v8136 = vsel %vm3713, %v8113, %v8115
  %v8137 = vsel %vm3713, %v8115, %v8117
  %v8138 = vsel %vm3713, %v8117, %v8119
  %v8139 = vsel %vm3713, %v8119, %v8121
  %v8140 = vsel %vm3713, %v8121, %v8123
  %v8141 = vsel %vm3713, %v8125, %v8127
  %v8142 = vsel %vm3713, %v8127, %v8129
  %v8143 = vsel %vm3713, %v8129, %v8131
  %v8144 = vsel %vm3713, %v8131, %v8133
  %v8145 = vsel %vm3713, %v8133, %v8135
  %v8157 = vsel %vm6574, %v8110, 0
  %v8160 = vsel %vm6574, %v8111, 0
  %8162 = vmatpush.msra.mxu0 0.0
  %8163 = vmatpush.msra.mxu0 0.0
  %8164 = vmatpush.msra.mxu0 0.0
  %8165 = vmatpush.msra.mxu0 0.0
  %8166 = vmatpush.msra.mxu0 0.0
  %8167 = vmatpush.msra.mxu0 0.0
  %8168 = vmatpush.msra.mxu0 0.0
  %8169 = vmatpush.msra.mxu0 0.0
  %8170 = vmatpush.msra.mxu0 0.0
  %8171 = vmatpush.msra.mxu0 0.0
  %8172 = vmatpush.msra.mxu0 0.0
  %8173 = vmatpush.msra.mxu0 0.0
  %8174 = vmatpush.msra.mxu0 0.0
  %8175 = vmatpush.msra.mxu0 0.0
  %8176 = vmatpush.msra.mxu0 %v8141
  %8177 = vmatpush.msra.mxu0 %v8136
  %8178 = vmatmul.f32.gmra.mxu0 %v8157
  %v8179 = vpop.f32.mrf.mxu0
  %v8180 = vadd.f32 0.0, %v8179
  %8181 = vmatmul.f32.gmra.mxu0 %v8160
  %v8182 = vpop.f32.mrf.mxu0
  %v8183 = vadd.f32 0.0, %v8182
  %8184 = vdwg.mxu0
  %8185 = vmatpush.msra.mxu0 0.0
  %8186 = vmatpush.msra.mxu0 0.0
  %8187 = vmatpush.msra.mxu0 0.0
  %8188 = vmatpush.msra.mxu0 0.0
  %8189 = vmatpush.msra.mxu0 0.0
  %8190 = vmatpush.msra.mxu0 0.0
  %8191 = vmatpush.msra.mxu0 0.0
  %8192 = vmatpush.msra.mxu0 0.0
  %8193 = vmatpush.msra.mxu0 0.0
  %8194 = vmatpush.msra.mxu0 0.0
  %8195 = vmatpush.msra.mxu0 0.0
  %8196 = vmatpush.msra.mxu0 0.0
  %8197 = vmatpush.msra.mxu0 0.0
  %8198 = vmatpush.msra.mxu0 0.0
  %8199 = vmatpush.msra.mxu0 %v8142
  %8200 = vmatpush.msra.mxu0 %v8137
  %8201 = vmatmul.f32.gmra.mxu0 %v8157
  %v8202 = vpop.f32.mrf.mxu0
  %v8203 = vadd.f32 0.0, %v8202
  %8204 = vmatmul.f32.gmra.mxu0 %v8160
  %v8205 = vpop.f32.mrf.mxu0
  %v8206 = vadd.f32 0.0, %v8205
  %8207 = vdwg.mxu0
  %8208 = vmatpush.msra.mxu0 0.0
  %8209 = vmatpush.msra.mxu0 0.0
  %8210 = vmatpush.msra.mxu0 0.0
  %8211 = vmatpush.msra.mxu0 0.0
  %8212 = vmatpush.msra.mxu0 0.0
  %8213 = vmatpush.msra.mxu0 0.0
  %8214 = vmatpush.msra.mxu0 0.0
  %8215 = vmatpush.msra.mxu0 0.0
  %8216 = vmatpush.msra.mxu0 0.0
  %8217 = vmatpush.msra.mxu0 0.0
  %8218 = vmatpush.msra.mxu0 0.0
  %8219 = vmatpush.msra.mxu0 0.0
  %8220 = vmatpush.msra.mxu0 0.0
  %8221 = vmatpush.msra.mxu0 0.0
  %8222 = vmatpush.msra.mxu0 %v8143
  %8223 = vmatpush.msra.mxu0 %v8138
  %8224 = vmatmul.f32.gmra.mxu0 %v8157
  %v8225 = vpop.f32.mrf.mxu0
  %v8226 = vadd.f32 0.0, %v8225
  %8227 = vmatmul.f32.gmra.mxu0 %v8160
  %v8228 = vpop.f32.mrf.mxu0
  %v8229 = vadd.f32 0.0, %v8228
  %8230 = vdwg.mxu0
  %8231 = vmatpush.msra.mxu0 0.0
  %8232 = vmatpush.msra.mxu0 0.0
  %8233 = vmatpush.msra.mxu0 0.0
  %8234 = vmatpush.msra.mxu0 0.0
  %8235 = vmatpush.msra.mxu0 0.0
  %8236 = vmatpush.msra.mxu0 0.0
  %8237 = vmatpush.msra.mxu0 0.0
  %8238 = vmatpush.msra.mxu0 0.0
  %8239 = vmatpush.msra.mxu0 0.0
  %8240 = vmatpush.msra.mxu0 0.0
  %8241 = vmatpush.msra.mxu0 0.0
  %8242 = vmatpush.msra.mxu0 0.0
  %8243 = vmatpush.msra.mxu0 0.0
  %8244 = vmatpush.msra.mxu0 0.0
  %8245 = vmatpush.msra.mxu0 %v8144
  %8246 = vmatpush.msra.mxu0 %v8139
  %8247 = vmatmul.f32.gmra.mxu0 %v8157
  %v8248 = vpop.f32.mrf.mxu0
  %v8249 = vadd.f32 0.0, %v8248
  %8250 = vmatmul.f32.gmra.mxu0 %v8160
  %v8251 = vpop.f32.mrf.mxu0
  %v8252 = vadd.f32 0.0, %v8251
  %8253 = vdwg.mxu0
  %8254 = vmatpush.msra.mxu0 0.0
  %8255 = vmatpush.msra.mxu0 0.0
  %8256 = vmatpush.msra.mxu0 0.0
  %8257 = vmatpush.msra.mxu0 0.0
  %8258 = vmatpush.msra.mxu0 0.0
  %8259 = vmatpush.msra.mxu0 0.0
  %8260 = vmatpush.msra.mxu0 0.0
  %8261 = vmatpush.msra.mxu0 0.0
  %8262 = vmatpush.msra.mxu0 0.0
  %8263 = vmatpush.msra.mxu0 0.0
  %8264 = vmatpush.msra.mxu0 0.0
  %8265 = vmatpush.msra.mxu0 0.0
  %8266 = vmatpush.msra.mxu0 0.0
  %8267 = vmatpush.msra.mxu0 0.0
  %8268 = vmatpush.msra.mxu0 %v8145
  %8269 = vmatpush.msra.mxu0 %v8140
  %8270 = vmatmul.f32.gmra.mxu0 %v8157
  %v8271 = vpop.f32.mrf.mxu0
  %v8272 = vadd.f32 0.0, %v8271
  %8273 = vmatmul.f32.gmra.mxu0 %v8160
  %v8274 = vpop.f32.mrf.mxu0
  %v8275 = vadd.f32 0.0, %v8274
  %8276 = vdwg.mxu0
  %v8277 = vadd.f32 %v8099, %v8180
  %v8278 = vadd.f32 %v8100, %v8203
  %v8279 = vadd.f32 %v8101, %v8226
  %v8280 = vadd.f32 %v8102, %v8249
  %v8281 = vadd.f32 %v8103, %v8272
  %v8282 = vadd.f32 %v8104, %v8183
  %v8283 = vadd.f32 %v8105, %v8206
  %v8284 = vadd.f32 %v8106, %v8229
  %v8285 = vadd.f32 %v8107, %v8252
  %v8286 = vadd.f32 %v8108, %v8275
  %s8287 = scalar_lea.vmem %s3, 160
  %v8288 = vld [vmem:[%s8287] sm:$0xff]
  %v8289 = vld [vmem:[%s8287 + $0x8] sm:$0xff]
  %8290 = vrot.lane.b32.xlu0 %v6501, 54
  %v8291 = vpop.permute.xlu0 %8290
  %8292 = vrot.lane.b32.xlu0 %v6502, 54
  %v8293 = vpop.permute.xlu0 %8292
  %8294 = vrot.lane.b32.xlu0 %v6503, 54
  %v8295 = vpop.permute.xlu0 %8294
  %8296 = vrot.lane.b32.xlu0 %v6504, 54
  %v8297 = vpop.permute.xlu0 %8296
  %8298 = vrot.lane.b32.xlu0 %v6505, 54
  %v8299 = vpop.permute.xlu0 %8298
  %8300 = vrot.lane.b32.xlu0 %v6506, 54
  %v8301 = vpop.permute.xlu0 %8300
  %8302 = vrot.lane.b32.xlu0 %v6507, 54
  %v8303 = vpop.permute.xlu0 %8302
  %8304 = vrot.lane.b32.xlu0 %v6508, 54
  %v8305 = vpop.permute.xlu0 %8304
  %8306 = vrot.lane.b32.xlu0 %v6509, 54
  %v8307 = vpop.permute.xlu0 %8306
  %8308 = vrot.lane.b32.xlu0 %v6510, 54
  %v8309 = vpop.permute.xlu0 %8308
  %8310 = vrot.lane.b32.xlu0 %v6511, 54
  %v8311 = vpop.permute.xlu0 %8310
  %8312 = vrot.lane.b32.xlu0 %v6512, 54
  %v8313 = vpop.permute.xlu0 %8312
  %vm8314 = vcmask 441344
  %v8315 = vsel %vm8314, %v8291, %v8293
  %v8316 = vsel %vm8314, %v8293, %v8295
  %v8317 = vsel %vm8314, %v8295, %v8297
  %v8318 = vsel %vm8314, %v8297, %v8299
  %v8319 = vsel %vm8314, %v8299, %v8301
  %v8320 = vsel %vm8314, %v8303, %v8305
  %v8321 = vsel %vm8314, %v8305, %v8307
  %v8322 = vsel %vm8314, %v8307, %v8309
  %v8323 = vsel %vm8314, %v8309, %v8311
  %v8324 = vsel %vm8314, %v8311, %v8313
  %v8336 = vsel %vm6574, %v8288, 0
  %v8339 = vsel %vm6574, %v8289, 0
  %8341 = vmatpush.msra.mxu0 0.0
  %8342 = vmatpush.msra.mxu0 0.0
  %8343 = vmatpush.msra.mxu0 0.0
  %8344 = vmatpush.msra.mxu0 0.0
  %8345 = vmatpush.msra.mxu0 0.0
  %8346 = vmatpush.msra.mxu0 0.0
  %8347 = vmatpush.msra.mxu0 0.0
  %8348 = vmatpush.msra.mxu0 0.0
  %8349 = vmatpush.msra.mxu0 0.0
  %8350 = vmatpush.msra.mxu0 0.0
  %8351 = vmatpush.msra.mxu0 0.0
  %8352 = vmatpush.msra.mxu0 0.0
  %8353 = vmatpush.msra.mxu0 0.0
  %8354 = vmatpush.msra.mxu0 0.0
  %8355 = vmatpush.msra.mxu0 %v8320
  %8356 = vmatpush.msra.mxu0 %v8315
  %8357 = vmatmul.f32.gmra.mxu0 %v8336
  %v8358 = vpop.f32.mrf.mxu0
  %v8359 = vadd.f32 0.0, %v8358
  %8360 = vmatmul.f32.gmra.mxu0 %v8339
  %v8361 = vpop.f32.mrf.mxu0
  %v8362 = vadd.f32 0.0, %v8361
  %8363 = vdwg.mxu0
  %8364 = vmatpush.msra.mxu0 0.0
  %8365 = vmatpush.msra.mxu0 0.0
  %8366 = vmatpush.msra.mxu0 0.0
  %8367 = vmatpush.msra.mxu0 0.0
  %8368 = vmatpush.msra.mxu0 0.0
  %8369 = vmatpush.msra.mxu0 0.0
  %8370 = vmatpush.msra.mxu0 0.0
  %8371 = vmatpush.msra.mxu0 0.0
  %8372 = vmatpush.msra.mxu0 0.0
  %8373 = vmatpush.msra.mxu0 0.0
  %8374 = vmatpush.msra.mxu0 0.0
  %8375 = vmatpush.msra.mxu0 0.0
  %8376 = vmatpush.msra.mxu0 0.0
  %8377 = vmatpush.msra.mxu0 0.0
  %8378 = vmatpush.msra.mxu0 %v8321
  %8379 = vmatpush.msra.mxu0 %v8316
  %8380 = vmatmul.f32.gmra.mxu0 %v8336
  %v8381 = vpop.f32.mrf.mxu0
  %v8382 = vadd.f32 0.0, %v8381
  %8383 = vmatmul.f32.gmra.mxu0 %v8339
  %v8384 = vpop.f32.mrf.mxu0
  %v8385 = vadd.f32 0.0, %v8384
  %8386 = vdwg.mxu0
  %8387 = vmatpush.msra.mxu0 0.0
  %8388 = vmatpush.msra.mxu0 0.0
  %8389 = vmatpush.msra.mxu0 0.0
  %8390 = vmatpush.msra.mxu0 0.0
  %8391 = vmatpush.msra.mxu0 0.0
  %8392 = vmatpush.msra.mxu0 0.0
  %8393 = vmatpush.msra.mxu0 0.0
  %8394 = vmatpush.msra.mxu0 0.0
  %8395 = vmatpush.msra.mxu0 0.0
  %8396 = vmatpush.msra.mxu0 0.0
  %8397 = vmatpush.msra.mxu0 0.0
  %8398 = vmatpush.msra.mxu0 0.0
  %8399 = vmatpush.msra.mxu0 0.0
  %8400 = vmatpush.msra.mxu0 0.0
  %8401 = vmatpush.msra.mxu0 %v8322
  %8402 = vmatpush.msra.mxu0 %v8317
  %8403 = vmatmul.f32.gmra.mxu0 %v8336
  %v8404 = vpop.f32.mrf.mxu0
  %v8405 = vadd.f32 0.0, %v8404
  %8406 = vmatmul.f32.gmra.mxu0 %v8339
  %v8407 = vpop.f32.mrf.mxu0
  %v8408 = vadd.f32 0.0, %v8407
  %8409 = vdwg.mxu0
  %8410 = vmatpush.msra.mxu0 0.0
  %8411 = vmatpush.msra.mxu0 0.0
  %8412 = vmatpush.msra.mxu0 0.0
  %8413 = vmatpush.msra.mxu0 0.0
  %8414 = vmatpush.msra.mxu0 0.0
  %8415 = vmatpush.msra.mxu0 0.0
  %8416 = vmatpush.msra.mxu0 0.0
  %8417 = vmatpush.msra.mxu0 0.0
  %8418 = vmatpush.msra.mxu0 0.0
  %8419 = vmatpush.msra.mxu0 0.0
  %8420 = vmatpush.msra.mxu0 0.0
  %8421 = vmatpush.msra.mxu0 0.0
  %8422 = vmatpush.msra.mxu0 0.0
  %8423 = vmatpush.msra.mxu0 0.0
  %8424 = vmatpush.msra.mxu0 %v8323
  %8425 = vmatpush.msra.mxu0 %v8318
  %8426 = vmatmul.f32.gmra.mxu0 %v8336
  %v8427 = vpop.f32.mrf.mxu0
  %v8428 = vadd.f32 0.0, %v8427
  %8429 = vmatmul.f32.gmra.mxu0 %v8339
  %v8430 = vpop.f32.mrf.mxu0
  %v8431 = vadd.f32 0.0, %v8430
  %8432 = vdwg.mxu0
  %8433 = vmatpush.msra.mxu0 0.0
  %8434 = vmatpush.msra.mxu0 0.0
  %8435 = vmatpush.msra.mxu0 0.0
  %8436 = vmatpush.msra.mxu0 0.0
  %8437 = vmatpush.msra.mxu0 0.0
  %8438 = vmatpush.msra.mxu0 0.0
  %8439 = vmatpush.msra.mxu0 0.0
  %8440 = vmatpush.msra.mxu0 0.0
  %8441 = vmatpush.msra.mxu0 0.0
  %8442 = vmatpush.msra.mxu0 0.0
  %8443 = vmatpush.msra.mxu0 0.0
  %8444 = vmatpush.msra.mxu0 0.0
  %8445 = vmatpush.msra.mxu0 0.0
  %8446 = vmatpush.msra.mxu0 0.0
  %8447 = vmatpush.msra.mxu0 %v8324
  %8448 = vmatpush.msra.mxu0 %v8319
  %8449 = vmatmul.f32.gmra.mxu0 %v8336
  %v8450 = vpop.f32.mrf.mxu0
  %v8451 = vadd.f32 0.0, %v8450
  %8452 = vmatmul.f32.gmra.mxu0 %v8339
  %v8453 = vpop.f32.mrf.mxu0
  %v8454 = vadd.f32 0.0, %v8453
  %8455 = vdwg.mxu0
  %v8456 = vadd.f32 %v8277, %v8359
  %v8457 = vadd.f32 %v8278, %v8382
  %v8458 = vadd.f32 %v8279, %v8405
  %v8459 = vadd.f32 %v8280, %v8428
  %v8460 = vadd.f32 %v8281, %v8451
  %v8461 = vadd.f32 %v8282, %v8362
  %v8462 = vadd.f32 %v8283, %v8385
  %v8463 = vadd.f32 %v8284, %v8408
  %v8464 = vadd.f32 %v8285, %v8431
  %v8465 = vadd.f32 %v8286, %v8454
  %s8466 = scalar_lea.vmem %s3, 176
  %v8467 = vld [vmem:[%s8466] sm:$0xff]
  %v8468 = vld [vmem:[%s8466 + $0x8] sm:$0xff]
  %8469 = vrot.lane.b32.xlu0 %v6501, 53
  %v8470 = vpop.permute.xlu0 %8469
  %8471 = vrot.lane.b32.xlu0 %v6502, 53
  %v8472 = vpop.permute.xlu0 %8471
  %8473 = vrot.lane.b32.xlu0 %v6503, 53
  %v8474 = vpop.permute.xlu0 %8473
  %8475 = vrot.lane.b32.xlu0 %v6504, 53
  %v8476 = vpop.permute.xlu0 %8475
  %8477 = vrot.lane.b32.xlu0 %v6505, 53
  %v8478 = vpop.permute.xlu0 %8477
  %8479 = vrot.lane.b32.xlu0 %v6506, 53
  %v8480 = vpop.permute.xlu0 %8479
  %8481 = vrot.lane.b32.xlu0 %v6507, 53
  %v8482 = vpop.permute.xlu0 %8481
  %8483 = vrot.lane.b32.xlu0 %v6508, 53
  %v8484 = vpop.permute.xlu0 %8483
  %8485 = vrot.lane.b32.xlu0 %v6509, 53
  %v8486 = vpop.permute.xlu0 %8485
  %8487 = vrot.lane.b32.xlu0 %v6510, 53
  %v8488 = vpop.permute.xlu0 %8487
  %8489 = vrot.lane.b32.xlu0 %v6511, 53
  %v8490 = vpop.permute.xlu0 %8489
  %8491 = vrot.lane.b32.xlu0 %v6512, 53
  %v8492 = vpop.permute.xlu0 %8491
  %v8493 = vsel %vm4159, %v8470, %v8472
  %v8494 = vsel %vm4159, %v8472, %v8474
  %v8495 = vsel %vm4159, %v8474, %v8476
  %v8496 = vsel %vm4159, %v8476, %v8478
  %v8497 = vsel %vm4159, %v8478, %v8480
  %v8498 = vsel %vm4159, %v8482, %v8484
  %v8499 = vsel %vm4159, %v8484, %v8486
  %v8500 = vsel %vm4159, %v8486, %v8488
  %v8501 = vsel %vm4159, %v8488, %v8490
  %v8502 = vsel %vm4159, %v8490, %v8492
  %v8514 = vsel %vm6574, %v8467, 0
  %v8517 = vsel %vm6574, %v8468, 0
  %8519 = vmatpush.msra.mxu0 0.0
  %8520 = vmatpush.msra.mxu0 0.0
  %8521 = vmatpush.msra.mxu0 0.0
  %8522 = vmatpush.msra.mxu0 0.0
  %8523 = vmatpush.msra.mxu0 0.0
  %8524 = vmatpush.msra.mxu0 0.0
  %8525 = vmatpush.msra.mxu0 0.0
  %8526 = vmatpush.msra.mxu0 0.0
  %8527 = vmatpush.msra.mxu0 0.0
  %8528 = vmatpush.msra.mxu0 0.0
  %8529 = vmatpush.msra.mxu0 0.0
  %8530 = vmatpush.msra.mxu0 0.0
  %8531 = vmatpush.msra.mxu0 0.0
  %8532 = vmatpush.msra.mxu0 0.0
  %8533 = vmatpush.msra.mxu0 %v8498
  %8534 = vmatpush.msra.mxu0 %v8493
  %8535 = vmatmul.f32.gmra.mxu0 %v8514
  %v8536 = vpop.f32.mrf.mxu0
  %v8537 = vadd.f32 0.0, %v8536
  %8538 = vmatmul.f32.gmra.mxu0 %v8517
  %v8539 = vpop.f32.mrf.mxu0
  %v8540 = vadd.f32 0.0, %v8539
  %8541 = vdwg.mxu0
  %8542 = vmatpush.msra.mxu0 0.0
  %8543 = vmatpush.msra.mxu0 0.0
  %8544 = vmatpush.msra.mxu0 0.0
  %8545 = vmatpush.msra.mxu0 0.0
  %8546 = vmatpush.msra.mxu0 0.0
  %8547 = vmatpush.msra.mxu0 0.0
  %8548 = vmatpush.msra.mxu0 0.0
  %8549 = vmatpush.msra.mxu0 0.0
  %8550 = vmatpush.msra.mxu0 0.0
  %8551 = vmatpush.msra.mxu0 0.0
  %8552 = vmatpush.msra.mxu0 0.0
  %8553 = vmatpush.msra.mxu0 0.0
  %8554 = vmatpush.msra.mxu0 0.0
  %8555 = vmatpush.msra.mxu0 0.0
  %8556 = vmatpush.msra.mxu0 %v8499
  %8557 = vmatpush.msra.mxu0 %v8494
  %8558 = vmatmul.f32.gmra.mxu0 %v8514
  %v8559 = vpop.f32.mrf.mxu0
  %v8560 = vadd.f32 0.0, %v8559
  %8561 = vmatmul.f32.gmra.mxu0 %v8517
  %v8562 = vpop.f32.mrf.mxu0
  %v8563 = vadd.f32 0.0, %v8562
  %8564 = vdwg.mxu0
  %8565 = vmatpush.msra.mxu0 0.0
  %8566 = vmatpush.msra.mxu0 0.0
  %8567 = vmatpush.msra.mxu0 0.0
  %8568 = vmatpush.msra.mxu0 0.0
  %8569 = vmatpush.msra.mxu0 0.0
  %8570 = vmatpush.msra.mxu0 0.0
  %8571 = vmatpush.msra.mxu0 0.0
  %8572 = vmatpush.msra.mxu0 0.0
  %8573 = vmatpush.msra.mxu0 0.0
  %8574 = vmatpush.msra.mxu0 0.0
  %8575 = vmatpush.msra.mxu0 0.0
  %8576 = vmatpush.msra.mxu0 0.0
  %8577 = vmatpush.msra.mxu0 0.0
  %8578 = vmatpush.msra.mxu0 0.0
  %8579 = vmatpush.msra.mxu0 %v8500
  %8580 = vmatpush.msra.mxu0 %v8495
  %8581 = vmatmul.f32.gmra.mxu0 %v8514
  %v8582 = vpop.f32.mrf.mxu0
  %v8583 = vadd.f32 0.0, %v8582
  %8584 = vmatmul.f32.gmra.mxu0 %v8517
  %v8585 = vpop.f32.mrf.mxu0
  %v8586 = vadd.f32 0.0, %v8585
  %8587 = vdwg.mxu0
  %8588 = vmatpush.msra.mxu0 0.0
  %8589 = vmatpush.msra.mxu0 0.0
  %8590 = vmatpush.msra.mxu0 0.0
  %8591 = vmatpush.msra.mxu0 0.0
  %8592 = vmatpush.msra.mxu0 0.0
  %8593 = vmatpush.msra.mxu0 0.0
  %8594 = vmatpush.msra.mxu0 0.0
  %8595 = vmatpush.msra.mxu0 0.0
  %8596 = vmatpush.msra.mxu0 0.0
  %8597 = vmatpush.msra.mxu0 0.0
  %8598 = vmatpush.msra.mxu0 0.0
  %8599 = vmatpush.msra.mxu0 0.0
  %8600 = vmatpush.msra.mxu0 0.0
  %8601 = vmatpush.msra.mxu0 0.0
  %8602 = vmatpush.msra.mxu0 %v8501
  %8603 = vmatpush.msra.mxu0 %v8496
  %8604 = vmatmul.f32.gmra.mxu0 %v8514
  %v8605 = vpop.f32.mrf.mxu0
  %v8606 = vadd.f32 0.0, %v8605
  %8607 = vmatmul.f32.gmra.mxu0 %v8517
  %v8608 = vpop.f32.mrf.mxu0
  %v8609 = vadd.f32 0.0, %v8608
  %8610 = vdwg.mxu0
  %8611 = vmatpush.msra.mxu0 0.0
  %8612 = vmatpush.msra.mxu0 0.0
  %8613 = vmatpush.msra.mxu0 0.0
  %8614 = vmatpush.msra.mxu0 0.0
  %8615 = vmatpush.msra.mxu0 0.0
  %8616 = vmatpush.msra.mxu0 0.0
  %8617 = vmatpush.msra.mxu0 0.0
  %8618 = vmatpush.msra.mxu0 0.0
  %8619 = vmatpush.msra.mxu0 0.0
  %8620 = vmatpush.msra.mxu0 0.0
  %8621 = vmatpush.msra.mxu0 0.0
  %8622 = vmatpush.msra.mxu0 0.0
  %8623 = vmatpush.msra.mxu0 0.0
  %8624 = vmatpush.msra.mxu0 0.0
  %8625 = vmatpush.msra.mxu0 %v8502
  %8626 = vmatpush.msra.mxu0 %v8497
  %8627 = vmatmul.f32.gmra.mxu0 %v8514
  %v8628 = vpop.f32.mrf.mxu0
  %v8629 = vadd.f32 0.0, %v8628
  %8630 = vmatmul.f32.gmra.mxu0 %v8517
  %v8631 = vpop.f32.mrf.mxu0
  %v8632 = vadd.f32 0.0, %v8631
  %8633 = vdwg.mxu0
  %v8634 = vadd.f32 %v8456, %v8537
  %v8635 = vadd.f32 %v8457, %v8560
  %v8636 = vadd.f32 %v8458, %v8583
  %v8637 = vadd.f32 %v8459, %v8606
  %v8638 = vadd.f32 %v8460, %v8629
  %v8639 = vadd.f32 %v8461, %v8540
  %v8640 = vadd.f32 %v8462, %v8563
  %v8641 = vadd.f32 %v8463, %v8586
  %v8642 = vadd.f32 %v8464, %v8609
  %v8643 = vadd.f32 %v8465, %v8632
  %s8644 = scalar_lea.vmem %s3, 192
  %v8645 = vld [vmem:[%s8644] sm:$0xff]
  %v8646 = vld [vmem:[%s8644 + $0x8] sm:$0xff]
  %8647 = vrot.lane.b32.xlu0 %v6501, 52
  %v8648 = vpop.permute.xlu0 %8647
  %8649 = vrot.lane.b32.xlu0 %v6502, 52
  %v8650 = vpop.permute.xlu0 %8649
  %8651 = vrot.lane.b32.xlu0 %v6503, 52
  %v8652 = vpop.permute.xlu0 %8651
  %8653 = vrot.lane.b32.xlu0 %v6504, 52
  %v8654 = vpop.permute.xlu0 %8653
  %8655 = vrot.lane.b32.xlu0 %v6505, 52
  %v8656 = vpop.permute.xlu0 %8655
  %8657 = vrot.lane.b32.xlu0 %v6506, 52
  %v8658 = vpop.permute.xlu0 %8657
  %8659 = vrot.lane.b32.xlu0 %v6507, 52
  %v8660 = vpop.permute.xlu0 %8659
  %8661 = vrot.lane.b32.xlu0 %v6508, 52
  %v8662 = vpop.permute.xlu0 %8661
  %8663 = vrot.lane.b32.xlu0 %v6509, 52
  %v8664 = vpop.permute.xlu0 %8663
  %8665 = vrot.lane.b32.xlu0 %v6510, 52
  %v8666 = vpop.permute.xlu0 %8665
  %8667 = vrot.lane.b32.xlu0 %v6511, 52
  %v8668 = vpop.permute.xlu0 %8667
  %8669 = vrot.lane.b32.xlu0 %v6512, 52
  %v8670 = vpop.permute.xlu0 %8669
  %v8671 = vsel %vm4382, %v8648, %v8650
  %v8672 = vsel %vm4382, %v8650, %v8652
  %v8673 = vsel %vm4382, %v8652, %v8654
  %v8674 = vsel %vm4382, %v8654, %v8656
  %v8675 = vsel %vm4382, %v8656, %v8658
  %v8676 = vsel %vm4382, %v8660, %v8662
  %v8677 = vsel %vm4382, %v8662, %v8664
  %v8678 = vsel %vm4382, %v8664, %v8666
  %v8679 = vsel %vm4382, %v8666, %v8668
  %v8680 = vsel %vm4382, %v8668, %v8670
  %v8692 = vsel %vm6574, %v8645, 0
  %v8695 = vsel %vm6574, %v8646, 0
  %8697 = vmatpush.msra.mxu0 0.0
  %8698 = vmatpush.msra.mxu0 0.0
  %8699 = vmatpush.msra.mxu0 0.0
  %8700 = vmatpush.msra.mxu0 0.0
  %8701 = vmatpush.msra.mxu0 0.0
  %8702 = vmatpush.msra.mxu0 0.0
  %8703 = vmatpush.msra.mxu0 0.0
  %8704 = vmatpush.msra.mxu0 0.0
  %8705 = vmatpush.msra.mxu0 0.0
  %8706 = vmatpush.msra.mxu0 0.0
  %8707 = vmatpush.msra.mxu0 0.0
  %8708 = vmatpush.msra.mxu0 0.0
  %8709 = vmatpush.msra.mxu0 0.0
  %8710 = vmatpush.msra.mxu0 0.0
  %8711 = vmatpush.msra.mxu0 %v8676
  %8712 = vmatpush.msra.mxu0 %v8671
  %8713 = vmatmul.f32.gmra.mxu0 %v8692
  %v8714 = vpop.f32.mrf.mxu0
  %v8715 = vadd.f32 0.0, %v8714
  %8716 = vmatmul.f32.gmra.mxu0 %v8695
  %v8717 = vpop.f32.mrf.mxu0
  %v8718 = vadd.f32 0.0, %v8717
  %8719 = vdwg.mxu0
  %8720 = vmatpush.msra.mxu0 0.0
  %8721 = vmatpush.msra.mxu0 0.0
  %8722 = vmatpush.msra.mxu0 0.0
  %8723 = vmatpush.msra.mxu0 0.0
  %8724 = vmatpush.msra.mxu0 0.0
  %8725 = vmatpush.msra.mxu0 0.0
  %8726 = vmatpush.msra.mxu0 0.0
  %8727 = vmatpush.msra.mxu0 0.0
  %8728 = vmatpush.msra.mxu0 0.0
  %8729 = vmatpush.msra.mxu0 0.0
  %8730 = vmatpush.msra.mxu0 0.0
  %8731 = vmatpush.msra.mxu0 0.0
  %8732 = vmatpush.msra.mxu0 0.0
  %8733 = vmatpush.msra.mxu0 0.0
  %8734 = vmatpush.msra.mxu0 %v8677
  %8735 = vmatpush.msra.mxu0 %v8672
  %8736 = vmatmul.f32.gmra.mxu0 %v8692
  %v8737 = vpop.f32.mrf.mxu0
  %v8738 = vadd.f32 0.0, %v8737
  %8739 = vmatmul.f32.gmra.mxu0 %v8695
  %v8740 = vpop.f32.mrf.mxu0
  %v8741 = vadd.f32 0.0, %v8740
  %8742 = vdwg.mxu0
  %8743 = vmatpush.msra.mxu0 0.0
  %8744 = vmatpush.msra.mxu0 0.0
  %8745 = vmatpush.msra.mxu0 0.0
  %8746 = vmatpush.msra.mxu0 0.0
  %8747 = vmatpush.msra.mxu0 0.0
  %8748 = vmatpush.msra.mxu0 0.0
  %8749 = vmatpush.msra.mxu0 0.0
  %8750 = vmatpush.msra.mxu0 0.0
  %8751 = vmatpush.msra.mxu0 0.0
  %8752 = vmatpush.msra.mxu0 0.0
  %8753 = vmatpush.msra.mxu0 0.0
  %8754 = vmatpush.msra.mxu0 0.0
  %8755 = vmatpush.msra.mxu0 0.0
  %8756 = vmatpush.msra.mxu0 0.0
  %8757 = vmatpush.msra.mxu0 %v8678
  %8758 = vmatpush.msra.mxu0 %v8673
  %8759 = vmatmul.f32.gmra.mxu0 %v8692
  %v8760 = vpop.f32.mrf.mxu0
  %v8761 = vadd.f32 0.0, %v8760
  %8762 = vmatmul.f32.gmra.mxu0 %v8695
  %v8763 = vpop.f32.mrf.mxu0
  %v8764 = vadd.f32 0.0, %v8763
  %8765 = vdwg.mxu0
  %8766 = vmatpush.msra.mxu0 0.0
  %8767 = vmatpush.msra.mxu0 0.0
  %8768 = vmatpush.msra.mxu0 0.0
  %8769 = vmatpush.msra.mxu0 0.0
  %8770 = vmatpush.msra.mxu0 0.0
  %8771 = vmatpush.msra.mxu0 0.0
  %8772 = vmatpush.msra.mxu0 0.0
  %8773 = vmatpush.msra.mxu0 0.0
  %8774 = vmatpush.msra.mxu0 0.0
  %8775 = vmatpush.msra.mxu0 0.0
  %8776 = vmatpush.msra.mxu0 0.0
  %8777 = vmatpush.msra.mxu0 0.0
  %8778 = vmatpush.msra.mxu0 0.0
  %8779 = vmatpush.msra.mxu0 0.0
  %8780 = vmatpush.msra.mxu0 %v8679
  %8781 = vmatpush.msra.mxu0 %v8674
  %8782 = vmatmul.f32.gmra.mxu0 %v8692
  %v8783 = vpop.f32.mrf.mxu0
  %v8784 = vadd.f32 0.0, %v8783
  %8785 = vmatmul.f32.gmra.mxu0 %v8695
  %v8786 = vpop.f32.mrf.mxu0
  %v8787 = vadd.f32 0.0, %v8786
  %8788 = vdwg.mxu0
  %8789 = vmatpush.msra.mxu0 0.0
  %8790 = vmatpush.msra.mxu0 0.0
  %8791 = vmatpush.msra.mxu0 0.0
  %8792 = vmatpush.msra.mxu0 0.0
  %8793 = vmatpush.msra.mxu0 0.0
  %8794 = vmatpush.msra.mxu0 0.0
  %8795 = vmatpush.msra.mxu0 0.0
  %8796 = vmatpush.msra.mxu0 0.0
  %8797 = vmatpush.msra.mxu0 0.0
  %8798 = vmatpush.msra.mxu0 0.0
  %8799 = vmatpush.msra.mxu0 0.0
  %8800 = vmatpush.msra.mxu0 0.0
  %8801 = vmatpush.msra.mxu0 0.0
  %8802 = vmatpush.msra.mxu0 0.0
  %8803 = vmatpush.msra.mxu0 %v8680
  %8804 = vmatpush.msra.mxu0 %v8675
  %8805 = vmatmul.f32.gmra.mxu0 %v8692
  %v8806 = vpop.f32.mrf.mxu0
  %v8807 = vadd.f32 0.0, %v8806
  %8808 = vmatmul.f32.gmra.mxu0 %v8695
  %v8809 = vpop.f32.mrf.mxu0
  %v8810 = vadd.f32 0.0, %v8809
  %8811 = vdwg.mxu0
  %v8812 = vadd.f32 %v8634, %v8715
  %v8813 = vadd.f32 %v8635, %v8738
  %v8814 = vadd.f32 %v8636, %v8761
  %v8815 = vadd.f32 %v8637, %v8784
  %v8816 = vadd.f32 %v8638, %v8807
  %v8817 = vadd.f32 %v8639, %v8718
  %v8818 = vadd.f32 %v8640, %v8741
  %v8819 = vadd.f32 %v8641, %v8764
  %v8820 = vadd.f32 %v8642, %v8787
  %v8821 = vadd.f32 %v8643, %v8810
  %s8822 = scalar_lea.vmem %s3, 208
  %v8823 = vld [vmem:[%s8822] sm:$0xff]
  %v8824 = vld [vmem:[%s8822 + $0x8] sm:$0xff]
  %8825 = vrot.lane.b32.xlu0 %v6501, 51
  %v8826 = vpop.permute.xlu0 %8825
  %8827 = vrot.lane.b32.xlu0 %v6502, 51
  %v8828 = vpop.permute.xlu0 %8827
  %8829 = vrot.lane.b32.xlu0 %v6503, 51
  %v8830 = vpop.permute.xlu0 %8829
  %8831 = vrot.lane.b32.xlu0 %v6504, 51
  %v8832 = vpop.permute.xlu0 %8831
  %8833 = vrot.lane.b32.xlu0 %v6505, 51
  %v8834 = vpop.permute.xlu0 %8833
  %8835 = vrot.lane.b32.xlu0 %v6506, 51
  %v8836 = vpop.permute.xlu0 %8835
  %8837 = vrot.lane.b32.xlu0 %v6507, 51
  %v8838 = vpop.permute.xlu0 %8837
  %8839 = vrot.lane.b32.xlu0 %v6508, 51
  %v8840 = vpop.permute.xlu0 %8839
  %8841 = vrot.lane.b32.xlu0 %v6509, 51
  %v8842 = vpop.permute.xlu0 %8841
  %8843 = vrot.lane.b32.xlu0 %v6510, 51
  %v8844 = vpop.permute.xlu0 %8843
  %8845 = vrot.lane.b32.xlu0 %v6511, 51
  %v8846 = vpop.permute.xlu0 %8845
  %8847 = vrot.lane.b32.xlu0 %v6512, 51
  %v8848 = vpop.permute.xlu0 %8847
  %v8849 = vsel %vm4605, %v8826, %v8828
  %v8850 = vsel %vm4605, %v8828, %v8830
  %v8851 = vsel %vm4605, %v8830, %v8832
  %v8852 = vsel %vm4605, %v8832, %v8834
  %v8853 = vsel %vm4605, %v8834, %v8836
  %v8854 = vsel %vm4605, %v8838, %v8840
  %v8855 = vsel %vm4605, %v8840, %v8842
  %v8856 = vsel %vm4605, %v8842, %v8844
  %v8857 = vsel %vm4605, %v8844, %v8846
  %v8858 = vsel %vm4605, %v8846, %v8848
  %v8870 = vsel %vm6574, %v8823, 0
  %v8873 = vsel %vm6574, %v8824, 0
  %8875 = vmatpush.msra.mxu0 0.0
  %8876 = vmatpush.msra.mxu0 0.0
  %8877 = vmatpush.msra.mxu0 0.0
  %8878 = vmatpush.msra.mxu0 0.0
  %8879 = vmatpush.msra.mxu0 0.0
  %8880 = vmatpush.msra.mxu0 0.0
  %8881 = vmatpush.msra.mxu0 0.0
  %8882 = vmatpush.msra.mxu0 0.0
  %8883 = vmatpush.msra.mxu0 0.0
  %8884 = vmatpush.msra.mxu0 0.0
  %8885 = vmatpush.msra.mxu0 0.0
  %8886 = vmatpush.msra.mxu0 0.0
  %8887 = vmatpush.msra.mxu0 0.0
  %8888 = vmatpush.msra.mxu0 0.0
  %8889 = vmatpush.msra.mxu0 %v8854
  %8890 = vmatpush.msra.mxu0 %v8849
  %8891 = vmatmul.f32.gmra.mxu0 %v8870
  %v8892 = vpop.f32.mrf.mxu0
  %v8893 = vadd.f32 0.0, %v8892
  %8894 = vmatmul.f32.gmra.mxu0 %v8873
  %v8895 = vpop.f32.mrf.mxu0
  %v8896 = vadd.f32 0.0, %v8895
  %8897 = vdwg.mxu0
  %8898 = vmatpush.msra.mxu0 0.0
  %8899 = vmatpush.msra.mxu0 0.0
  %8900 = vmatpush.msra.mxu0 0.0
  %8901 = vmatpush.msra.mxu0 0.0
  %8902 = vmatpush.msra.mxu0 0.0
  %8903 = vmatpush.msra.mxu0 0.0
  %8904 = vmatpush.msra.mxu0 0.0
  %8905 = vmatpush.msra.mxu0 0.0
  %8906 = vmatpush.msra.mxu0 0.0
  %8907 = vmatpush.msra.mxu0 0.0
  %8908 = vmatpush.msra.mxu0 0.0
  %8909 = vmatpush.msra.mxu0 0.0
  %8910 = vmatpush.msra.mxu0 0.0
  %8911 = vmatpush.msra.mxu0 0.0
  %8912 = vmatpush.msra.mxu0 %v8855
  %8913 = vmatpush.msra.mxu0 %v8850
  %8914 = vmatmul.f32.gmra.mxu0 %v8870
  %v8915 = vpop.f32.mrf.mxu0
  %v8916 = vadd.f32 0.0, %v8915
  %8917 = vmatmul.f32.gmra.mxu0 %v8873
  %v8918 = vpop.f32.mrf.mxu0
  %v8919 = vadd.f32 0.0, %v8918
  %8920 = vdwg.mxu0
  %8921 = vmatpush.msra.mxu0 0.0
  %8922 = vmatpush.msra.mxu0 0.0
  %8923 = vmatpush.msra.mxu0 0.0
  %8924 = vmatpush.msra.mxu0 0.0
  %8925 = vmatpush.msra.mxu0 0.0
  %8926 = vmatpush.msra.mxu0 0.0
  %8927 = vmatpush.msra.mxu0 0.0
  %8928 = vmatpush.msra.mxu0 0.0
  %8929 = vmatpush.msra.mxu0 0.0
  %8930 = vmatpush.msra.mxu0 0.0
  %8931 = vmatpush.msra.mxu0 0.0
  %8932 = vmatpush.msra.mxu0 0.0
  %8933 = vmatpush.msra.mxu0 0.0
  %8934 = vmatpush.msra.mxu0 0.0
  %8935 = vmatpush.msra.mxu0 %v8856
  %8936 = vmatpush.msra.mxu0 %v8851
  %8937 = vmatmul.f32.gmra.mxu0 %v8870
  %v8938 = vpop.f32.mrf.mxu0
  %v8939 = vadd.f32 0.0, %v8938
  %8940 = vmatmul.f32.gmra.mxu0 %v8873
  %v8941 = vpop.f32.mrf.mxu0
  %v8942 = vadd.f32 0.0, %v8941
  %8943 = vdwg.mxu0
  %8944 = vmatpush.msra.mxu0 0.0
  %8945 = vmatpush.msra.mxu0 0.0
  %8946 = vmatpush.msra.mxu0 0.0
  %8947 = vmatpush.msra.mxu0 0.0
  %8948 = vmatpush.msra.mxu0 0.0
  %8949 = vmatpush.msra.mxu0 0.0
  %8950 = vmatpush.msra.mxu0 0.0
  %8951 = vmatpush.msra.mxu0 0.0
  %8952 = vmatpush.msra.mxu0 0.0
  %8953 = vmatpush.msra.mxu0 0.0
  %8954 = vmatpush.msra.mxu0 0.0
  %8955 = vmatpush.msra.mxu0 0.0
  %8956 = vmatpush.msra.mxu0 0.0
  %8957 = vmatpush.msra.mxu0 0.0
  %8958 = vmatpush.msra.mxu0 %v8857
  %8959 = vmatpush.msra.mxu0 %v8852
  %8960 = vmatmul.f32.gmra.mxu0 %v8870
  %v8961 = vpop.f32.mrf.mxu0
  %v8962 = vadd.f32 0.0, %v8961
  %8963 = vmatmul.f32.gmra.mxu0 %v8873
  %v8964 = vpop.f32.mrf.mxu0
  %v8965 = vadd.f32 0.0, %v8964
  %8966 = vdwg.mxu0
  %8967 = vmatpush.msra.mxu0 0.0
  %8968 = vmatpush.msra.mxu0 0.0
  %8969 = vmatpush.msra.mxu0 0.0
  %8970 = vmatpush.msra.mxu0 0.0
  %8971 = vmatpush.msra.mxu0 0.0
  %8972 = vmatpush.msra.mxu0 0.0
  %8973 = vmatpush.msra.mxu0 0.0
  %8974 = vmatpush.msra.mxu0 0.0
  %8975 = vmatpush.msra.mxu0 0.0
  %8976 = vmatpush.msra.mxu0 0.0
  %8977 = vmatpush.msra.mxu0 0.0
  %8978 = vmatpush.msra.mxu0 0.0
  %8979 = vmatpush.msra.mxu0 0.0
  %8980 = vmatpush.msra.mxu0 0.0
  %8981 = vmatpush.msra.mxu0 %v8858
  %8982 = vmatpush.msra.mxu0 %v8853
  %8983 = vmatmul.f32.gmra.mxu0 %v8870
  %v8984 = vpop.f32.mrf.mxu0
  %v8985 = vadd.f32 0.0, %v8984
  %8986 = vmatmul.f32.gmra.mxu0 %v8873
  %v8987 = vpop.f32.mrf.mxu0
  %v8988 = vadd.f32 0.0, %v8987
  %8989 = vdwg.mxu0
  %v8990 = vadd.f32 %v8812, %v8893
  %v8991 = vadd.f32 %v8813, %v8916
  %v8992 = vadd.f32 %v8814, %v8939
  %v8993 = vadd.f32 %v8815, %v8962
  %v8994 = vadd.f32 %v8816, %v8985
  %v8995 = vadd.f32 %v8817, %v8896
  %v8996 = vadd.f32 %v8818, %v8919
  %v8997 = vadd.f32 %v8819, %v8942
  %v8998 = vadd.f32 %v8820, %v8965
  %v8999 = vadd.f32 %v8821, %v8988
  %s9000 = scalar_lea.vmem %s3, 224
  %v9001 = vld [vmem:[%s9000] sm:$0xff]
  %v9002 = vld [vmem:[%s9000 + $0x8] sm:$0xff]
  %9003 = vrot.lane.b32.xlu0 %v6501, 50
  %v9004 = vpop.permute.xlu0 %9003
  %9005 = vrot.lane.b32.xlu0 %v6502, 50
  %v9006 = vpop.permute.xlu0 %9005
  %9007 = vrot.lane.b32.xlu0 %v6503, 50
  %v9008 = vpop.permute.xlu0 %9007
  %9009 = vrot.lane.b32.xlu0 %v6504, 50
  %v9010 = vpop.permute.xlu0 %9009
  %9011 = vrot.lane.b32.xlu0 %v6505, 50
  %v9012 = vpop.permute.xlu0 %9011
  %9013 = vrot.lane.b32.xlu0 %v6506, 50
  %v9014 = vpop.permute.xlu0 %9013
  %9015 = vrot.lane.b32.xlu0 %v6507, 50
  %v9016 = vpop.permute.xlu0 %9015
  %9017 = vrot.lane.b32.xlu0 %v6508, 50
  %v9018 = vpop.permute.xlu0 %9017
  %9019 = vrot.lane.b32.xlu0 %v6509, 50
  %v9020 = vpop.permute.xlu0 %9019
  %9021 = vrot.lane.b32.xlu0 %v6510, 50
  %v9022 = vpop.permute.xlu0 %9021
  %9023 = vrot.lane.b32.xlu0 %v6511, 50
  %v9024 = vpop.permute.xlu0 %9023
  %9025 = vrot.lane.b32.xlu0 %v6512, 50
  %v9026 = vpop.permute.xlu0 %9025
  %v9027 = vsel %vm4828, %v9004, %v9006
  %v9028 = vsel %vm4828, %v9006, %v9008
  %v9029 = vsel %vm4828, %v9008, %v9010
  %v9030 = vsel %vm4828, %v9010, %v9012
  %v9031 = vsel %vm4828, %v9012, %v9014
  %v9032 = vsel %vm4828, %v9016, %v9018
  %v9033 = vsel %vm4828, %v9018, %v9020
  %v9034 = vsel %vm4828, %v9020, %v9022
  %v9035 = vsel %vm4828, %v9022, %v9024
  %v9036 = vsel %vm4828, %v9024, %v9026
  %v9048 = vsel %vm6574, %v9001, 0
  %v9051 = vsel %vm6574, %v9002, 0
  %9053 = vmatpush.msra.mxu0 0.0
  %9054 = vmatpush.msra.mxu0 0.0
  %9055 = vmatpush.msra.mxu0 0.0
  %9056 = vmatpush.msra.mxu0 0.0
  %9057 = vmatpush.msra.mxu0 0.0
  %9058 = vmatpush.msra.mxu0 0.0
  %9059 = vmatpush.msra.mxu0 0.0
  %9060 = vmatpush.msra.mxu0 0.0
  %9061 = vmatpush.msra.mxu0 0.0
  %9062 = vmatpush.msra.mxu0 0.0
  %9063 = vmatpush.msra.mxu0 0.0
  %9064 = vmatpush.msra.mxu0 0.0
  %9065 = vmatpush.msra.mxu0 0.0
  %9066 = vmatpush.msra.mxu0 0.0
  %9067 = vmatpush.msra.mxu0 %v9032
  %9068 = vmatpush.msra.mxu0 %v9027
  %9069 = vmatmul.f32.gmra.mxu0 %v9048
  %v9070 = vpop.f32.mrf.mxu0
  %v9071 = vadd.f32 0.0, %v9070
  %9072 = vmatmul.f32.gmra.mxu0 %v9051
  %v9073 = vpop.f32.mrf.mxu0
  %v9074 = vadd.f32 0.0, %v9073
  %9075 = vdwg.mxu0
  %9076 = vmatpush.msra.mxu0 0.0
  %9077 = vmatpush.msra.mxu0 0.0
  %9078 = vmatpush.msra.mxu0 0.0
  %9079 = vmatpush.msra.mxu0 0.0
  %9080 = vmatpush.msra.mxu0 0.0
  %9081 = vmatpush.msra.mxu0 0.0
  %9082 = vmatpush.msra.mxu0 0.0
  %9083 = vmatpush.msra.mxu0 0.0
  %9084 = vmatpush.msra.mxu0 0.0
  %9085 = vmatpush.msra.mxu0 0.0
  %9086 = vmatpush.msra.mxu0 0.0
  %9087 = vmatpush.msra.mxu0 0.0
  %9088 = vmatpush.msra.mxu0 0.0
  %9089 = vmatpush.msra.mxu0 0.0
  %9090 = vmatpush.msra.mxu0 %v9033
  %9091 = vmatpush.msra.mxu0 %v9028
  %9092 = vmatmul.f32.gmra.mxu0 %v9048
  %v9093 = vpop.f32.mrf.mxu0
  %v9094 = vadd.f32 0.0, %v9093
  %9095 = vmatmul.f32.gmra.mxu0 %v9051
  %v9096 = vpop.f32.mrf.mxu0
  %v9097 = vadd.f32 0.0, %v9096
  %9098 = vdwg.mxu0
  %9099 = vmatpush.msra.mxu0 0.0
  %9100 = vmatpush.msra.mxu0 0.0
  %9101 = vmatpush.msra.mxu0 0.0
  %9102 = vmatpush.msra.mxu0 0.0
  %9103 = vmatpush.msra.mxu0 0.0
  %9104 = vmatpush.msra.mxu0 0.0
  %9105 = vmatpush.msra.mxu0 0.0
  %9106 = vmatpush.msra.mxu0 0.0
  %9107 = vmatpush.msra.mxu0 0.0
  %9108 = vmatpush.msra.mxu0 0.0
  %9109 = vmatpush.msra.mxu0 0.0
  %9110 = vmatpush.msra.mxu0 0.0
  %9111 = vmatpush.msra.mxu0 0.0
  %9112 = vmatpush.msra.mxu0 0.0
  %9113 = vmatpush.msra.mxu0 %v9034
  %9114 = vmatpush.msra.mxu0 %v9029
  %9115 = vmatmul.f32.gmra.mxu0 %v9048
  %v9116 = vpop.f32.mrf.mxu0
  %v9117 = vadd.f32 0.0, %v9116
  %9118 = vmatmul.f32.gmra.mxu0 %v9051
  %v9119 = vpop.f32.mrf.mxu0
  %v9120 = vadd.f32 0.0, %v9119
  %9121 = vdwg.mxu0
  %9122 = vmatpush.msra.mxu0 0.0
  %9123 = vmatpush.msra.mxu0 0.0
  %9124 = vmatpush.msra.mxu0 0.0
  %9125 = vmatpush.msra.mxu0 0.0
  %9126 = vmatpush.msra.mxu0 0.0
  %9127 = vmatpush.msra.mxu0 0.0
  %9128 = vmatpush.msra.mxu0 0.0
  %9129 = vmatpush.msra.mxu0 0.0
  %9130 = vmatpush.msra.mxu0 0.0
  %9131 = vmatpush.msra.mxu0 0.0
  %9132 = vmatpush.msra.mxu0 0.0
  %9133 = vmatpush.msra.mxu0 0.0
  %9134 = vmatpush.msra.mxu0 0.0
  %9135 = vmatpush.msra.mxu0 0.0
  %9136 = vmatpush.msra.mxu0 %v9035
  %9137 = vmatpush.msra.mxu0 %v9030
  %9138 = vmatmul.f32.gmra.mxu0 %v9048
  %v9139 = vpop.f32.mrf.mxu0
  %v9140 = vadd.f32 0.0, %v9139
  %9141 = vmatmul.f32.gmra.mxu0 %v9051
  %v9142 = vpop.f32.mrf.mxu0
  %v9143 = vadd.f32 0.0, %v9142
  %9144 = vdwg.mxu0
  %9145 = vmatpush.msra.mxu0 0.0
  %9146 = vmatpush.msra.mxu0 0.0
  %9147 = vmatpush.msra.mxu0 0.0
  %9148 = vmatpush.msra.mxu0 0.0
  %9149 = vmatpush.msra.mxu0 0.0
  %9150 = vmatpush.msra.mxu0 0.0
  %9151 = vmatpush.msra.mxu0 0.0
  %9152 = vmatpush.msra.mxu0 0.0
  %9153 = vmatpush.msra.mxu0 0.0
  %9154 = vmatpush.msra.mxu0 0.0
  %9155 = vmatpush.msra.mxu0 0.0
  %9156 = vmatpush.msra.mxu0 0.0
  %9157 = vmatpush.msra.mxu0 0.0
  %9158 = vmatpush.msra.mxu0 0.0
  %9159 = vmatpush.msra.mxu0 %v9036
  %9160 = vmatpush.msra.mxu0 %v9031
  %9161 = vmatmul.f32.gmra.mxu0 %v9048
  %v9162 = vpop.f32.mrf.mxu0
  %v9163 = vadd.f32 0.0, %v9162
  %9164 = vmatmul.f32.gmra.mxu0 %v9051
  %v9165 = vpop.f32.mrf.mxu0
  %v9166 = vadd.f32 0.0, %v9165
  %9167 = vdwg.mxu0
  %v9168 = vadd.f32 %v8990, %v9071
  %v9169 = vadd.f32 %v8991, %v9094
  %v9170 = vadd.f32 %v8992, %v9117
  %v9171 = vadd.f32 %v8993, %v9140
  %v9172 = vadd.f32 %v8994, %v9163
  %v9173 = vadd.f32 %v8995, %v9074
  %v9174 = vadd.f32 %v8996, %v9097
  %v9175 = vadd.f32 %v8997, %v9120
  %v9176 = vadd.f32 %v8998, %v9143
  %v9177 = vadd.f32 %v8999, %v9166
  %s9178 = scalar_lea.vmem %s3, 240
  %v9179 = vld [vmem:[%s9178] sm:$0xff]
  %v9180 = vld [vmem:[%s9178 + $0x8] sm:$0xff]
  %9181 = vrot.lane.b32.xlu0 %v6501, 29
  %v9182 = vpop.permute.xlu0 %9181
  %9183 = vrot.lane.b32.xlu0 %v6502, 29
  %v9184 = vpop.permute.xlu0 %9183
  %9185 = vrot.lane.b32.xlu0 %v6503, 29
  %v9186 = vpop.permute.xlu0 %9185
  %9187 = vrot.lane.b32.xlu0 %v6504, 29
  %v9188 = vpop.permute.xlu0 %9187
  %9189 = vrot.lane.b32.xlu0 %v6505, 29
  %v9190 = vpop.permute.xlu0 %9189
  %9191 = vrot.lane.b32.xlu0 %v6506, 29
  %v9192 = vpop.permute.xlu0 %9191
  %9193 = vrot.lane.b32.xlu0 %v6507, 29
  %v9194 = vpop.permute.xlu0 %9193
  %9195 = vrot.lane.b32.xlu0 %v6508, 29
  %v9196 = vpop.permute.xlu0 %9195
  %9197 = vrot.lane.b32.xlu0 %v6509, 29
  %v9198 = vpop.permute.xlu0 %9197
  %9199 = vrot.lane.b32.xlu0 %v6510, 29
  %v9200 = vpop.permute.xlu0 %9199
  %9201 = vrot.lane.b32.xlu0 %v6511, 29
  %v9202 = vpop.permute.xlu0 %9201
  %9203 = vrot.lane.b32.xlu0 %v6512, 29
  %v9204 = vpop.permute.xlu0 %9203
  %vm9205 = vcmask 236544
  %v9206 = vsel %vm9205, %v9182, %v9184
  %v9207 = vsel %vm9205, %v9184, %v9186
  %v9208 = vsel %vm9205, %v9186, %v9188
  %v9209 = vsel %vm9205, %v9188, %v9190
  %v9210 = vsel %vm9205, %v9190, %v9192
  %v9211 = vsel %vm9205, %v9194, %v9196
  %v9212 = vsel %vm9205, %v9196, %v9198
  %v9213 = vsel %vm9205, %v9198, %v9200
  %v9214 = vsel %vm9205, %v9200, %v9202
  %v9215 = vsel %vm9205, %v9202, %v9204
  %v9227 = vsel %vm6574, %v9179, 0
  %v9230 = vsel %vm6574, %v9180, 0
  %9232 = vmatpush.msra.mxu0 0.0
  %9233 = vmatpush.msra.mxu0 0.0
  %9234 = vmatpush.msra.mxu0 0.0
  %9235 = vmatpush.msra.mxu0 0.0
  %9236 = vmatpush.msra.mxu0 0.0
  %9237 = vmatpush.msra.mxu0 0.0
  %9238 = vmatpush.msra.mxu0 0.0
  %9239 = vmatpush.msra.mxu0 0.0
  %9240 = vmatpush.msra.mxu0 0.0
  %9241 = vmatpush.msra.mxu0 0.0
  %9242 = vmatpush.msra.mxu0 0.0
  %9243 = vmatpush.msra.mxu0 0.0
  %9244 = vmatpush.msra.mxu0 0.0
  %9245 = vmatpush.msra.mxu0 0.0
  %9246 = vmatpush.msra.mxu0 %v9211
  %9247 = vmatpush.msra.mxu0 %v9206
  %9248 = vmatmul.f32.gmra.mxu0 %v9227
  %v9249 = vpop.f32.mrf.mxu0
  %v9250 = vadd.f32 0.0, %v9249
  %9251 = vmatmul.f32.gmra.mxu0 %v9230
  %v9252 = vpop.f32.mrf.mxu0
  %v9253 = vadd.f32 0.0, %v9252
  %9254 = vdwg.mxu0
  %9255 = vmatpush.msra.mxu0 0.0
  %9256 = vmatpush.msra.mxu0 0.0
  %9257 = vmatpush.msra.mxu0 0.0
  %9258 = vmatpush.msra.mxu0 0.0
  %9259 = vmatpush.msra.mxu0 0.0
  %9260 = vmatpush.msra.mxu0 0.0
  %9261 = vmatpush.msra.mxu0 0.0
  %9262 = vmatpush.msra.mxu0 0.0
  %9263 = vmatpush.msra.mxu0 0.0
  %9264 = vmatpush.msra.mxu0 0.0
  %9265 = vmatpush.msra.mxu0 0.0
  %9266 = vmatpush.msra.mxu0 0.0
  %9267 = vmatpush.msra.mxu0 0.0
  %9268 = vmatpush.msra.mxu0 0.0
  %9269 = vmatpush.msra.mxu0 %v9212
  %9270 = vmatpush.msra.mxu0 %v9207
  %9271 = vmatmul.f32.gmra.mxu0 %v9227
  %v9272 = vpop.f32.mrf.mxu0
  %v9273 = vadd.f32 0.0, %v9272
  %9274 = vmatmul.f32.gmra.mxu0 %v9230
  %v9275 = vpop.f32.mrf.mxu0
  %v9276 = vadd.f32 0.0, %v9275
  %9277 = vdwg.mxu0
  %9278 = vmatpush.msra.mxu0 0.0
  %9279 = vmatpush.msra.mxu0 0.0
  %9280 = vmatpush.msra.mxu0 0.0
  %9281 = vmatpush.msra.mxu0 0.0
  %9282 = vmatpush.msra.mxu0 0.0
  %9283 = vmatpush.msra.mxu0 0.0
  %9284 = vmatpush.msra.mxu0 0.0
  %9285 = vmatpush.msra.mxu0 0.0
  %9286 = vmatpush.msra.mxu0 0.0
  %9287 = vmatpush.msra.mxu0 0.0
  %9288 = vmatpush.msra.mxu0 0.0
  %9289 = vmatpush.msra.mxu0 0.0
  %9290 = vmatpush.msra.mxu0 0.0
  %9291 = vmatpush.msra.mxu0 0.0
  %9292 = vmatpush.msra.mxu0 %v9213
  %9293 = vmatpush.msra.mxu0 %v9208
  %9294 = vmatmul.f32.gmra.mxu0 %v9227
  %v9295 = vpop.f32.mrf.mxu0
  %v9296 = vadd.f32 0.0, %v9295
  %9297 = vmatmul.f32.gmra.mxu0 %v9230
  %v9298 = vpop.f32.mrf.mxu0
  %v9299 = vadd.f32 0.0, %v9298
  %9300 = vdwg.mxu0
  %9301 = vmatpush.msra.mxu0 0.0
  %9302 = vmatpush.msra.mxu0 0.0
  %9303 = vmatpush.msra.mxu0 0.0
  %9304 = vmatpush.msra.mxu0 0.0
  %9305 = vmatpush.msra.mxu0 0.0
  %9306 = vmatpush.msra.mxu0 0.0
  %9307 = vmatpush.msra.mxu0 0.0
  %9308 = vmatpush.msra.mxu0 0.0
  %9309 = vmatpush.msra.mxu0 0.0
  %9310 = vmatpush.msra.mxu0 0.0
  %9311 = vmatpush.msra.mxu0 0.0
  %9312 = vmatpush.msra.mxu0 0.0
  %9313 = vmatpush.msra.mxu0 0.0
  %9314 = vmatpush.msra.mxu0 0.0
  %9315 = vmatpush.msra.mxu0 %v9214
  %9316 = vmatpush.msra.mxu0 %v9209
  %9317 = vmatmul.f32.gmra.mxu0 %v9227
  %v9318 = vpop.f32.mrf.mxu0
  %v9319 = vadd.f32 0.0, %v9318
  %9320 = vmatmul.f32.gmra.mxu0 %v9230
  %v9321 = vpop.f32.mrf.mxu0
  %v9322 = vadd.f32 0.0, %v9321
  %9323 = vdwg.mxu0
  %9324 = vmatpush.msra.mxu0 0.0
  %9325 = vmatpush.msra.mxu0 0.0
  %9326 = vmatpush.msra.mxu0 0.0
  %9327 = vmatpush.msra.mxu0 0.0
  %9328 = vmatpush.msra.mxu0 0.0
  %9329 = vmatpush.msra.mxu0 0.0
  %9330 = vmatpush.msra.mxu0 0.0
  %9331 = vmatpush.msra.mxu0 0.0
  %9332 = vmatpush.msra.mxu0 0.0
  %9333 = vmatpush.msra.mxu0 0.0
  %9334 = vmatpush.msra.mxu0 0.0
  %9335 = vmatpush.msra.mxu0 0.0
  %9336 = vmatpush.msra.mxu0 0.0
  %9337 = vmatpush.msra.mxu0 0.0
  %9338 = vmatpush.msra.mxu0 %v9215
  %9339 = vmatpush.msra.mxu0 %v9210
  %9340 = vmatmul.f32.gmra.mxu0 %v9227
  %v9341 = vpop.f32.mrf.mxu0
  %v9342 = vadd.f32 0.0, %v9341
  %9343 = vmatmul.f32.gmra.mxu0 %v9230
  %v9344 = vpop.f32.mrf.mxu0
  %v9345 = vadd.f32 0.0, %v9344
  %9346 = vdwg.mxu0
  %v9347 = vadd.f32 %v9168, %v9250
  %v9348 = vadd.f32 %v9169, %v9273
  %v9349 = vadd.f32 %v9170, %v9296
  %v9350 = vadd.f32 %v9171, %v9319
  %v9351 = vadd.f32 %v9172, %v9342
  %v9352 = vadd.f32 %v9173, %v9253
  %v9353 = vadd.f32 %v9174, %v9276
  %v9354 = vadd.f32 %v9175, %v9299
  %v9355 = vadd.f32 %v9176, %v9322
  %v9356 = vadd.f32 %v9177, %v9345
  %s9357 = scalar_lea.vmem %s3, 256
  %v9358 = vld [vmem:[%s9357] sm:$0xff]
  %v9359 = vld [vmem:[%s9357 + $0x8] sm:$0xff]
  %9360 = vrot.lane.b32.xlu0 %v6501, 28
  %v9361 = vpop.permute.xlu0 %9360
  %9362 = vrot.lane.b32.xlu0 %v6502, 28
  %v9363 = vpop.permute.xlu0 %9362
  %9364 = vrot.lane.b32.xlu0 %v6503, 28
  %v9365 = vpop.permute.xlu0 %9364
  %9366 = vrot.lane.b32.xlu0 %v6504, 28
  %v9367 = vpop.permute.xlu0 %9366
  %9368 = vrot.lane.b32.xlu0 %v6505, 28
  %v9369 = vpop.permute.xlu0 %9368
  %9370 = vrot.lane.b32.xlu0 %v6506, 28
  %v9371 = vpop.permute.xlu0 %9370
  %9372 = vrot.lane.b32.xlu0 %v6507, 28
  %v9373 = vpop.permute.xlu0 %9372
  %9374 = vrot.lane.b32.xlu0 %v6508, 28
  %v9375 = vpop.permute.xlu0 %9374
  %9376 = vrot.lane.b32.xlu0 %v6509, 28
  %v9377 = vpop.permute.xlu0 %9376
  %9378 = vrot.lane.b32.xlu0 %v6510, 28
  %v9379 = vpop.permute.xlu0 %9378
  %9380 = vrot.lane.b32.xlu0 %v6511, 28
  %v9381 = vpop.permute.xlu0 %9380
  %9382 = vrot.lane.b32.xlu0 %v6512, 28
  %v9383 = vpop.permute.xlu0 %9382
  %v9384 = vsel %vm5274, %v9361, %v9363
  %v9385 = vsel %vm5274, %v9363, %v9365
  %v9386 = vsel %vm5274, %v9365, %v9367
  %v9387 = vsel %vm5274, %v9367, %v9369
  %v9388 = vsel %vm5274, %v9369, %v9371
  %v9389 = vsel %vm5274, %v9373, %v9375
  %v9390 = vsel %vm5274, %v9375, %v9377
  %v9391 = vsel %vm5274, %v9377, %v9379
  %v9392 = vsel %vm5274, %v9379, %v9381
  %v9393 = vsel %vm5274, %v9381, %v9383
  %v9405 = vsel %vm6574, %v9358, 0
  %v9408 = vsel %vm6574, %v9359, 0
  %9410 = vmatpush.msra.mxu0 0.0
  %9411 = vmatpush.msra.mxu0 0.0
  %9412 = vmatpush.msra.mxu0 0.0
  %9413 = vmatpush.msra.mxu0 0.0
  %9414 = vmatpush.msra.mxu0 0.0
  %9415 = vmatpush.msra.mxu0 0.0
  %9416 = vmatpush.msra.mxu0 0.0
  %9417 = vmatpush.msra.mxu0 0.0
  %9418 = vmatpush.msra.mxu0 0.0
  %9419 = vmatpush.msra.mxu0 0.0
  %9420 = vmatpush.msra.mxu0 0.0
  %9421 = vmatpush.msra.mxu0 0.0
  %9422 = vmatpush.msra.mxu0 0.0
  %9423 = vmatpush.msra.mxu0 0.0
  %9424 = vmatpush.msra.mxu0 %v9389
  %9425 = vmatpush.msra.mxu0 %v9384
  %9426 = vmatmul.f32.gmra.mxu0 %v9405
  %v9427 = vpop.f32.mrf.mxu0
  %v9428 = vadd.f32 0.0, %v9427
  %9429 = vmatmul.f32.gmra.mxu0 %v9408
  %v9430 = vpop.f32.mrf.mxu0
  %v9431 = vadd.f32 0.0, %v9430
  %9432 = vdwg.mxu0
  %9433 = vmatpush.msra.mxu0 0.0
  %9434 = vmatpush.msra.mxu0 0.0
  %9435 = vmatpush.msra.mxu0 0.0
  %9436 = vmatpush.msra.mxu0 0.0
  %9437 = vmatpush.msra.mxu0 0.0
  %9438 = vmatpush.msra.mxu0 0.0
  %9439 = vmatpush.msra.mxu0 0.0
  %9440 = vmatpush.msra.mxu0 0.0
  %9441 = vmatpush.msra.mxu0 0.0
  %9442 = vmatpush.msra.mxu0 0.0
  %9443 = vmatpush.msra.mxu0 0.0
  %9444 = vmatpush.msra.mxu0 0.0
  %9445 = vmatpush.msra.mxu0 0.0
  %9446 = vmatpush.msra.mxu0 0.0
  %9447 = vmatpush.msra.mxu0 %v9390
  %9448 = vmatpush.msra.mxu0 %v9385
  %9449 = vmatmul.f32.gmra.mxu0 %v9405
  %v9450 = vpop.f32.mrf.mxu0
  %v9451 = vadd.f32 0.0, %v9450
  %9452 = vmatmul.f32.gmra.mxu0 %v9408
  %v9453 = vpop.f32.mrf.mxu0
  %v9454 = vadd.f32 0.0, %v9453
  %9455 = vdwg.mxu0
  %9456 = vmatpush.msra.mxu0 0.0
  %9457 = vmatpush.msra.mxu0 0.0
  %9458 = vmatpush.msra.mxu0 0.0
  %9459 = vmatpush.msra.mxu0 0.0
  %9460 = vmatpush.msra.mxu0 0.0
  %9461 = vmatpush.msra.mxu0 0.0
  %9462 = vmatpush.msra.mxu0 0.0
  %9463 = vmatpush.msra.mxu0 0.0
  %9464 = vmatpush.msra.mxu0 0.0
  %9465 = vmatpush.msra.mxu0 0.0
  %9466 = vmatpush.msra.mxu0 0.0
  %9467 = vmatpush.msra.mxu0 0.0
  %9468 = vmatpush.msra.mxu0 0.0
  %9469 = vmatpush.msra.mxu0 0.0
  %9470 = vmatpush.msra.mxu0 %v9391
  %9471 = vmatpush.msra.mxu0 %v9386
  %9472 = vmatmul.f32.gmra.mxu0 %v9405
  %v9473 = vpop.f32.mrf.mxu0
  %v9474 = vadd.f32 0.0, %v9473
  %9475 = vmatmul.f32.gmra.mxu0 %v9408
  %v9476 = vpop.f32.mrf.mxu0
  %v9477 = vadd.f32 0.0, %v9476
  %9478 = vdwg.mxu0
  %9479 = vmatpush.msra.mxu0 0.0
  %9480 = vmatpush.msra.mxu0 0.0
  %9481 = vmatpush.msra.mxu0 0.0
  %9482 = vmatpush.msra.mxu0 0.0
  %9483 = vmatpush.msra.mxu0 0.0
  %9484 = vmatpush.msra.mxu0 0.0
  %9485 = vmatpush.msra.mxu0 0.0
  %9486 = vmatpush.msra.mxu0 0.0
  %9487 = vmatpush.msra.mxu0 0.0
  %9488 = vmatpush.msra.mxu0 0.0
  %9489 = vmatpush.msra.mxu0 0.0
  %9490 = vmatpush.msra.mxu0 0.0
  %9491 = vmatpush.msra.mxu0 0.0
  %9492 = vmatpush.msra.mxu0 0.0
  %9493 = vmatpush.msra.mxu0 %v9392
  %9494 = vmatpush.msra.mxu0 %v9387
  %9495 = vmatmul.f32.gmra.mxu0 %v9405
  %v9496 = vpop.f32.mrf.mxu0
  %v9497 = vadd.f32 0.0, %v9496
  %9498 = vmatmul.f32.gmra.mxu0 %v9408
  %v9499 = vpop.f32.mrf.mxu0
  %v9500 = vadd.f32 0.0, %v9499
  %9501 = vdwg.mxu0
  %9502 = vmatpush.msra.mxu0 0.0
  %9503 = vmatpush.msra.mxu0 0.0
  %9504 = vmatpush.msra.mxu0 0.0
  %9505 = vmatpush.msra.mxu0 0.0
  %9506 = vmatpush.msra.mxu0 0.0
  %9507 = vmatpush.msra.mxu0 0.0
  %9508 = vmatpush.msra.mxu0 0.0
  %9509 = vmatpush.msra.mxu0 0.0
  %9510 = vmatpush.msra.mxu0 0.0
  %9511 = vmatpush.msra.mxu0 0.0
  %9512 = vmatpush.msra.mxu0 0.0
  %9513 = vmatpush.msra.mxu0 0.0
  %9514 = vmatpush.msra.mxu0 0.0
  %9515 = vmatpush.msra.mxu0 0.0
  %9516 = vmatpush.msra.mxu0 %v9393
  %9517 = vmatpush.msra.mxu0 %v9388
  %9518 = vmatmul.f32.gmra.mxu0 %v9405
  %v9519 = vpop.f32.mrf.mxu0
  %v9520 = vadd.f32 0.0, %v9519
  %9521 = vmatmul.f32.gmra.mxu0 %v9408
  %v9522 = vpop.f32.mrf.mxu0
  %v9523 = vadd.f32 0.0, %v9522
  %9524 = vdwg.mxu0
  %v9525 = vadd.f32 %v9347, %v9428
  %v9526 = vadd.f32 %v9348, %v9451
  %v9527 = vadd.f32 %v9349, %v9474
  %v9528 = vadd.f32 %v9350, %v9497
  %v9529 = vadd.f32 %v9351, %v9520
  %v9530 = vadd.f32 %v9352, %v9431
  %v9531 = vadd.f32 %v9353, %v9454
  %v9532 = vadd.f32 %v9354, %v9477
  %v9533 = vadd.f32 %v9355, %v9500
  %v9534 = vadd.f32 %v9356, %v9523
  %s9535 = scalar_lea.vmem %s3, 272
  %v9536 = vld [vmem:[%s9535] sm:$0xff]
  %v9537 = vld [vmem:[%s9535 + $0x8] sm:$0xff]
  %9538 = vrot.lane.b32.xlu0 %v6501, 27
  %v9539 = vpop.permute.xlu0 %9538
  %9540 = vrot.lane.b32.xlu0 %v6502, 27
  %v9541 = vpop.permute.xlu0 %9540
  %9542 = vrot.lane.b32.xlu0 %v6503, 27
  %v9543 = vpop.permute.xlu0 %9542
  %9544 = vrot.lane.b32.xlu0 %v6504, 27
  %v9545 = vpop.permute.xlu0 %9544
  %9546 = vrot.lane.b32.xlu0 %v6505, 27
  %v9547 = vpop.permute.xlu0 %9546
  %9548 = vrot.lane.b32.xlu0 %v6506, 27
  %v9549 = vpop.permute.xlu0 %9548
  %9550 = vrot.lane.b32.xlu0 %v6507, 27
  %v9551 = vpop.permute.xlu0 %9550
  %9552 = vrot.lane.b32.xlu0 %v6508, 27
  %v9553 = vpop.permute.xlu0 %9552
  %9554 = vrot.lane.b32.xlu0 %v6509, 27
  %v9555 = vpop.permute.xlu0 %9554
  %9556 = vrot.lane.b32.xlu0 %v6510, 27
  %v9557 = vpop.permute.xlu0 %9556
  %9558 = vrot.lane.b32.xlu0 %v6511, 27
  %v9559 = vpop.permute.xlu0 %9558
  %9560 = vrot.lane.b32.xlu0 %v6512, 27
  %v9561 = vpop.permute.xlu0 %9560
  %v9562 = vsel %vm5497, %v9539, %v9541
  %v9563 = vsel %vm5497, %v9541, %v9543
  %v9564 = vsel %vm5497, %v9543, %v9545
  %v9565 = vsel %vm5497, %v9545, %v9547
  %v9566 = vsel %vm5497, %v9547, %v9549
  %v9567 = vsel %vm5497, %v9551, %v9553
  %v9568 = vsel %vm5497, %v9553, %v9555
  %v9569 = vsel %vm5497, %v9555, %v9557
  %v9570 = vsel %vm5497, %v9557, %v9559
  %v9571 = vsel %vm5497, %v9559, %v9561
  %v9583 = vsel %vm6574, %v9536, 0
  %v9586 = vsel %vm6574, %v9537, 0
  %9588 = vmatpush.msra.mxu0 0.0
  %9589 = vmatpush.msra.mxu0 0.0
  %9590 = vmatpush.msra.mxu0 0.0
  %9591 = vmatpush.msra.mxu0 0.0
  %9592 = vmatpush.msra.mxu0 0.0
  %9593 = vmatpush.msra.mxu0 0.0
  %9594 = vmatpush.msra.mxu0 0.0
  %9595 = vmatpush.msra.mxu0 0.0
  %9596 = vmatpush.msra.mxu0 0.0
  %9597 = vmatpush.msra.mxu0 0.0
  %9598 = vmatpush.msra.mxu0 0.0
  %9599 = vmatpush.msra.mxu0 0.0
  %9600 = vmatpush.msra.mxu0 0.0
  %9601 = vmatpush.msra.mxu0 0.0
  %9602 = vmatpush.msra.mxu0 %v9567
  %9603 = vmatpush.msra.mxu0 %v9562
  %9604 = vmatmul.f32.gmra.mxu0 %v9583
  %v9605 = vpop.f32.mrf.mxu0
  %v9606 = vadd.f32 0.0, %v9605
  %9607 = vmatmul.f32.gmra.mxu0 %v9586
  %v9608 = vpop.f32.mrf.mxu0
  %v9609 = vadd.f32 0.0, %v9608
  %9610 = vdwg.mxu0
  %9611 = vmatpush.msra.mxu0 0.0
  %9612 = vmatpush.msra.mxu0 0.0
  %9613 = vmatpush.msra.mxu0 0.0
  %9614 = vmatpush.msra.mxu0 0.0
  %9615 = vmatpush.msra.mxu0 0.0
  %9616 = vmatpush.msra.mxu0 0.0
  %9617 = vmatpush.msra.mxu0 0.0
  %9618 = vmatpush.msra.mxu0 0.0
  %9619 = vmatpush.msra.mxu0 0.0
  %9620 = vmatpush.msra.mxu0 0.0
  %9621 = vmatpush.msra.mxu0 0.0
  %9622 = vmatpush.msra.mxu0 0.0
  %9623 = vmatpush.msra.mxu0 0.0
  %9624 = vmatpush.msra.mxu0 0.0
  %9625 = vmatpush.msra.mxu0 %v9568
  %9626 = vmatpush.msra.mxu0 %v9563
  %9627 = vmatmul.f32.gmra.mxu0 %v9583
  %v9628 = vpop.f32.mrf.mxu0
  %v9629 = vadd.f32 0.0, %v9628
  %9630 = vmatmul.f32.gmra.mxu0 %v9586
  %v9631 = vpop.f32.mrf.mxu0
  %v9632 = vadd.f32 0.0, %v9631
  %9633 = vdwg.mxu0
  %9634 = vmatpush.msra.mxu0 0.0
  %9635 = vmatpush.msra.mxu0 0.0
  %9636 = vmatpush.msra.mxu0 0.0
  %9637 = vmatpush.msra.mxu0 0.0
  %9638 = vmatpush.msra.mxu0 0.0
  %9639 = vmatpush.msra.mxu0 0.0
  %9640 = vmatpush.msra.mxu0 0.0
  %9641 = vmatpush.msra.mxu0 0.0
  %9642 = vmatpush.msra.mxu0 0.0
  %9643 = vmatpush.msra.mxu0 0.0
  %9644 = vmatpush.msra.mxu0 0.0
  %9645 = vmatpush.msra.mxu0 0.0
  %9646 = vmatpush.msra.mxu0 0.0
  %9647 = vmatpush.msra.mxu0 0.0
  %9648 = vmatpush.msra.mxu0 %v9569
  %9649 = vmatpush.msra.mxu0 %v9564
  %9650 = vmatmul.f32.gmra.mxu0 %v9583
  %v9651 = vpop.f32.mrf.mxu0
  %v9652 = vadd.f32 0.0, %v9651
  %9653 = vmatmul.f32.gmra.mxu0 %v9586
  %v9654 = vpop.f32.mrf.mxu0
  %v9655 = vadd.f32 0.0, %v9654
  %9656 = vdwg.mxu0
  %9657 = vmatpush.msra.mxu0 0.0
  %9658 = vmatpush.msra.mxu0 0.0
  %9659 = vmatpush.msra.mxu0 0.0
  %9660 = vmatpush.msra.mxu0 0.0
  %9661 = vmatpush.msra.mxu0 0.0
  %9662 = vmatpush.msra.mxu0 0.0
  %9663 = vmatpush.msra.mxu0 0.0
  %9664 = vmatpush.msra.mxu0 0.0
  %9665 = vmatpush.msra.mxu0 0.0
  %9666 = vmatpush.msra.mxu0 0.0
  %9667 = vmatpush.msra.mxu0 0.0
  %9668 = vmatpush.msra.mxu0 0.0
  %9669 = vmatpush.msra.mxu0 0.0
  %9670 = vmatpush.msra.mxu0 0.0
  %9671 = vmatpush.msra.mxu0 %v9570
  %9672 = vmatpush.msra.mxu0 %v9565
  %9673 = vmatmul.f32.gmra.mxu0 %v9583
  %v9674 = vpop.f32.mrf.mxu0
  %v9675 = vadd.f32 0.0, %v9674
  %9676 = vmatmul.f32.gmra.mxu0 %v9586
  %v9677 = vpop.f32.mrf.mxu0
  %v9678 = vadd.f32 0.0, %v9677
  %9679 = vdwg.mxu0
  %9680 = vmatpush.msra.mxu0 0.0
  %9681 = vmatpush.msra.mxu0 0.0
  %9682 = vmatpush.msra.mxu0 0.0
  %9683 = vmatpush.msra.mxu0 0.0
  %9684 = vmatpush.msra.mxu0 0.0
  %9685 = vmatpush.msra.mxu0 0.0
  %9686 = vmatpush.msra.mxu0 0.0
  %9687 = vmatpush.msra.mxu0 0.0
  %9688 = vmatpush.msra.mxu0 0.0
  %9689 = vmatpush.msra.mxu0 0.0
  %9690 = vmatpush.msra.mxu0 0.0
  %9691 = vmatpush.msra.mxu0 0.0
  %9692 = vmatpush.msra.mxu0 0.0
  %9693 = vmatpush.msra.mxu0 0.0
  %9694 = vmatpush.msra.mxu0 %v9571
  %9695 = vmatpush.msra.mxu0 %v9566
  %9696 = vmatmul.f32.gmra.mxu0 %v9583
  %v9697 = vpop.f32.mrf.mxu0
  %v9698 = vadd.f32 0.0, %v9697
  %9699 = vmatmul.f32.gmra.mxu0 %v9586
  %v9700 = vpop.f32.mrf.mxu0
  %v9701 = vadd.f32 0.0, %v9700
  %9702 = vdwg.mxu0
  %v9703 = vadd.f32 %v9525, %v9606
  %v9704 = vadd.f32 %v9526, %v9629
  %v9705 = vadd.f32 %v9527, %v9652
  %v9706 = vadd.f32 %v9528, %v9675
  %v9707 = vadd.f32 %v9529, %v9698
  %v9708 = vadd.f32 %v9530, %v9609
  %v9709 = vadd.f32 %v9531, %v9632
  %v9710 = vadd.f32 %v9532, %v9655
  %v9711 = vadd.f32 %v9533, %v9678
  %v9712 = vadd.f32 %v9534, %v9701
  %s9713 = scalar_lea.vmem %s3, 288
  %v9714 = vld [vmem:[%s9713] sm:$0xff]
  %v9715 = vld [vmem:[%s9713 + $0x8] sm:$0xff]
  %9716 = vrot.lane.b32.xlu0 %v6501, 26
  %v9717 = vpop.permute.xlu0 %9716
  %9718 = vrot.lane.b32.xlu0 %v6502, 26
  %v9719 = vpop.permute.xlu0 %9718
  %9720 = vrot.lane.b32.xlu0 %v6503, 26
  %v9721 = vpop.permute.xlu0 %9720
  %9722 = vrot.lane.b32.xlu0 %v6504, 26
  %v9723 = vpop.permute.xlu0 %9722
  %9724 = vrot.lane.b32.xlu0 %v6505, 26
  %v9725 = vpop.permute.xlu0 %9724
  %9726 = vrot.lane.b32.xlu0 %v6506, 26
  %v9727 = vpop.permute.xlu0 %9726
  %9728 = vrot.lane.b32.xlu0 %v6507, 26
  %v9729 = vpop.permute.xlu0 %9728
  %9730 = vrot.lane.b32.xlu0 %v6508, 26
  %v9731 = vpop.permute.xlu0 %9730
  %9732 = vrot.lane.b32.xlu0 %v6509, 26
  %v9733 = vpop.permute.xlu0 %9732
  %9734 = vrot.lane.b32.xlu0 %v6510, 26
  %v9735 = vpop.permute.xlu0 %9734
  %9736 = vrot.lane.b32.xlu0 %v6511, 26
  %v9737 = vpop.permute.xlu0 %9736
  %9738 = vrot.lane.b32.xlu0 %v6512, 26
  %v9739 = vpop.permute.xlu0 %9738
  %v9740 = vsel %vm5720, %v9717, %v9719
  %v9741 = vsel %vm5720, %v9719, %v9721
  %v9742 = vsel %vm5720, %v9721, %v9723
  %v9743 = vsel %vm5720, %v9723, %v9725
  %v9744 = vsel %vm5720, %v9725, %v9727
  %v9745 = vsel %vm5720, %v9729, %v9731
  %v9746 = vsel %vm5720, %v9731, %v9733
  %v9747 = vsel %vm5720, %v9733, %v9735
  %v9748 = vsel %vm5720, %v9735, %v9737
  %v9749 = vsel %vm5720, %v9737, %v9739
  %v9761 = vsel %vm6574, %v9714, 0
  %v9764 = vsel %vm6574, %v9715, 0
  %9766 = vmatpush.msra.mxu0 0.0
  %9767 = vmatpush.msra.mxu0 0.0
  %9768 = vmatpush.msra.mxu0 0.0
  %9769 = vmatpush.msra.mxu0 0.0
  %9770 = vmatpush.msra.mxu0 0.0
  %9771 = vmatpush.msra.mxu0 0.0
  %9772 = vmatpush.msra.mxu0 0.0
  %9773 = vmatpush.msra.mxu0 0.0
  %9774 = vmatpush.msra.mxu0 0.0
  %9775 = vmatpush.msra.mxu0 0.0
  %9776 = vmatpush.msra.mxu0 0.0
  %9777 = vmatpush.msra.mxu0 0.0
  %9778 = vmatpush.msra.mxu0 0.0
  %9779 = vmatpush.msra.mxu0 0.0
  %9780 = vmatpush.msra.mxu0 %v9745
  %9781 = vmatpush.msra.mxu0 %v9740
  %9782 = vmatmul.f32.gmra.mxu0 %v9761
  %v9783 = vpop.f32.mrf.mxu0
  %v9784 = vadd.f32 0.0, %v9783
  %9785 = vmatmul.f32.gmra.mxu0 %v9764
  %v9786 = vpop.f32.mrf.mxu0
  %v9787 = vadd.f32 0.0, %v9786
  %9788 = vdwg.mxu0
  %9789 = vmatpush.msra.mxu0 0.0
  %9790 = vmatpush.msra.mxu0 0.0
  %9791 = vmatpush.msra.mxu0 0.0
  %9792 = vmatpush.msra.mxu0 0.0
  %9793 = vmatpush.msra.mxu0 0.0
  %9794 = vmatpush.msra.mxu0 0.0
  %9795 = vmatpush.msra.mxu0 0.0
  %9796 = vmatpush.msra.mxu0 0.0
  %9797 = vmatpush.msra.mxu0 0.0
  %9798 = vmatpush.msra.mxu0 0.0
  %9799 = vmatpush.msra.mxu0 0.0
  %9800 = vmatpush.msra.mxu0 0.0
  %9801 = vmatpush.msra.mxu0 0.0
  %9802 = vmatpush.msra.mxu0 0.0
  %9803 = vmatpush.msra.mxu0 %v9746
  %9804 = vmatpush.msra.mxu0 %v9741
  %9805 = vmatmul.f32.gmra.mxu0 %v9761
  %v9806 = vpop.f32.mrf.mxu0
  %v9807 = vadd.f32 0.0, %v9806
  %9808 = vmatmul.f32.gmra.mxu0 %v9764
  %v9809 = vpop.f32.mrf.mxu0
  %v9810 = vadd.f32 0.0, %v9809
  %9811 = vdwg.mxu0
  %9812 = vmatpush.msra.mxu0 0.0
  %9813 = vmatpush.msra.mxu0 0.0
  %9814 = vmatpush.msra.mxu0 0.0
  %9815 = vmatpush.msra.mxu0 0.0
  %9816 = vmatpush.msra.mxu0 0.0
  %9817 = vmatpush.msra.mxu0 0.0
  %9818 = vmatpush.msra.mxu0 0.0
  %9819 = vmatpush.msra.mxu0 0.0
  %9820 = vmatpush.msra.mxu0 0.0
  %9821 = vmatpush.msra.mxu0 0.0
  %9822 = vmatpush.msra.mxu0 0.0
  %9823 = vmatpush.msra.mxu0 0.0
  %9824 = vmatpush.msra.mxu0 0.0
  %9825 = vmatpush.msra.mxu0 0.0
  %9826 = vmatpush.msra.mxu0 %v9747
  %9827 = vmatpush.msra.mxu0 %v9742
  %9828 = vmatmul.f32.gmra.mxu0 %v9761
  %v9829 = vpop.f32.mrf.mxu0
  %v9830 = vadd.f32 0.0, %v9829
  %9831 = vmatmul.f32.gmra.mxu0 %v9764
  %v9832 = vpop.f32.mrf.mxu0
  %v9833 = vadd.f32 0.0, %v9832
  %9834 = vdwg.mxu0
  %9835 = vmatpush.msra.mxu0 0.0
  %9836 = vmatpush.msra.mxu0 0.0
  %9837 = vmatpush.msra.mxu0 0.0
  %9838 = vmatpush.msra.mxu0 0.0
  %9839 = vmatpush.msra.mxu0 0.0
  %9840 = vmatpush.msra.mxu0 0.0
  %9841 = vmatpush.msra.mxu0 0.0
  %9842 = vmatpush.msra.mxu0 0.0
  %9843 = vmatpush.msra.mxu0 0.0
  %9844 = vmatpush.msra.mxu0 0.0
  %9845 = vmatpush.msra.mxu0 0.0
  %9846 = vmatpush.msra.mxu0 0.0
  %9847 = vmatpush.msra.mxu0 0.0
  %9848 = vmatpush.msra.mxu0 0.0
  %9849 = vmatpush.msra.mxu0 %v9748
  %9850 = vmatpush.msra.mxu0 %v9743
  %9851 = vmatmul.f32.gmra.mxu0 %v9761
  %v9852 = vpop.f32.mrf.mxu0
  %v9853 = vadd.f32 0.0, %v9852
  %9854 = vmatmul.f32.gmra.mxu0 %v9764
  %v9855 = vpop.f32.mrf.mxu0
  %v9856 = vadd.f32 0.0, %v9855
  %9857 = vdwg.mxu0
  %9858 = vmatpush.msra.mxu0 0.0
  %9859 = vmatpush.msra.mxu0 0.0
  %9860 = vmatpush.msra.mxu0 0.0
  %9861 = vmatpush.msra.mxu0 0.0
  %9862 = vmatpush.msra.mxu0 0.0
  %9863 = vmatpush.msra.mxu0 0.0
  %9864 = vmatpush.msra.mxu0 0.0
  %9865 = vmatpush.msra.mxu0 0.0
  %9866 = vmatpush.msra.mxu0 0.0
  %9867 = vmatpush.msra.mxu0 0.0
  %9868 = vmatpush.msra.mxu0 0.0
  %9869 = vmatpush.msra.mxu0 0.0
  %9870 = vmatpush.msra.mxu0 0.0
  %9871 = vmatpush.msra.mxu0 0.0
  %9872 = vmatpush.msra.mxu0 %v9749
  %9873 = vmatpush.msra.mxu0 %v9744
  %9874 = vmatmul.f32.gmra.mxu0 %v9761
  %v9875 = vpop.f32.mrf.mxu0
  %v9876 = vadd.f32 0.0, %v9875
  %9877 = vmatmul.f32.gmra.mxu0 %v9764
  %v9878 = vpop.f32.mrf.mxu0
  %v9879 = vadd.f32 0.0, %v9878
  %9880 = vdwg.mxu0
  %v9881 = vadd.f32 %v9703, %v9784
  %v9882 = vadd.f32 %v9704, %v9807
  %v9883 = vadd.f32 %v9705, %v9830
  %v9884 = vadd.f32 %v9706, %v9853
  %v9885 = vadd.f32 %v9707, %v9876
  %v9886 = vadd.f32 %v9708, %v9787
  %v9887 = vadd.f32 %v9709, %v9810
  %v9888 = vadd.f32 %v9710, %v9833
  %v9889 = vadd.f32 %v9711, %v9856
  %v9890 = vadd.f32 %v9712, %v9879
  %s9891 = scalar_lea.vmem %s3, 304
  %v9892 = vld [vmem:[%s9891] sm:$0xff]
  %v9893 = vld [vmem:[%s9891 + $0x8] sm:$0xff]
  %9894 = vrot.lane.b32.xlu0 %v6501, 25
  %v9895 = vpop.permute.xlu0 %9894
  %9896 = vrot.lane.b32.xlu0 %v6502, 25
  %v9897 = vpop.permute.xlu0 %9896
  %9898 = vrot.lane.b32.xlu0 %v6503, 25
  %v9899 = vpop.permute.xlu0 %9898
  %9900 = vrot.lane.b32.xlu0 %v6504, 25
  %v9901 = vpop.permute.xlu0 %9900
  %9902 = vrot.lane.b32.xlu0 %v6505, 25
  %v9903 = vpop.permute.xlu0 %9902
  %9904 = vrot.lane.b32.xlu0 %v6506, 25
  %v9905 = vpop.permute.xlu0 %9904
  %9906 = vrot.lane.b32.xlu0 %v6507, 25
  %v9907 = vpop.permute.xlu0 %9906
  %9908 = vrot.lane.b32.xlu0 %v6508, 25
  %v9909 = vpop.permute.xlu0 %9908
  %9910 = vrot.lane.b32.xlu0 %v6509, 25
  %v9911 = vpop.permute.xlu0 %9910
  %9912 = vrot.lane.b32.xlu0 %v6510, 25
  %v9913 = vpop.permute.xlu0 %9912
  %9914 = vrot.lane.b32.xlu0 %v6511, 25
  %v9915 = vpop.permute.xlu0 %9914
  %9916 = vrot.lane.b32.xlu0 %v6512, 25
  %v9917 = vpop.permute.xlu0 %9916
  %v9918 = vsel %vm5943, %v9895, %v9897
  %v9919 = vsel %vm5943, %v9897, %v9899
  %v9920 = vsel %vm5943, %v9899, %v9901
  %v9921 = vsel %vm5943, %v9901, %v9903
  %v9922 = vsel %vm5943, %v9903, %v9905
  %v9923 = vsel %vm5943, %v9907, %v9909
  %v9924 = vsel %vm5943, %v9909, %v9911
  %v9925 = vsel %vm5943, %v9911, %v9913
  %v9926 = vsel %vm5943, %v9913, %v9915
  %v9927 = vsel %vm5943, %v9915, %v9917
  %v9939 = vsel %vm6574, %v9892, 0
  %v9942 = vsel %vm6574, %v9893, 0
  %9944 = vmatpush.msra.mxu0 0.0
  %9945 = vmatpush.msra.mxu0 0.0
  %9946 = vmatpush.msra.mxu0 0.0
  %9947 = vmatpush.msra.mxu0 0.0
  %9948 = vmatpush.msra.mxu0 0.0
  %9949 = vmatpush.msra.mxu0 0.0
  %9950 = vmatpush.msra.mxu0 0.0
  %9951 = vmatpush.msra.mxu0 0.0
  %9952 = vmatpush.msra.mxu0 0.0
  %9953 = vmatpush.msra.mxu0 0.0
  %9954 = vmatpush.msra.mxu0 0.0
  %9955 = vmatpush.msra.mxu0 0.0
  %9956 = vmatpush.msra.mxu0 0.0
  %9957 = vmatpush.msra.mxu0 0.0
  %9958 = vmatpush.msra.mxu0 %v9923
  %9959 = vmatpush.msra.mxu0 %v9918
  %9960 = vmatmul.f32.gmra.mxu0 %v9939
  %v9961 = vpop.f32.mrf.mxu0
  %v9962 = vadd.f32 0.0, %v9961
  %9963 = vmatmul.f32.gmra.mxu0 %v9942
  %v9964 = vpop.f32.mrf.mxu0
  %v9965 = vadd.f32 0.0, %v9964
  %9966 = vdwg.mxu0
  %9967 = vmatpush.msra.mxu0 0.0
  %9968 = vmatpush.msra.mxu0 0.0
  %9969 = vmatpush.msra.mxu0 0.0
  %9970 = vmatpush.msra.mxu0 0.0
  %9971 = vmatpush.msra.mxu0 0.0
  %9972 = vmatpush.msra.mxu0 0.0
  %9973 = vmatpush.msra.mxu0 0.0
  %9974 = vmatpush.msra.mxu0 0.0
  %9975 = vmatpush.msra.mxu0 0.0
  %9976 = vmatpush.msra.mxu0 0.0
  %9977 = vmatpush.msra.mxu0 0.0
  %9978 = vmatpush.msra.mxu0 0.0
  %9979 = vmatpush.msra.mxu0 0.0
  %9980 = vmatpush.msra.mxu0 0.0
  %9981 = vmatpush.msra.mxu0 %v9924
  %9982 = vmatpush.msra.mxu0 %v9919
  %9983 = vmatmul.f32.gmra.mxu0 %v9939
  %v9984 = vpop.f32.mrf.mxu0
  %v9985 = vadd.f32 0.0, %v9984
  %9986 = vmatmul.f32.gmra.mxu0 %v9942
  %v9987 = vpop.f32.mrf.mxu0
  %v9988 = vadd.f32 0.0, %v9987
  %9989 = vdwg.mxu0
  %9990 = vmatpush.msra.mxu0 0.0
  %9991 = vmatpush.msra.mxu0 0.0
  %9992 = vmatpush.msra.mxu0 0.0
  %9993 = vmatpush.msra.mxu0 0.0
  %9994 = vmatpush.msra.mxu0 0.0
  %9995 = vmatpush.msra.mxu0 0.0
  %9996 = vmatpush.msra.mxu0 0.0
  %9997 = vmatpush.msra.mxu0 0.0
  %9998 = vmatpush.msra.mxu0 0.0
  %9999 = vmatpush.msra.mxu0 0.0
  %10000 = vmatpush.msra.mxu0 0.0
  %10001 = vmatpush.msra.mxu0 0.0
  %10002 = vmatpush.msra.mxu0 0.0
  %10003 = vmatpush.msra.mxu0 0.0
  %10004 = vmatpush.msra.mxu0 %v9925
  %10005 = vmatpush.msra.mxu0 %v9920
  %10006 = vmatmul.f32.gmra.mxu0 %v9939
  %v10007 = vpop.f32.mrf.mxu0
  %v10008 = vadd.f32 0.0, %v10007
  %10009 = vmatmul.f32.gmra.mxu0 %v9942
  %v10010 = vpop.f32.mrf.mxu0
  %v10011 = vadd.f32 0.0, %v10010
  %10012 = vdwg.mxu0
  %10013 = vmatpush.msra.mxu0 0.0
  %10014 = vmatpush.msra.mxu0 0.0
  %10015 = vmatpush.msra.mxu0 0.0
  %10016 = vmatpush.msra.mxu0 0.0
  %10017 = vmatpush.msra.mxu0 0.0
  %10018 = vmatpush.msra.mxu0 0.0
  %10019 = vmatpush.msra.mxu0 0.0
  %10020 = vmatpush.msra.mxu0 0.0
  %10021 = vmatpush.msra.mxu0 0.0
  %10022 = vmatpush.msra.mxu0 0.0
  %10023 = vmatpush.msra.mxu0 0.0
  %10024 = vmatpush.msra.mxu0 0.0
  %10025 = vmatpush.msra.mxu0 0.0
  %10026 = vmatpush.msra.mxu0 0.0
  %10027 = vmatpush.msra.mxu0 %v9926
  %10028 = vmatpush.msra.mxu0 %v9921
  %10029 = vmatmul.f32.gmra.mxu0 %v9939
  %v10030 = vpop.f32.mrf.mxu0
  %v10031 = vadd.f32 0.0, %v10030
  %10032 = vmatmul.f32.gmra.mxu0 %v9942
  %v10033 = vpop.f32.mrf.mxu0
  %v10034 = vadd.f32 0.0, %v10033
  %10035 = vdwg.mxu0
  %10036 = vmatpush.msra.mxu0 0.0
  %10037 = vmatpush.msra.mxu0 0.0
  %10038 = vmatpush.msra.mxu0 0.0
  %10039 = vmatpush.msra.mxu0 0.0
  %10040 = vmatpush.msra.mxu0 0.0
  %10041 = vmatpush.msra.mxu0 0.0
  %10042 = vmatpush.msra.mxu0 0.0
  %10043 = vmatpush.msra.mxu0 0.0
  %10044 = vmatpush.msra.mxu0 0.0
  %10045 = vmatpush.msra.mxu0 0.0
  %10046 = vmatpush.msra.mxu0 0.0
  %10047 = vmatpush.msra.mxu0 0.0
  %10048 = vmatpush.msra.mxu0 0.0
  %10049 = vmatpush.msra.mxu0 0.0
  %10050 = vmatpush.msra.mxu0 %v9927
  %10051 = vmatpush.msra.mxu0 %v9922
  %10052 = vmatmul.f32.gmra.mxu0 %v9939
  %v10053 = vpop.f32.mrf.mxu0
  %v10054 = vadd.f32 0.0, %v10053
  %10055 = vmatmul.f32.gmra.mxu0 %v9942
  %v10056 = vpop.f32.mrf.mxu0
  %v10057 = vadd.f32 0.0, %v10056
  %10058 = vdwg.mxu0
  %v10059 = vadd.f32 %v9881, %v9962
  %v10060 = vadd.f32 %v9882, %v9985
  %v10061 = vadd.f32 %v9883, %v10008
  %v10062 = vadd.f32 %v9884, %v10031
  %v10063 = vadd.f32 %v9885, %v10054
  %v10064 = vadd.f32 %v9886, %v9965
  %v10065 = vadd.f32 %v9887, %v9988
  %v10066 = vadd.f32 %v9888, %v10011
  %v10067 = vadd.f32 %v9889, %v10034
  %v10068 = vadd.f32 %v9890, %v10057
  %s10069 = scalar_lea.vmem %s3, 320
  %v10070 = vld [vmem:[%s10069] sm:$0xff]
  %v10071 = vld [vmem:[%s10069 + $0x8] sm:$0xff]
  %10072 = vrot.lane.b32.xlu0 %v6501, 4
  %v10073 = vpop.permute.xlu0 %10072
  %10074 = vrot.lane.b32.xlu0 %v6502, 4
  %v10075 = vpop.permute.xlu0 %10074
  %10076 = vrot.lane.b32.xlu0 %v6503, 4
  %v10077 = vpop.permute.xlu0 %10076
  %10078 = vrot.lane.b32.xlu0 %v6504, 4
  %v10079 = vpop.permute.xlu0 %10078
  %10080 = vrot.lane.b32.xlu0 %v6505, 4
  %v10081 = vpop.permute.xlu0 %10080
  %10082 = vrot.lane.b32.xlu0 %v6506, 4
  %v10083 = vpop.permute.xlu0 %10082
  %10084 = vrot.lane.b32.xlu0 %v6507, 4
  %v10085 = vpop.permute.xlu0 %10084
  %10086 = vrot.lane.b32.xlu0 %v6508, 4
  %v10087 = vpop.permute.xlu0 %10086
  %10088 = vrot.lane.b32.xlu0 %v6509, 4
  %v10089 = vpop.permute.xlu0 %10088
  %10090 = vrot.lane.b32.xlu0 %v6510, 4
  %v10091 = vpop.permute.xlu0 %10090
  %10092 = vrot.lane.b32.xlu0 %v6511, 4
  %v10093 = vpop.permute.xlu0 %10092
  %10094 = vrot.lane.b32.xlu0 %v6512, 4
  %v10095 = vpop.permute.xlu0 %10094
  %vm10096 = vcmask 31744
  %v10097 = vsel %vm10096, %v10073, %v10075
  %v10098 = vsel %vm10096, %v10075, %v10077
  %v10099 = vsel %vm10096, %v10077, %v10079
  %v10100 = vsel %vm10096, %v10079, %v10081
  %v10101 = vsel %vm10096, %v10081, %v10083
  %v10102 = vsel %vm10096, %v10085, %v10087
  %v10103 = vsel %vm10096, %v10087, %v10089
  %v10104 = vsel %vm10096, %v10089, %v10091
  %v10105 = vsel %vm10096, %v10091, %v10093
  %v10106 = vsel %vm10096, %v10093, %v10095
  %v10118 = vsel %vm6574, %v10070, 0
  %v10121 = vsel %vm6574, %v10071, 0
  %10123 = vmatpush.msra.mxu0 0.0
  %10124 = vmatpush.msra.mxu0 0.0
  %10125 = vmatpush.msra.mxu0 0.0
  %10126 = vmatpush.msra.mxu0 0.0
  %10127 = vmatpush.msra.mxu0 0.0
  %10128 = vmatpush.msra.mxu0 0.0
  %10129 = vmatpush.msra.mxu0 0.0
  %10130 = vmatpush.msra.mxu0 0.0
  %10131 = vmatpush.msra.mxu0 0.0
  %10132 = vmatpush.msra.mxu0 0.0
  %10133 = vmatpush.msra.mxu0 0.0
  %10134 = vmatpush.msra.mxu0 0.0
  %10135 = vmatpush.msra.mxu0 0.0
  %10136 = vmatpush.msra.mxu0 0.0
  %10137 = vmatpush.msra.mxu0 %v10102
  %10138 = vmatpush.msra.mxu0 %v10097
  %10139 = vmatmul.f32.gmra.mxu0 %v10118
  %v10140 = vpop.f32.mrf.mxu0
  %v10141 = vadd.f32 0.0, %v10140
  %10142 = vmatmul.f32.gmra.mxu0 %v10121
  %v10143 = vpop.f32.mrf.mxu0
  %v10144 = vadd.f32 0.0, %v10143
  %10145 = vdwg.mxu0
  %10146 = vmatpush.msra.mxu0 0.0
  %10147 = vmatpush.msra.mxu0 0.0
  %10148 = vmatpush.msra.mxu0 0.0
  %10149 = vmatpush.msra.mxu0 0.0
  %10150 = vmatpush.msra.mxu0 0.0
  %10151 = vmatpush.msra.mxu0 0.0
  %10152 = vmatpush.msra.mxu0 0.0
  %10153 = vmatpush.msra.mxu0 0.0
  %10154 = vmatpush.msra.mxu0 0.0
  %10155 = vmatpush.msra.mxu0 0.0
  %10156 = vmatpush.msra.mxu0 0.0
  %10157 = vmatpush.msra.mxu0 0.0
  %10158 = vmatpush.msra.mxu0 0.0
  %10159 = vmatpush.msra.mxu0 0.0
  %10160 = vmatpush.msra.mxu0 %v10103
  %10161 = vmatpush.msra.mxu0 %v10098
  %10162 = vmatmul.f32.gmra.mxu0 %v10118
  %v10163 = vpop.f32.mrf.mxu0
  %v10164 = vadd.f32 0.0, %v10163
  %10165 = vmatmul.f32.gmra.mxu0 %v10121
  %v10166 = vpop.f32.mrf.mxu0
  %v10167 = vadd.f32 0.0, %v10166
  %10168 = vdwg.mxu0
  %10169 = vmatpush.msra.mxu0 0.0
  %10170 = vmatpush.msra.mxu0 0.0
  %10171 = vmatpush.msra.mxu0 0.0
  %10172 = vmatpush.msra.mxu0 0.0
  %10173 = vmatpush.msra.mxu0 0.0
  %10174 = vmatpush.msra.mxu0 0.0
  %10175 = vmatpush.msra.mxu0 0.0
  %10176 = vmatpush.msra.mxu0 0.0
  %10177 = vmatpush.msra.mxu0 0.0
  %10178 = vmatpush.msra.mxu0 0.0
  %10179 = vmatpush.msra.mxu0 0.0
  %10180 = vmatpush.msra.mxu0 0.0
  %10181 = vmatpush.msra.mxu0 0.0
  %10182 = vmatpush.msra.mxu0 0.0
  %10183 = vmatpush.msra.mxu0 %v10104
  %10184 = vmatpush.msra.mxu0 %v10099
  %10185 = vmatmul.f32.gmra.mxu0 %v10118
  %v10186 = vpop.f32.mrf.mxu0
  %v10187 = vadd.f32 0.0, %v10186
  %10188 = vmatmul.f32.gmra.mxu0 %v10121
  %v10189 = vpop.f32.mrf.mxu0
  %v10190 = vadd.f32 0.0, %v10189
  %10191 = vdwg.mxu0
  %10192 = vmatpush.msra.mxu0 0.0
  %10193 = vmatpush.msra.mxu0 0.0
  %10194 = vmatpush.msra.mxu0 0.0
  %10195 = vmatpush.msra.mxu0 0.0
  %10196 = vmatpush.msra.mxu0 0.0
  %10197 = vmatpush.msra.mxu0 0.0
  %10198 = vmatpush.msra.mxu0 0.0
  %10199 = vmatpush.msra.mxu0 0.0
  %10200 = vmatpush.msra.mxu0 0.0
  %10201 = vmatpush.msra.mxu0 0.0
  %10202 = vmatpush.msra.mxu0 0.0
  %10203 = vmatpush.msra.mxu0 0.0
  %10204 = vmatpush.msra.mxu0 0.0
  %10205 = vmatpush.msra.mxu0 0.0
  %10206 = vmatpush.msra.mxu0 %v10105
  %10207 = vmatpush.msra.mxu0 %v10100
  %10208 = vmatmul.f32.gmra.mxu0 %v10118
  %v10209 = vpop.f32.mrf.mxu0
  %v10210 = vadd.f32 0.0, %v10209
  %10211 = vmatmul.f32.gmra.mxu0 %v10121
  %v10212 = vpop.f32.mrf.mxu0
  %v10213 = vadd.f32 0.0, %v10212
  %10214 = vdwg.mxu0
  %10215 = vmatpush.msra.mxu0 0.0
  %10216 = vmatpush.msra.mxu0 0.0
  %10217 = vmatpush.msra.mxu0 0.0
  %10218 = vmatpush.msra.mxu0 0.0
  %10219 = vmatpush.msra.mxu0 0.0
  %10220 = vmatpush.msra.mxu0 0.0
  %10221 = vmatpush.msra.mxu0 0.0
  %10222 = vmatpush.msra.mxu0 0.0
  %10223 = vmatpush.msra.mxu0 0.0
  %10224 = vmatpush.msra.mxu0 0.0
  %10225 = vmatpush.msra.mxu0 0.0
  %10226 = vmatpush.msra.mxu0 0.0
  %10227 = vmatpush.msra.mxu0 0.0
  %10228 = vmatpush.msra.mxu0 0.0
  %10229 = vmatpush.msra.mxu0 %v10106
  %10230 = vmatpush.msra.mxu0 %v10101
  %10231 = vmatmul.f32.gmra.mxu0 %v10118
  %v10232 = vpop.f32.mrf.mxu0
  %v10233 = vadd.f32 0.0, %v10232
  %10234 = vmatmul.f32.gmra.mxu0 %v10121
  %v10235 = vpop.f32.mrf.mxu0
  %v10236 = vadd.f32 0.0, %v10235
  %10237 = vdwg.mxu0
  %v10238 = vadd.f32 %v10059, %v10141
  %v10239 = vadd.f32 %v10060, %v10164
  %v10240 = vadd.f32 %v10061, %v10187
  %v10241 = vadd.f32 %v10062, %v10210
  %v10242 = vadd.f32 %v10063, %v10233
  %v10243 = vadd.f32 %v10064, %v10144
  %v10244 = vadd.f32 %v10065, %v10167
  %v10245 = vadd.f32 %v10066, %v10190
  %v10246 = vadd.f32 %v10067, %v10213
  %v10247 = vadd.f32 %v10068, %v10236
  %s10248 = scalar_lea.vmem %s3, 336
  %v10249 = vld [vmem:[%s10248] sm:$0xff]
  %v10250 = vld [vmem:[%s10248 + $0x8] sm:$0xff]
  %10251 = vrot.lane.b32.xlu0 %v6501, 3
  %v10252 = vpop.permute.xlu0 %10251
  %10253 = vrot.lane.b32.xlu0 %v6502, 3
  %v10254 = vpop.permute.xlu0 %10253
  %10255 = vrot.lane.b32.xlu0 %v6503, 3
  %v10256 = vpop.permute.xlu0 %10255
  %10257 = vrot.lane.b32.xlu0 %v6504, 3
  %v10258 = vpop.permute.xlu0 %10257
  %10259 = vrot.lane.b32.xlu0 %v6505, 3
  %v10260 = vpop.permute.xlu0 %10259
  %10261 = vrot.lane.b32.xlu0 %v6506, 3
  %v10262 = vpop.permute.xlu0 %10261
  %10263 = vrot.lane.b32.xlu0 %v6507, 3
  %v10264 = vpop.permute.xlu0 %10263
  %10265 = vrot.lane.b32.xlu0 %v6508, 3
  %v10266 = vpop.permute.xlu0 %10265
  %10267 = vrot.lane.b32.xlu0 %v6509, 3
  %v10268 = vpop.permute.xlu0 %10267
  %10269 = vrot.lane.b32.xlu0 %v6510, 3
  %v10270 = vpop.permute.xlu0 %10269
  %10271 = vrot.lane.b32.xlu0 %v6511, 3
  %v10272 = vpop.permute.xlu0 %10271
  %10273 = vrot.lane.b32.xlu0 %v6512, 3
  %v10274 = vpop.permute.xlu0 %10273
  %vm10275 = vcmask 23552
  %v10276 = vsel %vm10275, %v10252, %v10254
  %v10277 = vsel %vm10275, %v10254, %v10256
  %v10278 = vsel %vm10275, %v10256, %v10258
  %v10279 = vsel %vm10275, %v10258, %v10260
  %v10280 = vsel %vm10275, %v10260, %v10262
  %v10281 = vsel %vm10275, %v10264, %v10266
  %v10282 = vsel %vm10275, %v10266, %v10268
  %v10283 = vsel %vm10275, %v10268, %v10270
  %v10284 = vsel %vm10275, %v10270, %v10272
  %v10285 = vsel %vm10275, %v10272, %v10274
  %v10297 = vsel %vm6574, %v10249, 0
  %v10300 = vsel %vm6574, %v10250, 0
  %10302 = vmatpush.msra.mxu0 0.0
  %10303 = vmatpush.msra.mxu0 0.0
  %10304 = vmatpush.msra.mxu0 0.0
  %10305 = vmatpush.msra.mxu0 0.0
  %10306 = vmatpush.msra.mxu0 0.0
  %10307 = vmatpush.msra.mxu0 0.0
  %10308 = vmatpush.msra.mxu0 0.0
  %10309 = vmatpush.msra.mxu0 0.0
  %10310 = vmatpush.msra.mxu0 0.0
  %10311 = vmatpush.msra.mxu0 0.0
  %10312 = vmatpush.msra.mxu0 0.0
  %10313 = vmatpush.msra.mxu0 0.0
  %10314 = vmatpush.msra.mxu0 0.0
  %10315 = vmatpush.msra.mxu0 0.0
  %10316 = vmatpush.msra.mxu0 %v10281
  %10317 = vmatpush.msra.mxu0 %v10276
  %10318 = vmatmul.f32.gmra.mxu0 %v10297
  %v10319 = vpop.f32.mrf.mxu0
  %v10320 = vadd.f32 0.0, %v10319
  %10321 = vmatmul.f32.gmra.mxu0 %v10300
  %v10322 = vpop.f32.mrf.mxu0
  %v10323 = vadd.f32 0.0, %v10322
  %10324 = vdwg.mxu0
  %10325 = vmatpush.msra.mxu0 0.0
  %10326 = vmatpush.msra.mxu0 0.0
  %10327 = vmatpush.msra.mxu0 0.0
  %10328 = vmatpush.msra.mxu0 0.0
  %10329 = vmatpush.msra.mxu0 0.0
  %10330 = vmatpush.msra.mxu0 0.0
  %10331 = vmatpush.msra.mxu0 0.0
  %10332 = vmatpush.msra.mxu0 0.0
  %10333 = vmatpush.msra.mxu0 0.0
  %10334 = vmatpush.msra.mxu0 0.0
  %10335 = vmatpush.msra.mxu0 0.0
  %10336 = vmatpush.msra.mxu0 0.0
  %10337 = vmatpush.msra.mxu0 0.0
  %10338 = vmatpush.msra.mxu0 0.0
  %10339 = vmatpush.msra.mxu0 %v10282
  %10340 = vmatpush.msra.mxu0 %v10277
  %10341 = vmatmul.f32.gmra.mxu0 %v10297
  %v10342 = vpop.f32.mrf.mxu0
  %v10343 = vadd.f32 0.0, %v10342
  %10344 = vmatmul.f32.gmra.mxu0 %v10300
  %v10345 = vpop.f32.mrf.mxu0
  %v10346 = vadd.f32 0.0, %v10345
  %10347 = vdwg.mxu0
  %10348 = vmatpush.msra.mxu0 0.0
  %10349 = vmatpush.msra.mxu0 0.0
  %10350 = vmatpush.msra.mxu0 0.0
  %10351 = vmatpush.msra.mxu0 0.0
  %10352 = vmatpush.msra.mxu0 0.0
  %10353 = vmatpush.msra.mxu0 0.0
  %10354 = vmatpush.msra.mxu0 0.0
  %10355 = vmatpush.msra.mxu0 0.0
  %10356 = vmatpush.msra.mxu0 0.0
  %10357 = vmatpush.msra.mxu0 0.0
  %10358 = vmatpush.msra.mxu0 0.0
  %10359 = vmatpush.msra.mxu0 0.0
  %10360 = vmatpush.msra.mxu0 0.0
  %10361 = vmatpush.msra.mxu0 0.0
  %10362 = vmatpush.msra.mxu0 %v10283
  %10363 = vmatpush.msra.mxu0 %v10278
  %10364 = vmatmul.f32.gmra.mxu0 %v10297
  %v10365 = vpop.f32.mrf.mxu0
  %v10366 = vadd.f32 0.0, %v10365
  %10367 = vmatmul.f32.gmra.mxu0 %v10300
  %v10368 = vpop.f32.mrf.mxu0
  %v10369 = vadd.f32 0.0, %v10368
  %10370 = vdwg.mxu0
  %10371 = vmatpush.msra.mxu0 0.0
  %10372 = vmatpush.msra.mxu0 0.0
  %10373 = vmatpush.msra.mxu0 0.0
  %10374 = vmatpush.msra.mxu0 0.0
  %10375 = vmatpush.msra.mxu0 0.0
  %10376 = vmatpush.msra.mxu0 0.0
  %10377 = vmatpush.msra.mxu0 0.0
  %10378 = vmatpush.msra.mxu0 0.0
  %10379 = vmatpush.msra.mxu0 0.0
  %10380 = vmatpush.msra.mxu0 0.0
  %10381 = vmatpush.msra.mxu0 0.0
  %10382 = vmatpush.msra.mxu0 0.0
  %10383 = vmatpush.msra.mxu0 0.0
  %10384 = vmatpush.msra.mxu0 0.0
  %10385 = vmatpush.msra.mxu0 %v10284
  %10386 = vmatpush.msra.mxu0 %v10279
  %10387 = vmatmul.f32.gmra.mxu0 %v10297
  %v10388 = vpop.f32.mrf.mxu0
  %v10389 = vadd.f32 0.0, %v10388
  %10390 = vmatmul.f32.gmra.mxu0 %v10300
  %v10391 = vpop.f32.mrf.mxu0
  %v10392 = vadd.f32 0.0, %v10391
  %10393 = vdwg.mxu0
  %10394 = vmatpush.msra.mxu0 0.0
  %10395 = vmatpush.msra.mxu0 0.0
  %10396 = vmatpush.msra.mxu0 0.0
  %10397 = vmatpush.msra.mxu0 0.0
  %10398 = vmatpush.msra.mxu0 0.0
  %10399 = vmatpush.msra.mxu0 0.0
  %10400 = vmatpush.msra.mxu0 0.0
  %10401 = vmatpush.msra.mxu0 0.0
  %10402 = vmatpush.msra.mxu0 0.0
  %10403 = vmatpush.msra.mxu0 0.0
  %10404 = vmatpush.msra.mxu0 0.0
  %10405 = vmatpush.msra.mxu0 0.0
  %10406 = vmatpush.msra.mxu0 0.0
  %10407 = vmatpush.msra.mxu0 0.0
  %10408 = vmatpush.msra.mxu0 %v10285
  %10409 = vmatpush.msra.mxu0 %v10280
  %10410 = vmatmul.f32.gmra.mxu0 %v10297
  %v10411 = vpop.f32.mrf.mxu0
  %v10412 = vadd.f32 0.0, %v10411
  %10413 = vmatmul.f32.gmra.mxu0 %v10300
  %v10414 = vpop.f32.mrf.mxu0
  %v10415 = vadd.f32 0.0, %v10414
  %10416 = vdwg.mxu0
  %v10417 = vadd.f32 %v10238, %v10320
  %v10418 = vadd.f32 %v10239, %v10343
  %v10419 = vadd.f32 %v10240, %v10366
  %v10420 = vadd.f32 %v10241, %v10389
  %v10421 = vadd.f32 %v10242, %v10412
  %v10422 = vadd.f32 %v10243, %v10323
  %v10423 = vadd.f32 %v10244, %v10346
  %v10424 = vadd.f32 %v10245, %v10369
  %v10425 = vadd.f32 %v10246, %v10392
  %v10426 = vadd.f32 %v10247, %v10415
  %s10427 = scalar_lea.vmem %s3, 352
  %v10428 = vld [vmem:[%s10427] sm:$0xff]
  %v10429 = vld [vmem:[%s10427 + $0x8] sm:$0xff]
  %10430 = vrot.lane.b32.xlu0 %v6501, 2
  %v10431 = vpop.permute.xlu0 %10430
  %10432 = vrot.lane.b32.xlu0 %v6502, 2
  %v10433 = vpop.permute.xlu0 %10432
  %10434 = vrot.lane.b32.xlu0 %v6503, 2
  %v10435 = vpop.permute.xlu0 %10434
  %10436 = vrot.lane.b32.xlu0 %v6504, 2
  %v10437 = vpop.permute.xlu0 %10436
  %10438 = vrot.lane.b32.xlu0 %v6505, 2
  %v10439 = vpop.permute.xlu0 %10438
  %10440 = vrot.lane.b32.xlu0 %v6506, 2
  %v10441 = vpop.permute.xlu0 %10440
  %10442 = vrot.lane.b32.xlu0 %v6507, 2
  %v10443 = vpop.permute.xlu0 %10442
  %10444 = vrot.lane.b32.xlu0 %v6508, 2
  %v10445 = vpop.permute.xlu0 %10444
  %10446 = vrot.lane.b32.xlu0 %v6509, 2
  %v10447 = vpop.permute.xlu0 %10446
  %10448 = vrot.lane.b32.xlu0 %v6510, 2
  %v10449 = vpop.permute.xlu0 %10448
  %10450 = vrot.lane.b32.xlu0 %v6511, 2
  %v10451 = vpop.permute.xlu0 %10450
  %10452 = vrot.lane.b32.xlu0 %v6512, 2
  %v10453 = vpop.permute.xlu0 %10452
  %vm10454 = vcmask 15360
  %v10455 = vsel %vm10454, %v10431, %v10433
  %v10456 = vsel %vm10454, %v10433, %v10435
  %v10457 = vsel %vm10454, %v10435, %v10437
  %v10458 = vsel %vm10454, %v10437, %v10439
  %v10459 = vsel %vm10454, %v10439, %v10441
  %v10460 = vsel %vm10454, %v10443, %v10445
  %v10461 = vsel %vm10454, %v10445, %v10447
  %v10462 = vsel %vm10454, %v10447, %v10449
  %v10463 = vsel %vm10454, %v10449, %v10451
  %v10464 = vsel %vm10454, %v10451, %v10453
  %v10476 = vsel %vm6574, %v10428, 0
  %v10479 = vsel %vm6574, %v10429, 0
  %10481 = vmatpush.msra.mxu0 0.0
  %10482 = vmatpush.msra.mxu0 0.0
  %10483 = vmatpush.msra.mxu0 0.0
  %10484 = vmatpush.msra.mxu0 0.0
  %10485 = vmatpush.msra.mxu0 0.0
  %10486 = vmatpush.msra.mxu0 0.0
  %10487 = vmatpush.msra.mxu0 0.0
  %10488 = vmatpush.msra.mxu0 0.0
  %10489 = vmatpush.msra.mxu0 0.0
  %10490 = vmatpush.msra.mxu0 0.0
  %10491 = vmatpush.msra.mxu0 0.0
  %10492 = vmatpush.msra.mxu0 0.0
  %10493 = vmatpush.msra.mxu0 0.0
  %10494 = vmatpush.msra.mxu0 0.0
  %10495 = vmatpush.msra.mxu0 %v10460
  %10496 = vmatpush.msra.mxu0 %v10455
  %10497 = vmatmul.f32.gmra.mxu0 %v10476
  %v10498 = vpop.f32.mrf.mxu0
  %v10499 = vadd.f32 0.0, %v10498
  %10500 = vmatmul.f32.gmra.mxu0 %v10479
  %v10501 = vpop.f32.mrf.mxu0
  %v10502 = vadd.f32 0.0, %v10501
  %10503 = vdwg.mxu0
  %10504 = vmatpush.msra.mxu0 0.0
  %10505 = vmatpush.msra.mxu0 0.0
  %10506 = vmatpush.msra.mxu0 0.0
  %10507 = vmatpush.msra.mxu0 0.0
  %10508 = vmatpush.msra.mxu0 0.0
  %10509 = vmatpush.msra.mxu0 0.0
  %10510 = vmatpush.msra.mxu0 0.0
  %10511 = vmatpush.msra.mxu0 0.0
  %10512 = vmatpush.msra.mxu0 0.0
  %10513 = vmatpush.msra.mxu0 0.0
  %10514 = vmatpush.msra.mxu0 0.0
  %10515 = vmatpush.msra.mxu0 0.0
  %10516 = vmatpush.msra.mxu0 0.0
  %10517 = vmatpush.msra.mxu0 0.0
  %10518 = vmatpush.msra.mxu0 %v10461
  %10519 = vmatpush.msra.mxu0 %v10456
  %10520 = vmatmul.f32.gmra.mxu0 %v10476
  %v10521 = vpop.f32.mrf.mxu0
  %v10522 = vadd.f32 0.0, %v10521
  %10523 = vmatmul.f32.gmra.mxu0 %v10479
  %v10524 = vpop.f32.mrf.mxu0
  %v10525 = vadd.f32 0.0, %v10524
  %10526 = vdwg.mxu0
  %10527 = vmatpush.msra.mxu0 0.0
  %10528 = vmatpush.msra.mxu0 0.0
  %10529 = vmatpush.msra.mxu0 0.0
  %10530 = vmatpush.msra.mxu0 0.0
  %10531 = vmatpush.msra.mxu0 0.0
  %10532 = vmatpush.msra.mxu0 0.0
  %10533 = vmatpush.msra.mxu0 0.0
  %10534 = vmatpush.msra.mxu0 0.0
  %10535 = vmatpush.msra.mxu0 0.0
  %10536 = vmatpush.msra.mxu0 0.0
  %10537 = vmatpush.msra.mxu0 0.0
  %10538 = vmatpush.msra.mxu0 0.0
  %10539 = vmatpush.msra.mxu0 0.0
  %10540 = vmatpush.msra.mxu0 0.0
  %10541 = vmatpush.msra.mxu0 %v10462
  %10542 = vmatpush.msra.mxu0 %v10457
  %10543 = vmatmul.f32.gmra.mxu0 %v10476
  %v10544 = vpop.f32.mrf.mxu0
  %v10545 = vadd.f32 0.0, %v10544
  %10546 = vmatmul.f32.gmra.mxu0 %v10479
  %v10547 = vpop.f32.mrf.mxu0
  %v10548 = vadd.f32 0.0, %v10547
  %10549 = vdwg.mxu0
  %10550 = vmatpush.msra.mxu0 0.0
  %10551 = vmatpush.msra.mxu0 0.0
  %10552 = vmatpush.msra.mxu0 0.0
  %10553 = vmatpush.msra.mxu0 0.0
  %10554 = vmatpush.msra.mxu0 0.0
  %10555 = vmatpush.msra.mxu0 0.0
  %10556 = vmatpush.msra.mxu0 0.0
  %10557 = vmatpush.msra.mxu0 0.0
  %10558 = vmatpush.msra.mxu0 0.0
  %10559 = vmatpush.msra.mxu0 0.0
  %10560 = vmatpush.msra.mxu0 0.0
  %10561 = vmatpush.msra.mxu0 0.0
  %10562 = vmatpush.msra.mxu0 0.0
  %10563 = vmatpush.msra.mxu0 0.0
  %10564 = vmatpush.msra.mxu0 %v10463
  %10565 = vmatpush.msra.mxu0 %v10458
  %10566 = vmatmul.f32.gmra.mxu0 %v10476
  %v10567 = vpop.f32.mrf.mxu0
  %v10568 = vadd.f32 0.0, %v10567
  %10569 = vmatmul.f32.gmra.mxu0 %v10479
  %v10570 = vpop.f32.mrf.mxu0
  %v10571 = vadd.f32 0.0, %v10570
  %10572 = vdwg.mxu0
  %10573 = vmatpush.msra.mxu0 0.0
  %10574 = vmatpush.msra.mxu0 0.0
  %10575 = vmatpush.msra.mxu0 0.0
  %10576 = vmatpush.msra.mxu0 0.0
  %10577 = vmatpush.msra.mxu0 0.0
  %10578 = vmatpush.msra.mxu0 0.0
  %10579 = vmatpush.msra.mxu0 0.0
  %10580 = vmatpush.msra.mxu0 0.0
  %10581 = vmatpush.msra.mxu0 0.0
  %10582 = vmatpush.msra.mxu0 0.0
  %10583 = vmatpush.msra.mxu0 0.0
  %10584 = vmatpush.msra.mxu0 0.0
  %10585 = vmatpush.msra.mxu0 0.0
  %10586 = vmatpush.msra.mxu0 0.0
  %10587 = vmatpush.msra.mxu0 %v10464
  %10588 = vmatpush.msra.mxu0 %v10459
  %10589 = vmatmul.f32.gmra.mxu0 %v10476
  %v10590 = vpop.f32.mrf.mxu0
  %v10591 = vadd.f32 0.0, %v10590
  %10592 = vmatmul.f32.gmra.mxu0 %v10479
  %v10593 = vpop.f32.mrf.mxu0
  %v10594 = vadd.f32 0.0, %v10593
  %10595 = vdwg.mxu0
  %v10596 = vadd.f32 %v10417, %v10499
  %v10597 = vadd.f32 %v10418, %v10522
  %v10598 = vadd.f32 %v10419, %v10545
  %v10599 = vadd.f32 %v10420, %v10568
  %v10600 = vadd.f32 %v10421, %v10591
  %v10601 = vadd.f32 %v10422, %v10502
  %v10602 = vadd.f32 %v10423, %v10525
  %v10603 = vadd.f32 %v10424, %v10548
  %v10604 = vadd.f32 %v10425, %v10571
  %v10605 = vadd.f32 %v10426, %v10594
  %s10606 = scalar_lea.vmem %s3, 368
  %v10607 = vld [vmem:[%s10606] sm:$0xff]
  %v10608 = vld [vmem:[%s10606 + $0x8] sm:$0xff]
  %10609 = vrot.lane.b32.xlu0 %v6501, 1
  %v10610 = vpop.permute.xlu0 %10609
  %10611 = vrot.lane.b32.xlu0 %v6502, 1
  %v10612 = vpop.permute.xlu0 %10611
  %10613 = vrot.lane.b32.xlu0 %v6503, 1
  %v10614 = vpop.permute.xlu0 %10613
  %10615 = vrot.lane.b32.xlu0 %v6504, 1
  %v10616 = vpop.permute.xlu0 %10615
  %10617 = vrot.lane.b32.xlu0 %v6505, 1
  %v10618 = vpop.permute.xlu0 %10617
  %10619 = vrot.lane.b32.xlu0 %v6506, 1
  %v10620 = vpop.permute.xlu0 %10619
  %10621 = vrot.lane.b32.xlu0 %v6507, 1
  %v10622 = vpop.permute.xlu0 %10621
  %10623 = vrot.lane.b32.xlu0 %v6508, 1
  %v10624 = vpop.permute.xlu0 %10623
  %10625 = vrot.lane.b32.xlu0 %v6509, 1
  %v10626 = vpop.permute.xlu0 %10625
  %10627 = vrot.lane.b32.xlu0 %v6510, 1
  %v10628 = vpop.permute.xlu0 %10627
  %10629 = vrot.lane.b32.xlu0 %v6511, 1
  %v10630 = vpop.permute.xlu0 %10629
  %10631 = vrot.lane.b32.xlu0 %v6512, 1
  %v10632 = vpop.permute.xlu0 %10631
  %vm10633 = vcmask 7168
  %v10634 = vsel %vm10633, %v10610, %v10612
  %v10635 = vsel %vm10633, %v10612, %v10614
  %v10636 = vsel %vm10633, %v10614, %v10616
  %v10637 = vsel %vm10633, %v10616, %v10618
  %v10638 = vsel %vm10633, %v10618, %v10620
  %v10639 = vsel %vm10633, %v10622, %v10624
  %v10640 = vsel %vm10633, %v10624, %v10626
  %v10641 = vsel %vm10633, %v10626, %v10628
  %v10642 = vsel %vm10633, %v10628, %v10630
  %v10643 = vsel %vm10633, %v10630, %v10632
  %v10655 = vsel %vm6574, %v10607, 0
  %v10658 = vsel %vm6574, %v10608, 0
  %10660 = vmatpush.msra.mxu0 0.0
  %10661 = vmatpush.msra.mxu0 0.0
  %10662 = vmatpush.msra.mxu0 0.0
  %10663 = vmatpush.msra.mxu0 0.0
  %10664 = vmatpush.msra.mxu0 0.0
  %10665 = vmatpush.msra.mxu0 0.0
  %10666 = vmatpush.msra.mxu0 0.0
  %10667 = vmatpush.msra.mxu0 0.0
  %10668 = vmatpush.msra.mxu0 0.0
  %10669 = vmatpush.msra.mxu0 0.0
  %10670 = vmatpush.msra.mxu0 0.0
  %10671 = vmatpush.msra.mxu0 0.0
  %10672 = vmatpush.msra.mxu0 0.0
  %10673 = vmatpush.msra.mxu0 0.0
  %10674 = vmatpush.msra.mxu0 %v10639
  %10675 = vmatpush.msra.mxu0 %v10634
  %10676 = vmatmul.f32.gmra.mxu0 %v10655
  %v10677 = vpop.f32.mrf.mxu0
  %v10678 = vadd.f32 0.0, %v10677
  %10679 = vmatmul.f32.gmra.mxu0 %v10658
  %v10680 = vpop.f32.mrf.mxu0
  %v10681 = vadd.f32 0.0, %v10680
  %10682 = vdwg.mxu0
  %10683 = vmatpush.msra.mxu0 0.0
  %10684 = vmatpush.msra.mxu0 0.0
  %10685 = vmatpush.msra.mxu0 0.0
  %10686 = vmatpush.msra.mxu0 0.0
  %10687 = vmatpush.msra.mxu0 0.0
  %10688 = vmatpush.msra.mxu0 0.0
  %10689 = vmatpush.msra.mxu0 0.0
  %10690 = vmatpush.msra.mxu0 0.0
  %10691 = vmatpush.msra.mxu0 0.0
  %10692 = vmatpush.msra.mxu0 0.0
  %10693 = vmatpush.msra.mxu0 0.0
  %10694 = vmatpush.msra.mxu0 0.0
  %10695 = vmatpush.msra.mxu0 0.0
  %10696 = vmatpush.msra.mxu0 0.0
  %10697 = vmatpush.msra.mxu0 %v10640
  %10698 = vmatpush.msra.mxu0 %v10635
  %10699 = vmatmul.f32.gmra.mxu0 %v10655
  %v10700 = vpop.f32.mrf.mxu0
  %v10701 = vadd.f32 0.0, %v10700
  %10702 = vmatmul.f32.gmra.mxu0 %v10658
  %v10703 = vpop.f32.mrf.mxu0
  %v10704 = vadd.f32 0.0, %v10703
  %10705 = vdwg.mxu0
  %10706 = vmatpush.msra.mxu0 0.0
  %10707 = vmatpush.msra.mxu0 0.0
  %10708 = vmatpush.msra.mxu0 0.0
  %10709 = vmatpush.msra.mxu0 0.0
  %10710 = vmatpush.msra.mxu0 0.0
  %10711 = vmatpush.msra.mxu0 0.0
  %10712 = vmatpush.msra.mxu0 0.0
  %10713 = vmatpush.msra.mxu0 0.0
  %10714 = vmatpush.msra.mxu0 0.0
  %10715 = vmatpush.msra.mxu0 0.0
  %10716 = vmatpush.msra.mxu0 0.0
  %10717 = vmatpush.msra.mxu0 0.0
  %10718 = vmatpush.msra.mxu0 0.0
  %10719 = vmatpush.msra.mxu0 0.0
  %10720 = vmatpush.msra.mxu0 %v10641
  %10721 = vmatpush.msra.mxu0 %v10636
  %10722 = vmatmul.f32.gmra.mxu0 %v10655
  %v10723 = vpop.f32.mrf.mxu0
  %v10724 = vadd.f32 0.0, %v10723
  %10725 = vmatmul.f32.gmra.mxu0 %v10658
  %v10726 = vpop.f32.mrf.mxu0
  %v10727 = vadd.f32 0.0, %v10726
  %10728 = vdwg.mxu0
  %10729 = vmatpush.msra.mxu0 0.0
  %10730 = vmatpush.msra.mxu0 0.0
  %10731 = vmatpush.msra.mxu0 0.0
  %10732 = vmatpush.msra.mxu0 0.0
  %10733 = vmatpush.msra.mxu0 0.0
  %10734 = vmatpush.msra.mxu0 0.0
  %10735 = vmatpush.msra.mxu0 0.0
  %10736 = vmatpush.msra.mxu0 0.0
  %10737 = vmatpush.msra.mxu0 0.0
  %10738 = vmatpush.msra.mxu0 0.0
  %10739 = vmatpush.msra.mxu0 0.0
  %10740 = vmatpush.msra.mxu0 0.0
  %10741 = vmatpush.msra.mxu0 0.0
  %10742 = vmatpush.msra.mxu0 0.0
  %10743 = vmatpush.msra.mxu0 %v10642
  %10744 = vmatpush.msra.mxu0 %v10637
  %10745 = vmatmul.f32.gmra.mxu0 %v10655
  %v10746 = vpop.f32.mrf.mxu0
  %v10747 = vadd.f32 0.0, %v10746
  %10748 = vmatmul.f32.gmra.mxu0 %v10658
  %v10749 = vpop.f32.mrf.mxu0
  %v10750 = vadd.f32 0.0, %v10749
  %10751 = vdwg.mxu0
  %10752 = vmatpush.msra.mxu0 0.0
  %10753 = vmatpush.msra.mxu0 0.0
  %10754 = vmatpush.msra.mxu0 0.0
  %10755 = vmatpush.msra.mxu0 0.0
  %10756 = vmatpush.msra.mxu0 0.0
  %10757 = vmatpush.msra.mxu0 0.0
  %10758 = vmatpush.msra.mxu0 0.0
  %10759 = vmatpush.msra.mxu0 0.0
  %10760 = vmatpush.msra.mxu0 0.0
  %10761 = vmatpush.msra.mxu0 0.0
  %10762 = vmatpush.msra.mxu0 0.0
  %10763 = vmatpush.msra.mxu0 0.0
  %10764 = vmatpush.msra.mxu0 0.0
  %10765 = vmatpush.msra.mxu0 0.0
  %10766 = vmatpush.msra.mxu0 %v10643
  %10767 = vmatpush.msra.mxu0 %v10638
  %10768 = vmatmul.f32.gmra.mxu0 %v10655
  %v10769 = vpop.f32.mrf.mxu0
  %v10770 = vadd.f32 0.0, %v10769
  %10771 = vmatmul.f32.gmra.mxu0 %v10658
  %v10772 = vpop.f32.mrf.mxu0
  %v10773 = vadd.f32 0.0, %v10772
  %10774 = vdwg.mxu0
  %v10775 = vadd.f32 %v10596, %v10678
  %v10776 = vadd.f32 %v10597, %v10701
  %v10777 = vadd.f32 %v10598, %v10724
  %v10778 = vadd.f32 %v10599, %v10747
  %v10779 = vadd.f32 %v10600, %v10770
  %v10780 = vadd.f32 %v10601, %v10681
  %v10781 = vadd.f32 %v10602, %v10704
  %v10782 = vadd.f32 %v10603, %v10727
  %v10783 = vadd.f32 %v10604, %v10750
  %v10784 = vadd.f32 %v10605, %v10773
  %s10785 = scalar_lea.vmem %s3, 384
  %v10786 = vld [vmem:[%s10785] sm:$0xff]
  %v10787 = vld [vmem:[%s10785 + $0x8] sm:$0xff]
  %v10789 = vsel %vm6574, %v10786, 0
  %v10792 = vsel %vm6574, %v10787, 0
  %10794 = vmatpush.msra.mxu0 0.0
  %10795 = vmatpush.msra.mxu0 0.0
  %10796 = vmatpush.msra.mxu0 0.0
  %10797 = vmatpush.msra.mxu0 0.0
  %10798 = vmatpush.msra.mxu0 0.0
  %10799 = vmatpush.msra.mxu0 0.0
  %10800 = vmatpush.msra.mxu0 0.0
  %10801 = vmatpush.msra.mxu0 0.0
  %10802 = vmatpush.msra.mxu0 0.0
  %10803 = vmatpush.msra.mxu0 0.0
  %10804 = vmatpush.msra.mxu0 0.0
  %10805 = vmatpush.msra.mxu0 0.0
  %10806 = vmatpush.msra.mxu0 0.0
  %10807 = vmatpush.msra.mxu0 0.0
  %10808 = vmatpush.msra.mxu0 %v6508
  %10809 = vmatpush.msra.mxu0 %v6502
  %10810 = vmatmul.f32.gmra.mxu0 %v10789
  %v10811 = vpop.f32.mrf.mxu0
  %v10812 = vadd.f32 0.0, %v10811
  %10813 = vmatmul.f32.gmra.mxu0 %v10792
  %v10814 = vpop.f32.mrf.mxu0
  %v10815 = vadd.f32 0.0, %v10814
  %10816 = vdwg.mxu0
  %10817 = vmatpush.msra.mxu0 0.0
  %10818 = vmatpush.msra.mxu0 0.0
  %10819 = vmatpush.msra.mxu0 0.0
  %10820 = vmatpush.msra.mxu0 0.0
  %10821 = vmatpush.msra.mxu0 0.0
  %10822 = vmatpush.msra.mxu0 0.0
  %10823 = vmatpush.msra.mxu0 0.0
  %10824 = vmatpush.msra.mxu0 0.0
  %10825 = vmatpush.msra.mxu0 0.0
  %10826 = vmatpush.msra.mxu0 0.0
  %10827 = vmatpush.msra.mxu0 0.0
  %10828 = vmatpush.msra.mxu0 0.0
  %10829 = vmatpush.msra.mxu0 0.0
  %10830 = vmatpush.msra.mxu0 0.0
  %10831 = vmatpush.msra.mxu0 %v6509
  %10832 = vmatpush.msra.mxu0 %v6503
  %10833 = vmatmul.f32.gmra.mxu0 %v10789
  %v10834 = vpop.f32.mrf.mxu0
  %v10835 = vadd.f32 0.0, %v10834
  %10836 = vmatmul.f32.gmra.mxu0 %v10792
  %v10837 = vpop.f32.mrf.mxu0
  %v10838 = vadd.f32 0.0, %v10837
  %10839 = vdwg.mxu0
  %10840 = vmatpush.msra.mxu0 0.0
  %10841 = vmatpush.msra.mxu0 0.0
  %10842 = vmatpush.msra.mxu0 0.0
  %10843 = vmatpush.msra.mxu0 0.0
  %10844 = vmatpush.msra.mxu0 0.0
  %10845 = vmatpush.msra.mxu0 0.0
  %10846 = vmatpush.msra.mxu0 0.0
  %10847 = vmatpush.msra.mxu0 0.0
  %10848 = vmatpush.msra.mxu0 0.0
  %10849 = vmatpush.msra.mxu0 0.0
  %10850 = vmatpush.msra.mxu0 0.0
  %10851 = vmatpush.msra.mxu0 0.0
  %10852 = vmatpush.msra.mxu0 0.0
  %10853 = vmatpush.msra.mxu0 0.0
  %10854 = vmatpush.msra.mxu0 %v6510
  %10855 = vmatpush.msra.mxu0 %v6504
  %10856 = vmatmul.f32.gmra.mxu0 %v10789
  %v10857 = vpop.f32.mrf.mxu0
  %v10858 = vadd.f32 0.0, %v10857
  %10859 = vmatmul.f32.gmra.mxu0 %v10792
  %v10860 = vpop.f32.mrf.mxu0
  %v10861 = vadd.f32 0.0, %v10860
  %10862 = vdwg.mxu0
  %10863 = vmatpush.msra.mxu0 0.0
  %10864 = vmatpush.msra.mxu0 0.0
  %10865 = vmatpush.msra.mxu0 0.0
  %10866 = vmatpush.msra.mxu0 0.0
  %10867 = vmatpush.msra.mxu0 0.0
  %10868 = vmatpush.msra.mxu0 0.0
  %10869 = vmatpush.msra.mxu0 0.0
  %10870 = vmatpush.msra.mxu0 0.0
  %10871 = vmatpush.msra.mxu0 0.0
  %10872 = vmatpush.msra.mxu0 0.0
  %10873 = vmatpush.msra.mxu0 0.0
  %10874 = vmatpush.msra.mxu0 0.0
  %10875 = vmatpush.msra.mxu0 0.0
  %10876 = vmatpush.msra.mxu0 0.0
  %10877 = vmatpush.msra.mxu0 %v6511
  %10878 = vmatpush.msra.mxu0 %v6505
  %10879 = vmatmul.f32.gmra.mxu0 %v10789
  %v10880 = vpop.f32.mrf.mxu0
  %v10881 = vadd.f32 0.0, %v10880
  %10882 = vmatmul.f32.gmra.mxu0 %v10792
  %v10883 = vpop.f32.mrf.mxu0
  %v10884 = vadd.f32 0.0, %v10883
  %10885 = vdwg.mxu0
  %10886 = vmatpush.msra.mxu0 0.0
  %10887 = vmatpush.msra.mxu0 0.0
  %10888 = vmatpush.msra.mxu0 0.0
  %10889 = vmatpush.msra.mxu0 0.0
  %10890 = vmatpush.msra.mxu0 0.0
  %10891 = vmatpush.msra.mxu0 0.0
  %10892 = vmatpush.msra.mxu0 0.0
  %10893 = vmatpush.msra.mxu0 0.0
  %10894 = vmatpush.msra.mxu0 0.0
  %10895 = vmatpush.msra.mxu0 0.0
  %10896 = vmatpush.msra.mxu0 0.0
  %10897 = vmatpush.msra.mxu0 0.0
  %10898 = vmatpush.msra.mxu0 0.0
  %10899 = vmatpush.msra.mxu0 0.0
  %10900 = vmatpush.msra.mxu0 %v6512
  %10901 = vmatpush.msra.mxu0 %v6506
  %10902 = vmatmul.f32.gmra.mxu0 %v10789
  %v10903 = vpop.f32.mrf.mxu0
  %v10904 = vadd.f32 0.0, %v10903
  %10905 = vmatmul.f32.gmra.mxu0 %v10792
  %v10906 = vpop.f32.mrf.mxu0
  %v10907 = vadd.f32 0.0, %v10906
  %10908 = vdwg.mxu0
  %v10909 = vadd.f32 %v10775, %v10812
  %v10910 = vadd.f32 %v10776, %v10835
  %v10911 = vadd.f32 %v10777, %v10858
  %v10912 = vadd.f32 %v10778, %v10881
  %v10913 = vadd.f32 %v10779, %v10904
  %v10914 = vadd.f32 %v10780, %v10815
  %v10915 = vadd.f32 %v10781, %v10838
  %v10916 = vadd.f32 %v10782, %v10861
  %v10917 = vadd.f32 %v10783, %v10884
  %v10918 = vadd.f32 %v10784, %v10907
  %v10919 = vld [vmem:[%s4] sm:$0xff]
  %v10920 = vadd.f32 %v10909, %v10910
  %v10921 = vadd.f32 %v10920, %v10911
  %v10922 = vadd.f32 %v10921, %v10912
  %v10923 = vsel %vm549, %v10913, 0.0
  %v10924 = vadd.f32 %v10922, %v10923
  %10925 = vadd.xlane.f32.xlu0 %v10924
  %v10926 = vpop.xlane.xlu0 %10925
  %v10927 = vadd.f32 %v10914, %v10915
  %v10928 = vadd.f32 %v10927, %v10916
  %v10929 = vadd.f32 %v10928, %v10917
  %v10930 = vsel %vm549, %v10918, 0.0
  %v10931 = vadd.f32 %v10929, %v10930
  %10932 = vadd.xlane.f32.xlu0 %v10931
  %v10933 = vpop.xlane.xlu0 %10932
  %v10934 = vadd.f32 %v10926, %v10933
  %v10935 = vrcp.pop 1250.0
  %v10936 = vmul.f32 1250.0, %v10935
  %v10937 = vsub.f32 1.0, %v10936
  %v10938 = vmul.f32 %v10935, %v10937
  %v10939 = vadd.f32 %v10935, %v10938
  %vm10940 = vweird.f32 %v10935
  %v10941 = vsel %vm10940, %v10935, %v10939
  %v10942 = vmul.f32 %v10934, %v10941
  %v10943 = vsub.f32 %v10909, %v10942
  %v10944 = vsub.f32 %v10910, %v10942
  %v10945 = vsub.f32 %v10911, %v10942
  %v10946 = vsub.f32 %v10912, %v10942
  %v10947 = vsub.f32 %v10913, %v10942
  %v10948 = vmul.f32 %v10943, %v10943
  %v10949 = vmul.f32 %v10944, %v10944
  %v10950 = vmul.f32 %v10945, %v10945
  %v10951 = vmul.f32 %v10946, %v10946
  %v10952 = vmul.f32 %v10947, %v10947
  %v10953 = vadd.f32 %v10948, %v10949
  %v10954 = vadd.f32 %v10953, %v10950
  %v10955 = vadd.f32 %v10954, %v10951
  %v10956 = vsel %vm549, %v10952, 0.0
  %v10957 = vadd.f32 %v10955, %v10956
  %10958 = vadd.xlane.f32.xlu0 %v10957
  %v10959 = vpop.xlane.xlu0 %10958
  %v10960 = vsub.f32 %v10914, %v10942
  %v10961 = vsub.f32 %v10915, %v10942
  %v10962 = vsub.f32 %v10916, %v10942
  %v10963 = vsub.f32 %v10917, %v10942
  %v10964 = vsub.f32 %v10918, %v10942
  %v10965 = vmul.f32 %v10960, %v10960
  %v10966 = vmul.f32 %v10961, %v10961
  %v10967 = vmul.f32 %v10962, %v10962
  %v10968 = vmul.f32 %v10963, %v10963
  %v10969 = vmul.f32 %v10964, %v10964
  %v10970 = vadd.f32 %v10965, %v10966
  %v10971 = vadd.f32 %v10970, %v10967
  %v10972 = vadd.f32 %v10971, %v10968
  %v10973 = vsel %vm549, %v10969, 0.0
  %v10974 = vadd.f32 %v10972, %v10973
  %10975 = vadd.xlane.f32.xlu0 %v10974
  %v10976 = vpop.xlane.xlu0 %10975
  %v10977 = vadd.f32 %v10959, %v10976
  %v10978 = vmul.f32 %v10977, %v10941
  %v10979 = vadd.f32 %v10978, 1e-05
  %v10980 = vrsqrt.pop %v10979
  %v10981 = vmul.f32 %v10980, %v10979
  %v10982 = vmul.f32 %v10981, %v10980
  %v10983 = vmul.f32 0.5, %v10982
  %v10984 = vsub.f32 1.5, %v10983
  %v10985 = vmul.f32 %v10980, %v10984
  %vm10986 = vweird.f32 %v10979
  %vm10987 = vweird.f32 %v10980
  %vm10988 = vmor %vm10986, %vm10987
  %v10989 = vsel %vm10988, %v10980, %v10985
  %v10990 = vmul.f32 %v10989, %v10919
  %10992 = vset.pattern.permute.xlu0 4
  %10993 = vperm.xlu0 %10992, %v10990
  %v10994 = vpop.permute.xlu0 %10993
  %v10996 = vmul.f32 %v10943, %v10994
  %v10997 = vmul.f32 %v10944, %v10994
  %v10998 = vmul.f32 %v10945, %v10994
  %v10999 = vmul.f32 %v10946, %v10994
  %v11000 = vmul.f32 %v10947, %v10994
  %11002 = vset.pattern.permute.xlu0 5
  %11003 = vperm.xlu0 %11002, %v10919
  %v11004 = vpop.permute.xlu0 %11003
  %v11006 = vadd.f32 %v10996, %v11004
  %v11007 = vadd.f32 %v10997, %v11004
  %v11008 = vadd.f32 %v10998, %v11004
  %v11009 = vadd.f32 %v10999, %v11004
  %v11010 = vadd.f32 %v11000, %v11004
  %v11011 = vmax.f32 %v11006, 0.0
  %v11012 = vmax.f32 %v11007, 0.0
  %v11013 = vmax.f32 %v11008, 0.0
  %v11014 = vmax.f32 %v11009, 0.0
  %v11015 = vmax.f32 %v11010, 0.0
  %11016 = vst [vmem:[%s7] sm:$0xff] %v11011
  %11017 = vst [vmem:[%s7 + $0x8] sm:$0xff] %v11012
  %11018 = vst [vmem:[%s7 + $0x10] sm:$0xff] %v11013
  %11019 = vst [vmem:[%s7 + $0x18] sm:$0xff] %v11014
  %11020 = vst.msk [vmem:[%s7 + $0x20] sm:$0xff] %vm549, %v11015
  %v11021 = vmul.f32 %v10960, %v10994
  %v11022 = vmul.f32 %v10961, %v10994
  %v11023 = vmul.f32 %v10962, %v10994
  %v11024 = vmul.f32 %v10963, %v10994
  %v11025 = vmul.f32 %v10964, %v10994
  %v11026 = vadd.f32 %v11021, %v11004
  %v11027 = vadd.f32 %v11022, %v11004
  %v11028 = vadd.f32 %v11023, %v11004
  %v11029 = vadd.f32 %v11024, %v11004
  %v11030 = vadd.f32 %v11025, %v11004
  %v11031 = vmax.f32 %v11026, 0.0
  %v11032 = vmax.f32 %v11027, 0.0
  %v11033 = vmax.f32 %v11028, 0.0
  %v11034 = vmax.f32 %v11029, 0.0
  %v11035 = vmax.f32 %v11030, 0.0
  %11036 = vst [vmem:[%s7 + $0x28] sm:$0xff] %v11031
  %11037 = vst [vmem:[%s7 + $0x30] sm:$0xff] %v11032
  %11038 = vst [vmem:[%s7 + $0x38] sm:$0xff] %v11033
  %11039 = vst [vmem:[%s7 + $0x40] sm:$0xff] %v11034
  %11040 = vst.msk [vmem:[%s7 + $0x48] sm:$0xff] %vm549, %v11035
  // Predicated region
  $region30: #{generator_forward.1} parent=0 // pred_check
    _
  $region31: #{generator_forward.1} parent=0 // pred_check_branch
    %11042 = sbr.rel (0) target = $region33
  $region32: #{generator_forward.1} parent=0 // pred_region
    _
  $region33: #{generator_forward.1} parent=0 // pred_fallthru
    _
  // Predicated region
  $region34: #{generator_forward.1} parent=0 // pred_check
    _
  $region35: #{generator_forward.1} parent=0 // pred_check_branch
    %11044 = sbr.rel (0) target = $region37
  $region36: #{generator_forward.1} parent=0 // pred_region
    _
  $region37: #{generator_forward.1} parent=0 // pred_fallthru
    _

</llo_original>
